<compile_context>
chip_gen: v7x
topology: tpu7x:2x2x1
jax: 0.10.0
libtpu: 0.0.40
codegen_flags: <defaults>
</compile_context>

<pallas_src>
import numpy as np
import jax
import jax.numpy as jnp
from jax.experimental import pallas as pl
from jax.experimental.pallas import tpu as pltpu


# ------------------------------ Pallas kernel -------------------------------

def _aux_head_kernel(x_ref, m_ref, shift_ref, w1_ref, b1_ref, w2_ref, b2_ref,
                     o_ref):
    # Stage 1: AvgPool(5,3) + 1x1 Conv + BN(eval), pre-composed into one matmul.
    #   (TM, C*H*W) @ (C*H*W, 2048) -> (TM, 2048), columns already in PyTorch
    #   flatten order (c*16 + s).  bf16 MXU inputs, f32 accumulation/epilogue.
    feat = jnp.dot(x_ref[...].astype(jnp.bfloat16), m_ref[...],
                   preferred_element_type=jnp.float32)
    feat = jnp.maximum(feat + shift_ref[...], 0.0)                 # ReLU (f32)

    # Stage 2: Linear(2048, 1024) + ReLU.  Dropout is identity in eval mode.
    h = jnp.dot(feat.astype(jnp.bfloat16), w1_ref[...],
                preferred_element_type=jnp.float32)
    h = jnp.maximum(h + b1_ref[...], 0.0)
    # TODO(synk): Dropout masking (training mode) is not applied here.

    # Stage 3: Linear(1024, num_classes) padded to 128 lanes (unmasked stores).
    o_ref[...] = jnp.dot(h.astype(jnp.bfloat16), w2_ref[...],
                         preferred_element_type=jnp.float32) + b2_ref[...]


# --------------------------- host-side preparation --------------------------

def make_pool_matrix(h, w, k, s):
    """(H*W, OH*OW) matrix implementing AvgPool2d(k, s)."""
    oh = (h - k) // s + 1
    ow = (w - k) // s + 1
    p = np.zeros((h * w, oh * ow), dtype=np.float32)
    for i in range(oh):
        for j in range(ow):
            for di in range(k):
                for dj in range(k):
                    p[(i * s + di) * w + (j * s + dj), i * ow + j] = 1.0 / (k * k)
    return p, oh, ow


def init_params(key, in_channels, num_classes, h, w):
    pool, oh, ow = make_pool_matrix(h, w, k=5, s=3)
    S = oh * ow                      # 16
    assert 128 * S == 2048, "fc input size must match Linear(2048, 1024)"

    ks = jax.random.split(key, 6)
    w_conv = jax.random.normal(ks[0], (128, in_channels), jnp.float32) * 0.1
    b_conv = jax.random.normal(ks[1], (128,), jnp.float32) * 0.1
    # BatchNorm2d(128) right after __init__ (eval): gamma=1, beta=0, rm=0, rv=1.
    eps = 1e-5
    bn_scale = jnp.full((128,), 1.0 / np.sqrt(1.0 + eps), jnp.float32)
    bn_shift = jnp.zeros((128,), jnp.float32)

    # Fold BN into the conv:  w' = scale * W,  shift' = scale * b + beta'.
    wc = w_conv * bn_scale[:, None]                       # (128, C)
    shift = bn_scale * b_conv + bn_shift                  # (128,)

    # Pre-compose AvgPool with the folded 1x1 conv (both linear):
    #   M[ci*HW + hw, c*S + s] = pool[hw, s] * wc[c, ci]
    # Column order c*S+s == PyTorch view(B,-1) order of a (B,128,4,4) tensor.
    M = jnp.einsum('hs,ci->ihcs', jnp.asarray(pool), wc)
    M = M.reshape(in_channels * h * w, 128 * S)
    shiftb = jnp.repeat(shift, S)[None, :]                # (1, 2048)

    # fc weights (kept in "x @ W^T" transposed layout).
    w1t = jax.random.normal(ks[2], (2048, 1024), jnp.float32) * 0.02
    b1 = jax.random.normal(ks[3], (1, 1024), jnp.float32) * 0.02
    w2t = jax.random.normal(ks[4], (1024, num_classes), jnp.float32) * 0.02
    b2 = jax.random.normal(ks[5], (1, num_classes), jnp.float32) * 0.02

    # Pad the class dim to 128 lanes for full-width MXU tiles / unmasked stores.
    ncp = 128
    w2p = jnp.zeros((1024, ncp), jnp.float32).at[:, :num_classes].set(w2t)
    b2p = jnp.zeros((1, ncp), jnp.float32).at[:, :num_classes].set(b2)

    kernel_params = dict(
        M=M.astype(jnp.bfloat16), shiftb=shiftb.astype(jnp.float32),
        w1t=w1t.astype(jnp.bfloat16), b1=b1.astype(jnp.float32),
        w2p=w2p.astype(jnp.bfloat16), b2p=b2p.astype(jnp.float32))
    raw_params = dict(pool=jnp.asarray(pool), w_conv=w_conv, b_conv=b_conv,
                      bn_scale=bn_scale, bn_shift=bn_shift,
                      w1t=w1t, b1=b1, w2t=w2t, b2=b2, S=S)
    return kernel_params, raw_params


def inception_aux_forward(x, params, num_classes):
    """x: (B, C, H, W) float32, NCHW."""
    B, C, H, W = x.shape
    chw = C * H * W
    x2 = x.reshape(B, chw)                         # NCHW flatten, no transpose

    # Batch-row tile (sublane multiple).  For large B use 128 (v5e) / 256
    # (v6e, v7x); the batch grid axis is "parallel" so v7x shards it across
    # both TensorCores.
    tm = 8
    bp = ((B + tm - 1) // tm) * tm
    if bp != B:
        x2 = jnp.pad(x2, ((0, bp - B), (0, 0)))

    nf = params["M"].shape[1]                      # 2048
    nh = params["w1t"].shape[1]                    # 1024
    ncp = params["w2p"].shape[1]                   # 128 (padded classes)

    out_padded = pl.pallas_call(
        _aux_head_kernel,
        out_shape=jax.ShapeDtypeStruct((bp, ncp), jnp.float32),
        grid=(bp // tm,),
        in_specs=[
            pl.BlockSpec((tm, chw), lambda i: (i, 0)),     # x rows
            pl.BlockSpec((chw, nf), lambda i: (0, 0)),     # composed pool+conv
            pl.BlockSpec((1, nf), lambda i: (0, 0)),       # folded shift
            pl.BlockSpec((nf, nh), lambda i: (0, 0)),      # fc1 weight
            pl.BlockSpec((1, nh), lambda i: (0, 0)),       # fc1 bias
            pl.BlockSpec((nh, ncp), lambda i: (0, 0)),     # fc2 weight (padded)
            pl.BlockSpec((1, ncp), lambda i: (0, 0)),      # fc2 bias (padded)
        ],
        out_specs=pl.BlockSpec((tm, ncp), lambda i: (i, 0)),
        compiler_params=pltpu.CompilerParams(
            dimension_semantics=("parallel",),
            vmem_limit_bytes=48 * 1024 * 1024,
        ),
    )(x2, params["M"], params["shiftb"], params["w1t"], params["b1"],
      params["w2p"], params["b2p"])

    return out_padded[:B, :num_classes]


# Pure-JAX f32 reference of the un-fused module (eval mode) for a sanity check.
def reference_forward(x, raw, num_classes):
    B, C, H, W = x.shape
    S = raw["S"]
    pooled = jnp.einsum('bch,hs->bcs', x.reshape(B, C, H * W), raw["pool"])
    conv = jnp.einsum('oc,bcs->bos', raw["w_conv"], pooled) + raw["b_conv"][None, :, None]
    bn = conv * raw["bn_scale"][None, :, None] + raw["bn_shift"][None, :, None]
    feat = jnp.maximum(bn, 0.0).reshape(B, 128 * S)        # == x.view(B, -1)
    h = jnp.maximum(feat @ raw["w1t"] + raw["b1"], 0.0)
    return h @ raw["w2t"] + raw["b2"]


# ---------------------------------- main -------------------------------------

if __name__ == "__main__":
    B, C, H, W = 2, 4, 14, 14          # 14x14 -> AvgPool(5,3) -> 4x4; 128*16 = 2048
    num_classes = 10

    key = jax.random.PRNGKey(0)
    k_x, k_p = jax.random.split(key)
    x = jax.random.normal(k_x, (B, C, H, W), jnp.float32)

    params, raw = init_params(k_p, C, num_classes, H, W)

    out = inception_aux_forward(x, params, num_classes)
    out = jax.block_until_ready(out)

    assert out.shape == (B, num_classes), out.shape
    assert bool(jnp.all(jnp.isfinite(out)))

    ref = reference_forward(x, raw, num_classes)
    assert bool(jnp.allclose(out, ref, rtol=5e-2, atol=1e-2)), (
        "kernel output deviates from f32 reference beyond bf16 tolerance")

    print("KERNEL_OK")
</pallas_src>

<mosaic_0001>
module attributes {stable_mosaic.version = 11 : i64} {
  func.func @_aux_head_kernel(%arg0: i32, %arg1: memref<8x784xf32, #tpu.memory_space<vmem>>, %arg2: memref<784x2048xbf16, #tpu.memory_space<vmem>>, %arg3: memref<1x2048xf32, #tpu.memory_space<vmem>>, %arg4: memref<2048x1024xbf16, #tpu.memory_space<vmem>>, %arg5: memref<1x1024xf32, #tpu.memory_space<vmem>>, %arg6: memref<1024x128xbf16, #tpu.memory_space<vmem>>, %arg7: memref<1x128xf32, #tpu.memory_space<vmem>>, %arg8: memref<8x128xf32, #tpu.memory_space<vmem>>) attributes {dimension_semantics = [#tpu.dimension_semantics<parallel>], iteration_bounds = array<i64: 1>, scalar_prefetch = 0 : i64, scratch_operands = 0 : i64, tpu.core_type = #tpu.core_type<tc>, window_params = [{transform_indices = @transform_0, window_bounds = array<i64: 8, 784>}, {pipeline_mode = #tpu.pipeline_mode<synchronous>, transform_indices = @transform_1, window_bounds = array<i64: 784, 2048>}, {pipeline_mode = #tpu.pipeline_mode<synchronous>, transform_indices = @transform_2, window_bounds = array<i64: 1, 2048>}, {pipeline_mode = #tpu.pipeline_mode<synchronous>, transform_indices = @transform_3, window_bounds = array<i64: 2048, 1024>}, {pipeline_mode = #tpu.pipeline_mode<synchronous>, transform_indices = @transform_4, window_bounds = array<i64: 1, 1024>}, {pipeline_mode = #tpu.pipeline_mode<synchronous>, transform_indices = @transform_5, window_bounds = array<i64: 1024, 128>}, {pipeline_mode = #tpu.pipeline_mode<synchronous>, transform_indices = @transform_6, window_bounds = array<i64: 1, 128>}, {transform_indices = @transform_7, window_bounds = array<i64: 8, 128>}]} {
    %c0 = arith.constant 0 : index
    %c0_0 = arith.constant 0 : index
    %0 = vector.load %arg1[%c0, %c0_0] : memref<8x784xf32, #tpu.memory_space<vmem>>, vector<8x784xf32>
    %1 = arith.truncf %0 : vector<8x784xf32> to vector<8x784xbf16>
    %c0_1 = arith.constant 0 : index
    %c0_2 = arith.constant 0 : index
    %2 = vector.load %arg2[%c0_1, %c0_2] : memref<784x2048xbf16, #tpu.memory_space<vmem>>, vector<784x2048xbf16>
    %cst = arith.constant dense<0.000000e+00> : vector<8x2048xf32>
    %3 = tpu.matmul %1, %2, %cst {dimension_numbers = #tpu.dot_dimension_numbers<[1], [0], [0], [1], [0, 0, 1, 1], [], []>} : vector<8x784xbf16>, vector<784x2048xbf16>, vector<8x2048xf32> -> vector<8x2048xf32>
    %c0_3 = arith.constant 0 : index
    %c0_4 = arith.constant 0 : index
    %4 = vector.load %arg3[%c0_3, %c0_4] : memref<1x2048xf32, #tpu.memory_space<vmem>>, vector<1x2048xf32>
    %5 = vector.broadcast %4 : vector<1x2048xf32> to vector<8x2048xf32>
    %6 = arith.addf %3, %5 : vector<8x2048xf32>
    %cst_5 = arith.constant 0.000000e+00 : f32
    %7 = vector.broadcast %cst_5 : f32 to vector<8x2048xf32>
    %8 = arith.maximumf %6, %7 : vector<8x2048xf32>
    %9 = arith.truncf %8 : vector<8x2048xf32> to vector<8x2048xbf16>
    %c0_6 = arith.constant 0 : index
    %c0_7 = arith.constant 0 : index
    %10 = vector.load %arg4[%c0_6, %c0_7] : memref<2048x1024xbf16, #tpu.memory_space<vmem>>, vector<2048x1024xbf16>
    %cst_8 = arith.constant dense<0.000000e+00> : vector<8x1024xf32>
    %11 = tpu.matmul %9, %10, %cst_8 {dimension_numbers = #tpu.dot_dimension_numbers<[1], [0], [0], [1], [0, 0, 1, 1], [], []>} : vector<8x2048xbf16>, vector<2048x1024xbf16>, vector<8x1024xf32> -> vector<8x1024xf32>
    %c0_9 = arith.constant 0 : index
    %c0_10 = arith.constant 0 : index
    %12 = vector.load %arg5[%c0_9, %c0_10] : memref<1x1024xf32, #tpu.memory_space<vmem>>, vector<1x1024xf32>
    %13 = vector.broadcast %12 : vector<1x1024xf32> to vector<8x1024xf32>
    %14 = arith.addf %11, %13 : vector<8x1024xf32>
    %cst_11 = arith.constant 0.000000e+00 : f32
    %15 = vector.broadcast %cst_11 : f32 to vector<8x1024xf32>
    %16 = arith.maximumf %14, %15 : vector<8x1024xf32>
    %17 = arith.truncf %16 : vector<8x1024xf32> to vector<8x1024xbf16>
    %c0_12 = arith.constant 0 : index
    %c0_13 = arith.constant 0 : index
    %18 = vector.load %arg6[%c0_12, %c0_13] : memref<1024x128xbf16, #tpu.memory_space<vmem>>, vector<1024x128xbf16>
    %cst_14 = arith.constant dense<0.000000e+00> : vector<8x128xf32>
    %19 = tpu.matmul %17, %18, %cst_14 {dimension_numbers = #tpu.dot_dimension_numbers<[1], [0], [0], [1], [0, 0, 1, 1], [], []>} : vector<8x1024xbf16>, vector<1024x128xbf16>, vector<8x128xf32> -> vector<8x128xf32>
    %c0_15 = arith.constant 0 : index
    %c0_16 = arith.constant 0 : index
    %20 = vector.load %arg7[%c0_15, %c0_16] : memref<1x128xf32, #tpu.memory_space<vmem>>, vector<1x128xf32>
    %21 = vector.broadcast %20 : vector<1x128xf32> to vector<8x128xf32>
    %22 = arith.addf %19, %21 : vector<8x128xf32>
    %c0_17 = arith.constant 0 : index
    %c0_18 = arith.constant 0 : index
    %23 = vector.load %arg8[%c0_17, %c0_18] : memref<8x128xf32, #tpu.memory_space<vmem>>, vector<8x128xf32>
    tpu.vector_store %arg8[%c0_17, %c0_18], %22 {strides = array<i32>} : memref<8x128xf32, #tpu.memory_space<vmem>>, vector<8x128xf32>,
    return
  }
  func.func @transform_0(%arg0: i32) -> (i32, i32) {
    %c0_i32 = arith.constant 0 : i32
    %c0_i32_0 = arith.constant 0 : i32
    return %arg0, %c0_i32 : i32, i32
  }
  func.func @transform_1(%arg0: i32) -> (i32, i32) {
    %c0_i32 = arith.constant 0 : i32
    %c0_i32_0 = arith.constant 0 : i32
    %c0_i32_1 = arith.constant 0 : i32
    return %c0_i32, %c0_i32_0 : i32, i32
  }
  func.func @transform_2(%arg0: i32) -> (i32, i32) {
    %c0_i32 = arith.constant 0 : i32
    %c0_i32_0 = arith.constant 0 : i32
    %c0_i32_1 = arith.constant 0 : i32
    return %c0_i32, %c0_i32_0 : i32, i32
  }
  func.func @transform_3(%arg0: i32) -> (i32, i32) {
    %c0_i32 = arith.constant 0 : i32
    %c0_i32_0 = arith.constant 0 : i32
    %c0_i32_1 = arith.constant 0 : i32
    return %c0_i32, %c0_i32_0 : i32, i32
  }
  func.func @transform_4(%arg0: i32) -> (i32, i32) {
    %c0_i32 = arith.constant 0 : i32
    %c0_i32_0 = arith.constant 0 : i32
    %c0_i32_1 = arith.constant 0 : i32
    return %c0_i32, %c0_i32_0 : i32, i32
  }
  func.func @transform_5(%arg0: i32) -> (i32, i32) {
    %c0_i32 = arith.constant 0 : i32
    %c0_i32_0 = arith.constant 0 : i32
    %c0_i32_1 = arith.constant 0 : i32
    return %c0_i32, %c0_i32_0 : i32, i32
  }
  func.func @transform_6(%arg0: i32) -> (i32, i32) {
    %c0_i32 = arith.constant 0 : i32
    %c0_i32_0 = arith.constant 0 : i32
    %c0_i32_1 = arith.constant 0 : i32
    return %c0_i32, %c0_i32_0 : i32, i32
  }
  func.func @transform_7(%arg0: i32) -> (i32, i32) {
    %c0_i32 = arith.constant 0 : i32
    %c0_i32_0 = arith.constant 0 : i32
    return %arg0, %c0_i32 : i32, i32
  }
}

</mosaic_0001>

<llo_original>
// kernel: tpu_custom_call.1
$region0: #{tpu_custom_call.1}
  #allocation0 [shape = 'u32[]', space=smem, size = 0x4, offset = 0x4, fixed_abs, tag = 'smem constant byte address 0x4 - core index']
  #allocation1 [shape = 'u32[144,128]{1,0:T(1,128)}', space=vmem, size = 0x12000, scoped, tag = 'internal scratch']
  %s0 = inlined_call_operand.hbm [shape: f32[8,784], index: 0, kind: input, shape index: {}]
  %s1 = inlined_call_operand.hbm [shape: bf16[784,2048], index: 1, kind: input, shape index: {}]
  %s2 = inlined_call_operand.hbm [shape: f32[1,2048], index: 2, kind: input, shape index: {}]
  %s3 = inlined_call_operand.hbm [shape: bf16[2048,1024], index: 3, kind: input, shape index: {}]
  %s4 = inlined_call_operand.hbm [shape: f32[1,1024], index: 4, kind: input, shape index: {}]
  %s5 = inlined_call_operand.hbm [shape: bf16[1024,128], index: 5, kind: input, shape index: {}]
  %s6 = inlined_call_operand.hbm [shape: f32[1,128], index: 6, kind: input, shape index: {}]
  %s7 = inlined_call_operand.hbm [shape: f32[8,128], index: 7, kind: output, shape index: {}]
  %s8 = sld [smem:[#allocation0]]
  $region66: #{tpu_custom_call.1} parent=0
    _
  %s10 = ssub.s32 1, %s8
  %s11 = scalar_select 0, %s10, %s8
  $region1: #{tpu_custom_call.1} parent=0
    #allocation2 [shape = 'u8[28672]{0}', space=vmem, size = 0x7000, scoped, tag = 'input window, operand 0, single buffered']
    #allocation3 [shape = 's32[1]{0}', space=sflag, size = 0x4, scoped, tag = 'scoped memory for tpu_custom_call.1']
    #allocation4 [shape = 's32[1]{0}', space=sflag, size = 0x4, scoped, tag = 'scoped memory for tpu_custom_call.1']
    #allocation5 [shape = 'u8[3211264]{0}', space=vmem, size = 0x310000, scoped, tag = 'input window, operand 1, single buffered']
    #allocation6 [shape = 's32[1]{0}', space=sflag, size = 0x4, scoped, tag = 'scoped memory for tpu_custom_call.1']
    #allocation7 [shape = 'u8[8192]{0}', space=vmem, size = 0x2000, scoped, tag = 'input window, operand 2, single buffered']
    #allocation8 [shape = 'u8[4194304]{0}', space=vmem, size = 0x400000, scoped, tag = 'input window, operand 3, single buffered']
    #allocation9 [shape = 's32[1]{0}', space=sflag, size = 0x4, scoped, tag = 'scoped memory for tpu_custom_call.1']
    #allocation10 [shape = 'u8[4096]{0}', space=vmem, size = 0x1000, scoped, tag = 'input window, operand 4, single buffered']
    #allocation11 [shape = 'u8[262144]{0}', space=vmem, size = 0x40000, scoped, tag = 'input window, operand 5, single buffered']
    #allocation12 [shape = 's32[1]{0}', space=sflag, size = 0x4, scoped, tag = 'scoped memory for tpu_custom_call.1']
    #allocation13 [shape = 'u8[512]{0}', space=vmem, size = 0x400, scoped, tag = 'input window, operand 6, single buffered']
    #allocation14 [shape = 'u8[4096]{0}', space=vmem, size = 0x1000, scoped, tag = 'output window, operand 0, single buffered']
    %12 = vsyncpa [#allocation3], 0
    %13 = vsyncpa [#allocation6], 0
    %14 = vsyncpa [#allocation9], 0
    %15 = vsyncpa [#allocation12], 0
    %16 = vsyncpa [#allocation4], 0
    // Predicated region
    $region2: #{tpu_custom_call.1} parent=1 // pred_check
      _
    $region3: #{tpu_custom_call.1} parent=1 // pred_check_branch
      %18 = sbr.rel (0) target = $region5
    $region4: #{tpu_custom_call.1} parent=1 // pred_region
      %s20 = ssub.s32 896, 896
      %21 = vsyncadd [#allocation3], %s20
      %s23 = sshll.u32 [#allocation2], 4
      %s24 = int_to_ptr.vmem [resolvable:$true] %s23
      %26 = dma.hbm_to_vmem [thread:$0]  %s0, 896, %s24, [#allocation3]
    $region5: #{tpu_custom_call.1} parent=1 // pred_fallthru
      _
    // Predicated region
    $region6: #{tpu_custom_call.1} parent=1 // pred_check
      _
    $region7: #{tpu_custom_call.1} parent=1 // pred_check_branch
      %28 = sbr.rel (0) target = $region9
    $region8: #{tpu_custom_call.1} parent=1 // pred_region
      %s30 = ssub.s32 100352, 100352
      %31 = vsyncadd [#allocation6], %s30
      %s32 = sshll.u32 [#allocation5], 4
      %s33 = int_to_ptr.vmem [resolvable:$true] %s32
      %38 = dma.hbm_to_vmem [thread:$0]  %s1, 100352, %s33, [#allocation6], 1024, 1024, 64
    $region9: #{tpu_custom_call.1} parent=1 // pred_fallthru
      _
    // Predicated region
    $region10: #{tpu_custom_call.1} parent=1 // pred_check
      _
    $region11: #{tpu_custom_call.1} parent=1 // pred_check_branch
      %40 = sbr.rel (0) target = $region13
    $region12: #{tpu_custom_call.1} parent=1 // pred_region
      %s42 = ssub.s32 256, 256
      %43 = vsyncadd [#allocation6], %s42
      %s45 = sshll.u32 [#allocation7], 4
      %s46 = int_to_ptr.vmem [resolvable:$true] %s45
      %48 = dma.hbm_to_vmem [thread:$0]  %s2, 256, %s46, [#allocation6]
    $region13: #{tpu_custom_call.1} parent=1 // pred_fallthru
      _
    // Predicated region
    $region14: #{tpu_custom_call.1} parent=1 // pred_check
      _
    $region15: #{tpu_custom_call.1} parent=1 // pred_check_branch
      %50 = sbr.rel (0) target = $region17
    $region16: #{tpu_custom_call.1} parent=1 // pred_region
      %s52 = ssub.s32 131072, 131072
      %53 = vsyncadd [#allocation9], %s52
      %s54 = sshll.u32 [#allocation8], 4
      %s55 = int_to_ptr.vmem [resolvable:$true] %s54
      %60 = dma.hbm_to_vmem [thread:$0]  %s3, 131072, %s55, [#allocation9], 512, 512, 32
    $region17: #{tpu_custom_call.1} parent=1 // pred_fallthru
      _
    // Predicated region
    $region18: #{tpu_custom_call.1} parent=1 // pred_check
      _
    $region19: #{tpu_custom_call.1} parent=1 // pred_check_branch
      %62 = sbr.rel (0) target = $region21
    $region20: #{tpu_custom_call.1} parent=1 // pred_region
      %s64 = ssub.s32 128, 128
      %65 = vsyncadd [#allocation9], %s64
      %s67 = sshll.u32 [#allocation10], 4
      %s68 = int_to_ptr.vmem [resolvable:$true] %s67
      %70 = dma.hbm_to_vmem [thread:$0]  %s4, 128, %s68, [#allocation9]
    $region21: #{tpu_custom_call.1} parent=1 // pred_fallthru
      _
    // Predicated region
    $region22: #{tpu_custom_call.1} parent=1 // pred_check
      _
    $region23: #{tpu_custom_call.1} parent=1 // pred_check_branch
      %72 = sbr.rel (0) target = $region25
    $region24: #{tpu_custom_call.1} parent=1 // pred_region
      %s74 = ssub.s32 8192, 8192
      %75 = vsyncadd [#allocation12], %s74
      %s76 = sshll.u32 [#allocation11], 4
      %s77 = int_to_ptr.vmem [resolvable:$true] %s76
      %82 = dma.hbm_to_vmem [thread:$0]  %s5, 8192, %s77, [#allocation12], 64, 64, 4
    $region25: #{tpu_custom_call.1} parent=1 // pred_fallthru
      _
    // Predicated region
    $region26: #{tpu_custom_call.1} parent=1 // pred_check
      _
    $region27: #{tpu_custom_call.1} parent=1 // pred_check_branch
      %84 = sbr.rel (0) target = $region29
    $region28: #{tpu_custom_call.1} parent=1 // pred_region
      %s86 = ssub.s32 16, 16
      %87 = vsyncadd [#allocation12], %s86
      %s89 = sshll.u32 [#allocation13], 4
      %s90 = int_to_ptr.vmem [resolvable:$true] %s89
      %92 = dma.hbm_to_vmem [thread:$0]  %s6, 16, %s90, [#allocation12]
    $region29: #{tpu_custom_call.1} parent=1 // pred_fallthru
      _
    // Predicated region
    $region30: #{tpu_custom_call.1} parent=1 // pred_check
      _
    $region31: #{tpu_custom_call.1} parent=1 // pred_check_branch
      %94 = sbr.rel (0) target = $region33
    $region32: #{tpu_custom_call.1} parent=1 // pred_region
      %95 = dma.done [#allocation3], 896
    $region33: #{tpu_custom_call.1} parent=1 // pred_fallthru
      _
    // Predicated region
    $region34: #{tpu_custom_call.1} parent=1 // pred_check
      _
    $region35: #{tpu_custom_call.1} parent=1 // pred_check_branch
      %97 = sbr.rel (0) target = $region37
    $region36: #{tpu_custom_call.1} parent=1 // pred_region
      %98 = dma.done [#allocation6], 100352
    $region37: #{tpu_custom_call.1} parent=1 // pred_fallthru
      _
    // Predicated region
    $region38: #{tpu_custom_call.1} parent=1 // pred_check
      _
    $region39: #{tpu_custom_call.1} parent=1 // pred_check_branch
      %100 = sbr.rel (0) target = $region41
    $region40: #{tpu_custom_call.1} parent=1 // pred_region
      %101 = dma.done [#allocation6], 256
    $region41: #{tpu_custom_call.1} parent=1 // pred_fallthru
      _
    // Predicated region
    $region42: #{tpu_custom_call.1} parent=1 // pred_check
      _
    $region43: #{tpu_custom_call.1} parent=1 // pred_check_branch
      %103 = sbr.rel (0) target = $region45
    $region44: #{tpu_custom_call.1} parent=1 // pred_region
      %104 = dma.done [#allocation9], 131072
    $region45: #{tpu_custom_call.1} parent=1 // pred_fallthru
      _
    // Predicated region
    $region46: #{tpu_custom_call.1} parent=1 // pred_check
      _
    $region47: #{tpu_custom_call.1} parent=1 // pred_check_branch
      %106 = sbr.rel (0) target = $region49
    $region48: #{tpu_custom_call.1} parent=1 // pred_region
      %107 = dma.done [#allocation9], 128
    $region49: #{tpu_custom_call.1} parent=1 // pred_fallthru
      _
    // Predicated region
    $region50: #{tpu_custom_call.1} parent=1 // pred_check
      _
    $region51: #{tpu_custom_call.1} parent=1 // pred_check_branch
      %109 = sbr.rel (0) target = $region53
    $region52: #{tpu_custom_call.1} parent=1 // pred_region
      %110 = dma.done [#allocation12], 8192
    $region53: #{tpu_custom_call.1} parent=1 // pred_fallthru
      _
    // Predicated region
    $region54: #{tpu_custom_call.1} parent=1 // pred_check
      _
    $region55: #{tpu_custom_call.1} parent=1 // pred_check_branch
      %112 = sbr.rel (0) target = $region57
    $region56: #{tpu_custom_call.1} parent=1 // pred_region
      %113 = dma.done [#allocation12], 16
    $region57: #{tpu_custom_call.1} parent=1 // pred_fallthru
      _
    %v115 = vld [vmem:[#allocation2] sm:$0xff]
    %v116 = vld [vmem:[#allocation2 + $0x8] sm:$0xff]
    %v117 = vld [vmem:[#allocation2 + $0x10] sm:$0xff]
    %v118 = vld [vmem:[#allocation2 + $0x18] sm:$0xff]
    %v119 = vld [vmem:[#allocation2 + $0x20] sm:$0xff]
    %v120 = vld [vmem:[#allocation2 + $0x28] sm:$0xff]
    %v121 = vld [vmem:[#allocation2 + $0x30] sm:$0xff]
    %v122 = vpack.c.bf16 %v115, %v115
    %v123 = vpack.c.bf16 %v116, %v116
    %v124 = vpack.c.bf16 %v117, %v117
    %v125 = vpack.c.bf16 %v118, %v118
    %v126 = vpack.c.bf16 %v119, %v119
    %v127 = vpack.c.bf16 %v120, %v120
    %v128 = vpack.c.bf16 %v121, %v121
    %v129 = vld [vmem:[#allocation5] sm:$0xff]
    %v130 = vld [vmem:[#allocation5 + $0x8] sm:$0xff]
    %v131 = vld [vmem:[#allocation5 + $0x10] sm:$0xff]
    %v132 = vld [vmem:[#allocation5 + $0x18] sm:$0xff]
    %v133 = vld [vmem:[#allocation5 + $0x20] sm:$0xff]
    %v134 = vld [vmem:[#allocation5 + $0x28] sm:$0xff]
    %v135 = vld [vmem:[#allocation5 + $0x30] sm:$0xff]
    %v136 = vld [vmem:[#allocation5 + $0x38] sm:$0xff]
    %v137 = vld [vmem:[#allocation5 + $0x40] sm:$0xff]
    %v138 = vld [vmem:[#allocation5 + $0x48] sm:$0xff]
    %v139 = vld [vmem:[#allocation5 + $0x50] sm:$0xff]
    %v140 = vld [vmem:[#allocation5 + $0x58] sm:$0xff]
    %v141 = vld [vmem:[#allocation5 + $0x60] sm:$0xff]
    %v142 = vld [vmem:[#allocation5 + $0x68] sm:$0xff]
    %v143 = vld [vmem:[#allocation5 + $0x70] sm:$0xff]
    %v144 = vld [vmem:[#allocation5 + $0x78] sm:$0xff]
    %v145 = vld [vmem:[#allocation5 + $0x80] sm:$0xff]
    %v146 = vld [vmem:[#allocation5 + $0x88] sm:$0xff]
    %v147 = vld [vmem:[#allocation5 + $0x90] sm:$0xff]
    %v148 = vld [vmem:[#allocation5 + $0x98] sm:$0xff]
    %v149 = vld [vmem:[#allocation5 + $0xa0] sm:$0xff]
    %v150 = vld [vmem:[#allocation5 + $0xa8] sm:$0xff]
    %v151 = vld [vmem:[#allocation5 + $0xb0] sm:$0xff]
    %v152 = vld [vmem:[#allocation5 + $0xb8] sm:$0xff]
    %v153 = vld [vmem:[#allocation5 + $0xc0] sm:$0xff]
    %v154 = vld [vmem:[#allocation5 + $0xc8] sm:$0xff]
    %v155 = vld [vmem:[#allocation5 + $0xd0] sm:$0xff]
    %v156 = vld [vmem:[#allocation5 + $0xd8] sm:$0xff]
    %v157 = vld [vmem:[#allocation5 + $0xe0] sm:$0xff]
    %v158 = vld [vmem:[#allocation5 + $0xe8] sm:$0xff]
    %v159 = vld [vmem:[#allocation5 + $0xf0] sm:$0xff]
    %v160 = vld [vmem:[#allocation5 + $0xf8] sm:$0xff]
    %v161 = vld [vmem:[#allocation5 + $0x100] sm:$0xff]
    %v162 = vld [vmem:[#allocation5 + $0x108] sm:$0xff]
    %v163 = vld [vmem:[#allocation5 + $0x110] sm:$0xff]
    %v164 = vld [vmem:[#allocation5 + $0x118] sm:$0xff]
    %v165 = vld [vmem:[#allocation5 + $0x120] sm:$0xff]
    %v166 = vld [vmem:[#allocation5 + $0x128] sm:$0xff]
    %v167 = vld [vmem:[#allocation5 + $0x130] sm:$0xff]
    %v168 = vld [vmem:[#allocation5 + $0x138] sm:$0xff]
    %v169 = vld [vmem:[#allocation5 + $0x140] sm:$0xff]
    %v170 = vld [vmem:[#allocation5 + $0x148] sm:$0xff]
    %v171 = vld [vmem:[#allocation5 + $0x150] sm:$0xff]
    %v172 = vld [vmem:[#allocation5 + $0x158] sm:$0xff]
    %v173 = vld [vmem:[#allocation5 + $0x160] sm:$0xff]
    %v174 = vld [vmem:[#allocation5 + $0x168] sm:$0xff]
    %v175 = vld [vmem:[#allocation5 + $0x170] sm:$0xff]
    %v176 = vld [vmem:[#allocation5 + $0x178] sm:$0xff]
    %v177 = vld [vmem:[#allocation5 + $0x180] sm:$0xff]
    %v178 = vld [vmem:[#allocation5 + $0x188] sm:$0xff]
    %v179 = vld [vmem:[#allocation5 + $0x190] sm:$0xff]
    %v180 = vld [vmem:[#allocation5 + $0x198] sm:$0xff]
    %v181 = vld [vmem:[#allocation5 + $0x1a0] sm:$0xff]
    %v182 = vld [vmem:[#allocation5 + $0x1a8] sm:$0xff]
    %v183 = vld [vmem:[#allocation5 + $0x1b0] sm:$0xff]
    %v184 = vld [vmem:[#allocation5 + $0x1b8] sm:$0xff]
    %v185 = vld [vmem:[#allocation5 + $0x1c0] sm:$0xff]
    %v186 = vld [vmem:[#allocation5 + $0x1c8] sm:$0xff]
    %v187 = vld [vmem:[#allocation5 + $0x1d0] sm:$0xff]
    %v188 = vld [vmem:[#allocation5 + $0x1d8] sm:$0xff]
    %v189 = vld [vmem:[#allocation5 + $0x1e0] sm:$0xff]
    %v190 = vld [vmem:[#allocation5 + $0x1e8] sm:$0xff]
    %v191 = vld [vmem:[#allocation5 + $0x1f0] sm:$0xff]
    %v192 = vld [vmem:[#allocation5 + $0x1f8] sm:$0xff]
    %v193 = vld [vmem:[#allocation5 + $0x200] sm:$0xff]
    %v194 = vld [vmem:[#allocation5 + $0x208] sm:$0xff]
    %v195 = vld [vmem:[#allocation5 + $0x210] sm:$0xff]
    %v196 = vld [vmem:[#allocation5 + $0x218] sm:$0xff]
    %v197 = vld [vmem:[#allocation5 + $0x220] sm:$0xff]
    %v198 = vld [vmem:[#allocation5 + $0x228] sm:$0xff]
    %v199 = vld [vmem:[#allocation5 + $0x230] sm:$0xff]
    %v200 = vld [vmem:[#allocation5 + $0x238] sm:$0xff]
    %v201 = vld [vmem:[#allocation5 + $0x240] sm:$0xff]
    %v202 = vld [vmem:[#allocation5 + $0x248] sm:$0xff]
    %v203 = vld [vmem:[#allocation5 + $0x250] sm:$0xff]
    %v204 = vld [vmem:[#allocation5 + $0x258] sm:$0xff]
    %v205 = vld [vmem:[#allocation5 + $0x260] sm:$0xff]
    %v206 = vld [vmem:[#allocation5 + $0x268] sm:$0xff]
    %v207 = vld [vmem:[#allocation5 + $0x270] sm:$0xff]
    %v208 = vld [vmem:[#allocation5 + $0x278] sm:$0xff]
    %v209 = vld [vmem:[#allocation5 + $0x280] sm:$0xff]
    %v210 = vld [vmem:[#allocation5 + $0x288] sm:$0xff]
    %v211 = vld [vmem:[#allocation5 + $0x290] sm:$0xff]
    %v212 = vld [vmem:[#allocation5 + $0x298] sm:$0xff]
    %v213 = vld [vmem:[#allocation5 + $0x2a0] sm:$0xff]
    %v214 = vld [vmem:[#allocation5 + $0x2a8] sm:$0xff]
    %v215 = vld [vmem:[#allocation5 + $0x2b0] sm:$0xff]
    %v216 = vld [vmem:[#allocation5 + $0x2b8] sm:$0xff]
    %v217 = vld [vmem:[#allocation5 + $0x2c0] sm:$0xff]
    %v218 = vld [vmem:[#allocation5 + $0x2c8] sm:$0xff]
    %v219 = vld [vmem:[#allocation5 + $0x2d0] sm:$0xff]
    %v220 = vld [vmem:[#allocation5 + $0x2d8] sm:$0xff]
    %v221 = vld [vmem:[#allocation5 + $0x2e0] sm:$0xff]
    %v222 = vld [vmem:[#allocation5 + $0x2e8] sm:$0xff]
    %v223 = vld [vmem:[#allocation5 + $0x2f0] sm:$0xff]
    %v224 = vld [vmem:[#allocation5 + $0x2f8] sm:$0xff]
    %v225 = vld [vmem:[#allocation5 + $0x300] sm:$0xff]
    %v226 = vld [vmem:[#allocation5 + $0x308] sm:$0xff]
    %v227 = vld [vmem:[#allocation5 + $0x310] sm:$0xff]
    %v228 = vld [vmem:[#allocation5 + $0x318] sm:$0xff]
    %v229 = vld [vmem:[#allocation5 + $0x320] sm:$0xff]
    %v230 = vld [vmem:[#allocation5 + $0x328] sm:$0xff]
    %v231 = vld [vmem:[#allocation5 + $0x330] sm:$0xff]
    %v232 = vld [vmem:[#allocation5 + $0x338] sm:$0xff]
    %v233 = vld [vmem:[#allocation5 + $0x340] sm:$0xff]
    %v234 = vld [vmem:[#allocation5 + $0x348] sm:$0xff]
    %v235 = vld [vmem:[#allocation5 + $0x350] sm:$0xff]
    %v236 = vld [vmem:[#allocation5 + $0x358] sm:$0xff]
    %v237 = vld [vmem:[#allocation5 + $0x360] sm:$0xff]
    %v238 = vld [vmem:[#allocation5 + $0x368] sm:$0xff]
    %v239 = vld [vmem:[#allocation5 + $0x370] sm:$0xff]
    %v240 = vld [vmem:[#allocation5 + $0x378] sm:$0xff]
    %v241 = vld [vmem:[#allocation5 + $0x380] sm:$0xff]
    %v242 = vld [vmem:[#allocation5 + $0x388] sm:$0xff]
    %v243 = vld [vmem:[#allocation5 + $0x390] sm:$0xff]
    %v244 = vld [vmem:[#allocation5 + $0x398] sm:$0xff]
    %v245 = vld [vmem:[#allocation5 + $0x3a0] sm:$0xff]
    %v246 = vld [vmem:[#allocation5 + $0x3a8] sm:$0xff]
    %v247 = vld [vmem:[#allocation5 + $0x3b0] sm:$0xff]
    %v248 = vld [vmem:[#allocation5 + $0x3b8] sm:$0xff]
    %v249 = vld [vmem:[#allocation5 + $0x3c0] sm:$0xff]
    %v250 = vld [vmem:[#allocation5 + $0x3c8] sm:$0xff]
    %v251 = vld [vmem:[#allocation5 + $0x3d0] sm:$0xff]
    %v252 = vld [vmem:[#allocation5 + $0x3d8] sm:$0xff]
    %v253 = vld [vmem:[#allocation5 + $0x3e0] sm:$0xff]
    %v254 = vld [vmem:[#allocation5 + $0x3e8] sm:$0xff]
    %v255 = vld [vmem:[#allocation5 + $0x3f0] sm:$0xff]
    %v256 = vld [vmem:[#allocation5 + $0x3f8] sm:$0xff]
    %v257 = vld [vmem:[#allocation5 + $0x400] sm:$0xff]
    %v258 = vld [vmem:[#allocation5 + $0x408] sm:$0xff]
    %v259 = vld [vmem:[#allocation5 + $0x410] sm:$0xff]
    %v260 = vld [vmem:[#allocation5 + $0x418] sm:$0xff]
    %v261 = vld [vmem:[#allocation5 + $0x420] sm:$0xff]
    %v262 = vld [vmem:[#allocation5 + $0x428] sm:$0xff]
    %v263 = vld [vmem:[#allocation5 + $0x430] sm:$0xff]
    %v264 = vld [vmem:[#allocation5 + $0x438] sm:$0xff]
    %v265 = vld [vmem:[#allocation5 + $0x440] sm:$0xff]
    %v266 = vld [vmem:[#allocation5 + $0x448] sm:$0xff]
    %v267 = vld [vmem:[#allocation5 + $0x450] sm:$0xff]
    %v268 = vld [vmem:[#allocation5 + $0x458] sm:$0xff]
    %v269 = vld [vmem:[#allocation5 + $0x460] sm:$0xff]
    %v270 = vld [vmem:[#allocation5 + $0x468] sm:$0xff]
    %v271 = vld [vmem:[#allocation5 + $0x470] sm:$0xff]
    %v272 = vld [vmem:[#allocation5 + $0x478] sm:$0xff]
    %v273 = vld [vmem:[#allocation5 + $0x480] sm:$0xff]
    %v274 = vld [vmem:[#allocation5 + $0x488] sm:$0xff]
    %v275 = vld [vmem:[#allocation5 + $0x490] sm:$0xff]
    %v276 = vld [vmem:[#allocation5 + $0x498] sm:$0xff]
    %v277 = vld [vmem:[#allocation5 + $0x4a0] sm:$0xff]
    %v278 = vld [vmem:[#allocation5 + $0x4a8] sm:$0xff]
    %v279 = vld [vmem:[#allocation5 + $0x4b0] sm:$0xff]
    %v280 = vld [vmem:[#allocation5 + $0x4b8] sm:$0xff]
    %v281 = vld [vmem:[#allocation5 + $0x4c0] sm:$0xff]
    %v282 = vld [vmem:[#allocation5 + $0x4c8] sm:$0xff]
    %v283 = vld [vmem:[#allocation5 + $0x4d0] sm:$0xff]
    %v284 = vld [vmem:[#allocation5 + $0x4d8] sm:$0xff]
    %v285 = vld [vmem:[#allocation5 + $0x4e0] sm:$0xff]
    %v286 = vld [vmem:[#allocation5 + $0x4e8] sm:$0xff]
    %v287 = vld [vmem:[#allocation5 + $0x4f0] sm:$0xff]
    %v288 = vld [vmem:[#allocation5 + $0x4f8] sm:$0xff]
    %v289 = vld [vmem:[#allocation5 + $0x500] sm:$0xff]
    %v290 = vld [vmem:[#allocation5 + $0x508] sm:$0xff]
    %v291 = vld [vmem:[#allocation5 + $0x510] sm:$0xff]
    %v292 = vld [vmem:[#allocation5 + $0x518] sm:$0xff]
    %v293 = vld [vmem:[#allocation5 + $0x520] sm:$0xff]
    %v294 = vld [vmem:[#allocation5 + $0x528] sm:$0xff]
    %v295 = vld [vmem:[#allocation5 + $0x530] sm:$0xff]
    %v296 = vld [vmem:[#allocation5 + $0x538] sm:$0xff]
    %v297 = vld [vmem:[#allocation5 + $0x540] sm:$0xff]
    %v298 = vld [vmem:[#allocation5 + $0x548] sm:$0xff]
    %v299 = vld [vmem:[#allocation5 + $0x550] sm:$0xff]
    %v300 = vld [vmem:[#allocation5 + $0x558] sm:$0xff]
    %v301 = vld [vmem:[#allocation5 + $0x560] sm:$0xff]
    %v302 = vld [vmem:[#allocation5 + $0x568] sm:$0xff]
    %v303 = vld [vmem:[#allocation5 + $0x570] sm:$0xff]
    %v304 = vld [vmem:[#allocation5 + $0x578] sm:$0xff]
    %v305 = vld [vmem:[#allocation5 + $0x580] sm:$0xff]
    %v306 = vld [vmem:[#allocation5 + $0x588] sm:$0xff]
    %v307 = vld [vmem:[#allocation5 + $0x590] sm:$0xff]
    %v308 = vld [vmem:[#allocation5 + $0x598] sm:$0xff]
    %v309 = vld [vmem:[#allocation5 + $0x5a0] sm:$0xff]
    %v310 = vld [vmem:[#allocation5 + $0x5a8] sm:$0xff]
    %v311 = vld [vmem:[#allocation5 + $0x5b0] sm:$0xff]
    %v312 = vld [vmem:[#allocation5 + $0x5b8] sm:$0xff]
    %v313 = vld [vmem:[#allocation5 + $0x5c0] sm:$0xff]
    %v314 = vld [vmem:[#allocation5 + $0x5c8] sm:$0xff]
    %v315 = vld [vmem:[#allocation5 + $0x5d0] sm:$0xff]
    %v316 = vld [vmem:[#allocation5 + $0x5d8] sm:$0xff]
    %v317 = vld [vmem:[#allocation5 + $0x5e0] sm:$0xff]
    %v318 = vld [vmem:[#allocation5 + $0x5e8] sm:$0xff]
    %v319 = vld [vmem:[#allocation5 + $0x5f0] sm:$0xff]
    %v320 = vld [vmem:[#allocation5 + $0x5f8] sm:$0xff]
    %v321 = vld [vmem:[#allocation5 + $0x600] sm:$0xff]
    %v322 = vld [vmem:[#allocation5 + $0x608] sm:$0xff]
    %v323 = vld [vmem:[#allocation5 + $0x610] sm:$0xff]
    %v324 = vld [vmem:[#allocation5 + $0x618] sm:$0xff]
    %v325 = vld [vmem:[#allocation5 + $0x620] sm:$0xff]
    %v326 = vld [vmem:[#allocation5 + $0x628] sm:$0xff]
    %v327 = vld [vmem:[#allocation5 + $0x630] sm:$0xff]
    %v328 = vld [vmem:[#allocation5 + $0x638] sm:$0xff]
    %v329 = vld [vmem:[#allocation5 + $0x640] sm:$0xff]
    %v330 = vld [vmem:[#allocation5 + $0x648] sm:$0xff]
    %v331 = vld [vmem:[#allocation5 + $0x650] sm:$0xff]
    %v332 = vld [vmem:[#allocation5 + $0x658] sm:$0xff]
    %v333 = vld [vmem:[#allocation5 + $0x660] sm:$0xff]
    %v334 = vld [vmem:[#allocation5 + $0x668] sm:$0xff]
    %v335 = vld [vmem:[#allocation5 + $0x670] sm:$0xff]
    %v336 = vld [vmem:[#allocation5 + $0x678] sm:$0xff]
    %v337 = vld [vmem:[#allocation5 + $0x680] sm:$0xff]
    %v338 = vld [vmem:[#allocation5 + $0x688] sm:$0xff]
    %v339 = vld [vmem:[#allocation5 + $0x690] sm:$0xff]
    %v340 = vld [vmem:[#allocation5 + $0x698] sm:$0xff]
    %v341 = vld [vmem:[#allocation5 + $0x6a0] sm:$0xff]
    %v342 = vld [vmem:[#allocation5 + $0x6a8] sm:$0xff]
    %v343 = vld [vmem:[#allocation5 + $0x6b0] sm:$0xff]
    %v344 = vld [vmem:[#allocation5 + $0x6b8] sm:$0xff]
    %v345 = vld [vmem:[#allocation5 + $0x6c0] sm:$0xff]
    %v346 = vld [vmem:[#allocation5 + $0x6c8] sm:$0xff]
    %v347 = vld [vmem:[#allocation5 + $0x6d0] sm:$0xff]
    %v348 = vld [vmem:[#allocation5 + $0x6d8] sm:$0xff]
    %v349 = vld [vmem:[#allocation5 + $0x6e0] sm:$0xff]
    %v350 = vld [vmem:[#allocation5 + $0x6e8] sm:$0xff]
    %v351 = vld [vmem:[#allocation5 + $0x6f0] sm:$0xff]
    %v352 = vld [vmem:[#allocation5 + $0x6f8] sm:$0xff]
    %v353 = vld [vmem:[#allocation5 + $0x700] sm:$0xff]
    %v354 = vld [vmem:[#allocation5 + $0x708] sm:$0xff]
    %v355 = vld [vmem:[#allocation5 + $0x710] sm:$0xff]
    %v356 = vld [vmem:[#allocation5 + $0x718] sm:$0xff]
    %v357 = vld [vmem:[#allocation5 + $0x720] sm:$0xff]
    %v358 = vld [vmem:[#allocation5 + $0x728] sm:$0xff]
    %v359 = vld [vmem:[#allocation5 + $0x730] sm:$0xff]
    %v360 = vld [vmem:[#allocation5 + $0x738] sm:$0xff]
    %v361 = vld [vmem:[#allocation5 + $0x740] sm:$0xff]
    %v362 = vld [vmem:[#allocation5 + $0x748] sm:$0xff]
    %v363 = vld [vmem:[#allocation5 + $0x750] sm:$0xff]
    %v364 = vld [vmem:[#allocation5 + $0x758] sm:$0xff]
    %v365 = vld [vmem:[#allocation5 + $0x760] sm:$0xff]
    %v366 = vld [vmem:[#allocation5 + $0x768] sm:$0xff]
    %v367 = vld [vmem:[#allocation5 + $0x770] sm:$0xff]
    %v368 = vld [vmem:[#allocation5 + $0x778] sm:$0xff]
    %v369 = vld [vmem:[#allocation5 + $0x780] sm:$0xff]
    %v370 = vld [vmem:[#allocation5 + $0x788] sm:$0xff]
    %v371 = vld [vmem:[#allocation5 + $0x790] sm:$0xff]
    %v372 = vld [vmem:[#allocation5 + $0x798] sm:$0xff]
    %v373 = vld [vmem:[#allocation5 + $0x7a0] sm:$0xff]
    %v374 = vld [vmem:[#allocation5 + $0x7a8] sm:$0xff]
    %v375 = vld [vmem:[#allocation5 + $0x7b0] sm:$0xff]
    %v376 = vld [vmem:[#allocation5 + $0x7b8] sm:$0xff]
    %v377 = vld [vmem:[#allocation5 + $0x7c0] sm:$0xff]
    %v378 = vld [vmem:[#allocation5 + $0x7c8] sm:$0xff]
    %v379 = vld [vmem:[#allocation5 + $0x7d0] sm:$0xff]
    %v380 = vld [vmem:[#allocation5 + $0x7d8] sm:$0xff]
    %v381 = vld [vmem:[#allocation5 + $0x7e0] sm:$0xff]
    %v382 = vld [vmem:[#allocation5 + $0x7e8] sm:$0xff]
    %v383 = vld [vmem:[#allocation5 + $0x7f0] sm:$0xff]
    %v384 = vld [vmem:[#allocation5 + $0x7f8] sm:$0xff]
    %v385 = vld [vmem:[#allocation5 + $0x800] sm:$0xff]
    %v386 = vld [vmem:[#allocation5 + $0x808] sm:$0xff]
    %v387 = vld [vmem:[#allocation5 + $0x810] sm:$0xff]
    %v388 = vld [vmem:[#allocation5 + $0x818] sm:$0xff]
    %v389 = vld [vmem:[#allocation5 + $0x820] sm:$0xff]
    %v390 = vld [vmem:[#allocation5 + $0x828] sm:$0xff]
    %v391 = vld [vmem:[#allocation5 + $0x830] sm:$0xff]
    %v392 = vld [vmem:[#allocation5 + $0x838] sm:$0xff]
    %v393 = vld [vmem:[#allocation5 + $0x840] sm:$0xff]
    %v394 = vld [vmem:[#allocation5 + $0x848] sm:$0xff]
    %v395 = vld [vmem:[#allocation5 + $0x850] sm:$0xff]
    %v396 = vld [vmem:[#allocation5 + $0x858] sm:$0xff]
    %v397 = vld [vmem:[#allocation5 + $0x860] sm:$0xff]
    %v398 = vld [vmem:[#allocation5 + $0x868] sm:$0xff]
    %v399 = vld [vmem:[#allocation5 + $0x870] sm:$0xff]
    %v400 = vld [vmem:[#allocation5 + $0x878] sm:$0xff]
    %v401 = vld [vmem:[#allocation5 + $0x880] sm:$0xff]
    %v402 = vld [vmem:[#allocation5 + $0x888] sm:$0xff]
    %v403 = vld [vmem:[#allocation5 + $0x890] sm:$0xff]
    %v404 = vld [vmem:[#allocation5 + $0x898] sm:$0xff]
    %v405 = vld [vmem:[#allocation5 + $0x8a0] sm:$0xff]
    %v406 = vld [vmem:[#allocation5 + $0x8a8] sm:$0xff]
    %v407 = vld [vmem:[#allocation5 + $0x8b0] sm:$0xff]
    %v408 = vld [vmem:[#allocation5 + $0x8b8] sm:$0xff]
    %v409 = vld [vmem:[#allocation5 + $0x8c0] sm:$0xff]
    %v410 = vld [vmem:[#allocation5 + $0x8c8] sm:$0xff]
    %v411 = vld [vmem:[#allocation5 + $0x8d0] sm:$0xff]
    %v412 = vld [vmem:[#allocation5 + $0x8d8] sm:$0xff]
    %v413 = vld [vmem:[#allocation5 + $0x8e0] sm:$0xff]
    %v414 = vld [vmem:[#allocation5 + $0x8e8] sm:$0xff]
    %v415 = vld [vmem:[#allocation5 + $0x8f0] sm:$0xff]
    %v416 = vld [vmem:[#allocation5 + $0x8f8] sm:$0xff]
    %v417 = vld [vmem:[#allocation5 + $0x900] sm:$0xff]
    %v418 = vld [vmem:[#allocation5 + $0x908] sm:$0xff]
    %v419 = vld [vmem:[#allocation5 + $0x910] sm:$0xff]
    %v420 = vld [vmem:[#allocation5 + $0x918] sm:$0xff]
    %v421 = vld [vmem:[#allocation5 + $0x920] sm:$0xff]
    %v422 = vld [vmem:[#allocation5 + $0x928] sm:$0xff]
    %v423 = vld [vmem:[#allocation5 + $0x930] sm:$0xff]
    %v424 = vld [vmem:[#allocation5 + $0x938] sm:$0xff]
    %v425 = vld [vmem:[#allocation5 + $0x940] sm:$0xff]
    %v426 = vld [vmem:[#allocation5 + $0x948] sm:$0xff]
    %v427 = vld [vmem:[#allocation5 + $0x950] sm:$0xff]
    %v428 = vld [vmem:[#allocation5 + $0x958] sm:$0xff]
    %v429 = vld [vmem:[#allocation5 + $0x960] sm:$0xff]
    %v430 = vld [vmem:[#allocation5 + $0x968] sm:$0xff]
    %v431 = vld [vmem:[#allocation5 + $0x970] sm:$0xff]
    %v432 = vld [vmem:[#allocation5 + $0x978] sm:$0xff]
    %v433 = vld [vmem:[#allocation5 + $0x980] sm:$0xff]
    %v434 = vld [vmem:[#allocation5 + $0x988] sm:$0xff]
    %v435 = vld [vmem:[#allocation5 + $0x990] sm:$0xff]
    %v436 = vld [vmem:[#allocation5 + $0x998] sm:$0xff]
    %v437 = vld [vmem:[#allocation5 + $0x9a0] sm:$0xff]
    %v438 = vld [vmem:[#allocation5 + $0x9a8] sm:$0xff]
    %v439 = vld [vmem:[#allocation5 + $0x9b0] sm:$0xff]
    %v440 = vld [vmem:[#allocation5 + $0x9b8] sm:$0xff]
    %v441 = vld [vmem:[#allocation5 + $0x9c0] sm:$0xff]
    %v442 = vld [vmem:[#allocation5 + $0x9c8] sm:$0xff]
    %v443 = vld [vmem:[#allocation5 + $0x9d0] sm:$0xff]
    %v444 = vld [vmem:[#allocation5 + $0x9d8] sm:$0xff]
    %v445 = vld [vmem:[#allocation5 + $0x9e0] sm:$0xff]
    %v446 = vld [vmem:[#allocation5 + $0x9e8] sm:$0xff]
    %v447 = vld [vmem:[#allocation5 + $0x9f0] sm:$0xff]
    %v448 = vld [vmem:[#allocation5 + $0x9f8] sm:$0xff]
    %v449 = vld [vmem:[#allocation5 + $0xa00] sm:$0xff]
    %v450 = vld [vmem:[#allocation5 + $0xa08] sm:$0xff]
    %v451 = vld [vmem:[#allocation5 + $0xa10] sm:$0xff]
    %v452 = vld [vmem:[#allocation5 + $0xa18] sm:$0xff]
    %v453 = vld [vmem:[#allocation5 + $0xa20] sm:$0xff]
    %v454 = vld [vmem:[#allocation5 + $0xa28] sm:$0xff]
    %v455 = vld [vmem:[#allocation5 + $0xa30] sm:$0xff]
    %v456 = vld [vmem:[#allocation5 + $0xa38] sm:$0xff]
    %v457 = vld [vmem:[#allocation5 + $0xa40] sm:$0xff]
    %v458 = vld [vmem:[#allocation5 + $0xa48] sm:$0xff]
    %v459 = vld [vmem:[#allocation5 + $0xa50] sm:$0xff]
    %v460 = vld [vmem:[#allocation5 + $0xa58] sm:$0xff]
    %v461 = vld [vmem:[#allocation5 + $0xa60] sm:$0xff]
    %v462 = vld [vmem:[#allocation5 + $0xa68] sm:$0xff]
    %v463 = vld [vmem:[#allocation5 + $0xa70] sm:$0xff]
    %v464 = vld [vmem:[#allocation5 + $0xa78] sm:$0xff]
    %v465 = vld [vmem:[#allocation5 + $0xa80] sm:$0xff]
    %v466 = vld [vmem:[#allocation5 + $0xa88] sm:$0xff]
    %v467 = vld [vmem:[#allocation5 + $0xa90] sm:$0xff]
    %v468 = vld [vmem:[#allocation5 + $0xa98] sm:$0xff]
    %v469 = vld [vmem:[#allocation5 + $0xaa0] sm:$0xff]
    %v470 = vld [vmem:[#allocation5 + $0xaa8] sm:$0xff]
    %v471 = vld [vmem:[#allocation5 + $0xab0] sm:$0xff]
    %v472 = vld [vmem:[#allocation5 + $0xab8] sm:$0xff]
    %v473 = vld [vmem:[#allocation5 + $0xac0] sm:$0xff]
    %v474 = vld [vmem:[#allocation5 + $0xac8] sm:$0xff]
    %v475 = vld [vmem:[#allocation5 + $0xad0] sm:$0xff]
    %v476 = vld [vmem:[#allocation5 + $0xad8] sm:$0xff]
    %v477 = vld [vmem:[#allocation5 + $0xae0] sm:$0xff]
    %v478 = vld [vmem:[#allocation5 + $0xae8] sm:$0xff]
    %v479 = vld [vmem:[#allocation5 + $0xaf0] sm:$0xff]
    %v480 = vld [vmem:[#allocation5 + $0xaf8] sm:$0xff]
    %v481 = vld [vmem:[#allocation5 + $0xb00] sm:$0xff]
    %v482 = vld [vmem:[#allocation5 + $0xb08] sm:$0xff]
    %v483 = vld [vmem:[#allocation5 + $0xb10] sm:$0xff]
    %v484 = vld [vmem:[#allocation5 + $0xb18] sm:$0xff]
    %v485 = vld [vmem:[#allocation5 + $0xb20] sm:$0xff]
    %v486 = vld [vmem:[#allocation5 + $0xb28] sm:$0xff]
    %v487 = vld [vmem:[#allocation5 + $0xb30] sm:$0xff]
    %v488 = vld [vmem:[#allocation5 + $0xb38] sm:$0xff]
    %v489 = vld [vmem:[#allocation5 + $0xb40] sm:$0xff]
    %v490 = vld [vmem:[#allocation5 + $0xb48] sm:$0xff]
    %v491 = vld [vmem:[#allocation5 + $0xb50] sm:$0xff]
    %v492 = vld [vmem:[#allocation5 + $0xb58] sm:$0xff]
    %v493 = vld [vmem:[#allocation5 + $0xb60] sm:$0xff]
    %v494 = vld [vmem:[#allocation5 + $0xb68] sm:$0xff]
    %v495 = vld [vmem:[#allocation5 + $0xb70] sm:$0xff]
    %v496 = vld [vmem:[#allocation5 + $0xb78] sm:$0xff]
    %v497 = vld [vmem:[#allocation5 + $0xb80] sm:$0xff]
    %v498 = vld [vmem:[#allocation5 + $0xb88] sm:$0xff]
    %v499 = vld [vmem:[#allocation5 + $0xb90] sm:$0xff]
    %v500 = vld [vmem:[#allocation5 + $0xb98] sm:$0xff]
    %v501 = vld [vmem:[#allocation5 + $0xba0] sm:$0xff]
    %v502 = vld [vmem:[#allocation5 + $0xba8] sm:$0xff]
    %v503 = vld [vmem:[#allocation5 + $0xbb0] sm:$0xff]
    %v504 = vld [vmem:[#allocation5 + $0xbb8] sm:$0xff]
    %v505 = vld [vmem:[#allocation5 + $0xbc0] sm:$0xff]
    %v506 = vld [vmem:[#allocation5 + $0xbc8] sm:$0xff]
    %v507 = vld [vmem:[#allocation5 + $0xbd0] sm:$0xff]
    %v508 = vld [vmem:[#allocation5 + $0xbd8] sm:$0xff]
    %v509 = vld [vmem:[#allocation5 + $0xbe0] sm:$0xff]
    %v510 = vld [vmem:[#allocation5 + $0xbe8] sm:$0xff]
    %v511 = vld [vmem:[#allocation5 + $0xbf0] sm:$0xff]
    %v512 = vld [vmem:[#allocation5 + $0xbf8] sm:$0xff]
    %v513 = vld [vmem:[#allocation5 + $0xc00] sm:$0xff]
    %v514 = vld [vmem:[#allocation5 + $0xc08] sm:$0xff]
    %v515 = vld [vmem:[#allocation5 + $0xc10] sm:$0xff]
    %v516 = vld [vmem:[#allocation5 + $0xc18] sm:$0xff]
    %v517 = vld [vmem:[#allocation5 + $0xc20] sm:$0xff]
    %v518 = vld [vmem:[#allocation5 + $0xc28] sm:$0xff]
    %v519 = vld [vmem:[#allocation5 + $0xc30] sm:$0xff]
    %v520 = vld [vmem:[#allocation5 + $0xc38] sm:$0xff]
    %v521 = vld [vmem:[#allocation5 + $0xc40] sm:$0xff]
    %v522 = vld [vmem:[#allocation5 + $0xc48] sm:$0xff]
    %v523 = vld [vmem:[#allocation5 + $0xc50] sm:$0xff]
    %v524 = vld [vmem:[#allocation5 + $0xc58] sm:$0xff]
    %v525 = vld [vmem:[#allocation5 + $0xc60] sm:$0xff]
    %v526 = vld [vmem:[#allocation5 + $0xc68] sm:$0xff]
    %v527 = vld [vmem:[#allocation5 + $0xc70] sm:$0xff]
    %v528 = vld [vmem:[#allocation5 + $0xc78] sm:$0xff]
    %v529 = vld [vmem:[#allocation5 + $0xc80] sm:$0xff]
    %v530 = vld [vmem:[#allocation5 + $0xc88] sm:$0xff]
    %v531 = vld [vmem:[#allocation5 + $0xc90] sm:$0xff]
    %v532 = vld [vmem:[#allocation5 + $0xc98] sm:$0xff]
    %v533 = vld [vmem:[#allocation5 + $0xca0] sm:$0xff]
    %v534 = vld [vmem:[#allocation5 + $0xca8] sm:$0xff]
    %v535 = vld [vmem:[#allocation5 + $0xcb0] sm:$0xff]
    %v536 = vld [vmem:[#allocation5 + $0xcb8] sm:$0xff]
    %v537 = vld [vmem:[#allocation5 + $0xcc0] sm:$0xff]
    %v538 = vld [vmem:[#allocation5 + $0xcc8] sm:$0xff]
    %v539 = vld [vmem:[#allocation5 + $0xcd0] sm:$0xff]
    %v540 = vld [vmem:[#allocation5 + $0xcd8] sm:$0xff]
    %v541 = vld [vmem:[#allocation5 + $0xce0] sm:$0xff]
    %v542 = vld [vmem:[#allocation5 + $0xce8] sm:$0xff]
    %v543 = vld [vmem:[#allocation5 + $0xcf0] sm:$0xff]
    %v544 = vld [vmem:[#allocation5 + $0xcf8] sm:$0xff]
    %v545 = vld [vmem:[#allocation5 + $0xd00] sm:$0xff]
    %v546 = vld [vmem:[#allocation5 + $0xd08] sm:$0xff]
    %v547 = vld [vmem:[#allocation5 + $0xd10] sm:$0xff]
    %v548 = vld [vmem:[#allocation5 + $0xd18] sm:$0xff]
    %v549 = vld [vmem:[#allocation5 + $0xd20] sm:$0xff]
    %v550 = vld [vmem:[#allocation5 + $0xd28] sm:$0xff]
    %v551 = vld [vmem:[#allocation5 + $0xd30] sm:$0xff]
    %v552 = vld [vmem:[#allocation5 + $0xd38] sm:$0xff]
    %v553 = vld [vmem:[#allocation5 + $0xd40] sm:$0xff]
    %v554 = vld [vmem:[#allocation5 + $0xd48] sm:$0xff]
    %v555 = vld [vmem:[#allocation5 + $0xd50] sm:$0xff]
    %v556 = vld [vmem:[#allocation5 + $0xd58] sm:$0xff]
    %v557 = vld [vmem:[#allocation5 + $0xd60] sm:$0xff]
    %v558 = vld [vmem:[#allocation5 + $0xd68] sm:$0xff]
    %v559 = vld [vmem:[#allocation5 + $0xd70] sm:$0xff]
    %v560 = vld [vmem:[#allocation5 + $0xd78] sm:$0xff]
    %v561 = vld [vmem:[#allocation5 + $0xd80] sm:$0xff]
    %v562 = vld [vmem:[#allocation5 + $0xd88] sm:$0xff]
    %v563 = vld [vmem:[#allocation5 + $0xd90] sm:$0xff]
    %v564 = vld [vmem:[#allocation5 + $0xd98] sm:$0xff]
    %v565 = vld [vmem:[#allocation5 + $0xda0] sm:$0xff]
    %v566 = vld [vmem:[#allocation5 + $0xda8] sm:$0xff]
    %v567 = vld [vmem:[#allocation5 + $0xdb0] sm:$0xff]
    %v568 = vld [vmem:[#allocation5 + $0xdb8] sm:$0xff]
    %v569 = vld [vmem:[#allocation5 + $0xdc0] sm:$0xff]
    %v570 = vld [vmem:[#allocation5 + $0xdc8] sm:$0xff]
    %v571 = vld [vmem:[#allocation5 + $0xdd0] sm:$0xff]
    %v572 = vld [vmem:[#allocation5 + $0xdd8] sm:$0xff]
    %v573 = vld [vmem:[#allocation5 + $0xde0] sm:$0xff]
    %v574 = vld [vmem:[#allocation5 + $0xde8] sm:$0xff]
    %v575 = vld [vmem:[#allocation5 + $0xdf0] sm:$0xff]
    %v576 = vld [vmem:[#allocation5 + $0xdf8] sm:$0xff]
    %v577 = vld [vmem:[#allocation5 + $0xe00] sm:$0xff]
    %v578 = vld [vmem:[#allocation5 + $0xe08] sm:$0xff]
    %v579 = vld [vmem:[#allocation5 + $0xe10] sm:$0xff]
    %v580 = vld [vmem:[#allocation5 + $0xe18] sm:$0xff]
    %v581 = vld [vmem:[#allocation5 + $0xe20] sm:$0xff]
    %v582 = vld [vmem:[#allocation5 + $0xe28] sm:$0xff]
    %v583 = vld [vmem:[#allocation5 + $0xe30] sm:$0xff]
    %v584 = vld [vmem:[#allocation5 + $0xe38] sm:$0xff]
    %v585 = vld [vmem:[#allocation5 + $0xe40] sm:$0xff]
    %v586 = vld [vmem:[#allocation5 + $0xe48] sm:$0xff]
    %v587 = vld [vmem:[#allocation5 + $0xe50] sm:$0xff]
    %v588 = vld [vmem:[#allocation5 + $0xe58] sm:$0xff]
    %v589 = vld [vmem:[#allocation5 + $0xe60] sm:$0xff]
    %v590 = vld [vmem:[#allocation5 + $0xe68] sm:$0xff]
    %v591 = vld [vmem:[#allocation5 + $0xe70] sm:$0xff]
    %v592 = vld [vmem:[#allocation5 + $0xe78] sm:$0xff]
    %v593 = vld [vmem:[#allocation5 + $0xe80] sm:$0xff]
    %v594 = vld [vmem:[#allocation5 + $0xe88] sm:$0xff]
    %v595 = vld [vmem:[#allocation5 + $0xe90] sm:$0xff]
    %v596 = vld [vmem:[#allocation5 + $0xe98] sm:$0xff]
    %v597 = vld [vmem:[#allocation5 + $0xea0] sm:$0xff]
    %v598 = vld [vmem:[#allocation5 + $0xea8] sm:$0xff]
    %v599 = vld [vmem:[#allocation5 + $0xeb0] sm:$0xff]
    %v600 = vld [vmem:[#allocation5 + $0xeb8] sm:$0xff]
    %v601 = vld [vmem:[#allocation5 + $0xec0] sm:$0xff]
    %v602 = vld [vmem:[#allocation5 + $0xec8] sm:$0xff]
    %v603 = vld [vmem:[#allocation5 + $0xed0] sm:$0xff]
    %v604 = vld [vmem:[#allocation5 + $0xed8] sm:$0xff]
    %v605 = vld [vmem:[#allocation5 + $0xee0] sm:$0xff]
    %v606 = vld [vmem:[#allocation5 + $0xee8] sm:$0xff]
    %v607 = vld [vmem:[#allocation5 + $0xef0] sm:$0xff]
    %v608 = vld [vmem:[#allocation5 + $0xef8] sm:$0xff]
    %v609 = vld [vmem:[#allocation5 + $0xf00] sm:$0xff]
    %v610 = vld [vmem:[#allocation5 + $0xf08] sm:$0xff]
    %v611 = vld [vmem:[#allocation5 + $0xf10] sm:$0xff]
    %v612 = vld [vmem:[#allocation5 + $0xf18] sm:$0xff]
    %v613 = vld [vmem:[#allocation5 + $0xf20] sm:$0xff]
    %v614 = vld [vmem:[#allocation5 + $0xf28] sm:$0xff]
    %v615 = vld [vmem:[#allocation5 + $0xf30] sm:$0xff]
    %v616 = vld [vmem:[#allocation5 + $0xf38] sm:$0xff]
    %v617 = vld [vmem:[#allocation5 + $0xf40] sm:$0xff]
    %v618 = vld [vmem:[#allocation5 + $0xf48] sm:$0xff]
    %v619 = vld [vmem:[#allocation5 + $0xf50] sm:$0xff]
    %v620 = vld [vmem:[#allocation5 + $0xf58] sm:$0xff]
    %v621 = vld [vmem:[#allocation5 + $0xf60] sm:$0xff]
    %v622 = vld [vmem:[#allocation5 + $0xf68] sm:$0xff]
    %v623 = vld [vmem:[#allocation5 + $0xf70] sm:$0xff]
    %v624 = vld [vmem:[#allocation5 + $0xf78] sm:$0xff]
    %v625 = vld [vmem:[#allocation5 + $0xf80] sm:$0xff]
    %v626 = vld [vmem:[#allocation5 + $0xf88] sm:$0xff]
    %v627 = vld [vmem:[#allocation5 + $0xf90] sm:$0xff]
    %v628 = vld [vmem:[#allocation5 + $0xf98] sm:$0xff]
    %v629 = vld [vmem:[#allocation5 + $0xfa0] sm:$0xff]
    %v630 = vld [vmem:[#allocation5 + $0xfa8] sm:$0xff]
    %v631 = vld [vmem:[#allocation5 + $0xfb0] sm:$0xff]
    %v632 = vld [vmem:[#allocation5 + $0xfb8] sm:$0xff]
    %v633 = vld [vmem:[#allocation5 + $0xfc0] sm:$0xff]
    %v634 = vld [vmem:[#allocation5 + $0xfc8] sm:$0xff]
    %v635 = vld [vmem:[#allocation5 + $0xfd0] sm:$0xff]
    %v636 = vld [vmem:[#allocation5 + $0xfd8] sm:$0xff]
    %v637 = vld [vmem:[#allocation5 + $0xfe0] sm:$0xff]
    %v638 = vld [vmem:[#allocation5 + $0xfe8] sm:$0xff]
    %v639 = vld [vmem:[#allocation5 + $0xff0] sm:$0xff]
    %v640 = vld [vmem:[#allocation5 + $0xff8] sm:$0xff]
    %v641 = vld [vmem:[#allocation5 + $0x1000] sm:$0xff]
    %v642 = vld [vmem:[#allocation5 + $0x1008] sm:$0xff]
    %v643 = vld [vmem:[#allocation5 + $0x1010] sm:$0xff]
    %v644 = vld [vmem:[#allocation5 + $0x1018] sm:$0xff]
    %v645 = vld [vmem:[#allocation5 + $0x1020] sm:$0xff]
    %v646 = vld [vmem:[#allocation5 + $0x1028] sm:$0xff]
    %v647 = vld [vmem:[#allocation5 + $0x1030] sm:$0xff]
    %v648 = vld [vmem:[#allocation5 + $0x1038] sm:$0xff]
    %v649 = vld [vmem:[#allocation5 + $0x1040] sm:$0xff]
    %v650 = vld [vmem:[#allocation5 + $0x1048] sm:$0xff]
    %v651 = vld [vmem:[#allocation5 + $0x1050] sm:$0xff]
    %v652 = vld [vmem:[#allocation5 + $0x1058] sm:$0xff]
    %v653 = vld [vmem:[#allocation5 + $0x1060] sm:$0xff]
    %v654 = vld [vmem:[#allocation5 + $0x1068] sm:$0xff]
    %v655 = vld [vmem:[#allocation5 + $0x1070] sm:$0xff]
    %v656 = vld [vmem:[#allocation5 + $0x1078] sm:$0xff]
    %v657 = vld [vmem:[#allocation5 + $0x1080] sm:$0xff]
    %v658 = vld [vmem:[#allocation5 + $0x1088] sm:$0xff]
    %v659 = vld [vmem:[#allocation5 + $0x1090] sm:$0xff]
    %v660 = vld [vmem:[#allocation5 + $0x1098] sm:$0xff]
    %v661 = vld [vmem:[#allocation5 + $0x10a0] sm:$0xff]
    %v662 = vld [vmem:[#allocation5 + $0x10a8] sm:$0xff]
    %v663 = vld [vmem:[#allocation5 + $0x10b0] sm:$0xff]
    %v664 = vld [vmem:[#allocation5 + $0x10b8] sm:$0xff]
    %v665 = vld [vmem:[#allocation5 + $0x10c0] sm:$0xff]
    %v666 = vld [vmem:[#allocation5 + $0x10c8] sm:$0xff]
    %v667 = vld [vmem:[#allocation5 + $0x10d0] sm:$0xff]
    %v668 = vld [vmem:[#allocation5 + $0x10d8] sm:$0xff]
    %v669 = vld [vmem:[#allocation5 + $0x10e0] sm:$0xff]
    %v670 = vld [vmem:[#allocation5 + $0x10e8] sm:$0xff]
    %v671 = vld [vmem:[#allocation5 + $0x10f0] sm:$0xff]
    %v672 = vld [vmem:[#allocation5 + $0x10f8] sm:$0xff]
    %v673 = vld [vmem:[#allocation5 + $0x1100] sm:$0xff]
    %v674 = vld [vmem:[#allocation5 + $0x1108] sm:$0xff]
    %v675 = vld [vmem:[#allocation5 + $0x1110] sm:$0xff]
    %v676 = vld [vmem:[#allocation5 + $0x1118] sm:$0xff]
    %v677 = vld [vmem:[#allocation5 + $0x1120] sm:$0xff]
    %v678 = vld [vmem:[#allocation5 + $0x1128] sm:$0xff]
    %v679 = vld [vmem:[#allocation5 + $0x1130] sm:$0xff]
    %v680 = vld [vmem:[#allocation5 + $0x1138] sm:$0xff]
    %v681 = vld [vmem:[#allocation5 + $0x1140] sm:$0xff]
    %v682 = vld [vmem:[#allocation5 + $0x1148] sm:$0xff]
    %v683 = vld [vmem:[#allocation5 + $0x1150] sm:$0xff]
    %v684 = vld [vmem:[#allocation5 + $0x1158] sm:$0xff]
    %v685 = vld [vmem:[#allocation5 + $0x1160] sm:$0xff]
    %v686 = vld [vmem:[#allocation5 + $0x1168] sm:$0xff]
    %v687 = vld [vmem:[#allocation5 + $0x1170] sm:$0xff]
    %v688 = vld [vmem:[#allocation5 + $0x1178] sm:$0xff]
    %v689 = vld [vmem:[#allocation5 + $0x1180] sm:$0xff]
    %v690 = vld [vmem:[#allocation5 + $0x1188] sm:$0xff]
    %v691 = vld [vmem:[#allocation5 + $0x1190] sm:$0xff]
    %v692 = vld [vmem:[#allocation5 + $0x1198] sm:$0xff]
    %v693 = vld [vmem:[#allocation5 + $0x11a0] sm:$0xff]
    %v694 = vld [vmem:[#allocation5 + $0x11a8] sm:$0xff]
    %v695 = vld [vmem:[#allocation5 + $0x11b0] sm:$0xff]
    %v696 = vld [vmem:[#allocation5 + $0x11b8] sm:$0xff]
    %v697 = vld [vmem:[#allocation5 + $0x11c0] sm:$0xff]
    %v698 = vld [vmem:[#allocation5 + $0x11c8] sm:$0xff]
    %v699 = vld [vmem:[#allocation5 + $0x11d0] sm:$0xff]
    %v700 = vld [vmem:[#allocation5 + $0x11d8] sm:$0xff]
    %v701 = vld [vmem:[#allocation5 + $0x11e0] sm:$0xff]
    %v702 = vld [vmem:[#allocation5 + $0x11e8] sm:$0xff]
    %v703 = vld [vmem:[#allocation5 + $0x11f0] sm:$0xff]
    %v704 = vld [vmem:[#allocation5 + $0x11f8] sm:$0xff]
    %v705 = vld [vmem:[#allocation5 + $0x1200] sm:$0xff]
    %v706 = vld [vmem:[#allocation5 + $0x1208] sm:$0xff]
    %v707 = vld [vmem:[#allocation5 + $0x1210] sm:$0xff]
    %v708 = vld [vmem:[#allocation5 + $0x1218] sm:$0xff]
    %v709 = vld [vmem:[#allocation5 + $0x1220] sm:$0xff]
    %v710 = vld [vmem:[#allocation5 + $0x1228] sm:$0xff]
    %v711 = vld [vmem:[#allocation5 + $0x1230] sm:$0xff]
    %v712 = vld [vmem:[#allocation5 + $0x1238] sm:$0xff]
    %v713 = vld [vmem:[#allocation5 + $0x1240] sm:$0xff]
    %v714 = vld [vmem:[#allocation5 + $0x1248] sm:$0xff]
    %v715 = vld [vmem:[#allocation5 + $0x1250] sm:$0xff]
    %v716 = vld [vmem:[#allocation5 + $0x1258] sm:$0xff]
    %v717 = vld [vmem:[#allocation5 + $0x1260] sm:$0xff]
    %v718 = vld [vmem:[#allocation5 + $0x1268] sm:$0xff]
    %v719 = vld [vmem:[#allocation5 + $0x1270] sm:$0xff]
    %v720 = vld [vmem:[#allocation5 + $0x1278] sm:$0xff]
    %v721 = vld [vmem:[#allocation5 + $0x1280] sm:$0xff]
    %v722 = vld [vmem:[#allocation5 + $0x1288] sm:$0xff]
    %v723 = vld [vmem:[#allocation5 + $0x1290] sm:$0xff]
    %v724 = vld [vmem:[#allocation5 + $0x1298] sm:$0xff]
    %v725 = vld [vmem:[#allocation5 + $0x12a0] sm:$0xff]
    %v726 = vld [vmem:[#allocation5 + $0x12a8] sm:$0xff]
    %v727 = vld [vmem:[#allocation5 + $0x12b0] sm:$0xff]
    %v728 = vld [vmem:[#allocation5 + $0x12b8] sm:$0xff]
    %v729 = vld [vmem:[#allocation5 + $0x12c0] sm:$0xff]
    %v730 = vld [vmem:[#allocation5 + $0x12c8] sm:$0xff]
    %v731 = vld [vmem:[#allocation5 + $0x12d0] sm:$0xff]
    %v732 = vld [vmem:[#allocation5 + $0x12d8] sm:$0xff]
    %v733 = vld [vmem:[#allocation5 + $0x12e0] sm:$0xff]
    %v734 = vld [vmem:[#allocation5 + $0x12e8] sm:$0xff]
    %v735 = vld [vmem:[#allocation5 + $0x12f0] sm:$0xff]
    %v736 = vld [vmem:[#allocation5 + $0x12f8] sm:$0xff]
    %v737 = vld [vmem:[#allocation5 + $0x1300] sm:$0xff]
    %v738 = vld [vmem:[#allocation5 + $0x1308] sm:$0xff]
    %v739 = vld [vmem:[#allocation5 + $0x1310] sm:$0xff]
    %v740 = vld [vmem:[#allocation5 + $0x1318] sm:$0xff]
    %v741 = vld [vmem:[#allocation5 + $0x1320] sm:$0xff]
    %v742 = vld [vmem:[#allocation5 + $0x1328] sm:$0xff]
    %v743 = vld [vmem:[#allocation5 + $0x1330] sm:$0xff]
    %v744 = vld [vmem:[#allocation5 + $0x1338] sm:$0xff]
    %v745 = vld [vmem:[#allocation5 + $0x1340] sm:$0xff]
    %v746 = vld [vmem:[#allocation5 + $0x1348] sm:$0xff]
    %v747 = vld [vmem:[#allocation5 + $0x1350] sm:$0xff]
    %v748 = vld [vmem:[#allocation5 + $0x1358] sm:$0xff]
    %v749 = vld [vmem:[#allocation5 + $0x1360] sm:$0xff]
    %v750 = vld [vmem:[#allocation5 + $0x1368] sm:$0xff]
    %v751 = vld [vmem:[#allocation5 + $0x1370] sm:$0xff]
    %v752 = vld [vmem:[#allocation5 + $0x1378] sm:$0xff]
    %v753 = vld [vmem:[#allocation5 + $0x1380] sm:$0xff]
    %v754 = vld [vmem:[#allocation5 + $0x1388] sm:$0xff]
    %v755 = vld [vmem:[#allocation5 + $0x1390] sm:$0xff]
    %v756 = vld [vmem:[#allocation5 + $0x1398] sm:$0xff]
    %v757 = vld [vmem:[#allocation5 + $0x13a0] sm:$0xff]
    %v758 = vld [vmem:[#allocation5 + $0x13a8] sm:$0xff]
    %v759 = vld [vmem:[#allocation5 + $0x13b0] sm:$0xff]
    %v760 = vld [vmem:[#allocation5 + $0x13b8] sm:$0xff]
    %v761 = vld [vmem:[#allocation5 + $0x13c0] sm:$0xff]
    %v762 = vld [vmem:[#allocation5 + $0x13c8] sm:$0xff]
    %v763 = vld [vmem:[#allocation5 + $0x13d0] sm:$0xff]
    %v764 = vld [vmem:[#allocation5 + $0x13d8] sm:$0xff]
    %v765 = vld [vmem:[#allocation5 + $0x13e0] sm:$0xff]
    %v766 = vld [vmem:[#allocation5 + $0x13e8] sm:$0xff]
    %v767 = vld [vmem:[#allocation5 + $0x13f0] sm:$0xff]
    %v768 = vld [vmem:[#allocation5 + $0x13f8] sm:$0xff]
    %v769 = vld [vmem:[#allocation5 + $0x1400] sm:$0xff]
    %v770 = vld [vmem:[#allocation5 + $0x1408] sm:$0xff]
    %v771 = vld [vmem:[#allocation5 + $0x1410] sm:$0xff]
    %v772 = vld [vmem:[#allocation5 + $0x1418] sm:$0xff]
    %v773 = vld [vmem:[#allocation5 + $0x1420] sm:$0xff]
    %v774 = vld [vmem:[#allocation5 + $0x1428] sm:$0xff]
    %v775 = vld [vmem:[#allocation5 + $0x1430] sm:$0xff]
    %v776 = vld [vmem:[#allocation5 + $0x1438] sm:$0xff]
    %v777 = vld [vmem:[#allocation5 + $0x1440] sm:$0xff]
    %v778 = vld [vmem:[#allocation5 + $0x1448] sm:$0xff]
    %v779 = vld [vmem:[#allocation5 + $0x1450] sm:$0xff]
    %v780 = vld [vmem:[#allocation5 + $0x1458] sm:$0xff]
    %v781 = vld [vmem:[#allocation5 + $0x1460] sm:$0xff]
    %v782 = vld [vmem:[#allocation5 + $0x1468] sm:$0xff]
    %v783 = vld [vmem:[#allocation5 + $0x1470] sm:$0xff]
    %v784 = vld [vmem:[#allocation5 + $0x1478] sm:$0xff]
    %v785 = vld [vmem:[#allocation5 + $0x1480] sm:$0xff]
    %v786 = vld [vmem:[#allocation5 + $0x1488] sm:$0xff]
    %v787 = vld [vmem:[#allocation5 + $0x1490] sm:$0xff]
    %v788 = vld [vmem:[#allocation5 + $0x1498] sm:$0xff]
    %v789 = vld [vmem:[#allocation5 + $0x14a0] sm:$0xff]
    %v790 = vld [vmem:[#allocation5 + $0x14a8] sm:$0xff]
    %v791 = vld [vmem:[#allocation5 + $0x14b0] sm:$0xff]
    %v792 = vld [vmem:[#allocation5 + $0x14b8] sm:$0xff]
    %v793 = vld [vmem:[#allocation5 + $0x14c0] sm:$0xff]
    %v794 = vld [vmem:[#allocation5 + $0x14c8] sm:$0xff]
    %v795 = vld [vmem:[#allocation5 + $0x14d0] sm:$0xff]
    %v796 = vld [vmem:[#allocation5 + $0x14d8] sm:$0xff]
    %v797 = vld [vmem:[#allocation5 + $0x14e0] sm:$0xff]
    %v798 = vld [vmem:[#allocation5 + $0x14e8] sm:$0xff]
    %v799 = vld [vmem:[#allocation5 + $0x14f0] sm:$0xff]
    %v800 = vld [vmem:[#allocation5 + $0x14f8] sm:$0xff]
    %v801 = vld [vmem:[#allocation5 + $0x1500] sm:$0xff]
    %v802 = vld [vmem:[#allocation5 + $0x1508] sm:$0xff]
    %v803 = vld [vmem:[#allocation5 + $0x1510] sm:$0xff]
    %v804 = vld [vmem:[#allocation5 + $0x1518] sm:$0xff]
    %v805 = vld [vmem:[#allocation5 + $0x1520] sm:$0xff]
    %v806 = vld [vmem:[#allocation5 + $0x1528] sm:$0xff]
    %v807 = vld [vmem:[#allocation5 + $0x1530] sm:$0xff]
    %v808 = vld [vmem:[#allocation5 + $0x1538] sm:$0xff]
    %v809 = vld [vmem:[#allocation5 + $0x1540] sm:$0xff]
    %v810 = vld [vmem:[#allocation5 + $0x1548] sm:$0xff]
    %v811 = vld [vmem:[#allocation5 + $0x1550] sm:$0xff]
    %v812 = vld [vmem:[#allocation5 + $0x1558] sm:$0xff]
    %v813 = vld [vmem:[#allocation5 + $0x1560] sm:$0xff]
    %v814 = vld [vmem:[#allocation5 + $0x1568] sm:$0xff]
    %v815 = vld [vmem:[#allocation5 + $0x1570] sm:$0xff]
    %v816 = vld [vmem:[#allocation5 + $0x1578] sm:$0xff]
    %v817 = vld [vmem:[#allocation5 + $0x1580] sm:$0xff]
    %v818 = vld [vmem:[#allocation5 + $0x1588] sm:$0xff]
    %v819 = vld [vmem:[#allocation5 + $0x1590] sm:$0xff]
    %v820 = vld [vmem:[#allocation5 + $0x1598] sm:$0xff]
    %v821 = vld [vmem:[#allocation5 + $0x15a0] sm:$0xff]
    %v822 = vld [vmem:[#allocation5 + $0x15a8] sm:$0xff]
    %v823 = vld [vmem:[#allocation5 + $0x15b0] sm:$0xff]
    %v824 = vld [vmem:[#allocation5 + $0x15b8] sm:$0xff]
    %v825 = vld [vmem:[#allocation5 + $0x15c0] sm:$0xff]
    %v826 = vld [vmem:[#allocation5 + $0x15c8] sm:$0xff]
    %v827 = vld [vmem:[#allocation5 + $0x15d0] sm:$0xff]
    %v828 = vld [vmem:[#allocation5 + $0x15d8] sm:$0xff]
    %v829 = vld [vmem:[#allocation5 + $0x15e0] sm:$0xff]
    %v830 = vld [vmem:[#allocation5 + $0x15e8] sm:$0xff]
    %v831 = vld [vmem:[#allocation5 + $0x15f0] sm:$0xff]
    %v832 = vld [vmem:[#allocation5 + $0x15f8] sm:$0xff]
    %v833 = vld [vmem:[#allocation5 + $0x1600] sm:$0xff]
    %v834 = vld [vmem:[#allocation5 + $0x1608] sm:$0xff]
    %v835 = vld [vmem:[#allocation5 + $0x1610] sm:$0xff]
    %v836 = vld [vmem:[#allocation5 + $0x1618] sm:$0xff]
    %v837 = vld [vmem:[#allocation5 + $0x1620] sm:$0xff]
    %v838 = vld [vmem:[#allocation5 + $0x1628] sm:$0xff]
    %v839 = vld [vmem:[#allocation5 + $0x1630] sm:$0xff]
    %v840 = vld [vmem:[#allocation5 + $0x1638] sm:$0xff]
    %v841 = vld [vmem:[#allocation5 + $0x1640] sm:$0xff]
    %v842 = vld [vmem:[#allocation5 + $0x1648] sm:$0xff]
    %v843 = vld [vmem:[#allocation5 + $0x1650] sm:$0xff]
    %v844 = vld [vmem:[#allocation5 + $0x1658] sm:$0xff]
    %v845 = vld [vmem:[#allocation5 + $0x1660] sm:$0xff]
    %v846 = vld [vmem:[#allocation5 + $0x1668] sm:$0xff]
    %v847 = vld [vmem:[#allocation5 + $0x1670] sm:$0xff]
    %v848 = vld [vmem:[#allocation5 + $0x1678] sm:$0xff]
    %v849 = vld [vmem:[#allocation5 + $0x1680] sm:$0xff]
    %v850 = vld [vmem:[#allocation5 + $0x1688] sm:$0xff]
    %v851 = vld [vmem:[#allocation5 + $0x1690] sm:$0xff]
    %v852 = vld [vmem:[#allocation5 + $0x1698] sm:$0xff]
    %v853 = vld [vmem:[#allocation5 + $0x16a0] sm:$0xff]
    %v854 = vld [vmem:[#allocation5 + $0x16a8] sm:$0xff]
    %v855 = vld [vmem:[#allocation5 + $0x16b0] sm:$0xff]
    %v856 = vld [vmem:[#allocation5 + $0x16b8] sm:$0xff]
    %v857 = vld [vmem:[#allocation5 + $0x16c0] sm:$0xff]
    %v858 = vld [vmem:[#allocation5 + $0x16c8] sm:$0xff]
    %v859 = vld [vmem:[#allocation5 + $0x16d0] sm:$0xff]
    %v860 = vld [vmem:[#allocation5 + $0x16d8] sm:$0xff]
    %v861 = vld [vmem:[#allocation5 + $0x16e0] sm:$0xff]
    %v862 = vld [vmem:[#allocation5 + $0x16e8] sm:$0xff]
    %v863 = vld [vmem:[#allocation5 + $0x16f0] sm:$0xff]
    %v864 = vld [vmem:[#allocation5 + $0x16f8] sm:$0xff]
    %v865 = vld [vmem:[#allocation5 + $0x1700] sm:$0xff]
    %v866 = vld [vmem:[#allocation5 + $0x1708] sm:$0xff]
    %v867 = vld [vmem:[#allocation5 + $0x1710] sm:$0xff]
    %v868 = vld [vmem:[#allocation5 + $0x1718] sm:$0xff]
    %v869 = vld [vmem:[#allocation5 + $0x1720] sm:$0xff]
    %v870 = vld [vmem:[#allocation5 + $0x1728] sm:$0xff]
    %v871 = vld [vmem:[#allocation5 + $0x1730] sm:$0xff]
    %v872 = vld [vmem:[#allocation5 + $0x1738] sm:$0xff]
    %v873 = vld [vmem:[#allocation5 + $0x1740] sm:$0xff]
    %v874 = vld [vmem:[#allocation5 + $0x1748] sm:$0xff]
    %v875 = vld [vmem:[#allocation5 + $0x1750] sm:$0xff]
    %v876 = vld [vmem:[#allocation5 + $0x1758] sm:$0xff]
    %v877 = vld [vmem:[#allocation5 + $0x1760] sm:$0xff]
    %v878 = vld [vmem:[#allocation5 + $0x1768] sm:$0xff]
    %v879 = vld [vmem:[#allocation5 + $0x1770] sm:$0xff]
    %v880 = vld [vmem:[#allocation5 + $0x1778] sm:$0xff]
    %v881 = vld [vmem:[#allocation5 + $0x1780] sm:$0xff]
    %v882 = vld [vmem:[#allocation5 + $0x1788] sm:$0xff]
    %v883 = vld [vmem:[#allocation5 + $0x1790] sm:$0xff]
    %v884 = vld [vmem:[#allocation5 + $0x1798] sm:$0xff]
    %v885 = vld [vmem:[#allocation5 + $0x17a0] sm:$0xff]
    %v886 = vld [vmem:[#allocation5 + $0x17a8] sm:$0xff]
    %v887 = vld [vmem:[#allocation5 + $0x17b0] sm:$0xff]
    %v888 = vld [vmem:[#allocation5 + $0x17b8] sm:$0xff]
    %v889 = vld [vmem:[#allocation5 + $0x17c0] sm:$0xff]
    %v890 = vld [vmem:[#allocation5 + $0x17c8] sm:$0xff]
    %v891 = vld [vmem:[#allocation5 + $0x17d0] sm:$0xff]
    %v892 = vld [vmem:[#allocation5 + $0x17d8] sm:$0xff]
    %v893 = vld [vmem:[#allocation5 + $0x17e0] sm:$0xff]
    %v894 = vld [vmem:[#allocation5 + $0x17e8] sm:$0xff]
    %v895 = vld [vmem:[#allocation5 + $0x17f0] sm:$0xff]
    %v896 = vld [vmem:[#allocation5 + $0x17f8] sm:$0xff]
    %v897 = vld [vmem:[#allocation5 + $0x1800] sm:$0xff]
    %v898 = vld [vmem:[#allocation5 + $0x1808] sm:$0xff]
    %v899 = vld [vmem:[#allocation5 + $0x1810] sm:$0xff]
    %v900 = vld [vmem:[#allocation5 + $0x1818] sm:$0xff]
    %v901 = vld [vmem:[#allocation5 + $0x1820] sm:$0xff]
    %v902 = vld [vmem:[#allocation5 + $0x1828] sm:$0xff]
    %v903 = vld [vmem:[#allocation5 + $0x1830] sm:$0xff]
    %v904 = vld [vmem:[#allocation5 + $0x1838] sm:$0xff]
    %v905 = vld [vmem:[#allocation5 + $0x1840] sm:$0xff]
    %v906 = vld [vmem:[#allocation5 + $0x1848] sm:$0xff]
    %v907 = vld [vmem:[#allocation5 + $0x1850] sm:$0xff]
    %v908 = vld [vmem:[#allocation5 + $0x1858] sm:$0xff]
    %v909 = vld [vmem:[#allocation5 + $0x1860] sm:$0xff]
    %v910 = vld [vmem:[#allocation5 + $0x1868] sm:$0xff]
    %v911 = vld [vmem:[#allocation5 + $0x1870] sm:$0xff]
    %v912 = vld [vmem:[#allocation5 + $0x1878] sm:$0xff]
    %v913 = vld [vmem:[#allocation7] sm:$0xff]
    %v914 = vld [vmem:[#allocation7 + $0x8] sm:$0xff]
    %v917 = vlaneseq
    %v918 = vshrl.u32 %v917, 7
    %v919 = vsub.s32 0, %v918
    %v920 = vrot.slane %v913, %v919
    %v921 = vlaneseq
    %v922 = vshrl.u32 %v921, 7
    %v923 = vsub.s32 1, %v922
    %v924 = vrot.slane %v913, %v923
    %v925 = vlaneseq
    %v926 = vshrl.u32 %v925, 7
    %v927 = vsub.s32 2, %v926
    %v928 = vrot.slane %v913, %v927
    %v929 = vlaneseq
    %v930 = vshrl.u32 %v929, 7
    %v931 = vsub.s32 3, %v930
    %v932 = vrot.slane %v913, %v931
    %v933 = vlaneseq
    %v934 = vshrl.u32 %v933, 7
    %v935 = vsub.s32 4, %v934
    %v936 = vrot.slane %v913, %v935
    %v937 = vlaneseq
    %v938 = vshrl.u32 %v937, 7
    %v939 = vsub.s32 5, %v938
    %v940 = vrot.slane %v913, %v939
    %v941 = vlaneseq
    %v942 = vshrl.u32 %v941, 7
    %v943 = vsub.s32 6, %v942
    %v944 = vrot.slane %v913, %v943
    %v945 = vlaneseq
    %v946 = vshrl.u32 %v945, 7
    %v947 = vsub.s32 7, %v946
    %v948 = vrot.slane %v913, %v947
    %v949 = vlaneseq
    %v950 = vshrl.u32 %v949, 7
    %v951 = vsub.s32 0, %v950
    %v952 = vrot.slane %v914, %v951
    %v953 = vlaneseq
    %v954 = vshrl.u32 %v953, 7
    %v955 = vsub.s32 1, %v954
    %v956 = vrot.slane %v914, %v955
    %v957 = vlaneseq
    %v958 = vshrl.u32 %v957, 7
    %v959 = vsub.s32 2, %v958
    %v960 = vrot.slane %v914, %v959
    %v961 = vlaneseq
    %v962 = vshrl.u32 %v961, 7
    %v963 = vsub.s32 3, %v962
    %v964 = vrot.slane %v914, %v963
    %v965 = vlaneseq
    %v966 = vshrl.u32 %v965, 7
    %v967 = vsub.s32 4, %v966
    %v968 = vrot.slane %v914, %v967
    %v969 = vlaneseq
    %v970 = vshrl.u32 %v969, 7
    %v971 = vsub.s32 5, %v970
    %v972 = vrot.slane %v914, %v971
    %v973 = vlaneseq
    %v974 = vshrl.u32 %v973, 7
    %v975 = vsub.s32 6, %v974
    %v976 = vrot.slane %v914, %v975
    %v977 = vlaneseq
    %v978 = vshrl.u32 %v977, 7
    %v979 = vsub.s32 7, %v978
    %v980 = vrot.slane %v914, %v979
    %v1781 = vunpack.c.l.b16 %v129
    %v1782 = vunpack.c.h.b16 %v129
    %v1783 = vunpack.c.l.b16 %v130
    %v1784 = vunpack.c.h.b16 %v130
    %v1785 = vunpack.c.l.b16 %v131
    %v1786 = vunpack.c.h.b16 %v131
    %v1787 = vunpack.c.l.b16 %v132
    %v1788 = vunpack.c.h.b16 %v132
    %v1789 = vunpack.c.l.b16 %v133
    %v1790 = vunpack.c.h.b16 %v133
    %v1791 = vunpack.c.l.b16 %v134
    %v1792 = vunpack.c.h.b16 %v134
    %v1793 = vunpack.c.l.b16 %v135
    %v1794 = vunpack.c.h.b16 %v135
    %v1795 = vunpack.c.l.b16 %v136
    %v1796 = vunpack.c.h.b16 %v136
    %v1797 = vunpack.c.l.b16 %v137
    %v1798 = vunpack.c.h.b16 %v137
    %v1799 = vunpack.c.l.b16 %v138
    %v1800 = vunpack.c.h.b16 %v138
    %v1801 = vunpack.c.l.b16 %v139
    %v1802 = vunpack.c.h.b16 %v139
    %v1803 = vunpack.c.l.b16 %v140
    %v1804 = vunpack.c.h.b16 %v140
    %v1805 = vunpack.c.l.b16 %v141
    %v1806 = vunpack.c.h.b16 %v141
    %v1807 = vunpack.c.l.b16 %v142
    %v1808 = vunpack.c.h.b16 %v142
    %v1809 = vunpack.c.l.b16 %v143
    %v1810 = vunpack.c.h.b16 %v143
    %v1811 = vunpack.c.l.b16 %v144
    %v1812 = vunpack.c.h.b16 %v144
    %v1813 = vunpack.c.l.b16 %v145
    %v1814 = vunpack.c.h.b16 %v145
    %v1815 = vunpack.c.l.b16 %v146
    %v1816 = vunpack.c.h.b16 %v146
    %v1817 = vunpack.c.l.b16 %v147
    %v1818 = vunpack.c.h.b16 %v147
    %v1819 = vunpack.c.l.b16 %v148
    %v1820 = vunpack.c.h.b16 %v148
    %v1821 = vunpack.c.l.b16 %v149
    %v1822 = vunpack.c.h.b16 %v149
    %v1823 = vunpack.c.l.b16 %v150
    %v1824 = vunpack.c.h.b16 %v150
    %v1825 = vunpack.c.l.b16 %v151
    %v1826 = vunpack.c.h.b16 %v151
    %v1827 = vunpack.c.l.b16 %v152
    %v1828 = vunpack.c.h.b16 %v152
    %v1829 = vunpack.c.l.b16 %v153
    %v1830 = vunpack.c.h.b16 %v153
    %v1831 = vunpack.c.l.b16 %v154
    %v1832 = vunpack.c.h.b16 %v154
    %v1833 = vunpack.c.l.b16 %v155
    %v1834 = vunpack.c.h.b16 %v155
    %v1835 = vunpack.c.l.b16 %v156
    %v1836 = vunpack.c.h.b16 %v156
    %v1837 = vunpack.c.l.b16 %v157
    %v1838 = vunpack.c.h.b16 %v157
    %v1839 = vunpack.c.l.b16 %v158
    %v1840 = vunpack.c.h.b16 %v158
    %v1841 = vunpack.c.l.b16 %v159
    %v1842 = vunpack.c.h.b16 %v159
    %v1843 = vunpack.c.l.b16 %v160
    %v1844 = vunpack.c.h.b16 %v160
    %v1845 = vunpack.c.l.b16 %v161
    %v1846 = vunpack.c.h.b16 %v161
    %v1847 = vunpack.c.l.b16 %v162
    %v1848 = vunpack.c.h.b16 %v162
    %v1849 = vunpack.c.l.b16 %v163
    %v1850 = vunpack.c.h.b16 %v163
    %v1851 = vunpack.c.l.b16 %v164
    %v1852 = vunpack.c.h.b16 %v164
    %v1853 = vunpack.c.l.b16 %v165
    %v1854 = vunpack.c.h.b16 %v165
    %v1855 = vunpack.c.l.b16 %v166
    %v1856 = vunpack.c.h.b16 %v166
    %v1857 = vunpack.c.l.b16 %v167
    %v1858 = vunpack.c.h.b16 %v167
    %v1859 = vunpack.c.l.b16 %v168
    %v1860 = vunpack.c.h.b16 %v168
    %v1861 = vunpack.c.l.b16 %v169
    %v1862 = vunpack.c.h.b16 %v169
    %v1863 = vunpack.c.l.b16 %v170
    %v1864 = vunpack.c.h.b16 %v170
    %v1865 = vunpack.c.l.b16 %v171
    %v1866 = vunpack.c.h.b16 %v171
    %v1867 = vunpack.c.l.b16 %v172
    %v1868 = vunpack.c.h.b16 %v172
    %v1869 = vunpack.c.l.b16 %v173
    %v1870 = vunpack.c.h.b16 %v173
    %v1871 = vunpack.c.l.b16 %v174
    %v1872 = vunpack.c.h.b16 %v174
    %v1873 = vunpack.c.l.b16 %v175
    %v1874 = vunpack.c.h.b16 %v175
    %v1875 = vunpack.c.l.b16 %v176
    %v1876 = vunpack.c.h.b16 %v176
    %v1877 = vunpack.c.l.b16 %v177
    %v1878 = vunpack.c.h.b16 %v177
    %v1879 = vunpack.c.l.b16 %v178
    %v1880 = vunpack.c.h.b16 %v178
    %v1881 = vunpack.c.l.b16 %v179
    %v1882 = vunpack.c.h.b16 %v179
    %v1883 = vunpack.c.l.b16 %v180
    %v1884 = vunpack.c.h.b16 %v180
    %v1885 = vunpack.c.l.b16 %v181
    %v1886 = vunpack.c.h.b16 %v181
    %v1887 = vunpack.c.l.b16 %v182
    %v1888 = vunpack.c.h.b16 %v182
    %v1889 = vunpack.c.l.b16 %v183
    %v1890 = vunpack.c.h.b16 %v183
    %v1891 = vunpack.c.l.b16 %v184
    %v1892 = vunpack.c.h.b16 %v184
    %v1893 = vunpack.c.l.b16 %v185
    %v1894 = vunpack.c.h.b16 %v185
    %v1895 = vunpack.c.l.b16 %v186
    %v1896 = vunpack.c.h.b16 %v186
    %v1897 = vunpack.c.l.b16 %v187
    %v1898 = vunpack.c.h.b16 %v187
    %v1899 = vunpack.c.l.b16 %v188
    %v1900 = vunpack.c.h.b16 %v188
    %v1901 = vunpack.c.l.b16 %v189
    %v1902 = vunpack.c.h.b16 %v189
    %v1903 = vunpack.c.l.b16 %v190
    %v1904 = vunpack.c.h.b16 %v190
    %v1905 = vunpack.c.l.b16 %v191
    %v1906 = vunpack.c.h.b16 %v191
    %v1907 = vunpack.c.l.b16 %v192
    %v1908 = vunpack.c.h.b16 %v192
    %v1909 = vunpack.c.l.b16 %v193
    %v1910 = vunpack.c.h.b16 %v193
    %v1911 = vunpack.c.l.b16 %v194
    %v1912 = vunpack.c.h.b16 %v194
    %v1913 = vunpack.c.l.b16 %v195
    %v1914 = vunpack.c.h.b16 %v195
    %v1915 = vunpack.c.l.b16 %v196
    %v1916 = vunpack.c.h.b16 %v196
    %v1917 = vunpack.c.l.b16 %v197
    %v1918 = vunpack.c.h.b16 %v197
    %v1919 = vunpack.c.l.b16 %v198
    %v1920 = vunpack.c.h.b16 %v198
    %v1921 = vunpack.c.l.b16 %v199
    %v1922 = vunpack.c.h.b16 %v199
    %v1923 = vunpack.c.l.b16 %v200
    %v1924 = vunpack.c.h.b16 %v200
    %v1925 = vunpack.c.l.b16 %v201
    %v1926 = vunpack.c.h.b16 %v201
    %v1927 = vunpack.c.l.b16 %v202
    %v1928 = vunpack.c.h.b16 %v202
    %v1929 = vunpack.c.l.b16 %v203
    %v1930 = vunpack.c.h.b16 %v203
    %v1931 = vunpack.c.l.b16 %v204
    %v1932 = vunpack.c.h.b16 %v204
    %v1933 = vunpack.c.l.b16 %v205
    %v1934 = vunpack.c.h.b16 %v205
    %v1935 = vunpack.c.l.b16 %v206
    %v1936 = vunpack.c.h.b16 %v206
    %v1937 = vunpack.c.l.b16 %v207
    %v1938 = vunpack.c.h.b16 %v207
    %v1939 = vunpack.c.l.b16 %v208
    %v1940 = vunpack.c.h.b16 %v208
    %v1941 = vunpack.c.l.b16 %v209
    %v1942 = vunpack.c.h.b16 %v209
    %v1943 = vunpack.c.l.b16 %v210
    %v1944 = vunpack.c.h.b16 %v210
    %v1945 = vunpack.c.l.b16 %v211
    %v1946 = vunpack.c.h.b16 %v211
    %v1947 = vunpack.c.l.b16 %v212
    %v1948 = vunpack.c.h.b16 %v212
    %v1949 = vunpack.c.l.b16 %v213
    %v1950 = vunpack.c.h.b16 %v213
    %v1951 = vunpack.c.l.b16 %v214
    %v1952 = vunpack.c.h.b16 %v214
    %v1953 = vunpack.c.l.b16 %v215
    %v1954 = vunpack.c.h.b16 %v215
    %v1955 = vunpack.c.l.b16 %v216
    %v1956 = vunpack.c.h.b16 %v216
    %v1957 = vunpack.c.l.b16 %v217
    %v1958 = vunpack.c.h.b16 %v217
    %v1959 = vunpack.c.l.b16 %v218
    %v1960 = vunpack.c.h.b16 %v218
    %v1961 = vunpack.c.l.b16 %v219
    %v1962 = vunpack.c.h.b16 %v219
    %v1963 = vunpack.c.l.b16 %v220
    %v1964 = vunpack.c.h.b16 %v220
    %v1965 = vunpack.c.l.b16 %v221
    %v1966 = vunpack.c.h.b16 %v221
    %v1967 = vunpack.c.l.b16 %v222
    %v1968 = vunpack.c.h.b16 %v222
    %v1969 = vunpack.c.l.b16 %v223
    %v1970 = vunpack.c.h.b16 %v223
    %v1971 = vunpack.c.l.b16 %v224
    %v1972 = vunpack.c.h.b16 %v224
    %v1973 = vunpack.c.l.b16 %v225
    %v1974 = vunpack.c.h.b16 %v225
    %v1975 = vunpack.c.l.b16 %v226
    %v1976 = vunpack.c.h.b16 %v226
    %v1977 = vunpack.c.l.b16 %v227
    %v1978 = vunpack.c.h.b16 %v227
    %v1979 = vunpack.c.l.b16 %v228
    %v1980 = vunpack.c.h.b16 %v228
    %v1981 = vunpack.c.l.b16 %v229
    %v1982 = vunpack.c.h.b16 %v229
    %v1983 = vunpack.c.l.b16 %v230
    %v1984 = vunpack.c.h.b16 %v230
    %v1985 = vunpack.c.l.b16 %v231
    %v1986 = vunpack.c.h.b16 %v231
    %v1987 = vunpack.c.l.b16 %v232
    %v1988 = vunpack.c.h.b16 %v232
    %v1989 = vunpack.c.l.b16 %v233
    %v1990 = vunpack.c.h.b16 %v233
    %v1991 = vunpack.c.l.b16 %v234
    %v1992 = vunpack.c.h.b16 %v234
    %v1993 = vunpack.c.l.b16 %v235
    %v1994 = vunpack.c.h.b16 %v235
    %v1995 = vunpack.c.l.b16 %v236
    %v1996 = vunpack.c.h.b16 %v236
    %v1997 = vunpack.c.l.b16 %v237
    %v1998 = vunpack.c.h.b16 %v237
    %v1999 = vunpack.c.l.b16 %v238
    %v2000 = vunpack.c.h.b16 %v238
    %v2001 = vunpack.c.l.b16 %v239
    %v2002 = vunpack.c.h.b16 %v239
    %v2003 = vunpack.c.l.b16 %v240
    %v2004 = vunpack.c.h.b16 %v240
    %v2005 = vunpack.c.l.b16 %v241
    %v2006 = vunpack.c.h.b16 %v241
    %v2007 = vunpack.c.l.b16 %v242
    %v2008 = vunpack.c.h.b16 %v242
    %v2009 = vunpack.c.l.b16 %v243
    %v2010 = vunpack.c.h.b16 %v243
    %v2011 = vunpack.c.l.b16 %v244
    %v2012 = vunpack.c.h.b16 %v244
    %v2013 = vunpack.c.l.b16 %v245
    %v2014 = vunpack.c.h.b16 %v245
    %v2015 = vunpack.c.l.b16 %v246
    %v2016 = vunpack.c.h.b16 %v246
    %v2017 = vunpack.c.l.b16 %v247
    %v2018 = vunpack.c.h.b16 %v247
    %v2019 = vunpack.c.l.b16 %v248
    %v2020 = vunpack.c.h.b16 %v248
    %v2021 = vunpack.c.l.b16 %v249
    %v2022 = vunpack.c.h.b16 %v249
    %v2023 = vunpack.c.l.b16 %v250
    %v2024 = vunpack.c.h.b16 %v250
    %v2025 = vunpack.c.l.b16 %v251
    %v2026 = vunpack.c.h.b16 %v251
    %v2027 = vunpack.c.l.b16 %v252
    %v2028 = vunpack.c.h.b16 %v252
    %v2029 = vunpack.c.l.b16 %v253
    %v2030 = vunpack.c.h.b16 %v253
    %v2031 = vunpack.c.l.b16 %v254
    %v2032 = vunpack.c.h.b16 %v254
    %v2033 = vunpack.c.l.b16 %v255
    %v2034 = vunpack.c.h.b16 %v255
    %v2035 = vunpack.c.l.b16 %v256
    %v2036 = vunpack.c.h.b16 %v256
    %v2037 = vunpack.c.l.b16 %v257
    %v2038 = vunpack.c.h.b16 %v257
    %v2039 = vunpack.c.l.b16 %v258
    %v2040 = vunpack.c.h.b16 %v258
    %v2041 = vunpack.c.l.b16 %v259
    %v2042 = vunpack.c.h.b16 %v259
    %v2043 = vunpack.c.l.b16 %v260
    %v2044 = vunpack.c.h.b16 %v260
    %v2045 = vunpack.c.l.b16 %v261
    %v2046 = vunpack.c.h.b16 %v261
    %v2047 = vunpack.c.l.b16 %v262
    %v2048 = vunpack.c.h.b16 %v262
    %v2049 = vunpack.c.l.b16 %v263
    %v2050 = vunpack.c.h.b16 %v263
    %v2051 = vunpack.c.l.b16 %v264
    %v2052 = vunpack.c.h.b16 %v264
    %v2053 = vunpack.c.l.b16 %v265
    %v2054 = vunpack.c.h.b16 %v265
    %v2055 = vunpack.c.l.b16 %v266
    %v2056 = vunpack.c.h.b16 %v266
    %v2057 = vunpack.c.l.b16 %v267
    %v2058 = vunpack.c.h.b16 %v267
    %v2059 = vunpack.c.l.b16 %v268
    %v2060 = vunpack.c.h.b16 %v268
    %v2061 = vunpack.c.l.b16 %v269
    %v2062 = vunpack.c.h.b16 %v269
    %v2063 = vunpack.c.l.b16 %v270
    %v2064 = vunpack.c.h.b16 %v270
    %v2065 = vunpack.c.l.b16 %v271
    %v2066 = vunpack.c.h.b16 %v271
    %v2067 = vunpack.c.l.b16 %v272
    %v2068 = vunpack.c.h.b16 %v272
    %v2069 = vunpack.c.l.b16 %v273
    %v2070 = vunpack.c.h.b16 %v273
    %v2071 = vunpack.c.l.b16 %v274
    %v2072 = vunpack.c.h.b16 %v274
    %v2073 = vunpack.c.l.b16 %v275
    %v2074 = vunpack.c.h.b16 %v275
    %v2075 = vunpack.c.l.b16 %v276
    %v2076 = vunpack.c.h.b16 %v276
    %v2077 = vunpack.c.l.b16 %v277
    %v2078 = vunpack.c.h.b16 %v277
    %v2079 = vunpack.c.l.b16 %v278
    %v2080 = vunpack.c.h.b16 %v278
    %v2081 = vunpack.c.l.b16 %v279
    %v2082 = vunpack.c.h.b16 %v279
    %v2083 = vunpack.c.l.b16 %v280
    %v2084 = vunpack.c.h.b16 %v280
    %v2085 = vunpack.c.l.b16 %v281
    %v2086 = vunpack.c.h.b16 %v281
    %v2087 = vunpack.c.l.b16 %v282
    %v2088 = vunpack.c.h.b16 %v282
    %v2089 = vunpack.c.l.b16 %v283
    %v2090 = vunpack.c.h.b16 %v283
    %v2091 = vunpack.c.l.b16 %v284
    %v2092 = vunpack.c.h.b16 %v284
    %v2093 = vunpack.c.l.b16 %v285
    %v2094 = vunpack.c.h.b16 %v285
    %v2095 = vunpack.c.l.b16 %v286
    %v2096 = vunpack.c.h.b16 %v286
    %v2097 = vunpack.c.l.b16 %v287
    %v2098 = vunpack.c.h.b16 %v287
    %v2099 = vunpack.c.l.b16 %v288
    %v2100 = vunpack.c.h.b16 %v288
    %v2101 = vunpack.c.l.b16 %v289
    %v2102 = vunpack.c.h.b16 %v289
    %v2103 = vunpack.c.l.b16 %v290
    %v2104 = vunpack.c.h.b16 %v290
    %v2105 = vunpack.c.l.b16 %v291
    %v2106 = vunpack.c.h.b16 %v291
    %v2107 = vunpack.c.l.b16 %v292
    %v2108 = vunpack.c.h.b16 %v292
    %v2109 = vunpack.c.l.b16 %v293
    %v2110 = vunpack.c.h.b16 %v293
    %v2111 = vunpack.c.l.b16 %v294
    %v2112 = vunpack.c.h.b16 %v294
    %v2113 = vunpack.c.l.b16 %v295
    %v2114 = vunpack.c.h.b16 %v295
    %v2115 = vunpack.c.l.b16 %v296
    %v2116 = vunpack.c.h.b16 %v296
    %v2117 = vunpack.c.l.b16 %v297
    %v2118 = vunpack.c.h.b16 %v297
    %v2119 = vunpack.c.l.b16 %v298
    %v2120 = vunpack.c.h.b16 %v298
    %v2121 = vunpack.c.l.b16 %v299
    %v2122 = vunpack.c.h.b16 %v299
    %v2123 = vunpack.c.l.b16 %v300
    %v2124 = vunpack.c.h.b16 %v300
    %v2125 = vunpack.c.l.b16 %v301
    %v2126 = vunpack.c.h.b16 %v301
    %v2127 = vunpack.c.l.b16 %v302
    %v2128 = vunpack.c.h.b16 %v302
    %v2129 = vunpack.c.l.b16 %v303
    %v2130 = vunpack.c.h.b16 %v303
    %v2131 = vunpack.c.l.b16 %v304
    %v2132 = vunpack.c.h.b16 %v304
    %v2133 = vunpack.c.l.b16 %v305
    %v2134 = vunpack.c.h.b16 %v305
    %v2135 = vunpack.c.l.b16 %v306
    %v2136 = vunpack.c.h.b16 %v306
    %v2137 = vunpack.c.l.b16 %v307
    %v2138 = vunpack.c.h.b16 %v307
    %v2139 = vunpack.c.l.b16 %v308
    %v2140 = vunpack.c.h.b16 %v308
    %v2141 = vunpack.c.l.b16 %v309
    %v2142 = vunpack.c.h.b16 %v309
    %v2143 = vunpack.c.l.b16 %v310
    %v2144 = vunpack.c.h.b16 %v310
    %v2145 = vunpack.c.l.b16 %v311
    %v2146 = vunpack.c.h.b16 %v311
    %v2147 = vunpack.c.l.b16 %v312
    %v2148 = vunpack.c.h.b16 %v312
    %v2149 = vunpack.c.l.b16 %v313
    %v2150 = vunpack.c.h.b16 %v313
    %v2151 = vunpack.c.l.b16 %v314
    %v2152 = vunpack.c.h.b16 %v314
    %v2153 = vunpack.c.l.b16 %v315
    %v2154 = vunpack.c.h.b16 %v315
    %v2155 = vunpack.c.l.b16 %v316
    %v2156 = vunpack.c.h.b16 %v316
    %v2157 = vunpack.c.l.b16 %v317
    %v2158 = vunpack.c.h.b16 %v317
    %v2159 = vunpack.c.l.b16 %v318
    %v2160 = vunpack.c.h.b16 %v318
    %v2161 = vunpack.c.l.b16 %v319
    %v2162 = vunpack.c.h.b16 %v319
    %v2163 = vunpack.c.l.b16 %v320
    %v2164 = vunpack.c.h.b16 %v320
    %v2165 = vunpack.c.l.b16 %v321
    %v2166 = vunpack.c.h.b16 %v321
    %v2167 = vunpack.c.l.b16 %v322
    %v2168 = vunpack.c.h.b16 %v322
    %v2169 = vunpack.c.l.b16 %v323
    %v2170 = vunpack.c.h.b16 %v323
    %v2171 = vunpack.c.l.b16 %v324
    %v2172 = vunpack.c.h.b16 %v324
    %v2173 = vunpack.c.l.b16 %v325
    %v2174 = vunpack.c.h.b16 %v325
    %v2175 = vunpack.c.l.b16 %v326
    %v2176 = vunpack.c.h.b16 %v326
    %v2177 = vunpack.c.l.b16 %v327
    %v2178 = vunpack.c.h.b16 %v327
    %v2179 = vunpack.c.l.b16 %v328
    %v2180 = vunpack.c.h.b16 %v328
    %v2181 = vunpack.c.l.b16 %v329
    %v2182 = vunpack.c.h.b16 %v329
    %v2183 = vunpack.c.l.b16 %v330
    %v2184 = vunpack.c.h.b16 %v330
    %v2185 = vunpack.c.l.b16 %v331
    %v2186 = vunpack.c.h.b16 %v331
    %v2187 = vunpack.c.l.b16 %v332
    %v2188 = vunpack.c.h.b16 %v332
    %v2189 = vunpack.c.l.b16 %v333
    %v2190 = vunpack.c.h.b16 %v333
    %v2191 = vunpack.c.l.b16 %v334
    %v2192 = vunpack.c.h.b16 %v334
    %v2193 = vunpack.c.l.b16 %v335
    %v2194 = vunpack.c.h.b16 %v335
    %v2195 = vunpack.c.l.b16 %v336
    %v2196 = vunpack.c.h.b16 %v336
    %v2197 = vunpack.c.l.b16 %v337
    %v2198 = vunpack.c.h.b16 %v337
    %v2199 = vunpack.c.l.b16 %v338
    %v2200 = vunpack.c.h.b16 %v338
    %v2201 = vunpack.c.l.b16 %v339
    %v2202 = vunpack.c.h.b16 %v339
    %v2203 = vunpack.c.l.b16 %v340
    %v2204 = vunpack.c.h.b16 %v340
    %v2205 = vunpack.c.l.b16 %v341
    %v2206 = vunpack.c.h.b16 %v341
    %v2207 = vunpack.c.l.b16 %v342
    %v2208 = vunpack.c.h.b16 %v342
    %v2209 = vunpack.c.l.b16 %v343
    %v2210 = vunpack.c.h.b16 %v343
    %v2211 = vunpack.c.l.b16 %v344
    %v2212 = vunpack.c.h.b16 %v344
    %v2213 = vunpack.c.l.b16 %v345
    %v2214 = vunpack.c.h.b16 %v345
    %v2215 = vunpack.c.l.b16 %v346
    %v2216 = vunpack.c.h.b16 %v346
    %v2217 = vunpack.c.l.b16 %v347
    %v2218 = vunpack.c.h.b16 %v347
    %v2219 = vunpack.c.l.b16 %v348
    %v2220 = vunpack.c.h.b16 %v348
    %v2221 = vunpack.c.l.b16 %v349
    %v2222 = vunpack.c.h.b16 %v349
    %v2223 = vunpack.c.l.b16 %v350
    %v2224 = vunpack.c.h.b16 %v350
    %v2225 = vunpack.c.l.b16 %v351
    %v2226 = vunpack.c.h.b16 %v351
    %v2227 = vunpack.c.l.b16 %v352
    %v2228 = vunpack.c.h.b16 %v352
    %v2229 = vunpack.c.l.b16 %v353
    %v2230 = vunpack.c.h.b16 %v353
    %v2231 = vunpack.c.l.b16 %v354
    %v2232 = vunpack.c.h.b16 %v354
    %v2233 = vunpack.c.l.b16 %v355
    %v2234 = vunpack.c.h.b16 %v355
    %v2235 = vunpack.c.l.b16 %v356
    %v2236 = vunpack.c.h.b16 %v356
    %v2237 = vunpack.c.l.b16 %v357
    %v2238 = vunpack.c.h.b16 %v357
    %v2239 = vunpack.c.l.b16 %v358
    %v2240 = vunpack.c.h.b16 %v358
    %v2241 = vunpack.c.l.b16 %v359
    %v2242 = vunpack.c.h.b16 %v359
    %v2243 = vunpack.c.l.b16 %v360
    %v2244 = vunpack.c.h.b16 %v360
    %v2245 = vunpack.c.l.b16 %v361
    %v2246 = vunpack.c.h.b16 %v361
    %v2247 = vunpack.c.l.b16 %v362
    %v2248 = vunpack.c.h.b16 %v362
    %v2249 = vunpack.c.l.b16 %v363
    %v2250 = vunpack.c.h.b16 %v363
    %v2251 = vunpack.c.l.b16 %v364
    %v2252 = vunpack.c.h.b16 %v364
    %v2253 = vunpack.c.l.b16 %v365
    %v2254 = vunpack.c.h.b16 %v365
    %v2255 = vunpack.c.l.b16 %v366
    %v2256 = vunpack.c.h.b16 %v366
    %v2257 = vunpack.c.l.b16 %v367
    %v2258 = vunpack.c.h.b16 %v367
    %v2259 = vunpack.c.l.b16 %v368
    %v2260 = vunpack.c.h.b16 %v368
    %v2261 = vunpack.c.l.b16 %v369
    %v2262 = vunpack.c.h.b16 %v369
    %v2263 = vunpack.c.l.b16 %v370
    %v2264 = vunpack.c.h.b16 %v370
    %v2265 = vunpack.c.l.b16 %v371
    %v2266 = vunpack.c.h.b16 %v371
    %v2267 = vunpack.c.l.b16 %v372
    %v2268 = vunpack.c.h.b16 %v372
    %v2269 = vunpack.c.l.b16 %v373
    %v2270 = vunpack.c.h.b16 %v373
    %v2271 = vunpack.c.l.b16 %v374
    %v2272 = vunpack.c.h.b16 %v374
    %v2273 = vunpack.c.l.b16 %v375
    %v2274 = vunpack.c.h.b16 %v375
    %v2275 = vunpack.c.l.b16 %v376
    %v2276 = vunpack.c.h.b16 %v376
    %v2277 = vunpack.c.l.b16 %v377
    %v2278 = vunpack.c.h.b16 %v377
    %v2279 = vunpack.c.l.b16 %v378
    %v2280 = vunpack.c.h.b16 %v378
    %v2281 = vunpack.c.l.b16 %v379
    %v2282 = vunpack.c.h.b16 %v379
    %v2283 = vunpack.c.l.b16 %v380
    %v2284 = vunpack.c.h.b16 %v380
    %v2285 = vunpack.c.l.b16 %v381
    %v2286 = vunpack.c.h.b16 %v381
    %v2287 = vunpack.c.l.b16 %v382
    %v2288 = vunpack.c.h.b16 %v382
    %v2289 = vunpack.c.l.b16 %v383
    %v2290 = vunpack.c.h.b16 %v383
    %v2291 = vunpack.c.l.b16 %v384
    %v2292 = vunpack.c.h.b16 %v384
    %v2293 = vunpack.c.l.b16 %v385
    %v2294 = vunpack.c.h.b16 %v385
    %v2295 = vunpack.c.l.b16 %v386
    %v2296 = vunpack.c.h.b16 %v386
    %v2297 = vunpack.c.l.b16 %v387
    %v2298 = vunpack.c.h.b16 %v387
    %v2299 = vunpack.c.l.b16 %v388
    %v2300 = vunpack.c.h.b16 %v388
    %v2301 = vunpack.c.l.b16 %v389
    %v2302 = vunpack.c.h.b16 %v389
    %v2303 = vunpack.c.l.b16 %v390
    %v2304 = vunpack.c.h.b16 %v390
    %v2305 = vunpack.c.l.b16 %v391
    %v2306 = vunpack.c.h.b16 %v391
    %v2307 = vunpack.c.l.b16 %v392
    %v2308 = vunpack.c.h.b16 %v392
    %v2309 = vunpack.c.l.b16 %v393
    %v2310 = vunpack.c.h.b16 %v393
    %v2311 = vunpack.c.l.b16 %v394
    %v2312 = vunpack.c.h.b16 %v394
    %v2313 = vunpack.c.l.b16 %v395
    %v2314 = vunpack.c.h.b16 %v395
    %v2315 = vunpack.c.l.b16 %v396
    %v2316 = vunpack.c.h.b16 %v396
    %v2317 = vunpack.c.l.b16 %v397
    %v2318 = vunpack.c.h.b16 %v397
    %v2319 = vunpack.c.l.b16 %v398
    %v2320 = vunpack.c.h.b16 %v398
    %v2321 = vunpack.c.l.b16 %v399
    %v2322 = vunpack.c.h.b16 %v399
    %v2323 = vunpack.c.l.b16 %v400
    %v2324 = vunpack.c.h.b16 %v400
    %v2325 = vunpack.c.l.b16 %v401
    %v2326 = vunpack.c.h.b16 %v401
    %v2327 = vunpack.c.l.b16 %v402
    %v2328 = vunpack.c.h.b16 %v402
    %v2329 = vunpack.c.l.b16 %v403
    %v2330 = vunpack.c.h.b16 %v403
    %v2331 = vunpack.c.l.b16 %v404
    %v2332 = vunpack.c.h.b16 %v404
    %v2333 = vunpack.c.l.b16 %v405
    %v2334 = vunpack.c.h.b16 %v405
    %v2335 = vunpack.c.l.b16 %v406
    %v2336 = vunpack.c.h.b16 %v406
    %v2337 = vunpack.c.l.b16 %v407
    %v2338 = vunpack.c.h.b16 %v407
    %v2339 = vunpack.c.l.b16 %v408
    %v2340 = vunpack.c.h.b16 %v408
    %v2341 = vunpack.c.l.b16 %v409
    %v2342 = vunpack.c.h.b16 %v409
    %v2343 = vunpack.c.l.b16 %v410
    %v2344 = vunpack.c.h.b16 %v410
    %v2345 = vunpack.c.l.b16 %v411
    %v2346 = vunpack.c.h.b16 %v411
    %v2347 = vunpack.c.l.b16 %v412
    %v2348 = vunpack.c.h.b16 %v412
    %v2349 = vunpack.c.l.b16 %v413
    %v2350 = vunpack.c.h.b16 %v413
    %v2351 = vunpack.c.l.b16 %v414
    %v2352 = vunpack.c.h.b16 %v414
    %v2353 = vunpack.c.l.b16 %v415
    %v2354 = vunpack.c.h.b16 %v415
    %v2355 = vunpack.c.l.b16 %v416
    %v2356 = vunpack.c.h.b16 %v416
    %v2357 = vunpack.c.l.b16 %v417
    %v2358 = vunpack.c.h.b16 %v417
    %v2359 = vunpack.c.l.b16 %v418
    %v2360 = vunpack.c.h.b16 %v418
    %v2361 = vunpack.c.l.b16 %v419
    %v2362 = vunpack.c.h.b16 %v419
    %v2363 = vunpack.c.l.b16 %v420
    %v2364 = vunpack.c.h.b16 %v420
    %v2365 = vunpack.c.l.b16 %v421
    %v2366 = vunpack.c.h.b16 %v421
    %v2367 = vunpack.c.l.b16 %v422
    %v2368 = vunpack.c.h.b16 %v422
    %v2369 = vunpack.c.l.b16 %v423
    %v2370 = vunpack.c.h.b16 %v423
    %v2371 = vunpack.c.l.b16 %v424
    %v2372 = vunpack.c.h.b16 %v424
    %v2373 = vunpack.c.l.b16 %v425
    %v2374 = vunpack.c.h.b16 %v425
    %v2375 = vunpack.c.l.b16 %v426
    %v2376 = vunpack.c.h.b16 %v426
    %v2377 = vunpack.c.l.b16 %v427
    %v2378 = vunpack.c.h.b16 %v427
    %v2379 = vunpack.c.l.b16 %v428
    %v2380 = vunpack.c.h.b16 %v428
    %v2381 = vunpack.c.l.b16 %v429
    %v2382 = vunpack.c.h.b16 %v429
    %v2383 = vunpack.c.l.b16 %v430
    %v2384 = vunpack.c.h.b16 %v430
    %v2385 = vunpack.c.l.b16 %v431
    %v2386 = vunpack.c.h.b16 %v431
    %v2387 = vunpack.c.l.b16 %v432
    %v2388 = vunpack.c.h.b16 %v432
    %v2389 = vunpack.c.l.b16 %v433
    %v2390 = vunpack.c.h.b16 %v433
    %v2391 = vunpack.c.l.b16 %v434
    %v2392 = vunpack.c.h.b16 %v434
    %v2393 = vunpack.c.l.b16 %v435
    %v2394 = vunpack.c.h.b16 %v435
    %v2395 = vunpack.c.l.b16 %v436
    %v2396 = vunpack.c.h.b16 %v436
    %v2397 = vunpack.c.l.b16 %v437
    %v2398 = vunpack.c.h.b16 %v437
    %v2399 = vunpack.c.l.b16 %v438
    %v2400 = vunpack.c.h.b16 %v438
    %v2401 = vunpack.c.l.b16 %v439
    %v2402 = vunpack.c.h.b16 %v439
    %v2403 = vunpack.c.l.b16 %v440
    %v2404 = vunpack.c.h.b16 %v440
    %v2405 = vunpack.c.l.b16 %v441
    %v2406 = vunpack.c.h.b16 %v441
    %v2407 = vunpack.c.l.b16 %v442
    %v2408 = vunpack.c.h.b16 %v442
    %v2409 = vunpack.c.l.b16 %v443
    %v2410 = vunpack.c.h.b16 %v443
    %v2411 = vunpack.c.l.b16 %v444
    %v2412 = vunpack.c.h.b16 %v444
    %v2413 = vunpack.c.l.b16 %v445
    %v2414 = vunpack.c.h.b16 %v445
    %v2415 = vunpack.c.l.b16 %v446
    %v2416 = vunpack.c.h.b16 %v446
    %v2417 = vunpack.c.l.b16 %v447
    %v2418 = vunpack.c.h.b16 %v447
    %v2419 = vunpack.c.l.b16 %v448
    %v2420 = vunpack.c.h.b16 %v448
    %v2421 = vunpack.c.l.b16 %v449
    %v2422 = vunpack.c.h.b16 %v449
    %v2423 = vunpack.c.l.b16 %v450
    %v2424 = vunpack.c.h.b16 %v450
    %v2425 = vunpack.c.l.b16 %v451
    %v2426 = vunpack.c.h.b16 %v451
    %v2427 = vunpack.c.l.b16 %v452
    %v2428 = vunpack.c.h.b16 %v452
    %v2429 = vunpack.c.l.b16 %v453
    %v2430 = vunpack.c.h.b16 %v453
    %v2431 = vunpack.c.l.b16 %v454
    %v2432 = vunpack.c.h.b16 %v454
    %v2433 = vunpack.c.l.b16 %v455
    %v2434 = vunpack.c.h.b16 %v455
    %v2435 = vunpack.c.l.b16 %v456
    %v2436 = vunpack.c.h.b16 %v456
    %v2437 = vunpack.c.l.b16 %v457
    %v2438 = vunpack.c.h.b16 %v457
    %v2439 = vunpack.c.l.b16 %v458
    %v2440 = vunpack.c.h.b16 %v458
    %v2441 = vunpack.c.l.b16 %v459
    %v2442 = vunpack.c.h.b16 %v459
    %v2443 = vunpack.c.l.b16 %v460
    %v2444 = vunpack.c.h.b16 %v460
    %v2445 = vunpack.c.l.b16 %v461
    %v2446 = vunpack.c.h.b16 %v461
    %v2447 = vunpack.c.l.b16 %v462
    %v2448 = vunpack.c.h.b16 %v462
    %v2449 = vunpack.c.l.b16 %v463
    %v2450 = vunpack.c.h.b16 %v463
    %v2451 = vunpack.c.l.b16 %v464
    %v2452 = vunpack.c.h.b16 %v464
    %v2453 = vunpack.c.l.b16 %v465
    %v2454 = vunpack.c.h.b16 %v465
    %v2455 = vunpack.c.l.b16 %v466
    %v2456 = vunpack.c.h.b16 %v466
    %v2457 = vunpack.c.l.b16 %v467
    %v2458 = vunpack.c.h.b16 %v467
    %v2459 = vunpack.c.l.b16 %v468
    %v2460 = vunpack.c.h.b16 %v468
    %v2461 = vunpack.c.l.b16 %v469
    %v2462 = vunpack.c.h.b16 %v469
    %v2463 = vunpack.c.l.b16 %v470
    %v2464 = vunpack.c.h.b16 %v470
    %v2465 = vunpack.c.l.b16 %v471
    %v2466 = vunpack.c.h.b16 %v471
    %v2467 = vunpack.c.l.b16 %v472
    %v2468 = vunpack.c.h.b16 %v472
    %v2469 = vunpack.c.l.b16 %v473
    %v2470 = vunpack.c.h.b16 %v473
    %v2471 = vunpack.c.l.b16 %v474
    %v2472 = vunpack.c.h.b16 %v474
    %v2473 = vunpack.c.l.b16 %v475
    %v2474 = vunpack.c.h.b16 %v475
    %v2475 = vunpack.c.l.b16 %v476
    %v2476 = vunpack.c.h.b16 %v476
    %v2477 = vunpack.c.l.b16 %v477
    %v2478 = vunpack.c.h.b16 %v477
    %v2479 = vunpack.c.l.b16 %v478
    %v2480 = vunpack.c.h.b16 %v478
    %v2481 = vunpack.c.l.b16 %v479
    %v2482 = vunpack.c.h.b16 %v479
    %v2483 = vunpack.c.l.b16 %v480
    %v2484 = vunpack.c.h.b16 %v480
    %v2485 = vunpack.c.l.b16 %v481
    %v2486 = vunpack.c.h.b16 %v481
    %v2487 = vunpack.c.l.b16 %v482
    %v2488 = vunpack.c.h.b16 %v482
    %v2489 = vunpack.c.l.b16 %v483
    %v2490 = vunpack.c.h.b16 %v483
    %v2491 = vunpack.c.l.b16 %v484
    %v2492 = vunpack.c.h.b16 %v484
    %v2493 = vunpack.c.l.b16 %v485
    %v2494 = vunpack.c.h.b16 %v485
    %v2495 = vunpack.c.l.b16 %v486
    %v2496 = vunpack.c.h.b16 %v486
    %v2497 = vunpack.c.l.b16 %v487
    %v2498 = vunpack.c.h.b16 %v487
    %v2499 = vunpack.c.l.b16 %v488
    %v2500 = vunpack.c.h.b16 %v488
    %v2501 = vunpack.c.l.b16 %v489
    %v2502 = vunpack.c.h.b16 %v489
    %v2503 = vunpack.c.l.b16 %v490
    %v2504 = vunpack.c.h.b16 %v490
    %v2505 = vunpack.c.l.b16 %v491
    %v2506 = vunpack.c.h.b16 %v491
    %v2507 = vunpack.c.l.b16 %v492
    %v2508 = vunpack.c.h.b16 %v492
    %v2509 = vunpack.c.l.b16 %v493
    %v2510 = vunpack.c.h.b16 %v493
    %v2511 = vunpack.c.l.b16 %v494
    %v2512 = vunpack.c.h.b16 %v494
    %v2513 = vunpack.c.l.b16 %v495
    %v2514 = vunpack.c.h.b16 %v495
    %v2515 = vunpack.c.l.b16 %v496
    %v2516 = vunpack.c.h.b16 %v496
    %v2517 = vunpack.c.l.b16 %v497
    %v2518 = vunpack.c.h.b16 %v497
    %v2519 = vunpack.c.l.b16 %v498
    %v2520 = vunpack.c.h.b16 %v498
    %v2521 = vunpack.c.l.b16 %v499
    %v2522 = vunpack.c.h.b16 %v499
    %v2523 = vunpack.c.l.b16 %v500
    %v2524 = vunpack.c.h.b16 %v500
    %v2525 = vunpack.c.l.b16 %v501
    %v2526 = vunpack.c.h.b16 %v501
    %v2527 = vunpack.c.l.b16 %v502
    %v2528 = vunpack.c.h.b16 %v502
    %v2529 = vunpack.c.l.b16 %v503
    %v2530 = vunpack.c.h.b16 %v503
    %v2531 = vunpack.c.l.b16 %v504
    %v2532 = vunpack.c.h.b16 %v504
    %v2533 = vunpack.c.l.b16 %v505
    %v2534 = vunpack.c.h.b16 %v505
    %v2535 = vunpack.c.l.b16 %v506
    %v2536 = vunpack.c.h.b16 %v506
    %v2537 = vunpack.c.l.b16 %v507
    %v2538 = vunpack.c.h.b16 %v507
    %v2539 = vunpack.c.l.b16 %v508
    %v2540 = vunpack.c.h.b16 %v508
    %v2541 = vunpack.c.l.b16 %v509
    %v2542 = vunpack.c.h.b16 %v509
    %v2543 = vunpack.c.l.b16 %v510
    %v2544 = vunpack.c.h.b16 %v510
    %v2545 = vunpack.c.l.b16 %v511
    %v2546 = vunpack.c.h.b16 %v511
    %v2547 = vunpack.c.l.b16 %v512
    %v2548 = vunpack.c.h.b16 %v512
    %v2549 = vunpack.c.l.b16 %v513
    %v2550 = vunpack.c.h.b16 %v513
    %v2551 = vunpack.c.l.b16 %v514
    %v2552 = vunpack.c.h.b16 %v514
    %v2553 = vunpack.c.l.b16 %v515
    %v2554 = vunpack.c.h.b16 %v515
    %v2555 = vunpack.c.l.b16 %v516
    %v2556 = vunpack.c.h.b16 %v516
    %v2557 = vunpack.c.l.b16 %v517
    %v2558 = vunpack.c.h.b16 %v517
    %v2559 = vunpack.c.l.b16 %v518
    %v2560 = vunpack.c.h.b16 %v518
    %v2561 = vunpack.c.l.b16 %v519
    %v2562 = vunpack.c.h.b16 %v519
    %v2563 = vunpack.c.l.b16 %v520
    %v2564 = vunpack.c.h.b16 %v520
    %v2565 = vunpack.c.l.b16 %v521
    %v2566 = vunpack.c.h.b16 %v521
    %v2567 = vunpack.c.l.b16 %v522
    %v2568 = vunpack.c.h.b16 %v522
    %v2569 = vunpack.c.l.b16 %v523
    %v2570 = vunpack.c.h.b16 %v523
    %v2571 = vunpack.c.l.b16 %v524
    %v2572 = vunpack.c.h.b16 %v524
    %v2573 = vunpack.c.l.b16 %v525
    %v2574 = vunpack.c.h.b16 %v525
    %v2575 = vunpack.c.l.b16 %v526
    %v2576 = vunpack.c.h.b16 %v526
    %v2577 = vunpack.c.l.b16 %v527
    %v2578 = vunpack.c.h.b16 %v527
    %v2579 = vunpack.c.l.b16 %v528
    %v2580 = vunpack.c.h.b16 %v528
    %v2581 = vunpack.c.l.b16 %v529
    %v2582 = vunpack.c.h.b16 %v529
    %v2583 = vunpack.c.l.b16 %v530
    %v2584 = vunpack.c.h.b16 %v530
    %v2585 = vunpack.c.l.b16 %v531
    %v2586 = vunpack.c.h.b16 %v531
    %v2587 = vunpack.c.l.b16 %v532
    %v2588 = vunpack.c.h.b16 %v532
    %v2589 = vunpack.c.l.b16 %v533
    %v2590 = vunpack.c.h.b16 %v533
    %v2591 = vunpack.c.l.b16 %v534
    %v2592 = vunpack.c.h.b16 %v534
    %v2593 = vunpack.c.l.b16 %v535
    %v2594 = vunpack.c.h.b16 %v535
    %v2595 = vunpack.c.l.b16 %v536
    %v2596 = vunpack.c.h.b16 %v536
    %v2597 = vunpack.c.l.b16 %v537
    %v2598 = vunpack.c.h.b16 %v537
    %v2599 = vunpack.c.l.b16 %v538
    %v2600 = vunpack.c.h.b16 %v538
    %v2601 = vunpack.c.l.b16 %v539
    %v2602 = vunpack.c.h.b16 %v539
    %v2603 = vunpack.c.l.b16 %v540
    %v2604 = vunpack.c.h.b16 %v540
    %v2605 = vunpack.c.l.b16 %v541
    %v2606 = vunpack.c.h.b16 %v541
    %v2607 = vunpack.c.l.b16 %v542
    %v2608 = vunpack.c.h.b16 %v542
    %v2609 = vunpack.c.l.b16 %v543
    %v2610 = vunpack.c.h.b16 %v543
    %v2611 = vunpack.c.l.b16 %v544
    %v2612 = vunpack.c.h.b16 %v544
    %v2613 = vunpack.c.l.b16 %v545
    %v2614 = vunpack.c.h.b16 %v545
    %v2615 = vunpack.c.l.b16 %v546
    %v2616 = vunpack.c.h.b16 %v546
    %v2617 = vunpack.c.l.b16 %v547
    %v2618 = vunpack.c.h.b16 %v547
    %v2619 = vunpack.c.l.b16 %v548
    %v2620 = vunpack.c.h.b16 %v548
    %v2621 = vunpack.c.l.b16 %v549
    %v2622 = vunpack.c.h.b16 %v549
    %v2623 = vunpack.c.l.b16 %v550
    %v2624 = vunpack.c.h.b16 %v550
    %v2625 = vunpack.c.l.b16 %v551
    %v2626 = vunpack.c.h.b16 %v551
    %v2627 = vunpack.c.l.b16 %v552
    %v2628 = vunpack.c.h.b16 %v552
    %v2629 = vunpack.c.l.b16 %v553
    %v2630 = vunpack.c.h.b16 %v553
    %v2631 = vunpack.c.l.b16 %v554
    %v2632 = vunpack.c.h.b16 %v554
    %v2633 = vunpack.c.l.b16 %v555
    %v2634 = vunpack.c.h.b16 %v555
    %v2635 = vunpack.c.l.b16 %v556
    %v2636 = vunpack.c.h.b16 %v556
    %v2637 = vunpack.c.l.b16 %v557
    %v2638 = vunpack.c.h.b16 %v557
    %v2639 = vunpack.c.l.b16 %v558
    %v2640 = vunpack.c.h.b16 %v558
    %v2641 = vunpack.c.l.b16 %v559
    %v2642 = vunpack.c.h.b16 %v559
    %v2643 = vunpack.c.l.b16 %v560
    %v2644 = vunpack.c.h.b16 %v560
    %v2645 = vunpack.c.l.b16 %v561
    %v2646 = vunpack.c.h.b16 %v561
    %v2647 = vunpack.c.l.b16 %v562
    %v2648 = vunpack.c.h.b16 %v562
    %v2649 = vunpack.c.l.b16 %v563
    %v2650 = vunpack.c.h.b16 %v563
    %v2651 = vunpack.c.l.b16 %v564
    %v2652 = vunpack.c.h.b16 %v564
    %v2653 = vunpack.c.l.b16 %v565
    %v2654 = vunpack.c.h.b16 %v565
    %v2655 = vunpack.c.l.b16 %v566
    %v2656 = vunpack.c.h.b16 %v566
    %v2657 = vunpack.c.l.b16 %v567
    %v2658 = vunpack.c.h.b16 %v567
    %v2659 = vunpack.c.l.b16 %v568
    %v2660 = vunpack.c.h.b16 %v568
    %v2661 = vunpack.c.l.b16 %v569
    %v2662 = vunpack.c.h.b16 %v569
    %v2663 = vunpack.c.l.b16 %v570
    %v2664 = vunpack.c.h.b16 %v570
    %v2665 = vunpack.c.l.b16 %v571
    %v2666 = vunpack.c.h.b16 %v571
    %v2667 = vunpack.c.l.b16 %v572
    %v2668 = vunpack.c.h.b16 %v572
    %v2669 = vunpack.c.l.b16 %v573
    %v2670 = vunpack.c.h.b16 %v573
    %v2671 = vunpack.c.l.b16 %v574
    %v2672 = vunpack.c.h.b16 %v574
    %v2673 = vunpack.c.l.b16 %v575
    %v2674 = vunpack.c.h.b16 %v575
    %v2675 = vunpack.c.l.b16 %v576
    %v2676 = vunpack.c.h.b16 %v576
    %v2677 = vunpack.c.l.b16 %v577
    %v2678 = vunpack.c.h.b16 %v577
    %v2679 = vunpack.c.l.b16 %v578
    %v2680 = vunpack.c.h.b16 %v578
    %v2681 = vunpack.c.l.b16 %v579
    %v2682 = vunpack.c.h.b16 %v579
    %v2683 = vunpack.c.l.b16 %v580
    %v2684 = vunpack.c.h.b16 %v580
    %v2685 = vunpack.c.l.b16 %v581
    %v2686 = vunpack.c.h.b16 %v581
    %v2687 = vunpack.c.l.b16 %v582
    %v2688 = vunpack.c.h.b16 %v582
    %v2689 = vunpack.c.l.b16 %v583
    %v2690 = vunpack.c.h.b16 %v583
    %v2691 = vunpack.c.l.b16 %v584
    %v2692 = vunpack.c.h.b16 %v584
    %v2693 = vunpack.c.l.b16 %v585
    %v2694 = vunpack.c.h.b16 %v585
    %v2695 = vunpack.c.l.b16 %v586
    %v2696 = vunpack.c.h.b16 %v586
    %v2697 = vunpack.c.l.b16 %v587
    %v2698 = vunpack.c.h.b16 %v587
    %v2699 = vunpack.c.l.b16 %v588
    %v2700 = vunpack.c.h.b16 %v588
    %v2701 = vunpack.c.l.b16 %v589
    %v2702 = vunpack.c.h.b16 %v589
    %v2703 = vunpack.c.l.b16 %v590
    %v2704 = vunpack.c.h.b16 %v590
    %v2705 = vunpack.c.l.b16 %v591
    %v2706 = vunpack.c.h.b16 %v591
    %v2707 = vunpack.c.l.b16 %v592
    %v2708 = vunpack.c.h.b16 %v592
    %v2709 = vunpack.c.l.b16 %v593
    %v2710 = vunpack.c.h.b16 %v593
    %v2711 = vunpack.c.l.b16 %v594
    %v2712 = vunpack.c.h.b16 %v594
    %v2713 = vunpack.c.l.b16 %v595
    %v2714 = vunpack.c.h.b16 %v595
    %v2715 = vunpack.c.l.b16 %v596
    %v2716 = vunpack.c.h.b16 %v596
    %v2717 = vunpack.c.l.b16 %v597
    %v2718 = vunpack.c.h.b16 %v597
    %v2719 = vunpack.c.l.b16 %v598
    %v2720 = vunpack.c.h.b16 %v598
    %v2721 = vunpack.c.l.b16 %v599
    %v2722 = vunpack.c.h.b16 %v599
    %v2723 = vunpack.c.l.b16 %v600
    %v2724 = vunpack.c.h.b16 %v600
    %v2725 = vunpack.c.l.b16 %v601
    %v2726 = vunpack.c.h.b16 %v601
    %v2727 = vunpack.c.l.b16 %v602
    %v2728 = vunpack.c.h.b16 %v602
    %v2729 = vunpack.c.l.b16 %v603
    %v2730 = vunpack.c.h.b16 %v603
    %v2731 = vunpack.c.l.b16 %v604
    %v2732 = vunpack.c.h.b16 %v604
    %v2733 = vunpack.c.l.b16 %v605
    %v2734 = vunpack.c.h.b16 %v605
    %v2735 = vunpack.c.l.b16 %v606
    %v2736 = vunpack.c.h.b16 %v606
    %v2737 = vunpack.c.l.b16 %v607
    %v2738 = vunpack.c.h.b16 %v607
    %v2739 = vunpack.c.l.b16 %v608
    %v2740 = vunpack.c.h.b16 %v608
    %v2741 = vunpack.c.l.b16 %v609
    %v2742 = vunpack.c.h.b16 %v609
    %v2743 = vunpack.c.l.b16 %v610
    %v2744 = vunpack.c.h.b16 %v610
    %v2745 = vunpack.c.l.b16 %v611
    %v2746 = vunpack.c.h.b16 %v611
    %v2747 = vunpack.c.l.b16 %v612
    %v2748 = vunpack.c.h.b16 %v612
    %v2749 = vunpack.c.l.b16 %v613
    %v2750 = vunpack.c.h.b16 %v613
    %v2751 = vunpack.c.l.b16 %v614
    %v2752 = vunpack.c.h.b16 %v614
    %v2753 = vunpack.c.l.b16 %v615
    %v2754 = vunpack.c.h.b16 %v615
    %v2755 = vunpack.c.l.b16 %v616
    %v2756 = vunpack.c.h.b16 %v616
    %v2757 = vunpack.c.l.b16 %v617
    %v2758 = vunpack.c.h.b16 %v617
    %v2759 = vunpack.c.l.b16 %v618
    %v2760 = vunpack.c.h.b16 %v618
    %v2761 = vunpack.c.l.b16 %v619
    %v2762 = vunpack.c.h.b16 %v619
    %v2763 = vunpack.c.l.b16 %v620
    %v2764 = vunpack.c.h.b16 %v620
    %v2765 = vunpack.c.l.b16 %v621
    %v2766 = vunpack.c.h.b16 %v621
    %v2767 = vunpack.c.l.b16 %v622
    %v2768 = vunpack.c.h.b16 %v622
    %v2769 = vunpack.c.l.b16 %v623
    %v2770 = vunpack.c.h.b16 %v623
    %v2771 = vunpack.c.l.b16 %v624
    %v2772 = vunpack.c.h.b16 %v624
    %v2773 = vunpack.c.l.b16 %v625
    %v2774 = vunpack.c.h.b16 %v625
    %v2775 = vunpack.c.l.b16 %v626
    %v2776 = vunpack.c.h.b16 %v626
    %v2777 = vunpack.c.l.b16 %v627
    %v2778 = vunpack.c.h.b16 %v627
    %v2779 = vunpack.c.l.b16 %v628
    %v2780 = vunpack.c.h.b16 %v628
    %v2781 = vunpack.c.l.b16 %v629
    %v2782 = vunpack.c.h.b16 %v629
    %v2783 = vunpack.c.l.b16 %v630
    %v2784 = vunpack.c.h.b16 %v630
    %v2785 = vunpack.c.l.b16 %v631
    %v2786 = vunpack.c.h.b16 %v631
    %v2787 = vunpack.c.l.b16 %v632
    %v2788 = vunpack.c.h.b16 %v632
    %v2789 = vunpack.c.l.b16 %v633
    %v2790 = vunpack.c.h.b16 %v633
    %v2791 = vunpack.c.l.b16 %v634
    %v2792 = vunpack.c.h.b16 %v634
    %v2793 = vunpack.c.l.b16 %v635
    %v2794 = vunpack.c.h.b16 %v635
    %v2795 = vunpack.c.l.b16 %v636
    %v2796 = vunpack.c.h.b16 %v636
    %v2797 = vunpack.c.l.b16 %v637
    %v2798 = vunpack.c.h.b16 %v637
    %v2799 = vunpack.c.l.b16 %v638
    %v2800 = vunpack.c.h.b16 %v638
    %v2801 = vunpack.c.l.b16 %v639
    %v2802 = vunpack.c.h.b16 %v639
    %v2803 = vunpack.c.l.b16 %v640
    %v2804 = vunpack.c.h.b16 %v640
    %v2805 = vunpack.c.l.b16 %v641
    %v2806 = vunpack.c.h.b16 %v641
    %v2807 = vunpack.c.l.b16 %v642
    %v2808 = vunpack.c.h.b16 %v642
    %v2809 = vunpack.c.l.b16 %v643
    %v2810 = vunpack.c.h.b16 %v643
    %v2811 = vunpack.c.l.b16 %v644
    %v2812 = vunpack.c.h.b16 %v644
    %v2813 = vunpack.c.l.b16 %v645
    %v2814 = vunpack.c.h.b16 %v645
    %v2815 = vunpack.c.l.b16 %v646
    %v2816 = vunpack.c.h.b16 %v646
    %v2817 = vunpack.c.l.b16 %v647
    %v2818 = vunpack.c.h.b16 %v647
    %v2819 = vunpack.c.l.b16 %v648
    %v2820 = vunpack.c.h.b16 %v648
    %v2821 = vunpack.c.l.b16 %v649
    %v2822 = vunpack.c.h.b16 %v649
    %v2823 = vunpack.c.l.b16 %v650
    %v2824 = vunpack.c.h.b16 %v650
    %v2825 = vunpack.c.l.b16 %v651
    %v2826 = vunpack.c.h.b16 %v651
    %v2827 = vunpack.c.l.b16 %v652
    %v2828 = vunpack.c.h.b16 %v652
    %v2829 = vunpack.c.l.b16 %v653
    %v2830 = vunpack.c.h.b16 %v653
    %v2831 = vunpack.c.l.b16 %v654
    %v2832 = vunpack.c.h.b16 %v654
    %v2833 = vunpack.c.l.b16 %v655
    %v2834 = vunpack.c.h.b16 %v655
    %v2835 = vunpack.c.l.b16 %v656
    %v2836 = vunpack.c.h.b16 %v656
    %v2837 = vunpack.c.l.b16 %v657
    %v2838 = vunpack.c.h.b16 %v657
    %v2839 = vunpack.c.l.b16 %v658
    %v2840 = vunpack.c.h.b16 %v658
    %v2841 = vunpack.c.l.b16 %v659
    %v2842 = vunpack.c.h.b16 %v659
    %v2843 = vunpack.c.l.b16 %v660
    %v2844 = vunpack.c.h.b16 %v660
    %v2845 = vunpack.c.l.b16 %v661
    %v2846 = vunpack.c.h.b16 %v661
    %v2847 = vunpack.c.l.b16 %v662
    %v2848 = vunpack.c.h.b16 %v662
    %v2849 = vunpack.c.l.b16 %v663
    %v2850 = vunpack.c.h.b16 %v663
    %v2851 = vunpack.c.l.b16 %v664
    %v2852 = vunpack.c.h.b16 %v664
    %v2853 = vunpack.c.l.b16 %v665
    %v2854 = vunpack.c.h.b16 %v665
    %v2855 = vunpack.c.l.b16 %v666
    %v2856 = vunpack.c.h.b16 %v666
    %v2857 = vunpack.c.l.b16 %v667
    %v2858 = vunpack.c.h.b16 %v667
    %v2859 = vunpack.c.l.b16 %v668
    %v2860 = vunpack.c.h.b16 %v668
    %v2861 = vunpack.c.l.b16 %v669
    %v2862 = vunpack.c.h.b16 %v669
    %v2863 = vunpack.c.l.b16 %v670
    %v2864 = vunpack.c.h.b16 %v670
    %v2865 = vunpack.c.l.b16 %v671
    %v2866 = vunpack.c.h.b16 %v671
    %v2867 = vunpack.c.l.b16 %v672
    %v2868 = vunpack.c.h.b16 %v672
    %v2869 = vunpack.c.l.b16 %v673
    %v2870 = vunpack.c.h.b16 %v673
    %v2871 = vunpack.c.l.b16 %v674
    %v2872 = vunpack.c.h.b16 %v674
    %v2873 = vunpack.c.l.b16 %v675
    %v2874 = vunpack.c.h.b16 %v675
    %v2875 = vunpack.c.l.b16 %v676
    %v2876 = vunpack.c.h.b16 %v676
    %v2877 = vunpack.c.l.b16 %v677
    %v2878 = vunpack.c.h.b16 %v677
    %v2879 = vunpack.c.l.b16 %v678
    %v2880 = vunpack.c.h.b16 %v678
    %v2881 = vunpack.c.l.b16 %v679
    %v2882 = vunpack.c.h.b16 %v679
    %v2883 = vunpack.c.l.b16 %v680
    %v2884 = vunpack.c.h.b16 %v680
    %v2885 = vunpack.c.l.b16 %v681
    %v2886 = vunpack.c.h.b16 %v681
    %v2887 = vunpack.c.l.b16 %v682
    %v2888 = vunpack.c.h.b16 %v682
    %v2889 = vunpack.c.l.b16 %v683
    %v2890 = vunpack.c.h.b16 %v683
    %v2891 = vunpack.c.l.b16 %v684
    %v2892 = vunpack.c.h.b16 %v684
    %v2893 = vunpack.c.l.b16 %v685
    %v2894 = vunpack.c.h.b16 %v685
    %v2895 = vunpack.c.l.b16 %v686
    %v2896 = vunpack.c.h.b16 %v686
    %v2897 = vunpack.c.l.b16 %v687
    %v2898 = vunpack.c.h.b16 %v687
    %v2899 = vunpack.c.l.b16 %v688
    %v2900 = vunpack.c.h.b16 %v688
    %v2901 = vunpack.c.l.b16 %v689
    %v2902 = vunpack.c.h.b16 %v689
    %v2903 = vunpack.c.l.b16 %v690
    %v2904 = vunpack.c.h.b16 %v690
    %v2905 = vunpack.c.l.b16 %v691
    %v2906 = vunpack.c.h.b16 %v691
    %v2907 = vunpack.c.l.b16 %v692
    %v2908 = vunpack.c.h.b16 %v692
    %v2909 = vunpack.c.l.b16 %v693
    %v2910 = vunpack.c.h.b16 %v693
    %v2911 = vunpack.c.l.b16 %v694
    %v2912 = vunpack.c.h.b16 %v694
    %v2913 = vunpack.c.l.b16 %v695
    %v2914 = vunpack.c.h.b16 %v695
    %v2915 = vunpack.c.l.b16 %v696
    %v2916 = vunpack.c.h.b16 %v696
    %v2917 = vunpack.c.l.b16 %v697
    %v2918 = vunpack.c.h.b16 %v697
    %v2919 = vunpack.c.l.b16 %v698
    %v2920 = vunpack.c.h.b16 %v698
    %v2921 = vunpack.c.l.b16 %v699
    %v2922 = vunpack.c.h.b16 %v699
    %v2923 = vunpack.c.l.b16 %v700
    %v2924 = vunpack.c.h.b16 %v700
    %v2925 = vunpack.c.l.b16 %v701
    %v2926 = vunpack.c.h.b16 %v701
    %v2927 = vunpack.c.l.b16 %v702
    %v2928 = vunpack.c.h.b16 %v702
    %v2929 = vunpack.c.l.b16 %v703
    %v2930 = vunpack.c.h.b16 %v703
    %v2931 = vunpack.c.l.b16 %v704
    %v2932 = vunpack.c.h.b16 %v704
    %v2933 = vunpack.c.l.b16 %v705
    %v2934 = vunpack.c.h.b16 %v705
    %v2935 = vunpack.c.l.b16 %v706
    %v2936 = vunpack.c.h.b16 %v706
    %v2937 = vunpack.c.l.b16 %v707
    %v2938 = vunpack.c.h.b16 %v707
    %v2939 = vunpack.c.l.b16 %v708
    %v2940 = vunpack.c.h.b16 %v708
    %v2941 = vunpack.c.l.b16 %v709
    %v2942 = vunpack.c.h.b16 %v709
    %v2943 = vunpack.c.l.b16 %v710
    %v2944 = vunpack.c.h.b16 %v710
    %v2945 = vunpack.c.l.b16 %v711
    %v2946 = vunpack.c.h.b16 %v711
    %v2947 = vunpack.c.l.b16 %v712
    %v2948 = vunpack.c.h.b16 %v712
    %v2949 = vunpack.c.l.b16 %v713
    %v2950 = vunpack.c.h.b16 %v713
    %v2951 = vunpack.c.l.b16 %v714
    %v2952 = vunpack.c.h.b16 %v714
    %v2953 = vunpack.c.l.b16 %v715
    %v2954 = vunpack.c.h.b16 %v715
    %v2955 = vunpack.c.l.b16 %v716
    %v2956 = vunpack.c.h.b16 %v716
    %v2957 = vunpack.c.l.b16 %v717
    %v2958 = vunpack.c.h.b16 %v717
    %v2959 = vunpack.c.l.b16 %v718
    %v2960 = vunpack.c.h.b16 %v718
    %v2961 = vunpack.c.l.b16 %v719
    %v2962 = vunpack.c.h.b16 %v719
    %v2963 = vunpack.c.l.b16 %v720
    %v2964 = vunpack.c.h.b16 %v720
    %v2965 = vunpack.c.l.b16 %v721
    %v2966 = vunpack.c.h.b16 %v721
    %v2967 = vunpack.c.l.b16 %v722
    %v2968 = vunpack.c.h.b16 %v722
    %v2969 = vunpack.c.l.b16 %v723
    %v2970 = vunpack.c.h.b16 %v723
    %v2971 = vunpack.c.l.b16 %v724
    %v2972 = vunpack.c.h.b16 %v724
    %v2973 = vunpack.c.l.b16 %v725
    %v2974 = vunpack.c.h.b16 %v725
    %v2975 = vunpack.c.l.b16 %v726
    %v2976 = vunpack.c.h.b16 %v726
    %v2977 = vunpack.c.l.b16 %v727
    %v2978 = vunpack.c.h.b16 %v727
    %v2979 = vunpack.c.l.b16 %v728
    %v2980 = vunpack.c.h.b16 %v728
    %v2981 = vunpack.c.l.b16 %v729
    %v2982 = vunpack.c.h.b16 %v729
    %v2983 = vunpack.c.l.b16 %v730
    %v2984 = vunpack.c.h.b16 %v730
    %v2985 = vunpack.c.l.b16 %v731
    %v2986 = vunpack.c.h.b16 %v731
    %v2987 = vunpack.c.l.b16 %v732
    %v2988 = vunpack.c.h.b16 %v732
    %v2989 = vunpack.c.l.b16 %v733
    %v2990 = vunpack.c.h.b16 %v733
    %v2991 = vunpack.c.l.b16 %v734
    %v2992 = vunpack.c.h.b16 %v734
    %v2993 = vunpack.c.l.b16 %v735
    %v2994 = vunpack.c.h.b16 %v735
    %v2995 = vunpack.c.l.b16 %v736
    %v2996 = vunpack.c.h.b16 %v736
    %v2997 = vunpack.c.l.b16 %v737
    %v2998 = vunpack.c.h.b16 %v737
    %v2999 = vunpack.c.l.b16 %v738
    %v3000 = vunpack.c.h.b16 %v738
    %v3001 = vunpack.c.l.b16 %v739
    %v3002 = vunpack.c.h.b16 %v739
    %v3003 = vunpack.c.l.b16 %v740
    %v3004 = vunpack.c.h.b16 %v740
    %v3005 = vunpack.c.l.b16 %v741
    %v3006 = vunpack.c.h.b16 %v741
    %v3007 = vunpack.c.l.b16 %v742
    %v3008 = vunpack.c.h.b16 %v742
    %v3009 = vunpack.c.l.b16 %v743
    %v3010 = vunpack.c.h.b16 %v743
    %v3011 = vunpack.c.l.b16 %v744
    %v3012 = vunpack.c.h.b16 %v744
    %v3013 = vunpack.c.l.b16 %v745
    %v3014 = vunpack.c.h.b16 %v745
    %v3015 = vunpack.c.l.b16 %v746
    %v3016 = vunpack.c.h.b16 %v746
    %v3017 = vunpack.c.l.b16 %v747
    %v3018 = vunpack.c.h.b16 %v747
    %v3019 = vunpack.c.l.b16 %v748
    %v3020 = vunpack.c.h.b16 %v748
    %v3021 = vunpack.c.l.b16 %v749
    %v3022 = vunpack.c.h.b16 %v749
    %v3023 = vunpack.c.l.b16 %v750
    %v3024 = vunpack.c.h.b16 %v750
    %v3025 = vunpack.c.l.b16 %v751
    %v3026 = vunpack.c.h.b16 %v751
    %v3027 = vunpack.c.l.b16 %v752
    %v3028 = vunpack.c.h.b16 %v752
    %v3029 = vunpack.c.l.b16 %v753
    %v3030 = vunpack.c.h.b16 %v753
    %v3031 = vunpack.c.l.b16 %v754
    %v3032 = vunpack.c.h.b16 %v754
    %v3033 = vunpack.c.l.b16 %v755
    %v3034 = vunpack.c.h.b16 %v755
    %v3035 = vunpack.c.l.b16 %v756
    %v3036 = vunpack.c.h.b16 %v756
    %v3037 = vunpack.c.l.b16 %v757
    %v3038 = vunpack.c.h.b16 %v757
    %v3039 = vunpack.c.l.b16 %v758
    %v3040 = vunpack.c.h.b16 %v758
    %v3041 = vunpack.c.l.b16 %v759
    %v3042 = vunpack.c.h.b16 %v759
    %v3043 = vunpack.c.l.b16 %v760
    %v3044 = vunpack.c.h.b16 %v760
    %v3045 = vunpack.c.l.b16 %v761
    %v3046 = vunpack.c.h.b16 %v761
    %v3047 = vunpack.c.l.b16 %v762
    %v3048 = vunpack.c.h.b16 %v762
    %v3049 = vunpack.c.l.b16 %v763
    %v3050 = vunpack.c.h.b16 %v763
    %v3051 = vunpack.c.l.b16 %v764
    %v3052 = vunpack.c.h.b16 %v764
    %v3053 = vunpack.c.l.b16 %v765
    %v3054 = vunpack.c.h.b16 %v765
    %v3055 = vunpack.c.l.b16 %v766
    %v3056 = vunpack.c.h.b16 %v766
    %v3057 = vunpack.c.l.b16 %v767
    %v3058 = vunpack.c.h.b16 %v767
    %v3059 = vunpack.c.l.b16 %v768
    %v3060 = vunpack.c.h.b16 %v768
    %v3061 = vunpack.c.l.b16 %v769
    %v3062 = vunpack.c.h.b16 %v769
    %v3063 = vunpack.c.l.b16 %v770
    %v3064 = vunpack.c.h.b16 %v770
    %v3065 = vunpack.c.l.b16 %v771
    %v3066 = vunpack.c.h.b16 %v771
    %v3067 = vunpack.c.l.b16 %v772
    %v3068 = vunpack.c.h.b16 %v772
    %v3069 = vunpack.c.l.b16 %v773
    %v3070 = vunpack.c.h.b16 %v773
    %v3071 = vunpack.c.l.b16 %v774
    %v3072 = vunpack.c.h.b16 %v774
    %v3073 = vunpack.c.l.b16 %v775
    %v3074 = vunpack.c.h.b16 %v775
    %v3075 = vunpack.c.l.b16 %v776
    %v3076 = vunpack.c.h.b16 %v776
    %v3077 = vunpack.c.l.b16 %v777
    %v3078 = vunpack.c.h.b16 %v777
    %v3079 = vunpack.c.l.b16 %v778
    %v3080 = vunpack.c.h.b16 %v778
    %v3081 = vunpack.c.l.b16 %v779
    %v3082 = vunpack.c.h.b16 %v779
    %v3083 = vunpack.c.l.b16 %v780
    %v3084 = vunpack.c.h.b16 %v780
    %v3085 = vunpack.c.l.b16 %v781
    %v3086 = vunpack.c.h.b16 %v781
    %v3087 = vunpack.c.l.b16 %v782
    %v3088 = vunpack.c.h.b16 %v782
    %v3089 = vunpack.c.l.b16 %v783
    %v3090 = vunpack.c.h.b16 %v783
    %v3091 = vunpack.c.l.b16 %v784
    %v3092 = vunpack.c.h.b16 %v784
    %v3093 = vunpack.c.l.b16 %v785
    %v3094 = vunpack.c.h.b16 %v785
    %v3095 = vunpack.c.l.b16 %v786
    %v3096 = vunpack.c.h.b16 %v786
    %v3097 = vunpack.c.l.b16 %v787
    %v3098 = vunpack.c.h.b16 %v787
    %v3099 = vunpack.c.l.b16 %v788
    %v3100 = vunpack.c.h.b16 %v788
    %v3101 = vunpack.c.l.b16 %v789
    %v3102 = vunpack.c.h.b16 %v789
    %v3103 = vunpack.c.l.b16 %v790
    %v3104 = vunpack.c.h.b16 %v790
    %v3105 = vunpack.c.l.b16 %v791
    %v3106 = vunpack.c.h.b16 %v791
    %v3107 = vunpack.c.l.b16 %v792
    %v3108 = vunpack.c.h.b16 %v792
    %v3109 = vunpack.c.l.b16 %v793
    %v3110 = vunpack.c.h.b16 %v793
    %v3111 = vunpack.c.l.b16 %v794
    %v3112 = vunpack.c.h.b16 %v794
    %v3113 = vunpack.c.l.b16 %v795
    %v3114 = vunpack.c.h.b16 %v795
    %v3115 = vunpack.c.l.b16 %v796
    %v3116 = vunpack.c.h.b16 %v796
    %v3117 = vunpack.c.l.b16 %v797
    %v3118 = vunpack.c.h.b16 %v797
    %v3119 = vunpack.c.l.b16 %v798
    %v3120 = vunpack.c.h.b16 %v798
    %v3121 = vunpack.c.l.b16 %v799
    %v3122 = vunpack.c.h.b16 %v799
    %v3123 = vunpack.c.l.b16 %v800
    %v3124 = vunpack.c.h.b16 %v800
    %v3125 = vunpack.c.l.b16 %v801
    %v3126 = vunpack.c.h.b16 %v801
    %v3127 = vunpack.c.l.b16 %v802
    %v3128 = vunpack.c.h.b16 %v802
    %v3129 = vunpack.c.l.b16 %v803
    %v3130 = vunpack.c.h.b16 %v803
    %v3131 = vunpack.c.l.b16 %v804
    %v3132 = vunpack.c.h.b16 %v804
    %v3133 = vunpack.c.l.b16 %v805
    %v3134 = vunpack.c.h.b16 %v805
    %v3135 = vunpack.c.l.b16 %v806
    %v3136 = vunpack.c.h.b16 %v806
    %v3137 = vunpack.c.l.b16 %v807
    %v3138 = vunpack.c.h.b16 %v807
    %v3139 = vunpack.c.l.b16 %v808
    %v3140 = vunpack.c.h.b16 %v808
    %v3141 = vunpack.c.l.b16 %v809
    %v3142 = vunpack.c.h.b16 %v809
    %v3143 = vunpack.c.l.b16 %v810
    %v3144 = vunpack.c.h.b16 %v810
    %v3145 = vunpack.c.l.b16 %v811
    %v3146 = vunpack.c.h.b16 %v811
    %v3147 = vunpack.c.l.b16 %v812
    %v3148 = vunpack.c.h.b16 %v812
    %v3149 = vunpack.c.l.b16 %v813
    %v3150 = vunpack.c.h.b16 %v813
    %v3151 = vunpack.c.l.b16 %v814
    %v3152 = vunpack.c.h.b16 %v814
    %v3153 = vunpack.c.l.b16 %v815
    %v3154 = vunpack.c.h.b16 %v815
    %v3155 = vunpack.c.l.b16 %v816
    %v3156 = vunpack.c.h.b16 %v816
    %v3157 = vunpack.c.l.b16 %v817
    %v3158 = vunpack.c.h.b16 %v817
    %v3159 = vunpack.c.l.b16 %v818
    %v3160 = vunpack.c.h.b16 %v818
    %v3161 = vunpack.c.l.b16 %v819
    %v3162 = vunpack.c.h.b16 %v819
    %v3163 = vunpack.c.l.b16 %v820
    %v3164 = vunpack.c.h.b16 %v820
    %v3165 = vunpack.c.l.b16 %v821
    %v3166 = vunpack.c.h.b16 %v821
    %v3167 = vunpack.c.l.b16 %v822
    %v3168 = vunpack.c.h.b16 %v822
    %v3169 = vunpack.c.l.b16 %v823
    %v3170 = vunpack.c.h.b16 %v823
    %v3171 = vunpack.c.l.b16 %v824
    %v3172 = vunpack.c.h.b16 %v824
    %v3173 = vunpack.c.l.b16 %v825
    %v3174 = vunpack.c.h.b16 %v825
    %v3175 = vunpack.c.l.b16 %v826
    %v3176 = vunpack.c.h.b16 %v826
    %v3177 = vunpack.c.l.b16 %v827
    %v3178 = vunpack.c.h.b16 %v827
    %v3179 = vunpack.c.l.b16 %v828
    %v3180 = vunpack.c.h.b16 %v828
    %v3181 = vunpack.c.l.b16 %v829
    %v3182 = vunpack.c.h.b16 %v829
    %v3183 = vunpack.c.l.b16 %v830
    %v3184 = vunpack.c.h.b16 %v830
    %v3185 = vunpack.c.l.b16 %v831
    %v3186 = vunpack.c.h.b16 %v831
    %v3187 = vunpack.c.l.b16 %v832
    %v3188 = vunpack.c.h.b16 %v832
    %v3189 = vunpack.c.l.b16 %v833
    %v3190 = vunpack.c.h.b16 %v833
    %v3191 = vunpack.c.l.b16 %v834
    %v3192 = vunpack.c.h.b16 %v834
    %v3193 = vunpack.c.l.b16 %v835
    %v3194 = vunpack.c.h.b16 %v835
    %v3195 = vunpack.c.l.b16 %v836
    %v3196 = vunpack.c.h.b16 %v836
    %v3197 = vunpack.c.l.b16 %v837
    %v3198 = vunpack.c.h.b16 %v837
    %v3199 = vunpack.c.l.b16 %v838
    %v3200 = vunpack.c.h.b16 %v838
    %v3201 = vunpack.c.l.b16 %v839
    %v3202 = vunpack.c.h.b16 %v839
    %v3203 = vunpack.c.l.b16 %v840
    %v3204 = vunpack.c.h.b16 %v840
    %v3205 = vunpack.c.l.b16 %v841
    %v3206 = vunpack.c.h.b16 %v841
    %v3207 = vunpack.c.l.b16 %v842
    %v3208 = vunpack.c.h.b16 %v842
    %v3209 = vunpack.c.l.b16 %v843
    %v3210 = vunpack.c.h.b16 %v843
    %v3211 = vunpack.c.l.b16 %v844
    %v3212 = vunpack.c.h.b16 %v844
    %v3213 = vunpack.c.l.b16 %v845
    %v3214 = vunpack.c.h.b16 %v845
    %v3215 = vunpack.c.l.b16 %v846
    %v3216 = vunpack.c.h.b16 %v846
    %v3217 = vunpack.c.l.b16 %v847
    %v3218 = vunpack.c.h.b16 %v847
    %v3219 = vunpack.c.l.b16 %v848
    %v3220 = vunpack.c.h.b16 %v848
    %v3221 = vunpack.c.l.b16 %v849
    %v3222 = vunpack.c.h.b16 %v849
    %v3223 = vunpack.c.l.b16 %v850
    %v3224 = vunpack.c.h.b16 %v850
    %v3225 = vunpack.c.l.b16 %v851
    %v3226 = vunpack.c.h.b16 %v851
    %v3227 = vunpack.c.l.b16 %v852
    %v3228 = vunpack.c.h.b16 %v852
    %v3229 = vunpack.c.l.b16 %v853
    %v3230 = vunpack.c.h.b16 %v853
    %v3231 = vunpack.c.l.b16 %v854
    %v3232 = vunpack.c.h.b16 %v854
    %v3233 = vunpack.c.l.b16 %v855
    %v3234 = vunpack.c.h.b16 %v855
    %v3235 = vunpack.c.l.b16 %v856
    %v3236 = vunpack.c.h.b16 %v856
    %v3237 = vunpack.c.l.b16 %v857
    %v3238 = vunpack.c.h.b16 %v857
    %v3239 = vunpack.c.l.b16 %v858
    %v3240 = vunpack.c.h.b16 %v858
    %v3241 = vunpack.c.l.b16 %v859
    %v3242 = vunpack.c.h.b16 %v859
    %v3243 = vunpack.c.l.b16 %v860
    %v3244 = vunpack.c.h.b16 %v860
    %v3245 = vunpack.c.l.b16 %v861
    %v3246 = vunpack.c.h.b16 %v861
    %v3247 = vunpack.c.l.b16 %v862
    %v3248 = vunpack.c.h.b16 %v862
    %v3249 = vunpack.c.l.b16 %v863
    %v3250 = vunpack.c.h.b16 %v863
    %v3251 = vunpack.c.l.b16 %v864
    %v3252 = vunpack.c.h.b16 %v864
    %v3253 = vunpack.c.l.b16 %v865
    %v3254 = vunpack.c.h.b16 %v865
    %v3255 = vunpack.c.l.b16 %v866
    %v3256 = vunpack.c.h.b16 %v866
    %v3257 = vunpack.c.l.b16 %v867
    %v3258 = vunpack.c.h.b16 %v867
    %v3259 = vunpack.c.l.b16 %v868
    %v3260 = vunpack.c.h.b16 %v868
    %v3261 = vunpack.c.l.b16 %v869
    %v3262 = vunpack.c.h.b16 %v869
    %v3263 = vunpack.c.l.b16 %v870
    %v3264 = vunpack.c.h.b16 %v870
    %v3265 = vunpack.c.l.b16 %v871
    %v3266 = vunpack.c.h.b16 %v871
    %v3267 = vunpack.c.l.b16 %v872
    %v3268 = vunpack.c.h.b16 %v872
    %v3269 = vunpack.c.l.b16 %v873
    %v3270 = vunpack.c.h.b16 %v873
    %v3271 = vunpack.c.l.b16 %v874
    %v3272 = vunpack.c.h.b16 %v874
    %v3273 = vunpack.c.l.b16 %v875
    %v3274 = vunpack.c.h.b16 %v875
    %v3275 = vunpack.c.l.b16 %v876
    %v3276 = vunpack.c.h.b16 %v876
    %v3277 = vunpack.c.l.b16 %v877
    %v3278 = vunpack.c.h.b16 %v877
    %v3279 = vunpack.c.l.b16 %v878
    %v3280 = vunpack.c.h.b16 %v878
    %v3281 = vunpack.c.l.b16 %v879
    %v3282 = vunpack.c.h.b16 %v879
    %v3283 = vunpack.c.l.b16 %v880
    %v3284 = vunpack.c.h.b16 %v880
    %v3285 = vunpack.c.l.b16 %v881
    %v3286 = vunpack.c.h.b16 %v881
    %v3287 = vunpack.c.l.b16 %v882
    %v3288 = vunpack.c.h.b16 %v882
    %v3289 = vunpack.c.l.b16 %v883
    %v3290 = vunpack.c.h.b16 %v883
    %v3291 = vunpack.c.l.b16 %v884
    %v3292 = vunpack.c.h.b16 %v884
    %v3293 = vunpack.c.l.b16 %v885
    %v3294 = vunpack.c.h.b16 %v885
    %v3295 = vunpack.c.l.b16 %v886
    %v3296 = vunpack.c.h.b16 %v886
    %v3297 = vunpack.c.l.b16 %v887
    %v3298 = vunpack.c.h.b16 %v887
    %v3299 = vunpack.c.l.b16 %v888
    %v3300 = vunpack.c.h.b16 %v888
    %v3301 = vunpack.c.l.b16 %v889
    %v3302 = vunpack.c.h.b16 %v889
    %v3303 = vunpack.c.l.b16 %v890
    %v3304 = vunpack.c.h.b16 %v890
    %v3305 = vunpack.c.l.b16 %v891
    %v3306 = vunpack.c.h.b16 %v891
    %v3307 = vunpack.c.l.b16 %v892
    %v3308 = vunpack.c.h.b16 %v892
    %v3309 = vunpack.c.l.b16 %v893
    %v3310 = vunpack.c.h.b16 %v893
    %v3311 = vunpack.c.l.b16 %v894
    %v3312 = vunpack.c.h.b16 %v894
    %v3313 = vunpack.c.l.b16 %v895
    %v3314 = vunpack.c.h.b16 %v895
    %v3315 = vunpack.c.l.b16 %v896
    %v3316 = vunpack.c.h.b16 %v896
    %v3317 = vunpack.c.l.b16 %v897
    %v3318 = vunpack.c.h.b16 %v897
    %v3319 = vunpack.c.l.b16 %v898
    %v3320 = vunpack.c.h.b16 %v898
    %v3321 = vunpack.c.l.b16 %v899
    %v3322 = vunpack.c.h.b16 %v899
    %v3323 = vunpack.c.l.b16 %v900
    %v3324 = vunpack.c.h.b16 %v900
    %v3325 = vunpack.c.l.b16 %v901
    %v3326 = vunpack.c.h.b16 %v901
    %v3327 = vunpack.c.l.b16 %v902
    %v3328 = vunpack.c.h.b16 %v902
    %v3329 = vunpack.c.l.b16 %v903
    %v3330 = vunpack.c.h.b16 %v903
    %v3331 = vunpack.c.l.b16 %v904
    %v3332 = vunpack.c.h.b16 %v904
    %v3333 = vunpack.c.l.b16 %v905
    %v3334 = vunpack.c.h.b16 %v905
    %v3335 = vunpack.c.l.b16 %v906
    %v3336 = vunpack.c.h.b16 %v906
    %v3337 = vunpack.c.l.b16 %v907
    %v3338 = vunpack.c.h.b16 %v907
    %v3339 = vunpack.c.l.b16 %v908
    %v3340 = vunpack.c.h.b16 %v908
    %v3341 = vunpack.c.l.b16 %v909
    %v3342 = vunpack.c.h.b16 %v909
    %v3343 = vunpack.c.l.b16 %v910
    %v3344 = vunpack.c.h.b16 %v910
    %v3345 = vunpack.c.l.b16 %v911
    %v3346 = vunpack.c.h.b16 %v911
    %v3347 = vunpack.c.l.b16 %v912
    %v3348 = vunpack.c.h.b16 %v912
    %v3349 = vpack.c.b16 %v1797, %v1781
    %v3350 = vpack.c.b16 %v1798, %v1782
    %v3351 = vpack.c.b16 %v1799, %v1783
    %v3352 = vpack.c.b16 %v1800, %v1784
    %v3353 = vpack.c.b16 %v1801, %v1785
    %v3354 = vpack.c.b16 %v1802, %v1786
    %v3355 = vpack.c.b16 %v1803, %v1787
    %v3356 = vpack.c.b16 %v1804, %v1788
    %v3357 = vpack.c.b16 %v1805, %v1789
    %v3358 = vpack.c.b16 %v1806, %v1790
    %v3359 = vpack.c.b16 %v1807, %v1791
    %v3360 = vpack.c.b16 %v1808, %v1792
    %v3361 = vpack.c.b16 %v1809, %v1793
    %v3362 = vpack.c.b16 %v1810, %v1794
    %v3363 = vpack.c.b16 %v1811, %v1795
    %v3364 = vpack.c.b16 %v1812, %v1796
    %v3365 = vpack.c.b16 %v1829, %v1813
    %v3366 = vpack.c.b16 %v1830, %v1814
    %v3367 = vpack.c.b16 %v1831, %v1815
    %v3368 = vpack.c.b16 %v1832, %v1816
    %v3369 = vpack.c.b16 %v1833, %v1817
    %v3370 = vpack.c.b16 %v1834, %v1818
    %v3371 = vpack.c.b16 %v1835, %v1819
    %v3372 = vpack.c.b16 %v1836, %v1820
    %v3373 = vpack.c.b16 %v1837, %v1821
    %v3374 = vpack.c.b16 %v1838, %v1822
    %v3375 = vpack.c.b16 %v1839, %v1823
    %v3376 = vpack.c.b16 %v1840, %v1824
    %v3377 = vpack.c.b16 %v1841, %v1825
    %v3378 = vpack.c.b16 %v1842, %v1826
    %v3379 = vpack.c.b16 %v1843, %v1827
    %v3380 = vpack.c.b16 %v1844, %v1828
    %v3381 = vpack.c.b16 %v1861, %v1845
    %v3382 = vpack.c.b16 %v1862, %v1846
    %v3383 = vpack.c.b16 %v1863, %v1847
    %v3384 = vpack.c.b16 %v1864, %v1848
    %v3385 = vpack.c.b16 %v1865, %v1849
    %v3386 = vpack.c.b16 %v1866, %v1850
    %v3387 = vpack.c.b16 %v1867, %v1851
    %v3388 = vpack.c.b16 %v1868, %v1852
    %v3389 = vpack.c.b16 %v1869, %v1853
    %v3390 = vpack.c.b16 %v1870, %v1854
    %v3391 = vpack.c.b16 %v1871, %v1855
    %v3392 = vpack.c.b16 %v1872, %v1856
    %v3393 = vpack.c.b16 %v1873, %v1857
    %v3394 = vpack.c.b16 %v1874, %v1858
    %v3395 = vpack.c.b16 %v1875, %v1859
    %v3396 = vpack.c.b16 %v1876, %v1860
    %v3397 = vpack.c.b16 %v1893, %v1877
    %v3398 = vpack.c.b16 %v1894, %v1878
    %v3399 = vpack.c.b16 %v1895, %v1879
    %v3400 = vpack.c.b16 %v1896, %v1880
    %v3401 = vpack.c.b16 %v1897, %v1881
    %v3402 = vpack.c.b16 %v1898, %v1882
    %v3403 = vpack.c.b16 %v1899, %v1883
    %v3404 = vpack.c.b16 %v1900, %v1884
    %v3405 = vpack.c.b16 %v1901, %v1885
    %v3406 = vpack.c.b16 %v1902, %v1886
    %v3407 = vpack.c.b16 %v1903, %v1887
    %v3408 = vpack.c.b16 %v1904, %v1888
    %v3409 = vpack.c.b16 %v1905, %v1889
    %v3410 = vpack.c.b16 %v1906, %v1890
    %v3411 = vpack.c.b16 %v1907, %v1891
    %v3412 = vpack.c.b16 %v1908, %v1892
    %v3413 = vpack.c.b16 %v1925, %v1909
    %v3414 = vpack.c.b16 %v1926, %v1910
    %v3415 = vpack.c.b16 %v1927, %v1911
    %v3416 = vpack.c.b16 %v1928, %v1912
    %v3417 = vpack.c.b16 %v1929, %v1913
    %v3418 = vpack.c.b16 %v1930, %v1914
    %v3419 = vpack.c.b16 %v1931, %v1915
    %v3420 = vpack.c.b16 %v1932, %v1916
    %v3421 = vpack.c.b16 %v1933, %v1917
    %v3422 = vpack.c.b16 %v1934, %v1918
    %v3423 = vpack.c.b16 %v1935, %v1919
    %v3424 = vpack.c.b16 %v1936, %v1920
    %v3425 = vpack.c.b16 %v1937, %v1921
    %v3426 = vpack.c.b16 %v1938, %v1922
    %v3427 = vpack.c.b16 %v1939, %v1923
    %v3428 = vpack.c.b16 %v1940, %v1924
    %v3429 = vpack.c.b16 %v1957, %v1941
    %v3430 = vpack.c.b16 %v1958, %v1942
    %v3431 = vpack.c.b16 %v1959, %v1943
    %v3432 = vpack.c.b16 %v1960, %v1944
    %v3433 = vpack.c.b16 %v1961, %v1945
    %v3434 = vpack.c.b16 %v1962, %v1946
    %v3435 = vpack.c.b16 %v1963, %v1947
    %v3436 = vpack.c.b16 %v1964, %v1948
    %v3437 = vpack.c.b16 %v1965, %v1949
    %v3438 = vpack.c.b16 %v1966, %v1950
    %v3439 = vpack.c.b16 %v1967, %v1951
    %v3440 = vpack.c.b16 %v1968, %v1952
    %v3441 = vpack.c.b16 %v1969, %v1953
    %v3442 = vpack.c.b16 %v1970, %v1954
    %v3443 = vpack.c.b16 %v1971, %v1955
    %v3444 = vpack.c.b16 %v1972, %v1956
    %v3445 = vpack.c.b16 %v1989, %v1973
    %v3446 = vpack.c.b16 %v1990, %v1974
    %v3447 = vpack.c.b16 %v1991, %v1975
    %v3448 = vpack.c.b16 %v1992, %v1976
    %v3449 = vpack.c.b16 %v1993, %v1977
    %v3450 = vpack.c.b16 %v1994, %v1978
    %v3451 = vpack.c.b16 %v1995, %v1979
    %v3452 = vpack.c.b16 %v1996, %v1980
    %v3453 = vpack.c.b16 %v1997, %v1981
    %v3454 = vpack.c.b16 %v1998, %v1982
    %v3455 = vpack.c.b16 %v1999, %v1983
    %v3456 = vpack.c.b16 %v2000, %v1984
    %v3457 = vpack.c.b16 %v2001, %v1985
    %v3458 = vpack.c.b16 %v2002, %v1986
    %v3459 = vpack.c.b16 %v2003, %v1987
    %v3460 = vpack.c.b16 %v2004, %v1988
    %v3461 = vpack.c.b16 %v2021, %v2005
    %v3462 = vpack.c.b16 %v2022, %v2006
    %v3463 = vpack.c.b16 %v2023, %v2007
    %v3464 = vpack.c.b16 %v2024, %v2008
    %v3465 = vpack.c.b16 %v2025, %v2009
    %v3466 = vpack.c.b16 %v2026, %v2010
    %v3467 = vpack.c.b16 %v2027, %v2011
    %v3468 = vpack.c.b16 %v2028, %v2012
    %v3469 = vpack.c.b16 %v2029, %v2013
    %v3470 = vpack.c.b16 %v2030, %v2014
    %v3471 = vpack.c.b16 %v2031, %v2015
    %v3472 = vpack.c.b16 %v2032, %v2016
    %v3473 = vpack.c.b16 %v2033, %v2017
    %v3474 = vpack.c.b16 %v2034, %v2018
    %v3475 = vpack.c.b16 %v2035, %v2019
    %v3476 = vpack.c.b16 %v2036, %v2020
    %v3477 = vpack.c.b16 %v2053, %v2037
    %v3478 = vpack.c.b16 %v2054, %v2038
    %v3479 = vpack.c.b16 %v2055, %v2039
    %v3480 = vpack.c.b16 %v2056, %v2040
    %v3481 = vpack.c.b16 %v2057, %v2041
    %v3482 = vpack.c.b16 %v2058, %v2042
    %v3483 = vpack.c.b16 %v2059, %v2043
    %v3484 = vpack.c.b16 %v2060, %v2044
    %v3485 = vpack.c.b16 %v2061, %v2045
    %v3486 = vpack.c.b16 %v2062, %v2046
    %v3487 = vpack.c.b16 %v2063, %v2047
    %v3488 = vpack.c.b16 %v2064, %v2048
    %v3489 = vpack.c.b16 %v2065, %v2049
    %v3490 = vpack.c.b16 %v2066, %v2050
    %v3491 = vpack.c.b16 %v2067, %v2051
    %v3492 = vpack.c.b16 %v2068, %v2052
    %v3493 = vpack.c.b16 %v2085, %v2069
    %v3494 = vpack.c.b16 %v2086, %v2070
    %v3495 = vpack.c.b16 %v2087, %v2071
    %v3496 = vpack.c.b16 %v2088, %v2072
    %v3497 = vpack.c.b16 %v2089, %v2073
    %v3498 = vpack.c.b16 %v2090, %v2074
    %v3499 = vpack.c.b16 %v2091, %v2075
    %v3500 = vpack.c.b16 %v2092, %v2076
    %v3501 = vpack.c.b16 %v2093, %v2077
    %v3502 = vpack.c.b16 %v2094, %v2078
    %v3503 = vpack.c.b16 %v2095, %v2079
    %v3504 = vpack.c.b16 %v2096, %v2080
    %v3505 = vpack.c.b16 %v2097, %v2081
    %v3506 = vpack.c.b16 %v2098, %v2082
    %v3507 = vpack.c.b16 %v2099, %v2083
    %v3508 = vpack.c.b16 %v2100, %v2084
    %v3509 = vpack.c.b16 %v2117, %v2101
    %v3510 = vpack.c.b16 %v2118, %v2102
    %v3511 = vpack.c.b16 %v2119, %v2103
    %v3512 = vpack.c.b16 %v2120, %v2104
    %v3513 = vpack.c.b16 %v2121, %v2105
    %v3514 = vpack.c.b16 %v2122, %v2106
    %v3515 = vpack.c.b16 %v2123, %v2107
    %v3516 = vpack.c.b16 %v2124, %v2108
    %v3517 = vpack.c.b16 %v2125, %v2109
    %v3518 = vpack.c.b16 %v2126, %v2110
    %v3519 = vpack.c.b16 %v2127, %v2111
    %v3520 = vpack.c.b16 %v2128, %v2112
    %v3521 = vpack.c.b16 %v2129, %v2113
    %v3522 = vpack.c.b16 %v2130, %v2114
    %v3523 = vpack.c.b16 %v2131, %v2115
    %v3524 = vpack.c.b16 %v2132, %v2116
    %v3525 = vpack.c.b16 %v2149, %v2133
    %v3526 = vpack.c.b16 %v2150, %v2134
    %v3527 = vpack.c.b16 %v2151, %v2135
    %v3528 = vpack.c.b16 %v2152, %v2136
    %v3529 = vpack.c.b16 %v2153, %v2137
    %v3530 = vpack.c.b16 %v2154, %v2138
    %v3531 = vpack.c.b16 %v2155, %v2139
    %v3532 = vpack.c.b16 %v2156, %v2140
    %v3533 = vpack.c.b16 %v2157, %v2141
    %v3534 = vpack.c.b16 %v2158, %v2142
    %v3535 = vpack.c.b16 %v2159, %v2143
    %v3536 = vpack.c.b16 %v2160, %v2144
    %v3537 = vpack.c.b16 %v2161, %v2145
    %v3538 = vpack.c.b16 %v2162, %v2146
    %v3539 = vpack.c.b16 %v2163, %v2147
    %v3540 = vpack.c.b16 %v2164, %v2148
    %v3541 = vpack.c.b16 %v2181, %v2165
    %v3542 = vpack.c.b16 %v2182, %v2166
    %v3543 = vpack.c.b16 %v2183, %v2167
    %v3544 = vpack.c.b16 %v2184, %v2168
    %v3545 = vpack.c.b16 %v2185, %v2169
    %v3546 = vpack.c.b16 %v2186, %v2170
    %v3547 = vpack.c.b16 %v2187, %v2171
    %v3548 = vpack.c.b16 %v2188, %v2172
    %v3549 = vpack.c.b16 %v2189, %v2173
    %v3550 = vpack.c.b16 %v2190, %v2174
    %v3551 = vpack.c.b16 %v2191, %v2175
    %v3552 = vpack.c.b16 %v2192, %v2176
    %v3553 = vpack.c.b16 %v2193, %v2177
    %v3554 = vpack.c.b16 %v2194, %v2178
    %v3555 = vpack.c.b16 %v2195, %v2179
    %v3556 = vpack.c.b16 %v2196, %v2180
    %v3557 = vpack.c.b16 %v2213, %v2197
    %v3558 = vpack.c.b16 %v2214, %v2198
    %v3559 = vpack.c.b16 %v2215, %v2199
    %v3560 = vpack.c.b16 %v2216, %v2200
    %v3561 = vpack.c.b16 %v2217, %v2201
    %v3562 = vpack.c.b16 %v2218, %v2202
    %v3563 = vpack.c.b16 %v2219, %v2203
    %v3564 = vpack.c.b16 %v2220, %v2204
    %v3565 = vpack.c.b16 %v2221, %v2205
    %v3566 = vpack.c.b16 %v2222, %v2206
    %v3567 = vpack.c.b16 %v2223, %v2207
    %v3568 = vpack.c.b16 %v2224, %v2208
    %v3569 = vpack.c.b16 %v2225, %v2209
    %v3570 = vpack.c.b16 %v2226, %v2210
    %v3571 = vpack.c.b16 %v2227, %v2211
    %v3572 = vpack.c.b16 %v2228, %v2212
    %v3573 = vpack.c.b16 %v2245, %v2229
    %v3574 = vpack.c.b16 %v2246, %v2230
    %v3575 = vpack.c.b16 %v2247, %v2231
    %v3576 = vpack.c.b16 %v2248, %v2232
    %v3577 = vpack.c.b16 %v2249, %v2233
    %v3578 = vpack.c.b16 %v2250, %v2234
    %v3579 = vpack.c.b16 %v2251, %v2235
    %v3580 = vpack.c.b16 %v2252, %v2236
    %v3581 = vpack.c.b16 %v2253, %v2237
    %v3582 = vpack.c.b16 %v2254, %v2238
    %v3583 = vpack.c.b16 %v2255, %v2239
    %v3584 = vpack.c.b16 %v2256, %v2240
    %v3585 = vpack.c.b16 %v2257, %v2241
    %v3586 = vpack.c.b16 %v2258, %v2242
    %v3587 = vpack.c.b16 %v2259, %v2243
    %v3588 = vpack.c.b16 %v2260, %v2244
    %v3589 = vpack.c.b16 %v2277, %v2261
    %v3590 = vpack.c.b16 %v2278, %v2262
    %v3591 = vpack.c.b16 %v2279, %v2263
    %v3592 = vpack.c.b16 %v2280, %v2264
    %v3593 = vpack.c.b16 %v2281, %v2265
    %v3594 = vpack.c.b16 %v2282, %v2266
    %v3595 = vpack.c.b16 %v2283, %v2267
    %v3596 = vpack.c.b16 %v2284, %v2268
    %v3597 = vpack.c.b16 %v2285, %v2269
    %v3598 = vpack.c.b16 %v2286, %v2270
    %v3599 = vpack.c.b16 %v2287, %v2271
    %v3600 = vpack.c.b16 %v2288, %v2272
    %v3601 = vpack.c.b16 %v2289, %v2273
    %v3602 = vpack.c.b16 %v2290, %v2274
    %v3603 = vpack.c.b16 %v2291, %v2275
    %v3604 = vpack.c.b16 %v2292, %v2276
    %v3605 = vpack.c.b16 %v2309, %v2293
    %v3606 = vpack.c.b16 %v2310, %v2294
    %v3607 = vpack.c.b16 %v2311, %v2295
    %v3608 = vpack.c.b16 %v2312, %v2296
    %v3609 = vpack.c.b16 %v2313, %v2297
    %v3610 = vpack.c.b16 %v2314, %v2298
    %v3611 = vpack.c.b16 %v2315, %v2299
    %v3612 = vpack.c.b16 %v2316, %v2300
    %v3613 = vpack.c.b16 %v2317, %v2301
    %v3614 = vpack.c.b16 %v2318, %v2302
    %v3615 = vpack.c.b16 %v2319, %v2303
    %v3616 = vpack.c.b16 %v2320, %v2304
    %v3617 = vpack.c.b16 %v2321, %v2305
    %v3618 = vpack.c.b16 %v2322, %v2306
    %v3619 = vpack.c.b16 %v2323, %v2307
    %v3620 = vpack.c.b16 %v2324, %v2308
    %v3621 = vpack.c.b16 %v2341, %v2325
    %v3622 = vpack.c.b16 %v2342, %v2326
    %v3623 = vpack.c.b16 %v2343, %v2327
    %v3624 = vpack.c.b16 %v2344, %v2328
    %v3625 = vpack.c.b16 %v2345, %v2329
    %v3626 = vpack.c.b16 %v2346, %v2330
    %v3627 = vpack.c.b16 %v2347, %v2331
    %v3628 = vpack.c.b16 %v2348, %v2332
    %v3629 = vpack.c.b16 %v2349, %v2333
    %v3630 = vpack.c.b16 %v2350, %v2334
    %v3631 = vpack.c.b16 %v2351, %v2335
    %v3632 = vpack.c.b16 %v2352, %v2336
    %v3633 = vpack.c.b16 %v2353, %v2337
    %v3634 = vpack.c.b16 %v2354, %v2338
    %v3635 = vpack.c.b16 %v2355, %v2339
    %v3636 = vpack.c.b16 %v2356, %v2340
    %v3637 = vpack.c.b16 %v2373, %v2357
    %v3638 = vpack.c.b16 %v2374, %v2358
    %v3639 = vpack.c.b16 %v2375, %v2359
    %v3640 = vpack.c.b16 %v2376, %v2360
    %v3641 = vpack.c.b16 %v2377, %v2361
    %v3642 = vpack.c.b16 %v2378, %v2362
    %v3643 = vpack.c.b16 %v2379, %v2363
    %v3644 = vpack.c.b16 %v2380, %v2364
    %v3645 = vpack.c.b16 %v2381, %v2365
    %v3646 = vpack.c.b16 %v2382, %v2366
    %v3647 = vpack.c.b16 %v2383, %v2367
    %v3648 = vpack.c.b16 %v2384, %v2368
    %v3649 = vpack.c.b16 %v2385, %v2369
    %v3650 = vpack.c.b16 %v2386, %v2370
    %v3651 = vpack.c.b16 %v2387, %v2371
    %v3652 = vpack.c.b16 %v2388, %v2372
    %v3653 = vpack.c.b16 %v2405, %v2389
    %v3654 = vpack.c.b16 %v2406, %v2390
    %v3655 = vpack.c.b16 %v2407, %v2391
    %v3656 = vpack.c.b16 %v2408, %v2392
    %v3657 = vpack.c.b16 %v2409, %v2393
    %v3658 = vpack.c.b16 %v2410, %v2394
    %v3659 = vpack.c.b16 %v2411, %v2395
    %v3660 = vpack.c.b16 %v2412, %v2396
    %v3661 = vpack.c.b16 %v2413, %v2397
    %v3662 = vpack.c.b16 %v2414, %v2398
    %v3663 = vpack.c.b16 %v2415, %v2399
    %v3664 = vpack.c.b16 %v2416, %v2400
    %v3665 = vpack.c.b16 %v2417, %v2401
    %v3666 = vpack.c.b16 %v2418, %v2402
    %v3667 = vpack.c.b16 %v2419, %v2403
    %v3668 = vpack.c.b16 %v2420, %v2404
    %v3669 = vpack.c.b16 %v2437, %v2421
    %v3670 = vpack.c.b16 %v2438, %v2422
    %v3671 = vpack.c.b16 %v2439, %v2423
    %v3672 = vpack.c.b16 %v2440, %v2424
    %v3673 = vpack.c.b16 %v2441, %v2425
    %v3674 = vpack.c.b16 %v2442, %v2426
    %v3675 = vpack.c.b16 %v2443, %v2427
    %v3676 = vpack.c.b16 %v2444, %v2428
    %v3677 = vpack.c.b16 %v2445, %v2429
    %v3678 = vpack.c.b16 %v2446, %v2430
    %v3679 = vpack.c.b16 %v2447, %v2431
    %v3680 = vpack.c.b16 %v2448, %v2432
    %v3681 = vpack.c.b16 %v2449, %v2433
    %v3682 = vpack.c.b16 %v2450, %v2434
    %v3683 = vpack.c.b16 %v2451, %v2435
    %v3684 = vpack.c.b16 %v2452, %v2436
    %v3685 = vpack.c.b16 %v2469, %v2453
    %v3686 = vpack.c.b16 %v2470, %v2454
    %v3687 = vpack.c.b16 %v2471, %v2455
    %v3688 = vpack.c.b16 %v2472, %v2456
    %v3689 = vpack.c.b16 %v2473, %v2457
    %v3690 = vpack.c.b16 %v2474, %v2458
    %v3691 = vpack.c.b16 %v2475, %v2459
    %v3692 = vpack.c.b16 %v2476, %v2460
    %v3693 = vpack.c.b16 %v2477, %v2461
    %v3694 = vpack.c.b16 %v2478, %v2462
    %v3695 = vpack.c.b16 %v2479, %v2463
    %v3696 = vpack.c.b16 %v2480, %v2464
    %v3697 = vpack.c.b16 %v2481, %v2465
    %v3698 = vpack.c.b16 %v2482, %v2466
    %v3699 = vpack.c.b16 %v2483, %v2467
    %v3700 = vpack.c.b16 %v2484, %v2468
    %v3701 = vpack.c.b16 %v2501, %v2485
    %v3702 = vpack.c.b16 %v2502, %v2486
    %v3703 = vpack.c.b16 %v2503, %v2487
    %v3704 = vpack.c.b16 %v2504, %v2488
    %v3705 = vpack.c.b16 %v2505, %v2489
    %v3706 = vpack.c.b16 %v2506, %v2490
    %v3707 = vpack.c.b16 %v2507, %v2491
    %v3708 = vpack.c.b16 %v2508, %v2492
    %v3709 = vpack.c.b16 %v2509, %v2493
    %v3710 = vpack.c.b16 %v2510, %v2494
    %v3711 = vpack.c.b16 %v2511, %v2495
    %v3712 = vpack.c.b16 %v2512, %v2496
    %v3713 = vpack.c.b16 %v2513, %v2497
    %v3714 = vpack.c.b16 %v2514, %v2498
    %v3715 = vpack.c.b16 %v2515, %v2499
    %v3716 = vpack.c.b16 %v2516, %v2500
    %v3717 = vpack.c.b16 %v2533, %v2517
    %v3718 = vpack.c.b16 %v2534, %v2518
    %v3719 = vpack.c.b16 %v2535, %v2519
    %v3720 = vpack.c.b16 %v2536, %v2520
    %v3721 = vpack.c.b16 %v2537, %v2521
    %v3722 = vpack.c.b16 %v2538, %v2522
    %v3723 = vpack.c.b16 %v2539, %v2523
    %v3724 = vpack.c.b16 %v2540, %v2524
    %v3725 = vpack.c.b16 %v2541, %v2525
    %v3726 = vpack.c.b16 %v2542, %v2526
    %v3727 = vpack.c.b16 %v2543, %v2527
    %v3728 = vpack.c.b16 %v2544, %v2528
    %v3729 = vpack.c.b16 %v2545, %v2529
    %v3730 = vpack.c.b16 %v2546, %v2530
    %v3731 = vpack.c.b16 %v2547, %v2531
    %v3732 = vpack.c.b16 %v2548, %v2532
    %v3733 = vpack.c.b16 %v2565, %v2549
    %v3734 = vpack.c.b16 %v2566, %v2550
    %v3735 = vpack.c.b16 %v2567, %v2551
    %v3736 = vpack.c.b16 %v2568, %v2552
    %v3737 = vpack.c.b16 %v2569, %v2553
    %v3738 = vpack.c.b16 %v2570, %v2554
    %v3739 = vpack.c.b16 %v2571, %v2555
    %v3740 = vpack.c.b16 %v2572, %v2556
    %v3741 = vpack.c.b16 %v2573, %v2557
    %v3742 = vpack.c.b16 %v2574, %v2558
    %v3743 = vpack.c.b16 %v2575, %v2559
    %v3744 = vpack.c.b16 %v2576, %v2560
    %v3745 = vpack.c.b16 %v2577, %v2561
    %v3746 = vpack.c.b16 %v2578, %v2562
    %v3747 = vpack.c.b16 %v2579, %v2563
    %v3748 = vpack.c.b16 %v2580, %v2564
    %v3749 = vpack.c.b16 %v2597, %v2581
    %v3750 = vpack.c.b16 %v2598, %v2582
    %v3751 = vpack.c.b16 %v2599, %v2583
    %v3752 = vpack.c.b16 %v2600, %v2584
    %v3753 = vpack.c.b16 %v2601, %v2585
    %v3754 = vpack.c.b16 %v2602, %v2586
    %v3755 = vpack.c.b16 %v2603, %v2587
    %v3756 = vpack.c.b16 %v2604, %v2588
    %v3757 = vpack.c.b16 %v2605, %v2589
    %v3758 = vpack.c.b16 %v2606, %v2590
    %v3759 = vpack.c.b16 %v2607, %v2591
    %v3760 = vpack.c.b16 %v2608, %v2592
    %v3761 = vpack.c.b16 %v2609, %v2593
    %v3762 = vpack.c.b16 %v2610, %v2594
    %v3763 = vpack.c.b16 %v2611, %v2595
    %v3764 = vpack.c.b16 %v2612, %v2596
    %v3765 = vpack.c.b16 %v2629, %v2613
    %v3766 = vpack.c.b16 %v2630, %v2614
    %v3767 = vpack.c.b16 %v2631, %v2615
    %v3768 = vpack.c.b16 %v2632, %v2616
    %v3769 = vpack.c.b16 %v2633, %v2617
    %v3770 = vpack.c.b16 %v2634, %v2618
    %v3771 = vpack.c.b16 %v2635, %v2619
    %v3772 = vpack.c.b16 %v2636, %v2620
    %v3773 = vpack.c.b16 %v2637, %v2621
    %v3774 = vpack.c.b16 %v2638, %v2622
    %v3775 = vpack.c.b16 %v2639, %v2623
    %v3776 = vpack.c.b16 %v2640, %v2624
    %v3777 = vpack.c.b16 %v2641, %v2625
    %v3778 = vpack.c.b16 %v2642, %v2626
    %v3779 = vpack.c.b16 %v2643, %v2627
    %v3780 = vpack.c.b16 %v2644, %v2628
    %v3781 = vpack.c.b16 %v2661, %v2645
    %v3782 = vpack.c.b16 %v2662, %v2646
    %v3783 = vpack.c.b16 %v2663, %v2647
    %v3784 = vpack.c.b16 %v2664, %v2648
    %v3785 = vpack.c.b16 %v2665, %v2649
    %v3786 = vpack.c.b16 %v2666, %v2650
    %v3787 = vpack.c.b16 %v2667, %v2651
    %v3788 = vpack.c.b16 %v2668, %v2652
    %v3789 = vpack.c.b16 %v2669, %v2653
    %v3790 = vpack.c.b16 %v2670, %v2654
    %v3791 = vpack.c.b16 %v2671, %v2655
    %v3792 = vpack.c.b16 %v2672, %v2656
    %v3793 = vpack.c.b16 %v2673, %v2657
    %v3794 = vpack.c.b16 %v2674, %v2658
    %v3795 = vpack.c.b16 %v2675, %v2659
    %v3796 = vpack.c.b16 %v2676, %v2660
    %v3797 = vpack.c.b16 %v2693, %v2677
    %v3798 = vpack.c.b16 %v2694, %v2678
    %v3799 = vpack.c.b16 %v2695, %v2679
    %v3800 = vpack.c.b16 %v2696, %v2680
    %v3801 = vpack.c.b16 %v2697, %v2681
    %v3802 = vpack.c.b16 %v2698, %v2682
    %v3803 = vpack.c.b16 %v2699, %v2683
    %v3804 = vpack.c.b16 %v2700, %v2684
    %v3805 = vpack.c.b16 %v2701, %v2685
    %v3806 = vpack.c.b16 %v2702, %v2686
    %v3807 = vpack.c.b16 %v2703, %v2687
    %v3808 = vpack.c.b16 %v2704, %v2688
    %v3809 = vpack.c.b16 %v2705, %v2689
    %v3810 = vpack.c.b16 %v2706, %v2690
    %v3811 = vpack.c.b16 %v2707, %v2691
    %v3812 = vpack.c.b16 %v2708, %v2692
    %v3813 = vpack.c.b16 %v2725, %v2709
    %v3814 = vpack.c.b16 %v2726, %v2710
    %v3815 = vpack.c.b16 %v2727, %v2711
    %v3816 = vpack.c.b16 %v2728, %v2712
    %v3817 = vpack.c.b16 %v2729, %v2713
    %v3818 = vpack.c.b16 %v2730, %v2714
    %v3819 = vpack.c.b16 %v2731, %v2715
    %v3820 = vpack.c.b16 %v2732, %v2716
    %v3821 = vpack.c.b16 %v2733, %v2717
    %v3822 = vpack.c.b16 %v2734, %v2718
    %v3823 = vpack.c.b16 %v2735, %v2719
    %v3824 = vpack.c.b16 %v2736, %v2720
    %v3825 = vpack.c.b16 %v2737, %v2721
    %v3826 = vpack.c.b16 %v2738, %v2722
    %v3827 = vpack.c.b16 %v2739, %v2723
    %v3828 = vpack.c.b16 %v2740, %v2724
    %v3829 = vpack.c.b16 %v2757, %v2741
    %v3830 = vpack.c.b16 %v2758, %v2742
    %v3831 = vpack.c.b16 %v2759, %v2743
    %v3832 = vpack.c.b16 %v2760, %v2744
    %v3833 = vpack.c.b16 %v2761, %v2745
    %v3834 = vpack.c.b16 %v2762, %v2746
    %v3835 = vpack.c.b16 %v2763, %v2747
    %v3836 = vpack.c.b16 %v2764, %v2748
    %v3837 = vpack.c.b16 %v2765, %v2749
    %v3838 = vpack.c.b16 %v2766, %v2750
    %v3839 = vpack.c.b16 %v2767, %v2751
    %v3840 = vpack.c.b16 %v2768, %v2752
    %v3841 = vpack.c.b16 %v2769, %v2753
    %v3842 = vpack.c.b16 %v2770, %v2754
    %v3843 = vpack.c.b16 %v2771, %v2755
    %v3844 = vpack.c.b16 %v2772, %v2756
    %v3845 = vpack.c.b16 %v2789, %v2773
    %v3846 = vpack.c.b16 %v2790, %v2774
    %v3847 = vpack.c.b16 %v2791, %v2775
    %v3848 = vpack.c.b16 %v2792, %v2776
    %v3849 = vpack.c.b16 %v2793, %v2777
    %v3850 = vpack.c.b16 %v2794, %v2778
    %v3851 = vpack.c.b16 %v2795, %v2779
    %v3852 = vpack.c.b16 %v2796, %v2780
    %v3853 = vpack.c.b16 %v2797, %v2781
    %v3854 = vpack.c.b16 %v2798, %v2782
    %v3855 = vpack.c.b16 %v2799, %v2783
    %v3856 = vpack.c.b16 %v2800, %v2784
    %v3857 = vpack.c.b16 %v2801, %v2785
    %v3858 = vpack.c.b16 %v2802, %v2786
    %v3859 = vpack.c.b16 %v2803, %v2787
    %v3860 = vpack.c.b16 %v2804, %v2788
    %v3861 = vpack.c.b16 %v2821, %v2805
    %v3862 = vpack.c.b16 %v2822, %v2806
    %v3863 = vpack.c.b16 %v2823, %v2807
    %v3864 = vpack.c.b16 %v2824, %v2808
    %v3865 = vpack.c.b16 %v2825, %v2809
    %v3866 = vpack.c.b16 %v2826, %v2810
    %v3867 = vpack.c.b16 %v2827, %v2811
    %v3868 = vpack.c.b16 %v2828, %v2812
    %v3869 = vpack.c.b16 %v2829, %v2813
    %v3870 = vpack.c.b16 %v2830, %v2814
    %v3871 = vpack.c.b16 %v2831, %v2815
    %v3872 = vpack.c.b16 %v2832, %v2816
    %v3873 = vpack.c.b16 %v2833, %v2817
    %v3874 = vpack.c.b16 %v2834, %v2818
    %v3875 = vpack.c.b16 %v2835, %v2819
    %v3876 = vpack.c.b16 %v2836, %v2820
    %v3877 = vpack.c.b16 %v2853, %v2837
    %v3878 = vpack.c.b16 %v2854, %v2838
    %v3879 = vpack.c.b16 %v2855, %v2839
    %v3880 = vpack.c.b16 %v2856, %v2840
    %v3881 = vpack.c.b16 %v2857, %v2841
    %v3882 = vpack.c.b16 %v2858, %v2842
    %v3883 = vpack.c.b16 %v2859, %v2843
    %v3884 = vpack.c.b16 %v2860, %v2844
    %v3885 = vpack.c.b16 %v2861, %v2845
    %v3886 = vpack.c.b16 %v2862, %v2846
    %v3887 = vpack.c.b16 %v2863, %v2847
    %v3888 = vpack.c.b16 %v2864, %v2848
    %v3889 = vpack.c.b16 %v2865, %v2849
    %v3890 = vpack.c.b16 %v2866, %v2850
    %v3891 = vpack.c.b16 %v2867, %v2851
    %v3892 = vpack.c.b16 %v2868, %v2852
    %v3893 = vpack.c.b16 %v2885, %v2869
    %v3894 = vpack.c.b16 %v2886, %v2870
    %v3895 = vpack.c.b16 %v2887, %v2871
    %v3896 = vpack.c.b16 %v2888, %v2872
    %v3897 = vpack.c.b16 %v2889, %v2873
    %v3898 = vpack.c.b16 %v2890, %v2874
    %v3899 = vpack.c.b16 %v2891, %v2875
    %v3900 = vpack.c.b16 %v2892, %v2876
    %v3901 = vpack.c.b16 %v2893, %v2877
    %v3902 = vpack.c.b16 %v2894, %v2878
    %v3903 = vpack.c.b16 %v2895, %v2879
    %v3904 = vpack.c.b16 %v2896, %v2880
    %v3905 = vpack.c.b16 %v2897, %v2881
    %v3906 = vpack.c.b16 %v2898, %v2882
    %v3907 = vpack.c.b16 %v2899, %v2883
    %v3908 = vpack.c.b16 %v2900, %v2884
    %v3909 = vpack.c.b16 %v2917, %v2901
    %v3910 = vpack.c.b16 %v2918, %v2902
    %v3911 = vpack.c.b16 %v2919, %v2903
    %v3912 = vpack.c.b16 %v2920, %v2904
    %v3913 = vpack.c.b16 %v2921, %v2905
    %v3914 = vpack.c.b16 %v2922, %v2906
    %v3915 = vpack.c.b16 %v2923, %v2907
    %v3916 = vpack.c.b16 %v2924, %v2908
    %v3917 = vpack.c.b16 %v2925, %v2909
    %v3918 = vpack.c.b16 %v2926, %v2910
    %v3919 = vpack.c.b16 %v2927, %v2911
    %v3920 = vpack.c.b16 %v2928, %v2912
    %v3921 = vpack.c.b16 %v2929, %v2913
    %v3922 = vpack.c.b16 %v2930, %v2914
    %v3923 = vpack.c.b16 %v2931, %v2915
    %v3924 = vpack.c.b16 %v2932, %v2916
    %v3925 = vpack.c.b16 %v2949, %v2933
    %v3926 = vpack.c.b16 %v2950, %v2934
    %v3927 = vpack.c.b16 %v2951, %v2935
    %v3928 = vpack.c.b16 %v2952, %v2936
    %v3929 = vpack.c.b16 %v2953, %v2937
    %v3930 = vpack.c.b16 %v2954, %v2938
    %v3931 = vpack.c.b16 %v2955, %v2939
    %v3932 = vpack.c.b16 %v2956, %v2940
    %v3933 = vpack.c.b16 %v2957, %v2941
    %v3934 = vpack.c.b16 %v2958, %v2942
    %v3935 = vpack.c.b16 %v2959, %v2943
    %v3936 = vpack.c.b16 %v2960, %v2944
    %v3937 = vpack.c.b16 %v2961, %v2945
    %v3938 = vpack.c.b16 %v2962, %v2946
    %v3939 = vpack.c.b16 %v2963, %v2947
    %v3940 = vpack.c.b16 %v2964, %v2948
    %v3941 = vpack.c.b16 %v2981, %v2965
    %v3942 = vpack.c.b16 %v2982, %v2966
    %v3943 = vpack.c.b16 %v2983, %v2967
    %v3944 = vpack.c.b16 %v2984, %v2968
    %v3945 = vpack.c.b16 %v2985, %v2969
    %v3946 = vpack.c.b16 %v2986, %v2970
    %v3947 = vpack.c.b16 %v2987, %v2971
    %v3948 = vpack.c.b16 %v2988, %v2972
    %v3949 = vpack.c.b16 %v2989, %v2973
    %v3950 = vpack.c.b16 %v2990, %v2974
    %v3951 = vpack.c.b16 %v2991, %v2975
    %v3952 = vpack.c.b16 %v2992, %v2976
    %v3953 = vpack.c.b16 %v2993, %v2977
    %v3954 = vpack.c.b16 %v2994, %v2978
    %v3955 = vpack.c.b16 %v2995, %v2979
    %v3956 = vpack.c.b16 %v2996, %v2980
    %v3957 = vpack.c.b16 %v3013, %v2997
    %v3958 = vpack.c.b16 %v3014, %v2998
    %v3959 = vpack.c.b16 %v3015, %v2999
    %v3960 = vpack.c.b16 %v3016, %v3000
    %v3961 = vpack.c.b16 %v3017, %v3001
    %v3962 = vpack.c.b16 %v3018, %v3002
    %v3963 = vpack.c.b16 %v3019, %v3003
    %v3964 = vpack.c.b16 %v3020, %v3004
    %v3965 = vpack.c.b16 %v3021, %v3005
    %v3966 = vpack.c.b16 %v3022, %v3006
    %v3967 = vpack.c.b16 %v3023, %v3007
    %v3968 = vpack.c.b16 %v3024, %v3008
    %v3969 = vpack.c.b16 %v3025, %v3009
    %v3970 = vpack.c.b16 %v3026, %v3010
    %v3971 = vpack.c.b16 %v3027, %v3011
    %v3972 = vpack.c.b16 %v3028, %v3012
    %v3973 = vpack.c.b16 %v3045, %v3029
    %v3974 = vpack.c.b16 %v3046, %v3030
    %v3975 = vpack.c.b16 %v3047, %v3031
    %v3976 = vpack.c.b16 %v3048, %v3032
    %v3977 = vpack.c.b16 %v3049, %v3033
    %v3978 = vpack.c.b16 %v3050, %v3034
    %v3979 = vpack.c.b16 %v3051, %v3035
    %v3980 = vpack.c.b16 %v3052, %v3036
    %v3981 = vpack.c.b16 %v3053, %v3037
    %v3982 = vpack.c.b16 %v3054, %v3038
    %v3983 = vpack.c.b16 %v3055, %v3039
    %v3984 = vpack.c.b16 %v3056, %v3040
    %v3985 = vpack.c.b16 %v3057, %v3041
    %v3986 = vpack.c.b16 %v3058, %v3042
    %v3987 = vpack.c.b16 %v3059, %v3043
    %v3988 = vpack.c.b16 %v3060, %v3044
    %v3989 = vpack.c.b16 %v3077, %v3061
    %v3990 = vpack.c.b16 %v3078, %v3062
    %v3991 = vpack.c.b16 %v3079, %v3063
    %v3992 = vpack.c.b16 %v3080, %v3064
    %v3993 = vpack.c.b16 %v3081, %v3065
    %v3994 = vpack.c.b16 %v3082, %v3066
    %v3995 = vpack.c.b16 %v3083, %v3067
    %v3996 = vpack.c.b16 %v3084, %v3068
    %v3997 = vpack.c.b16 %v3085, %v3069
    %v3998 = vpack.c.b16 %v3086, %v3070
    %v3999 = vpack.c.b16 %v3087, %v3071
    %v4000 = vpack.c.b16 %v3088, %v3072
    %v4001 = vpack.c.b16 %v3089, %v3073
    %v4002 = vpack.c.b16 %v3090, %v3074
    %v4003 = vpack.c.b16 %v3091, %v3075
    %v4004 = vpack.c.b16 %v3092, %v3076
    %v4005 = vpack.c.b16 %v3109, %v3093
    %v4006 = vpack.c.b16 %v3110, %v3094
    %v4007 = vpack.c.b16 %v3111, %v3095
    %v4008 = vpack.c.b16 %v3112, %v3096
    %v4009 = vpack.c.b16 %v3113, %v3097
    %v4010 = vpack.c.b16 %v3114, %v3098
    %v4011 = vpack.c.b16 %v3115, %v3099
    %v4012 = vpack.c.b16 %v3116, %v3100
    %v4013 = vpack.c.b16 %v3117, %v3101
    %v4014 = vpack.c.b16 %v3118, %v3102
    %v4015 = vpack.c.b16 %v3119, %v3103
    %v4016 = vpack.c.b16 %v3120, %v3104
    %v4017 = vpack.c.b16 %v3121, %v3105
    %v4018 = vpack.c.b16 %v3122, %v3106
    %v4019 = vpack.c.b16 %v3123, %v3107
    %v4020 = vpack.c.b16 %v3124, %v3108
    %v4021 = vpack.c.b16 %v3141, %v3125
    %v4022 = vpack.c.b16 %v3142, %v3126
    %v4023 = vpack.c.b16 %v3143, %v3127
    %v4024 = vpack.c.b16 %v3144, %v3128
    %v4025 = vpack.c.b16 %v3145, %v3129
    %v4026 = vpack.c.b16 %v3146, %v3130
    %v4027 = vpack.c.b16 %v3147, %v3131
    %v4028 = vpack.c.b16 %v3148, %v3132
    %v4029 = vpack.c.b16 %v3149, %v3133
    %v4030 = vpack.c.b16 %v3150, %v3134
    %v4031 = vpack.c.b16 %v3151, %v3135
    %v4032 = vpack.c.b16 %v3152, %v3136
    %v4033 = vpack.c.b16 %v3153, %v3137
    %v4034 = vpack.c.b16 %v3154, %v3138
    %v4035 = vpack.c.b16 %v3155, %v3139
    %v4036 = vpack.c.b16 %v3156, %v3140
    %v4037 = vpack.c.b16 %v3173, %v3157
    %v4038 = vpack.c.b16 %v3174, %v3158
    %v4039 = vpack.c.b16 %v3175, %v3159
    %v4040 = vpack.c.b16 %v3176, %v3160
    %v4041 = vpack.c.b16 %v3177, %v3161
    %v4042 = vpack.c.b16 %v3178, %v3162
    %v4043 = vpack.c.b16 %v3179, %v3163
    %v4044 = vpack.c.b16 %v3180, %v3164
    %v4045 = vpack.c.b16 %v3181, %v3165
    %v4046 = vpack.c.b16 %v3182, %v3166
    %v4047 = vpack.c.b16 %v3183, %v3167
    %v4048 = vpack.c.b16 %v3184, %v3168
    %v4049 = vpack.c.b16 %v3185, %v3169
    %v4050 = vpack.c.b16 %v3186, %v3170
    %v4051 = vpack.c.b16 %v3187, %v3171
    %v4052 = vpack.c.b16 %v3188, %v3172
    %v4053 = vpack.c.b16 %v3205, %v3189
    %v4054 = vpack.c.b16 %v3206, %v3190
    %v4055 = vpack.c.b16 %v3207, %v3191
    %v4056 = vpack.c.b16 %v3208, %v3192
    %v4057 = vpack.c.b16 %v3209, %v3193
    %v4058 = vpack.c.b16 %v3210, %v3194
    %v4059 = vpack.c.b16 %v3211, %v3195
    %v4060 = vpack.c.b16 %v3212, %v3196
    %v4061 = vpack.c.b16 %v3213, %v3197
    %v4062 = vpack.c.b16 %v3214, %v3198
    %v4063 = vpack.c.b16 %v3215, %v3199
    %v4064 = vpack.c.b16 %v3216, %v3200
    %v4065 = vpack.c.b16 %v3217, %v3201
    %v4066 = vpack.c.b16 %v3218, %v3202
    %v4067 = vpack.c.b16 %v3219, %v3203
    %v4068 = vpack.c.b16 %v3220, %v3204
    %v4069 = vpack.c.b16 %v3237, %v3221
    %v4070 = vpack.c.b16 %v3238, %v3222
    %v4071 = vpack.c.b16 %v3239, %v3223
    %v4072 = vpack.c.b16 %v3240, %v3224
    %v4073 = vpack.c.b16 %v3241, %v3225
    %v4074 = vpack.c.b16 %v3242, %v3226
    %v4075 = vpack.c.b16 %v3243, %v3227
    %v4076 = vpack.c.b16 %v3244, %v3228
    %v4077 = vpack.c.b16 %v3245, %v3229
    %v4078 = vpack.c.b16 %v3246, %v3230
    %v4079 = vpack.c.b16 %v3247, %v3231
    %v4080 = vpack.c.b16 %v3248, %v3232
    %v4081 = vpack.c.b16 %v3249, %v3233
    %v4082 = vpack.c.b16 %v3250, %v3234
    %v4083 = vpack.c.b16 %v3251, %v3235
    %v4084 = vpack.c.b16 %v3252, %v3236
    %v4085 = vpack.c.b16 %v3269, %v3253
    %v4086 = vpack.c.b16 %v3270, %v3254
    %v4087 = vpack.c.b16 %v3271, %v3255
    %v4088 = vpack.c.b16 %v3272, %v3256
    %v4089 = vpack.c.b16 %v3273, %v3257
    %v4090 = vpack.c.b16 %v3274, %v3258
    %v4091 = vpack.c.b16 %v3275, %v3259
    %v4092 = vpack.c.b16 %v3276, %v3260
    %v4093 = vpack.c.b16 %v3277, %v3261
    %v4094 = vpack.c.b16 %v3278, %v3262
    %v4095 = vpack.c.b16 %v3279, %v3263
    %v4096 = vpack.c.b16 %v3280, %v3264
    %v4097 = vpack.c.b16 %v3281, %v3265
    %v4098 = vpack.c.b16 %v3282, %v3266
    %v4099 = vpack.c.b16 %v3283, %v3267
    %v4100 = vpack.c.b16 %v3284, %v3268
    %v4101 = vpack.c.b16 %v3301, %v3285
    %v4102 = vpack.c.b16 %v3302, %v3286
    %v4103 = vpack.c.b16 %v3303, %v3287
    %v4104 = vpack.c.b16 %v3304, %v3288
    %v4105 = vpack.c.b16 %v3305, %v3289
    %v4106 = vpack.c.b16 %v3306, %v3290
    %v4107 = vpack.c.b16 %v3307, %v3291
    %v4108 = vpack.c.b16 %v3308, %v3292
    %v4109 = vpack.c.b16 %v3309, %v3293
    %v4110 = vpack.c.b16 %v3310, %v3294
    %v4111 = vpack.c.b16 %v3311, %v3295
    %v4112 = vpack.c.b16 %v3312, %v3296
    %v4113 = vpack.c.b16 %v3313, %v3297
    %v4114 = vpack.c.b16 %v3314, %v3298
    %v4115 = vpack.c.b16 %v3315, %v3299
    %v4116 = vpack.c.b16 %v3316, %v3300
    %v4117 = vpack.c.b16 %v3333, %v3317
    %v4118 = vpack.c.b16 %v3334, %v3318
    %v4119 = vpack.c.b16 %v3335, %v3319
    %v4120 = vpack.c.b16 %v3336, %v3320
    %v4121 = vpack.c.b16 %v3337, %v3321
    %v4122 = vpack.c.b16 %v3338, %v3322
    %v4123 = vpack.c.b16 %v3339, %v3323
    %v4124 = vpack.c.b16 %v3340, %v3324
    %v4125 = vpack.c.b16 %v3341, %v3325
    %v4126 = vpack.c.b16 %v3342, %v3326
    %v4127 = vpack.c.b16 %v3343, %v3327
    %v4128 = vpack.c.b16 %v3344, %v3328
    %v4129 = vpack.c.b16 %v3345, %v3329
    %v4130 = vpack.c.b16 %v3346, %v3330
    %v4131 = vpack.c.b16 %v3347, %v3331
    %v4132 = vpack.c.b16 %v3348, %v3332
    %vm4917 = vcmask 130048
    %v4919 = vsel %vm4917, %v128, 0
    %4921 = vmatprep.subr.bf16.mxu0 %v3350
    %4922 = vmatpush1.bf16.msra.mxu0 %v3349
    %4923 = vmatprep.subr.bf16.mxu0 %v3366
    %4924 = vmatpush1.bf16.msra.mxu0 %v3365
    %4925 = vmatprep.subr.bf16.mxu0 %v3382
    %4926 = vmatpush1.bf16.msra.mxu0 %v3381
    %4927 = vmatprep.subr.bf16.mxu0 %v3398
    %4928 = vmatpush1.bf16.msra.mxu0 %v3397
    %4929 = vmatprep.subr.bf16.mxu0 %v3414
    %4930 = vmatpush1.bf16.msra.mxu0 %v3413
    %4931 = vmatprep.subr.bf16.mxu0 %v3430
    %4932 = vmatpush1.bf16.msra.mxu0 %v3429
    %4933 = vmatprep.subr.bf16.mxu0 %v3446
    %4934 = vmatpush1.bf16.msra.mxu0 %v3445
    %4935 = vmatprep.subr.bf16.mxu0 %v3462
    %4936 = vmatpush1.bf16.msra.mxu0 %v3461
    %4937 = vmatprep.subr.bf16.mxu0 %v3478
    %4938 = vmatpush1.bf16.msra.mxu0 %v3477
    %4939 = vmatprep.subr.bf16.mxu0 %v3494
    %4940 = vmatpush1.bf16.msra.mxu0 %v3493
    %4941 = vmatprep.subr.bf16.mxu0 %v3510
    %4942 = vmatpush1.bf16.msra.mxu0 %v3509
    %4943 = vmatprep.subr.bf16.mxu0 %v3526
    %4944 = vmatpush1.bf16.msra.mxu0 %v3525
    %4945 = vmatprep.subr.bf16.mxu0 %v3542
    %4946 = vmatpush1.bf16.msra.mxu0 %v3541
    %4947 = vmatprep.subr.bf16.mxu0 %v3558
    %4948 = vmatpush1.bf16.msra.mxu0 %v3557
    %4949 = vmatprep.subr.bf16.mxu0 %v3574
    %4950 = vmatpush1.bf16.msra.mxu0 %v3573
    %4951 = vmatprep.subr.bf16.mxu0 %v3590
    %4952 = vmatpush1.bf16.msra.mxu0 %v3589
    %4953 = vmatprep.mubr.bf16.mxu0 %v123
    %4954 = vmatmul.mubr.bf16.gmra.mrb[0].mxu0 %v122
    %v4955 = vpop.f32.mrb[0].mxu0
    %v4956 = vadd.f32 %v920, %v4955
    %v4957 = vpop.f32.mrb[0].mxu0
    %v4958 = vadd.f32 %v924, %v4957
    %v4959 = vpop.f32.mrb[0].mxu0
    %v4960 = vpop.f32.mrb[0].mxu0
    %4961 = vdwg.mxu0
    %4962 = vmatprep.subr.bf16.mxu0 %v3606
    %4963 = vmatpush1.bf16.msra.mxu0 %v3605
    %4964 = vmatprep.subr.bf16.mxu0 %v3622
    %4965 = vmatpush1.bf16.msra.mxu0 %v3621
    %4966 = vmatprep.subr.bf16.mxu0 %v3638
    %4967 = vmatpush1.bf16.msra.mxu0 %v3637
    %4968 = vmatprep.subr.bf16.mxu0 %v3654
    %4969 = vmatpush1.bf16.msra.mxu0 %v3653
    %4970 = vmatprep.subr.bf16.mxu0 %v3670
    %4971 = vmatpush1.bf16.msra.mxu0 %v3669
    %4972 = vmatprep.subr.bf16.mxu0 %v3686
    %4973 = vmatpush1.bf16.msra.mxu0 %v3685
    %4974 = vmatprep.subr.bf16.mxu0 %v3702
    %4975 = vmatpush1.bf16.msra.mxu0 %v3701
    %4976 = vmatprep.subr.bf16.mxu0 %v3718
    %4977 = vmatpush1.bf16.msra.mxu0 %v3717
    %4978 = vmatprep.subr.bf16.mxu0 %v3734
    %4979 = vmatpush1.bf16.msra.mxu0 %v3733
    %4980 = vmatprep.subr.bf16.mxu0 %v3750
    %4981 = vmatpush1.bf16.msra.mxu0 %v3749
    %4982 = vmatprep.subr.bf16.mxu0 %v3766
    %4983 = vmatpush1.bf16.msra.mxu0 %v3765
    %4984 = vmatprep.subr.bf16.mxu0 %v3782
    %4985 = vmatpush1.bf16.msra.mxu0 %v3781
    %4986 = vmatprep.subr.bf16.mxu0 %v3798
    %4987 = vmatpush1.bf16.msra.mxu0 %v3797
    %4988 = vmatprep.subr.bf16.mxu0 %v3814
    %4989 = vmatpush1.bf16.msra.mxu0 %v3813
    %4990 = vmatprep.subr.bf16.mxu0 %v3830
    %4991 = vmatpush1.bf16.msra.mxu0 %v3829
    %4992 = vmatprep.subr.bf16.mxu0 %v3846
    %4993 = vmatpush1.bf16.msra.mxu0 %v3845
    %4994 = vmatprep.mubr.bf16.mxu0 %v125
    %4995 = vmatmul.mubr.bf16.gmra.mrb[0].mxu0 %v124
    %v4996 = vpop.f32.mrb[0].mxu0
    %v4997 = vadd.f32 %v4956, %v4996
    %v4998 = vpop.f32.mrb[0].mxu0
    %v4999 = vadd.f32 %v4958, %v4998
    %v5000 = vpop.f32.mrb[0].mxu0
    %v5001 = vpop.f32.mrb[0].mxu0
    %5002 = vdwg.mxu0
    %5003 = vmatprep.subr.bf16.mxu0 %v3862
    %5004 = vmatpush1.bf16.msra.mxu0 %v3861
    %5005 = vmatprep.subr.bf16.mxu0 %v3878
    %5006 = vmatpush1.bf16.msra.mxu0 %v3877
    %5007 = vmatprep.subr.bf16.mxu0 %v3894
    %5008 = vmatpush1.bf16.msra.mxu0 %v3893
    %5009 = vmatprep.subr.bf16.mxu0 %v3910
    %5010 = vmatpush1.bf16.msra.mxu0 %v3909
    %5011 = vmatprep.subr.bf16.mxu0 %v3926
    %5012 = vmatpush1.bf16.msra.mxu0 %v3925
    %5013 = vmatprep.subr.bf16.mxu0 %v3942
    %5014 = vmatpush1.bf16.msra.mxu0 %v3941
    %5015 = vmatprep.subr.bf16.mxu0 %v3958
    %5016 = vmatpush1.bf16.msra.mxu0 %v3957
    %5017 = vmatprep.subr.bf16.mxu0 %v3974
    %5018 = vmatpush1.bf16.msra.mxu0 %v3973
    %5019 = vmatprep.subr.bf16.mxu0 %v3990
    %5020 = vmatpush1.bf16.msra.mxu0 %v3989
    %5021 = vmatprep.subr.bf16.mxu0 %v4006
    %5022 = vmatpush1.bf16.msra.mxu0 %v4005
    %5023 = vmatprep.subr.bf16.mxu0 %v4022
    %5024 = vmatpush1.bf16.msra.mxu0 %v4021
    %5025 = vmatprep.subr.bf16.mxu0 %v4038
    %5026 = vmatpush1.bf16.msra.mxu0 %v4037
    %5027 = vmatprep.subr.bf16.mxu0 %v4054
    %5028 = vmatpush1.bf16.msra.mxu0 %v4053
    %5029 = vmatprep.subr.bf16.mxu0 %v4070
    %5030 = vmatpush1.bf16.msra.mxu0 %v4069
    %5031 = vmatprep.subr.bf16.mxu0 %v4086
    %5032 = vmatpush1.bf16.msra.mxu0 %v4085
    %5033 = vmatprep.subr.bf16.mxu0 %v4102
    %5034 = vmatpush1.bf16.msra.mxu0 %v4101
    %5035 = vmatprep.mubr.bf16.mxu0 %v127
    %5036 = vmatmul.mubr.bf16.gmra.mrb[0].mxu0 %v126
    %v5037 = vpop.f32.mrb[0].mxu0
    %v5038 = vadd.f32 %v4997, %v5037
    %v5039 = vpop.f32.mrb[0].mxu0
    %v5040 = vadd.f32 %v4999, %v5039
    %v5041 = vpop.f32.mrb[0].mxu0
    %v5042 = vpop.f32.mrb[0].mxu0
    %5043 = vdwg.mxu0
    %5044 = vmatprep.subr.bf16.mxu0 %v4118
    %5045 = vmatpush1.bf16.msra.mxu0 %v4117
    %5046 = vmatprep.subr.bf16.mxu0 0
    %5047 = vmatpush1.bf16.msra.mxu0 0
    %5048 = vmatprep.subr.bf16.mxu0 0
    %5049 = vmatpush1.bf16.msra.mxu0 0
    %5050 = vmatprep.subr.bf16.mxu0 0
    %5051 = vmatpush1.bf16.msra.mxu0 0
    %5052 = vmatprep.subr.bf16.mxu0 0
    %5053 = vmatpush1.bf16.msra.mxu0 0
    %5054 = vmatprep.subr.bf16.mxu0 0
    %5055 = vmatpush1.bf16.msra.mxu0 0
    %5056 = vmatprep.subr.bf16.mxu0 0
    %5057 = vmatpush1.bf16.msra.mxu0 0
    %5058 = vmatprep.subr.bf16.mxu0 0
    %5059 = vmatpush1.bf16.msra.mxu0 0
    %5060 = vmatprep.subr.bf16.mxu0 0
    %5061 = vmatpush1.bf16.msra.mxu0 0
    %5062 = vmatprep.subr.bf16.mxu0 0
    %5063 = vmatpush1.bf16.msra.mxu0 0
    %5064 = vmatprep.subr.bf16.mxu0 0
    %5065 = vmatpush1.bf16.msra.mxu0 0
    %5066 = vmatprep.subr.bf16.mxu0 0
    %5067 = vmatpush1.bf16.msra.mxu0 0
    %5068 = vmatprep.subr.bf16.mxu0 0
    %5069 = vmatpush1.bf16.msra.mxu0 0
    %5070 = vmatprep.subr.bf16.mxu0 0
    %5071 = vmatpush1.bf16.msra.mxu0 0
    %5072 = vmatprep.subr.bf16.mxu0 0
    %5073 = vmatpush1.bf16.msra.mxu0 0
    %5074 = vmatprep.subr.bf16.mxu0 0
    %5075 = vmatpush1.bf16.msra.mxu0 0
    %5076 = vmatprep.mubr.bf16.mxu0 0
    %5077 = vmatmul.mubr.bf16.gmra.mrb[0].mxu0 %v4919
    %v5078 = vpop.f32.mrb[0].mxu0
    %v5079 = vadd.f32 %v5038, %v5078
    %v5080 = vpop.f32.mrb[0].mxu0
    %v5081 = vadd.f32 %v5040, %v5080
    %v5082 = vpop.f32.mrb[0].mxu0
    %v5083 = vpop.f32.mrb[0].mxu0
    %5084 = vdwg.mxu0
    %5085 = vmatprep.subr.bf16.mxu0 %v3352
    %5086 = vmatpush1.bf16.msra.mxu0 %v3351
    %5087 = vmatprep.subr.bf16.mxu0 %v3368
    %5088 = vmatpush1.bf16.msra.mxu0 %v3367
    %5089 = vmatprep.subr.bf16.mxu0 %v3384
    %5090 = vmatpush1.bf16.msra.mxu0 %v3383
    %5091 = vmatprep.subr.bf16.mxu0 %v3400
    %5092 = vmatpush1.bf16.msra.mxu0 %v3399
    %5093 = vmatprep.subr.bf16.mxu0 %v3416
    %5094 = vmatpush1.bf16.msra.mxu0 %v3415
    %5095 = vmatprep.subr.bf16.mxu0 %v3432
    %5096 = vmatpush1.bf16.msra.mxu0 %v3431
    %5097 = vmatprep.subr.bf16.mxu0 %v3448
    %5098 = vmatpush1.bf16.msra.mxu0 %v3447
    %5099 = vmatprep.subr.bf16.mxu0 %v3464
    %5100 = vmatpush1.bf16.msra.mxu0 %v3463
    %5101 = vmatprep.subr.bf16.mxu0 %v3480
    %5102 = vmatpush1.bf16.msra.mxu0 %v3479
    %5103 = vmatprep.subr.bf16.mxu0 %v3496
    %5104 = vmatpush1.bf16.msra.mxu0 %v3495
    %5105 = vmatprep.subr.bf16.mxu0 %v3512
    %5106 = vmatpush1.bf16.msra.mxu0 %v3511
    %5107 = vmatprep.subr.bf16.mxu0 %v3528
    %5108 = vmatpush1.bf16.msra.mxu0 %v3527
    %5109 = vmatprep.subr.bf16.mxu0 %v3544
    %5110 = vmatpush1.bf16.msra.mxu0 %v3543
    %5111 = vmatprep.subr.bf16.mxu0 %v3560
    %5112 = vmatpush1.bf16.msra.mxu0 %v3559
    %5113 = vmatprep.subr.bf16.mxu0 %v3576
    %5114 = vmatpush1.bf16.msra.mxu0 %v3575
    %5115 = vmatprep.subr.bf16.mxu0 %v3592
    %5116 = vmatpush1.bf16.msra.mxu0 %v3591
    %5117 = vmatprep.mubr.bf16.mxu0 %v123
    %5118 = vmatmul.mubr.bf16.gmra.mrb[0].mxu0 %v122
    %v5119 = vpop.f32.mrb[0].mxu0
    %v5120 = vadd.f32 %v928, %v5119
    %v5121 = vpop.f32.mrb[0].mxu0
    %v5122 = vadd.f32 %v932, %v5121
    %v5123 = vpop.f32.mrb[0].mxu0
    %v5124 = vpop.f32.mrb[0].mxu0
    %5125 = vdwg.mxu0
    %5126 = vmatprep.subr.bf16.mxu0 %v3608
    %5127 = vmatpush1.bf16.msra.mxu0 %v3607
    %5128 = vmatprep.subr.bf16.mxu0 %v3624
    %5129 = vmatpush1.bf16.msra.mxu0 %v3623
    %5130 = vmatprep.subr.bf16.mxu0 %v3640
    %5131 = vmatpush1.bf16.msra.mxu0 %v3639
    %5132 = vmatprep.subr.bf16.mxu0 %v3656
    %5133 = vmatpush1.bf16.msra.mxu0 %v3655
    %5134 = vmatprep.subr.bf16.mxu0 %v3672
    %5135 = vmatpush1.bf16.msra.mxu0 %v3671
    %5136 = vmatprep.subr.bf16.mxu0 %v3688
    %5137 = vmatpush1.bf16.msra.mxu0 %v3687
    %5138 = vmatprep.subr.bf16.mxu0 %v3704
    %5139 = vmatpush1.bf16.msra.mxu0 %v3703
    %5140 = vmatprep.subr.bf16.mxu0 %v3720
    %5141 = vmatpush1.bf16.msra.mxu0 %v3719
    %5142 = vmatprep.subr.bf16.mxu0 %v3736
    %5143 = vmatpush1.bf16.msra.mxu0 %v3735
    %5144 = vmatprep.subr.bf16.mxu0 %v3752
    %5145 = vmatpush1.bf16.msra.mxu0 %v3751
    %5146 = vmatprep.subr.bf16.mxu0 %v3768
    %5147 = vmatpush1.bf16.msra.mxu0 %v3767
    %5148 = vmatprep.subr.bf16.mxu0 %v3784
    %5149 = vmatpush1.bf16.msra.mxu0 %v3783
    %5150 = vmatprep.subr.bf16.mxu0 %v3800
    %5151 = vmatpush1.bf16.msra.mxu0 %v3799
    %5152 = vmatprep.subr.bf16.mxu0 %v3816
    %5153 = vmatpush1.bf16.msra.mxu0 %v3815
    %5154 = vmatprep.subr.bf16.mxu0 %v3832
    %5155 = vmatpush1.bf16.msra.mxu0 %v3831
    %5156 = vmatprep.subr.bf16.mxu0 %v3848
    %5157 = vmatpush1.bf16.msra.mxu0 %v3847
    %5158 = vmatprep.mubr.bf16.mxu0 %v125
    %5159 = vmatmul.mubr.bf16.gmra.mrb[0].mxu0 %v124
    %v5160 = vpop.f32.mrb[0].mxu0
    %v5161 = vadd.f32 %v5120, %v5160
    %v5162 = vpop.f32.mrb[0].mxu0
    %v5163 = vadd.f32 %v5122, %v5162
    %v5164 = vpop.f32.mrb[0].mxu0
    %v5165 = vpop.f32.mrb[0].mxu0
    %5166 = vdwg.mxu0
    %5167 = vmatprep.subr.bf16.mxu0 %v3864
    %5168 = vmatpush1.bf16.msra.mxu0 %v3863
    %5169 = vmatprep.subr.bf16.mxu0 %v3880
    %5170 = vmatpush1.bf16.msra.mxu0 %v3879
    %5171 = vmatprep.subr.bf16.mxu0 %v3896
    %5172 = vmatpush1.bf16.msra.mxu0 %v3895
    %5173 = vmatprep.subr.bf16.mxu0 %v3912
    %5174 = vmatpush1.bf16.msra.mxu0 %v3911
    %5175 = vmatprep.subr.bf16.mxu0 %v3928
    %5176 = vmatpush1.bf16.msra.mxu0 %v3927
    %5177 = vmatprep.subr.bf16.mxu0 %v3944
    %5178 = vmatpush1.bf16.msra.mxu0 %v3943
    %5179 = vmatprep.subr.bf16.mxu0 %v3960
    %5180 = vmatpush1.bf16.msra.mxu0 %v3959
    %5181 = vmatprep.subr.bf16.mxu0 %v3976
    %5182 = vmatpush1.bf16.msra.mxu0 %v3975
    %5183 = vmatprep.subr.bf16.mxu0 %v3992
    %5184 = vmatpush1.bf16.msra.mxu0 %v3991
    %5185 = vmatprep.subr.bf16.mxu0 %v4008
    %5186 = vmatpush1.bf16.msra.mxu0 %v4007
    %5187 = vmatprep.subr.bf16.mxu0 %v4024
    %5188 = vmatpush1.bf16.msra.mxu0 %v4023
    %5189 = vmatprep.subr.bf16.mxu0 %v4040
    %5190 = vmatpush1.bf16.msra.mxu0 %v4039
    %5191 = vmatprep.subr.bf16.mxu0 %v4056
    %5192 = vmatpush1.bf16.msra.mxu0 %v4055
    %5193 = vmatprep.subr.bf16.mxu0 %v4072
    %5194 = vmatpush1.bf16.msra.mxu0 %v4071
    %5195 = vmatprep.subr.bf16.mxu0 %v4088
    %5196 = vmatpush1.bf16.msra.mxu0 %v4087
    %5197 = vmatprep.subr.bf16.mxu0 %v4104
    %5198 = vmatpush1.bf16.msra.mxu0 %v4103
    %5199 = vmatprep.mubr.bf16.mxu0 %v127
    %5200 = vmatmul.mubr.bf16.gmra.mrb[0].mxu0 %v126
    %v5201 = vpop.f32.mrb[0].mxu0
    %v5202 = vadd.f32 %v5161, %v5201
    %v5203 = vpop.f32.mrb[0].mxu0
    %v5204 = vadd.f32 %v5163, %v5203
    %v5205 = vpop.f32.mrb[0].mxu0
    %v5206 = vpop.f32.mrb[0].mxu0
    %5207 = vdwg.mxu0
    %5208 = vmatprep.subr.bf16.mxu0 %v4120
    %5209 = vmatpush1.bf16.msra.mxu0 %v4119
    %5210 = vmatprep.subr.bf16.mxu0 0
    %5211 = vmatpush1.bf16.msra.mxu0 0
    %5212 = vmatprep.subr.bf16.mxu0 0
    %5213 = vmatpush1.bf16.msra.mxu0 0
    %5214 = vmatprep.subr.bf16.mxu0 0
    %5215 = vmatpush1.bf16.msra.mxu0 0
    %5216 = vmatprep.subr.bf16.mxu0 0
    %5217 = vmatpush1.bf16.msra.mxu0 0
    %5218 = vmatprep.subr.bf16.mxu0 0
    %5219 = vmatpush1.bf16.msra.mxu0 0
    %5220 = vmatprep.subr.bf16.mxu0 0
    %5221 = vmatpush1.bf16.msra.mxu0 0
    %5222 = vmatprep.subr.bf16.mxu0 0
    %5223 = vmatpush1.bf16.msra.mxu0 0
    %5224 = vmatprep.subr.bf16.mxu0 0
    %5225 = vmatpush1.bf16.msra.mxu0 0
    %5226 = vmatprep.subr.bf16.mxu0 0
    %5227 = vmatpush1.bf16.msra.mxu0 0
    %5228 = vmatprep.subr.bf16.mxu0 0
    %5229 = vmatpush1.bf16.msra.mxu0 0
    %5230 = vmatprep.subr.bf16.mxu0 0
    %5231 = vmatpush1.bf16.msra.mxu0 0
    %5232 = vmatprep.subr.bf16.mxu0 0
    %5233 = vmatpush1.bf16.msra.mxu0 0
    %5234 = vmatprep.subr.bf16.mxu0 0
    %5235 = vmatpush1.bf16.msra.mxu0 0
    %5236 = vmatprep.subr.bf16.mxu0 0
    %5237 = vmatpush1.bf16.msra.mxu0 0
    %5238 = vmatprep.subr.bf16.mxu0 0
    %5239 = vmatpush1.bf16.msra.mxu0 0
    %5240 = vmatprep.mubr.bf16.mxu0 0
    %5241 = vmatmul.mubr.bf16.gmra.mrb[0].mxu0 %v4919
    %v5242 = vpop.f32.mrb[0].mxu0
    %v5243 = vadd.f32 %v5202, %v5242
    %v5244 = vpop.f32.mrb[0].mxu0
    %v5245 = vadd.f32 %v5204, %v5244
    %v5246 = vpop.f32.mrb[0].mxu0
    %v5247 = vpop.f32.mrb[0].mxu0
    %5248 = vdwg.mxu0
    %5249 = vmatprep.subr.bf16.mxu0 %v3354
    %5250 = vmatpush1.bf16.msra.mxu0 %v3353
    %5251 = vmatprep.subr.bf16.mxu0 %v3370
    %5252 = vmatpush1.bf16.msra.mxu0 %v3369
    %5253 = vmatprep.subr.bf16.mxu0 %v3386
    %5254 = vmatpush1.bf16.msra.mxu0 %v3385
    %5255 = vmatprep.subr.bf16.mxu0 %v3402
    %5256 = vmatpush1.bf16.msra.mxu0 %v3401
    %5257 = vmatprep.subr.bf16.mxu0 %v3418
    %5258 = vmatpush1.bf16.msra.mxu0 %v3417
    %5259 = vmatprep.subr.bf16.mxu0 %v3434
    %5260 = vmatpush1.bf16.msra.mxu0 %v3433
    %5261 = vmatprep.subr.bf16.mxu0 %v3450
    %5262 = vmatpush1.bf16.msra.mxu0 %v3449
    %5263 = vmatprep.subr.bf16.mxu0 %v3466
    %5264 = vmatpush1.bf16.msra.mxu0 %v3465
    %5265 = vmatprep.subr.bf16.mxu0 %v3482
    %5266 = vmatpush1.bf16.msra.mxu0 %v3481
    %5267 = vmatprep.subr.bf16.mxu0 %v3498
    %5268 = vmatpush1.bf16.msra.mxu0 %v3497
    %5269 = vmatprep.subr.bf16.mxu0 %v3514
    %5270 = vmatpush1.bf16.msra.mxu0 %v3513
    %5271 = vmatprep.subr.bf16.mxu0 %v3530
    %5272 = vmatpush1.bf16.msra.mxu0 %v3529
    %5273 = vmatprep.subr.bf16.mxu0 %v3546
    %5274 = vmatpush1.bf16.msra.mxu0 %v3545
    %5275 = vmatprep.subr.bf16.mxu0 %v3562
    %5276 = vmatpush1.bf16.msra.mxu0 %v3561
    %5277 = vmatprep.subr.bf16.mxu0 %v3578
    %5278 = vmatpush1.bf16.msra.mxu0 %v3577
    %5279 = vmatprep.subr.bf16.mxu0 %v3594
    %5280 = vmatpush1.bf16.msra.mxu0 %v3593
    %5281 = vmatprep.mubr.bf16.mxu0 %v123
    %5282 = vmatmul.mubr.bf16.gmra.mrb[0].mxu0 %v122
    %v5283 = vpop.f32.mrb[0].mxu0
    %v5284 = vadd.f32 %v936, %v5283
    %v5285 = vpop.f32.mrb[0].mxu0
    %v5286 = vadd.f32 %v940, %v5285
    %v5287 = vpop.f32.mrb[0].mxu0
    %v5288 = vpop.f32.mrb[0].mxu0
    %5289 = vdwg.mxu0
    %5290 = vmatprep.subr.bf16.mxu0 %v3610
    %5291 = vmatpush1.bf16.msra.mxu0 %v3609
    %5292 = vmatprep.subr.bf16.mxu0 %v3626
    %5293 = vmatpush1.bf16.msra.mxu0 %v3625
    %5294 = vmatprep.subr.bf16.mxu0 %v3642
    %5295 = vmatpush1.bf16.msra.mxu0 %v3641
    %5296 = vmatprep.subr.bf16.mxu0 %v3658
    %5297 = vmatpush1.bf16.msra.mxu0 %v3657
    %5298 = vmatprep.subr.bf16.mxu0 %v3674
    %5299 = vmatpush1.bf16.msra.mxu0 %v3673
    %5300 = vmatprep.subr.bf16.mxu0 %v3690
    %5301 = vmatpush1.bf16.msra.mxu0 %v3689
    %5302 = vmatprep.subr.bf16.mxu0 %v3706
    %5303 = vmatpush1.bf16.msra.mxu0 %v3705
    %5304 = vmatprep.subr.bf16.mxu0 %v3722
    %5305 = vmatpush1.bf16.msra.mxu0 %v3721
    %5306 = vmatprep.subr.bf16.mxu0 %v3738
    %5307 = vmatpush1.bf16.msra.mxu0 %v3737
    %5308 = vmatprep.subr.bf16.mxu0 %v3754
    %5309 = vmatpush1.bf16.msra.mxu0 %v3753
    %5310 = vmatprep.subr.bf16.mxu0 %v3770
    %5311 = vmatpush1.bf16.msra.mxu0 %v3769
    %5312 = vmatprep.subr.bf16.mxu0 %v3786
    %5313 = vmatpush1.bf16.msra.mxu0 %v3785
    %5314 = vmatprep.subr.bf16.mxu0 %v3802
    %5315 = vmatpush1.bf16.msra.mxu0 %v3801
    %5316 = vmatprep.subr.bf16.mxu0 %v3818
    %5317 = vmatpush1.bf16.msra.mxu0 %v3817
    %5318 = vmatprep.subr.bf16.mxu0 %v3834
    %5319 = vmatpush1.bf16.msra.mxu0 %v3833
    %5320 = vmatprep.subr.bf16.mxu0 %v3850
    %5321 = vmatpush1.bf16.msra.mxu0 %v3849
    %5322 = vmatprep.mubr.bf16.mxu0 %v125
    %5323 = vmatmul.mubr.bf16.gmra.mrb[0].mxu0 %v124
    %v5324 = vpop.f32.mrb[0].mxu0
    %v5325 = vadd.f32 %v5284, %v5324
    %v5326 = vpop.f32.mrb[0].mxu0
    %v5327 = vadd.f32 %v5286, %v5326
    %v5328 = vpop.f32.mrb[0].mxu0
    %v5329 = vpop.f32.mrb[0].mxu0
    %5330 = vdwg.mxu0
    %5331 = vmatprep.subr.bf16.mxu0 %v3866
    %5332 = vmatpush1.bf16.msra.mxu0 %v3865
    %5333 = vmatprep.subr.bf16.mxu0 %v3882
    %5334 = vmatpush1.bf16.msra.mxu0 %v3881
    %5335 = vmatprep.subr.bf16.mxu0 %v3898
    %5336 = vmatpush1.bf16.msra.mxu0 %v3897
    %5337 = vmatprep.subr.bf16.mxu0 %v3914
    %5338 = vmatpush1.bf16.msra.mxu0 %v3913
    %5339 = vmatprep.subr.bf16.mxu0 %v3930
    %5340 = vmatpush1.bf16.msra.mxu0 %v3929
    %5341 = vmatprep.subr.bf16.mxu0 %v3946
    %5342 = vmatpush1.bf16.msra.mxu0 %v3945
    %5343 = vmatprep.subr.bf16.mxu0 %v3962
    %5344 = vmatpush1.bf16.msra.mxu0 %v3961
    %5345 = vmatprep.subr.bf16.mxu0 %v3978
    %5346 = vmatpush1.bf16.msra.mxu0 %v3977
    %5347 = vmatprep.subr.bf16.mxu0 %v3994
    %5348 = vmatpush1.bf16.msra.mxu0 %v3993
    %5349 = vmatprep.subr.bf16.mxu0 %v4010
    %5350 = vmatpush1.bf16.msra.mxu0 %v4009
    %5351 = vmatprep.subr.bf16.mxu0 %v4026
    %5352 = vmatpush1.bf16.msra.mxu0 %v4025
    %5353 = vmatprep.subr.bf16.mxu0 %v4042
    %5354 = vmatpush1.bf16.msra.mxu0 %v4041
    %5355 = vmatprep.subr.bf16.mxu0 %v4058
    %5356 = vmatpush1.bf16.msra.mxu0 %v4057
    %5357 = vmatprep.subr.bf16.mxu0 %v4074
    %5358 = vmatpush1.bf16.msra.mxu0 %v4073
    %5359 = vmatprep.subr.bf16.mxu0 %v4090
    %5360 = vmatpush1.bf16.msra.mxu0 %v4089
    %5361 = vmatprep.subr.bf16.mxu0 %v4106
    %5362 = vmatpush1.bf16.msra.mxu0 %v4105
    %5363 = vmatprep.mubr.bf16.mxu0 %v127
    %5364 = vmatmul.mubr.bf16.gmra.mrb[0].mxu0 %v126
    %v5365 = vpop.f32.mrb[0].mxu0
    %v5366 = vadd.f32 %v5325, %v5365
    %v5367 = vpop.f32.mrb[0].mxu0
    %v5368 = vadd.f32 %v5327, %v5367
    %v5369 = vpop.f32.mrb[0].mxu0
    %v5370 = vpop.f32.mrb[0].mxu0
    %5371 = vdwg.mxu0
    %5372 = vmatprep.subr.bf16.mxu0 %v4122
    %5373 = vmatpush1.bf16.msra.mxu0 %v4121
    %5374 = vmatprep.subr.bf16.mxu0 0
    %5375 = vmatpush1.bf16.msra.mxu0 0
    %5376 = vmatprep.subr.bf16.mxu0 0
    %5377 = vmatpush1.bf16.msra.mxu0 0
    %5378 = vmatprep.subr.bf16.mxu0 0
    %5379 = vmatpush1.bf16.msra.mxu0 0
    %5380 = vmatprep.subr.bf16.mxu0 0
    %5381 = vmatpush1.bf16.msra.mxu0 0
    %5382 = vmatprep.subr.bf16.mxu0 0
    %5383 = vmatpush1.bf16.msra.mxu0 0
    %5384 = vmatprep.subr.bf16.mxu0 0
    %5385 = vmatpush1.bf16.msra.mxu0 0
    %5386 = vmatprep.subr.bf16.mxu0 0
    %5387 = vmatpush1.bf16.msra.mxu0 0
    %5388 = vmatprep.subr.bf16.mxu0 0
    %5389 = vmatpush1.bf16.msra.mxu0 0
    %5390 = vmatprep.subr.bf16.mxu0 0
    %5391 = vmatpush1.bf16.msra.mxu0 0
    %5392 = vmatprep.subr.bf16.mxu0 0
    %5393 = vmatpush1.bf16.msra.mxu0 0
    %5394 = vmatprep.subr.bf16.mxu0 0
    %5395 = vmatpush1.bf16.msra.mxu0 0
    %5396 = vmatprep.subr.bf16.mxu0 0
    %5397 = vmatpush1.bf16.msra.mxu0 0
    %5398 = vmatprep.subr.bf16.mxu0 0
    %5399 = vmatpush1.bf16.msra.mxu0 0
    %5400 = vmatprep.subr.bf16.mxu0 0
    %5401 = vmatpush1.bf16.msra.mxu0 0
    %5402 = vmatprep.subr.bf16.mxu0 0
    %5403 = vmatpush1.bf16.msra.mxu0 0
    %5404 = vmatprep.mubr.bf16.mxu0 0
    %5405 = vmatmul.mubr.bf16.gmra.mrb[0].mxu0 %v4919
    %v5406 = vpop.f32.mrb[0].mxu0
    %v5407 = vadd.f32 %v5366, %v5406
    %v5408 = vpop.f32.mrb[0].mxu0
    %v5409 = vadd.f32 %v5368, %v5408
    %v5410 = vpop.f32.mrb[0].mxu0
    %v5411 = vpop.f32.mrb[0].mxu0
    %5412 = vdwg.mxu0
    %5413 = vmatprep.subr.bf16.mxu0 %v3356
    %5414 = vmatpush1.bf16.msra.mxu0 %v3355
    %5415 = vmatprep.subr.bf16.mxu0 %v3372
    %5416 = vmatpush1.bf16.msra.mxu0 %v3371
    %5417 = vmatprep.subr.bf16.mxu0 %v3388
    %5418 = vmatpush1.bf16.msra.mxu0 %v3387
    %5419 = vmatprep.subr.bf16.mxu0 %v3404
    %5420 = vmatpush1.bf16.msra.mxu0 %v3403
    %5421 = vmatprep.subr.bf16.mxu0 %v3420
    %5422 = vmatpush1.bf16.msra.mxu0 %v3419
    %5423 = vmatprep.subr.bf16.mxu0 %v3436
    %5424 = vmatpush1.bf16.msra.mxu0 %v3435
    %5425 = vmatprep.subr.bf16.mxu0 %v3452
    %5426 = vmatpush1.bf16.msra.mxu0 %v3451
    %5427 = vmatprep.subr.bf16.mxu0 %v3468
    %5428 = vmatpush1.bf16.msra.mxu0 %v3467
    %5429 = vmatprep.subr.bf16.mxu0 %v3484
    %5430 = vmatpush1.bf16.msra.mxu0 %v3483
    %5431 = vmatprep.subr.bf16.mxu0 %v3500
    %5432 = vmatpush1.bf16.msra.mxu0 %v3499
    %5433 = vmatprep.subr.bf16.mxu0 %v3516
    %5434 = vmatpush1.bf16.msra.mxu0 %v3515
    %5435 = vmatprep.subr.bf16.mxu0 %v3532
    %5436 = vmatpush1.bf16.msra.mxu0 %v3531
    %5437 = vmatprep.subr.bf16.mxu0 %v3548
    %5438 = vmatpush1.bf16.msra.mxu0 %v3547
    %5439 = vmatprep.subr.bf16.mxu0 %v3564
    %5440 = vmatpush1.bf16.msra.mxu0 %v3563
    %5441 = vmatprep.subr.bf16.mxu0 %v3580
    %5442 = vmatpush1.bf16.msra.mxu0 %v3579
    %5443 = vmatprep.subr.bf16.mxu0 %v3596
    %5444 = vmatpush1.bf16.msra.mxu0 %v3595
    %5445 = vmatprep.mubr.bf16.mxu0 %v123
    %5446 = vmatmul.mubr.bf16.gmra.mrb[0].mxu0 %v122
    %v5447 = vpop.f32.mrb[0].mxu0
    %v5448 = vadd.f32 %v944, %v5447
    %v5449 = vpop.f32.mrb[0].mxu0
    %v5450 = vadd.f32 %v948, %v5449
    %v5451 = vpop.f32.mrb[0].mxu0
    %v5452 = vpop.f32.mrb[0].mxu0
    %5453 = vdwg.mxu0
    %5454 = vmatprep.subr.bf16.mxu0 %v3612
    %5455 = vmatpush1.bf16.msra.mxu0 %v3611
    %5456 = vmatprep.subr.bf16.mxu0 %v3628
    %5457 = vmatpush1.bf16.msra.mxu0 %v3627
    %5458 = vmatprep.subr.bf16.mxu0 %v3644
    %5459 = vmatpush1.bf16.msra.mxu0 %v3643
    %5460 = vmatprep.subr.bf16.mxu0 %v3660
    %5461 = vmatpush1.bf16.msra.mxu0 %v3659
    %5462 = vmatprep.subr.bf16.mxu0 %v3676
    %5463 = vmatpush1.bf16.msra.mxu0 %v3675
    %5464 = vmatprep.subr.bf16.mxu0 %v3692
    %5465 = vmatpush1.bf16.msra.mxu0 %v3691
    %5466 = vmatprep.subr.bf16.mxu0 %v3708
    %5467 = vmatpush1.bf16.msra.mxu0 %v3707
    %5468 = vmatprep.subr.bf16.mxu0 %v3724
    %5469 = vmatpush1.bf16.msra.mxu0 %v3723
    %5470 = vmatprep.subr.bf16.mxu0 %v3740
    %5471 = vmatpush1.bf16.msra.mxu0 %v3739
    %5472 = vmatprep.subr.bf16.mxu0 %v3756
    %5473 = vmatpush1.bf16.msra.mxu0 %v3755
    %5474 = vmatprep.subr.bf16.mxu0 %v3772
    %5475 = vmatpush1.bf16.msra.mxu0 %v3771
    %5476 = vmatprep.subr.bf16.mxu0 %v3788
    %5477 = vmatpush1.bf16.msra.mxu0 %v3787
    %5478 = vmatprep.subr.bf16.mxu0 %v3804
    %5479 = vmatpush1.bf16.msra.mxu0 %v3803
    %5480 = vmatprep.subr.bf16.mxu0 %v3820
    %5481 = vmatpush1.bf16.msra.mxu0 %v3819
    %5482 = vmatprep.subr.bf16.mxu0 %v3836
    %5483 = vmatpush1.bf16.msra.mxu0 %v3835
    %5484 = vmatprep.subr.bf16.mxu0 %v3852
    %5485 = vmatpush1.bf16.msra.mxu0 %v3851
    %5486 = vmatprep.mubr.bf16.mxu0 %v125
    %5487 = vmatmul.mubr.bf16.gmra.mrb[0].mxu0 %v124
    %v5488 = vpop.f32.mrb[0].mxu0
    %v5489 = vadd.f32 %v5448, %v5488
    %v5490 = vpop.f32.mrb[0].mxu0
    %v5491 = vadd.f32 %v5450, %v5490
    %v5492 = vpop.f32.mrb[0].mxu0
    %v5493 = vpop.f32.mrb[0].mxu0
    %5494 = vdwg.mxu0
    %5495 = vmatprep.subr.bf16.mxu0 %v3868
    %5496 = vmatpush1.bf16.msra.mxu0 %v3867
    %5497 = vmatprep.subr.bf16.mxu0 %v3884
    %5498 = vmatpush1.bf16.msra.mxu0 %v3883
    %5499 = vmatprep.subr.bf16.mxu0 %v3900
    %5500 = vmatpush1.bf16.msra.mxu0 %v3899
    %5501 = vmatprep.subr.bf16.mxu0 %v3916
    %5502 = vmatpush1.bf16.msra.mxu0 %v3915
    %5503 = vmatprep.subr.bf16.mxu0 %v3932
    %5504 = vmatpush1.bf16.msra.mxu0 %v3931
    %5505 = vmatprep.subr.bf16.mxu0 %v3948
    %5506 = vmatpush1.bf16.msra.mxu0 %v3947
    %5507 = vmatprep.subr.bf16.mxu0 %v3964
    %5508 = vmatpush1.bf16.msra.mxu0 %v3963
    %5509 = vmatprep.subr.bf16.mxu0 %v3980
    %5510 = vmatpush1.bf16.msra.mxu0 %v3979
    %5511 = vmatprep.subr.bf16.mxu0 %v3996
    %5512 = vmatpush1.bf16.msra.mxu0 %v3995
    %5513 = vmatprep.subr.bf16.mxu0 %v4012
    %5514 = vmatpush1.bf16.msra.mxu0 %v4011
    %5515 = vmatprep.subr.bf16.mxu0 %v4028
    %5516 = vmatpush1.bf16.msra.mxu0 %v4027
    %5517 = vmatprep.subr.bf16.mxu0 %v4044
    %5518 = vmatpush1.bf16.msra.mxu0 %v4043
    %5519 = vmatprep.subr.bf16.mxu0 %v4060
    %5520 = vmatpush1.bf16.msra.mxu0 %v4059
    %5521 = vmatprep.subr.bf16.mxu0 %v4076
    %5522 = vmatpush1.bf16.msra.mxu0 %v4075
    %5523 = vmatprep.subr.bf16.mxu0 %v4092
    %5524 = vmatpush1.bf16.msra.mxu0 %v4091
    %5525 = vmatprep.subr.bf16.mxu0 %v4108
    %5526 = vmatpush1.bf16.msra.mxu0 %v4107
    %5527 = vmatprep.mubr.bf16.mxu0 %v127
    %5528 = vmatmul.mubr.bf16.gmra.mrb[0].mxu0 %v126
    %v5529 = vpop.f32.mrb[0].mxu0
    %v5530 = vadd.f32 %v5489, %v5529
    %v5531 = vpop.f32.mrb[0].mxu0
    %v5532 = vadd.f32 %v5491, %v5531
    %v5533 = vpop.f32.mrb[0].mxu0
    %v5534 = vpop.f32.mrb[0].mxu0
    %5535 = vdwg.mxu0
    %5536 = vmatprep.subr.bf16.mxu0 %v4124
    %5537 = vmatpush1.bf16.msra.mxu0 %v4123
    %5538 = vmatprep.subr.bf16.mxu0 0
    %5539 = vmatpush1.bf16.msra.mxu0 0
    %5540 = vmatprep.subr.bf16.mxu0 0
    %5541 = vmatpush1.bf16.msra.mxu0 0
    %5542 = vmatprep.subr.bf16.mxu0 0
    %5543 = vmatpush1.bf16.msra.mxu0 0
    %5544 = vmatprep.subr.bf16.mxu0 0
    %5545 = vmatpush1.bf16.msra.mxu0 0
    %5546 = vmatprep.subr.bf16.mxu0 0
    %5547 = vmatpush1.bf16.msra.mxu0 0
    %5548 = vmatprep.subr.bf16.mxu0 0
    %5549 = vmatpush1.bf16.msra.mxu0 0
    %5550 = vmatprep.subr.bf16.mxu0 0
    %5551 = vmatpush1.bf16.msra.mxu0 0
    %5552 = vmatprep.subr.bf16.mxu0 0
    %5553 = vmatpush1.bf16.msra.mxu0 0
    %5554 = vmatprep.subr.bf16.mxu0 0
    %5555 = vmatpush1.bf16.msra.mxu0 0
    %5556 = vmatprep.subr.bf16.mxu0 0
    %5557 = vmatpush1.bf16.msra.mxu0 0
    %5558 = vmatprep.subr.bf16.mxu0 0
    %5559 = vmatpush1.bf16.msra.mxu0 0
    %5560 = vmatprep.subr.bf16.mxu0 0
    %5561 = vmatpush1.bf16.msra.mxu0 0
    %5562 = vmatprep.subr.bf16.mxu0 0
    %5563 = vmatpush1.bf16.msra.mxu0 0
    %5564 = vmatprep.subr.bf16.mxu0 0
    %5565 = vmatpush1.bf16.msra.mxu0 0
    %5566 = vmatprep.subr.bf16.mxu0 0
    %5567 = vmatpush1.bf16.msra.mxu0 0
    %5568 = vmatprep.mubr.bf16.mxu0 0
    %5569 = vmatmul.mubr.bf16.gmra.mrb[0].mxu0 %v4919
    %v5570 = vpop.f32.mrb[0].mxu0
    %v5571 = vadd.f32 %v5530, %v5570
    %v5572 = vpop.f32.mrb[0].mxu0
    %v5573 = vadd.f32 %v5532, %v5572
    %v5574 = vpop.f32.mrb[0].mxu0
    %v5575 = vpop.f32.mrb[0].mxu0
    %5576 = vdwg.mxu0
    %5577 = vmatprep.subr.bf16.mxu0 %v3358
    %5578 = vmatpush1.bf16.msra.mxu0 %v3357
    %5579 = vmatprep.subr.bf16.mxu0 %v3374
    %5580 = vmatpush1.bf16.msra.mxu0 %v3373
    %5581 = vmatprep.subr.bf16.mxu0 %v3390
    %5582 = vmatpush1.bf16.msra.mxu0 %v3389
    %5583 = vmatprep.subr.bf16.mxu0 %v3406
    %5584 = vmatpush1.bf16.msra.mxu0 %v3405
    %5585 = vmatprep.subr.bf16.mxu0 %v3422
    %5586 = vmatpush1.bf16.msra.mxu0 %v3421
    %5587 = vmatprep.subr.bf16.mxu0 %v3438
    %5588 = vmatpush1.bf16.msra.mxu0 %v3437
    %5589 = vmatprep.subr.bf16.mxu0 %v3454
    %5590 = vmatpush1.bf16.msra.mxu0 %v3453
    %5591 = vmatprep.subr.bf16.mxu0 %v3470
    %5592 = vmatpush1.bf16.msra.mxu0 %v3469
    %5593 = vmatprep.subr.bf16.mxu0 %v3486
    %5594 = vmatpush1.bf16.msra.mxu0 %v3485
    %5595 = vmatprep.subr.bf16.mxu0 %v3502
    %5596 = vmatpush1.bf16.msra.mxu0 %v3501
    %5597 = vmatprep.subr.bf16.mxu0 %v3518
    %5598 = vmatpush1.bf16.msra.mxu0 %v3517
    %5599 = vmatprep.subr.bf16.mxu0 %v3534
    %5600 = vmatpush1.bf16.msra.mxu0 %v3533
    %5601 = vmatprep.subr.bf16.mxu0 %v3550
    %5602 = vmatpush1.bf16.msra.mxu0 %v3549
    %5603 = vmatprep.subr.bf16.mxu0 %v3566
    %5604 = vmatpush1.bf16.msra.mxu0 %v3565
    %5605 = vmatprep.subr.bf16.mxu0 %v3582
    %5606 = vmatpush1.bf16.msra.mxu0 %v3581
    %5607 = vmatprep.subr.bf16.mxu0 %v3598
    %5608 = vmatpush1.bf16.msra.mxu0 %v3597
    %5609 = vmatprep.mubr.bf16.mxu0 %v123
    %5610 = vmatmul.mubr.bf16.gmra.mrb[0].mxu0 %v122
    %v5611 = vpop.f32.mrb[0].mxu0
    %v5612 = vadd.f32 %v952, %v5611
    %v5613 = vpop.f32.mrb[0].mxu0
    %v5614 = vadd.f32 %v956, %v5613
    %v5615 = vpop.f32.mrb[0].mxu0
    %v5616 = vpop.f32.mrb[0].mxu0
    %5617 = vdwg.mxu0
    %5618 = vmatprep.subr.bf16.mxu0 %v3614
    %5619 = vmatpush1.bf16.msra.mxu0 %v3613
    %5620 = vmatprep.subr.bf16.mxu0 %v3630
    %5621 = vmatpush1.bf16.msra.mxu0 %v3629
    %5622 = vmatprep.subr.bf16.mxu0 %v3646
    %5623 = vmatpush1.bf16.msra.mxu0 %v3645
    %5624 = vmatprep.subr.bf16.mxu0 %v3662
    %5625 = vmatpush1.bf16.msra.mxu0 %v3661
    %5626 = vmatprep.subr.bf16.mxu0 %v3678
    %5627 = vmatpush1.bf16.msra.mxu0 %v3677
    %5628 = vmatprep.subr.bf16.mxu0 %v3694
    %5629 = vmatpush1.bf16.msra.mxu0 %v3693
    %5630 = vmatprep.subr.bf16.mxu0 %v3710
    %5631 = vmatpush1.bf16.msra.mxu0 %v3709
    %5632 = vmatprep.subr.bf16.mxu0 %v3726
    %5633 = vmatpush1.bf16.msra.mxu0 %v3725
    %5634 = vmatprep.subr.bf16.mxu0 %v3742
    %5635 = vmatpush1.bf16.msra.mxu0 %v3741
    %5636 = vmatprep.subr.bf16.mxu0 %v3758
    %5637 = vmatpush1.bf16.msra.mxu0 %v3757
    %5638 = vmatprep.subr.bf16.mxu0 %v3774
    %5639 = vmatpush1.bf16.msra.mxu0 %v3773
    %5640 = vmatprep.subr.bf16.mxu0 %v3790
    %5641 = vmatpush1.bf16.msra.mxu0 %v3789
    %5642 = vmatprep.subr.bf16.mxu0 %v3806
    %5643 = vmatpush1.bf16.msra.mxu0 %v3805
    %5644 = vmatprep.subr.bf16.mxu0 %v3822
    %5645 = vmatpush1.bf16.msra.mxu0 %v3821
    %5646 = vmatprep.subr.bf16.mxu0 %v3838
    %5647 = vmatpush1.bf16.msra.mxu0 %v3837
    %5648 = vmatprep.subr.bf16.mxu0 %v3854
    %5649 = vmatpush1.bf16.msra.mxu0 %v3853
    %5650 = vmatprep.mubr.bf16.mxu0 %v125
    %5651 = vmatmul.mubr.bf16.gmra.mrb[0].mxu0 %v124
    %v5652 = vpop.f32.mrb[0].mxu0
    %v5653 = vadd.f32 %v5612, %v5652
    %v5654 = vpop.f32.mrb[0].mxu0
    %v5655 = vadd.f32 %v5614, %v5654
    %v5656 = vpop.f32.mrb[0].mxu0
    %v5657 = vpop.f32.mrb[0].mxu0
    %5658 = vdwg.mxu0
    %5659 = vmatprep.subr.bf16.mxu0 %v3870
    %5660 = vmatpush1.bf16.msra.mxu0 %v3869
    %5661 = vmatprep.subr.bf16.mxu0 %v3886
    %5662 = vmatpush1.bf16.msra.mxu0 %v3885
    %5663 = vmatprep.subr.bf16.mxu0 %v3902
    %5664 = vmatpush1.bf16.msra.mxu0 %v3901
    %5665 = vmatprep.subr.bf16.mxu0 %v3918
    %5666 = vmatpush1.bf16.msra.mxu0 %v3917
    %5667 = vmatprep.subr.bf16.mxu0 %v3934
    %5668 = vmatpush1.bf16.msra.mxu0 %v3933
    %5669 = vmatprep.subr.bf16.mxu0 %v3950
    %5670 = vmatpush1.bf16.msra.mxu0 %v3949
    %5671 = vmatprep.subr.bf16.mxu0 %v3966
    %5672 = vmatpush1.bf16.msra.mxu0 %v3965
    %5673 = vmatprep.subr.bf16.mxu0 %v3982
    %5674 = vmatpush1.bf16.msra.mxu0 %v3981
    %5675 = vmatprep.subr.bf16.mxu0 %v3998
    %5676 = vmatpush1.bf16.msra.mxu0 %v3997
    %5677 = vmatprep.subr.bf16.mxu0 %v4014
    %5678 = vmatpush1.bf16.msra.mxu0 %v4013
    %5679 = vmatprep.subr.bf16.mxu0 %v4030
    %5680 = vmatpush1.bf16.msra.mxu0 %v4029
    %5681 = vmatprep.subr.bf16.mxu0 %v4046
    %5682 = vmatpush1.bf16.msra.mxu0 %v4045
    %5683 = vmatprep.subr.bf16.mxu0 %v4062
    %5684 = vmatpush1.bf16.msra.mxu0 %v4061
    %5685 = vmatprep.subr.bf16.mxu0 %v4078
    %5686 = vmatpush1.bf16.msra.mxu0 %v4077
    %5687 = vmatprep.subr.bf16.mxu0 %v4094
    %5688 = vmatpush1.bf16.msra.mxu0 %v4093
    %5689 = vmatprep.subr.bf16.mxu0 %v4110
    %5690 = vmatpush1.bf16.msra.mxu0 %v4109
    %5691 = vmatprep.mubr.bf16.mxu0 %v127
    %5692 = vmatmul.mubr.bf16.gmra.mrb[0].mxu0 %v126
    %v5693 = vpop.f32.mrb[0].mxu0
    %v5694 = vadd.f32 %v5653, %v5693
    %v5695 = vpop.f32.mrb[0].mxu0
    %v5696 = vadd.f32 %v5655, %v5695
    %v5697 = vpop.f32.mrb[0].mxu0
    %v5698 = vpop.f32.mrb[0].mxu0
    %5699 = vdwg.mxu0
    %5700 = vmatprep.subr.bf16.mxu0 %v4126
    %5701 = vmatpush1.bf16.msra.mxu0 %v4125
    %5702 = vmatprep.subr.bf16.mxu0 0
    %5703 = vmatpush1.bf16.msra.mxu0 0
    %5704 = vmatprep.subr.bf16.mxu0 0
    %5705 = vmatpush1.bf16.msra.mxu0 0
    %5706 = vmatprep.subr.bf16.mxu0 0
    %5707 = vmatpush1.bf16.msra.mxu0 0
    %5708 = vmatprep.subr.bf16.mxu0 0
    %5709 = vmatpush1.bf16.msra.mxu0 0
    %5710 = vmatprep.subr.bf16.mxu0 0
    %5711 = vmatpush1.bf16.msra.mxu0 0
    %5712 = vmatprep.subr.bf16.mxu0 0
    %5713 = vmatpush1.bf16.msra.mxu0 0
    %5714 = vmatprep.subr.bf16.mxu0 0
    %5715 = vmatpush1.bf16.msra.mxu0 0
    %5716 = vmatprep.subr.bf16.mxu0 0
    %5717 = vmatpush1.bf16.msra.mxu0 0
    %5718 = vmatprep.subr.bf16.mxu0 0
    %5719 = vmatpush1.bf16.msra.mxu0 0
    %5720 = vmatprep.subr.bf16.mxu0 0
    %5721 = vmatpush1.bf16.msra.mxu0 0
    %5722 = vmatprep.subr.bf16.mxu0 0
    %5723 = vmatpush1.bf16.msra.mxu0 0
    %5724 = vmatprep.subr.bf16.mxu0 0
    %5725 = vmatpush1.bf16.msra.mxu0 0
    %5726 = vmatprep.subr.bf16.mxu0 0
    %5727 = vmatpush1.bf16.msra.mxu0 0
    %5728 = vmatprep.subr.bf16.mxu0 0
    %5729 = vmatpush1.bf16.msra.mxu0 0
    %5730 = vmatprep.subr.bf16.mxu0 0
    %5731 = vmatpush1.bf16.msra.mxu0 0
    %5732 = vmatprep.mubr.bf16.mxu0 0
    %5733 = vmatmul.mubr.bf16.gmra.mrb[0].mxu0 %v4919
    %v5734 = vpop.f32.mrb[0].mxu0
    %v5735 = vadd.f32 %v5694, %v5734
    %v5736 = vpop.f32.mrb[0].mxu0
    %v5737 = vadd.f32 %v5696, %v5736
    %v5738 = vpop.f32.mrb[0].mxu0
    %v5739 = vpop.f32.mrb[0].mxu0
    %5740 = vdwg.mxu0
    %5741 = vmatprep.subr.bf16.mxu0 %v3360
    %5742 = vmatpush1.bf16.msra.mxu0 %v3359
    %5743 = vmatprep.subr.bf16.mxu0 %v3376
    %5744 = vmatpush1.bf16.msra.mxu0 %v3375
    %5745 = vmatprep.subr.bf16.mxu0 %v3392
    %5746 = vmatpush1.bf16.msra.mxu0 %v3391
    %5747 = vmatprep.subr.bf16.mxu0 %v3408
    %5748 = vmatpush1.bf16.msra.mxu0 %v3407
    %5749 = vmatprep.subr.bf16.mxu0 %v3424
    %5750 = vmatpush1.bf16.msra.mxu0 %v3423
    %5751 = vmatprep.subr.bf16.mxu0 %v3440
    %5752 = vmatpush1.bf16.msra.mxu0 %v3439
    %5753 = vmatprep.subr.bf16.mxu0 %v3456
    %5754 = vmatpush1.bf16.msra.mxu0 %v3455
    %5755 = vmatprep.subr.bf16.mxu0 %v3472
    %5756 = vmatpush1.bf16.msra.mxu0 %v3471
    %5757 = vmatprep.subr.bf16.mxu0 %v3488
    %5758 = vmatpush1.bf16.msra.mxu0 %v3487
    %5759 = vmatprep.subr.bf16.mxu0 %v3504
    %5760 = vmatpush1.bf16.msra.mxu0 %v3503
    %5761 = vmatprep.subr.bf16.mxu0 %v3520
    %5762 = vmatpush1.bf16.msra.mxu0 %v3519
    %5763 = vmatprep.subr.bf16.mxu0 %v3536
    %5764 = vmatpush1.bf16.msra.mxu0 %v3535
    %5765 = vmatprep.subr.bf16.mxu0 %v3552
    %5766 = vmatpush1.bf16.msra.mxu0 %v3551
    %5767 = vmatprep.subr.bf16.mxu0 %v3568
    %5768 = vmatpush1.bf16.msra.mxu0 %v3567
    %5769 = vmatprep.subr.bf16.mxu0 %v3584
    %5770 = vmatpush1.bf16.msra.mxu0 %v3583
    %5771 = vmatprep.subr.bf16.mxu0 %v3600
    %5772 = vmatpush1.bf16.msra.mxu0 %v3599
    %5773 = vmatprep.mubr.bf16.mxu0 %v123
    %5774 = vmatmul.mubr.bf16.gmra.mrb[0].mxu0 %v122
    %v5775 = vpop.f32.mrb[0].mxu0
    %v5776 = vadd.f32 %v960, %v5775
    %v5777 = vpop.f32.mrb[0].mxu0
    %v5778 = vadd.f32 %v964, %v5777
    %v5779 = vpop.f32.mrb[0].mxu0
    %v5780 = vpop.f32.mrb[0].mxu0
    %5781 = vdwg.mxu0
    %5782 = vmatprep.subr.bf16.mxu0 %v3616
    %5783 = vmatpush1.bf16.msra.mxu0 %v3615
    %5784 = vmatprep.subr.bf16.mxu0 %v3632
    %5785 = vmatpush1.bf16.msra.mxu0 %v3631
    %5786 = vmatprep.subr.bf16.mxu0 %v3648
    %5787 = vmatpush1.bf16.msra.mxu0 %v3647
    %5788 = vmatprep.subr.bf16.mxu0 %v3664
    %5789 = vmatpush1.bf16.msra.mxu0 %v3663
    %5790 = vmatprep.subr.bf16.mxu0 %v3680
    %5791 = vmatpush1.bf16.msra.mxu0 %v3679
    %5792 = vmatprep.subr.bf16.mxu0 %v3696
    %5793 = vmatpush1.bf16.msra.mxu0 %v3695
    %5794 = vmatprep.subr.bf16.mxu0 %v3712
    %5795 = vmatpush1.bf16.msra.mxu0 %v3711
    %5796 = vmatprep.subr.bf16.mxu0 %v3728
    %5797 = vmatpush1.bf16.msra.mxu0 %v3727
    %5798 = vmatprep.subr.bf16.mxu0 %v3744
    %5799 = vmatpush1.bf16.msra.mxu0 %v3743
    %5800 = vmatprep.subr.bf16.mxu0 %v3760
    %5801 = vmatpush1.bf16.msra.mxu0 %v3759
    %5802 = vmatprep.subr.bf16.mxu0 %v3776
    %5803 = vmatpush1.bf16.msra.mxu0 %v3775
    %5804 = vmatprep.subr.bf16.mxu0 %v3792
    %5805 = vmatpush1.bf16.msra.mxu0 %v3791
    %5806 = vmatprep.subr.bf16.mxu0 %v3808
    %5807 = vmatpush1.bf16.msra.mxu0 %v3807
    %5808 = vmatprep.subr.bf16.mxu0 %v3824
    %5809 = vmatpush1.bf16.msra.mxu0 %v3823
    %5810 = vmatprep.subr.bf16.mxu0 %v3840
    %5811 = vmatpush1.bf16.msra.mxu0 %v3839
    %5812 = vmatprep.subr.bf16.mxu0 %v3856
    %5813 = vmatpush1.bf16.msra.mxu0 %v3855
    %5814 = vmatprep.mubr.bf16.mxu0 %v125
    %5815 = vmatmul.mubr.bf16.gmra.mrb[0].mxu0 %v124
    %v5816 = vpop.f32.mrb[0].mxu0
    %v5817 = vadd.f32 %v5776, %v5816
    %v5818 = vpop.f32.mrb[0].mxu0
    %v5819 = vadd.f32 %v5778, %v5818
    %v5820 = vpop.f32.mrb[0].mxu0
    %v5821 = vpop.f32.mrb[0].mxu0
    %5822 = vdwg.mxu0
    %5823 = vmatprep.subr.bf16.mxu0 %v3872
    %5824 = vmatpush1.bf16.msra.mxu0 %v3871
    %5825 = vmatprep.subr.bf16.mxu0 %v3888
    %5826 = vmatpush1.bf16.msra.mxu0 %v3887
    %5827 = vmatprep.subr.bf16.mxu0 %v3904
    %5828 = vmatpush1.bf16.msra.mxu0 %v3903
    %5829 = vmatprep.subr.bf16.mxu0 %v3920
    %5830 = vmatpush1.bf16.msra.mxu0 %v3919
    %5831 = vmatprep.subr.bf16.mxu0 %v3936
    %5832 = vmatpush1.bf16.msra.mxu0 %v3935
    %5833 = vmatprep.subr.bf16.mxu0 %v3952
    %5834 = vmatpush1.bf16.msra.mxu0 %v3951
    %5835 = vmatprep.subr.bf16.mxu0 %v3968
    %5836 = vmatpush1.bf16.msra.mxu0 %v3967
    %5837 = vmatprep.subr.bf16.mxu0 %v3984
    %5838 = vmatpush1.bf16.msra.mxu0 %v3983
    %5839 = vmatprep.subr.bf16.mxu0 %v4000
    %5840 = vmatpush1.bf16.msra.mxu0 %v3999
    %5841 = vmatprep.subr.bf16.mxu0 %v4016
    %5842 = vmatpush1.bf16.msra.mxu0 %v4015
    %5843 = vmatprep.subr.bf16.mxu0 %v4032
    %5844 = vmatpush1.bf16.msra.mxu0 %v4031
    %5845 = vmatprep.subr.bf16.mxu0 %v4048
    %5846 = vmatpush1.bf16.msra.mxu0 %v4047
    %5847 = vmatprep.subr.bf16.mxu0 %v4064
    %5848 = vmatpush1.bf16.msra.mxu0 %v4063
    %5849 = vmatprep.subr.bf16.mxu0 %v4080
    %5850 = vmatpush1.bf16.msra.mxu0 %v4079
    %5851 = vmatprep.subr.bf16.mxu0 %v4096
    %5852 = vmatpush1.bf16.msra.mxu0 %v4095
    %5853 = vmatprep.subr.bf16.mxu0 %v4112
    %5854 = vmatpush1.bf16.msra.mxu0 %v4111
    %5855 = vmatprep.mubr.bf16.mxu0 %v127
    %5856 = vmatmul.mubr.bf16.gmra.mrb[0].mxu0 %v126
    %v5857 = vpop.f32.mrb[0].mxu0
    %v5858 = vadd.f32 %v5817, %v5857
    %v5859 = vpop.f32.mrb[0].mxu0
    %v5860 = vadd.f32 %v5819, %v5859
    %v5861 = vpop.f32.mrb[0].mxu0
    %v5862 = vpop.f32.mrb[0].mxu0
    %5863 = vdwg.mxu0
    %5864 = vmatprep.subr.bf16.mxu0 %v4128
    %5865 = vmatpush1.bf16.msra.mxu0 %v4127
    %5866 = vmatprep.subr.bf16.mxu0 0
    %5867 = vmatpush1.bf16.msra.mxu0 0
    %5868 = vmatprep.subr.bf16.mxu0 0
    %5869 = vmatpush1.bf16.msra.mxu0 0
    %5870 = vmatprep.subr.bf16.mxu0 0
    %5871 = vmatpush1.bf16.msra.mxu0 0
    %5872 = vmatprep.subr.bf16.mxu0 0
    %5873 = vmatpush1.bf16.msra.mxu0 0
    %5874 = vmatprep.subr.bf16.mxu0 0
    %5875 = vmatpush1.bf16.msra.mxu0 0
    %5876 = vmatprep.subr.bf16.mxu0 0
    %5877 = vmatpush1.bf16.msra.mxu0 0
    %5878 = vmatprep.subr.bf16.mxu0 0
    %5879 = vmatpush1.bf16.msra.mxu0 0
    %5880 = vmatprep.subr.bf16.mxu0 0
    %5881 = vmatpush1.bf16.msra.mxu0 0
    %5882 = vmatprep.subr.bf16.mxu0 0
    %5883 = vmatpush1.bf16.msra.mxu0 0
    %5884 = vmatprep.subr.bf16.mxu0 0
    %5885 = vmatpush1.bf16.msra.mxu0 0
    %5886 = vmatprep.subr.bf16.mxu0 0
    %5887 = vmatpush1.bf16.msra.mxu0 0
    %5888 = vmatprep.subr.bf16.mxu0 0
    %5889 = vmatpush1.bf16.msra.mxu0 0
    %5890 = vmatprep.subr.bf16.mxu0 0
    %5891 = vmatpush1.bf16.msra.mxu0 0
    %5892 = vmatprep.subr.bf16.mxu0 0
    %5893 = vmatpush1.bf16.msra.mxu0 0
    %5894 = vmatprep.subr.bf16.mxu0 0
    %5895 = vmatpush1.bf16.msra.mxu0 0
    %5896 = vmatprep.mubr.bf16.mxu0 0
    %5897 = vmatmul.mubr.bf16.gmra.mrb[0].mxu0 %v4919
    %v5898 = vpop.f32.mrb[0].mxu0
    %v5899 = vadd.f32 %v5858, %v5898
    %v5900 = vpop.f32.mrb[0].mxu0
    %v5901 = vadd.f32 %v5860, %v5900
    %v5902 = vpop.f32.mrb[0].mxu0
    %v5903 = vpop.f32.mrb[0].mxu0
    %5904 = vdwg.mxu0
    %5905 = vmatprep.subr.bf16.mxu0 %v3362
    %5906 = vmatpush1.bf16.msra.mxu0 %v3361
    %5907 = vmatprep.subr.bf16.mxu0 %v3378
    %5908 = vmatpush1.bf16.msra.mxu0 %v3377
    %5909 = vmatprep.subr.bf16.mxu0 %v3394
    %5910 = vmatpush1.bf16.msra.mxu0 %v3393
    %5911 = vmatprep.subr.bf16.mxu0 %v3410
    %5912 = vmatpush1.bf16.msra.mxu0 %v3409
    %5913 = vmatprep.subr.bf16.mxu0 %v3426
    %5914 = vmatpush1.bf16.msra.mxu0 %v3425
    %5915 = vmatprep.subr.bf16.mxu0 %v3442
    %5916 = vmatpush1.bf16.msra.mxu0 %v3441
    %5917 = vmatprep.subr.bf16.mxu0 %v3458
    %5918 = vmatpush1.bf16.msra.mxu0 %v3457
    %5919 = vmatprep.subr.bf16.mxu0 %v3474
    %5920 = vmatpush1.bf16.msra.mxu0 %v3473
    %5921 = vmatprep.subr.bf16.mxu0 %v3490
    %5922 = vmatpush1.bf16.msra.mxu0 %v3489
    %5923 = vmatprep.subr.bf16.mxu0 %v3506
    %5924 = vmatpush1.bf16.msra.mxu0 %v3505
    %5925 = vmatprep.subr.bf16.mxu0 %v3522
    %5926 = vmatpush1.bf16.msra.mxu0 %v3521
    %5927 = vmatprep.subr.bf16.mxu0 %v3538
    %5928 = vmatpush1.bf16.msra.mxu0 %v3537
    %5929 = vmatprep.subr.bf16.mxu0 %v3554
    %5930 = vmatpush1.bf16.msra.mxu0 %v3553
    %5931 = vmatprep.subr.bf16.mxu0 %v3570
    %5932 = vmatpush1.bf16.msra.mxu0 %v3569
    %5933 = vmatprep.subr.bf16.mxu0 %v3586
    %5934 = vmatpush1.bf16.msra.mxu0 %v3585
    %5935 = vmatprep.subr.bf16.mxu0 %v3602
    %5936 = vmatpush1.bf16.msra.mxu0 %v3601
    %5937 = vmatprep.mubr.bf16.mxu0 %v123
    %5938 = vmatmul.mubr.bf16.gmra.mrb[0].mxu0 %v122
    %v5939 = vpop.f32.mrb[0].mxu0
    %v5940 = vadd.f32 %v968, %v5939
    %v5941 = vpop.f32.mrb[0].mxu0
    %v5942 = vadd.f32 %v972, %v5941
    %v5943 = vpop.f32.mrb[0].mxu0
    %v5944 = vpop.f32.mrb[0].mxu0
    %5945 = vdwg.mxu0
    %5946 = vmatprep.subr.bf16.mxu0 %v3618
    %5947 = vmatpush1.bf16.msra.mxu0 %v3617
    %5948 = vmatprep.subr.bf16.mxu0 %v3634
    %5949 = vmatpush1.bf16.msra.mxu0 %v3633
    %5950 = vmatprep.subr.bf16.mxu0 %v3650
    %5951 = vmatpush1.bf16.msra.mxu0 %v3649
    %5952 = vmatprep.subr.bf16.mxu0 %v3666
    %5953 = vmatpush1.bf16.msra.mxu0 %v3665
    %5954 = vmatprep.subr.bf16.mxu0 %v3682
    %5955 = vmatpush1.bf16.msra.mxu0 %v3681
    %5956 = vmatprep.subr.bf16.mxu0 %v3698
    %5957 = vmatpush1.bf16.msra.mxu0 %v3697
    %5958 = vmatprep.subr.bf16.mxu0 %v3714
    %5959 = vmatpush1.bf16.msra.mxu0 %v3713
    %5960 = vmatprep.subr.bf16.mxu0 %v3730
    %5961 = vmatpush1.bf16.msra.mxu0 %v3729
    %5962 = vmatprep.subr.bf16.mxu0 %v3746
    %5963 = vmatpush1.bf16.msra.mxu0 %v3745
    %5964 = vmatprep.subr.bf16.mxu0 %v3762
    %5965 = vmatpush1.bf16.msra.mxu0 %v3761
    %5966 = vmatprep.subr.bf16.mxu0 %v3778
    %5967 = vmatpush1.bf16.msra.mxu0 %v3777
    %5968 = vmatprep.subr.bf16.mxu0 %v3794
    %5969 = vmatpush1.bf16.msra.mxu0 %v3793
    %5970 = vmatprep.subr.bf16.mxu0 %v3810
    %5971 = vmatpush1.bf16.msra.mxu0 %v3809
    %5972 = vmatprep.subr.bf16.mxu0 %v3826
    %5973 = vmatpush1.bf16.msra.mxu0 %v3825
    %5974 = vmatprep.subr.bf16.mxu0 %v3842
    %5975 = vmatpush1.bf16.msra.mxu0 %v3841
    %5976 = vmatprep.subr.bf16.mxu0 %v3858
    %5977 = vmatpush1.bf16.msra.mxu0 %v3857
    %5978 = vmatprep.mubr.bf16.mxu0 %v125
    %5979 = vmatmul.mubr.bf16.gmra.mrb[0].mxu0 %v124
    %v5980 = vpop.f32.mrb[0].mxu0
    %v5981 = vadd.f32 %v5940, %v5980
    %v5982 = vpop.f32.mrb[0].mxu0
    %v5983 = vadd.f32 %v5942, %v5982
    %v5984 = vpop.f32.mrb[0].mxu0
    %v5985 = vpop.f32.mrb[0].mxu0
    %5986 = vdwg.mxu0
    %5987 = vmatprep.subr.bf16.mxu0 %v3874
    %5988 = vmatpush1.bf16.msra.mxu0 %v3873
    %5989 = vmatprep.subr.bf16.mxu0 %v3890
    %5990 = vmatpush1.bf16.msra.mxu0 %v3889
    %5991 = vmatprep.subr.bf16.mxu0 %v3906
    %5992 = vmatpush1.bf16.msra.mxu0 %v3905
    %5993 = vmatprep.subr.bf16.mxu0 %v3922
    %5994 = vmatpush1.bf16.msra.mxu0 %v3921
    %5995 = vmatprep.subr.bf16.mxu0 %v3938
    %5996 = vmatpush1.bf16.msra.mxu0 %v3937
    %5997 = vmatprep.subr.bf16.mxu0 %v3954
    %5998 = vmatpush1.bf16.msra.mxu0 %v3953
    %5999 = vmatprep.subr.bf16.mxu0 %v3970
    %6000 = vmatpush1.bf16.msra.mxu0 %v3969
    %6001 = vmatprep.subr.bf16.mxu0 %v3986
    %6002 = vmatpush1.bf16.msra.mxu0 %v3985
    %6003 = vmatprep.subr.bf16.mxu0 %v4002
    %6004 = vmatpush1.bf16.msra.mxu0 %v4001
    %6005 = vmatprep.subr.bf16.mxu0 %v4018
    %6006 = vmatpush1.bf16.msra.mxu0 %v4017
    %6007 = vmatprep.subr.bf16.mxu0 %v4034
    %6008 = vmatpush1.bf16.msra.mxu0 %v4033
    %6009 = vmatprep.subr.bf16.mxu0 %v4050
    %6010 = vmatpush1.bf16.msra.mxu0 %v4049
    %6011 = vmatprep.subr.bf16.mxu0 %v4066
    %6012 = vmatpush1.bf16.msra.mxu0 %v4065
    %6013 = vmatprep.subr.bf16.mxu0 %v4082
    %6014 = vmatpush1.bf16.msra.mxu0 %v4081
    %6015 = vmatprep.subr.bf16.mxu0 %v4098
    %6016 = vmatpush1.bf16.msra.mxu0 %v4097
    %6017 = vmatprep.subr.bf16.mxu0 %v4114
    %6018 = vmatpush1.bf16.msra.mxu0 %v4113
    %6019 = vmatprep.mubr.bf16.mxu0 %v127
    %6020 = vmatmul.mubr.bf16.gmra.mrb[0].mxu0 %v126
    %v6021 = vpop.f32.mrb[0].mxu0
    %v6022 = vadd.f32 %v5981, %v6021
    %v6023 = vpop.f32.mrb[0].mxu0
    %v6024 = vadd.f32 %v5983, %v6023
    %v6025 = vpop.f32.mrb[0].mxu0
    %v6026 = vpop.f32.mrb[0].mxu0
    %6027 = vdwg.mxu0
    %6028 = vmatprep.subr.bf16.mxu0 %v4130
    %6029 = vmatpush1.bf16.msra.mxu0 %v4129
    %6030 = vmatprep.subr.bf16.mxu0 0
    %6031 = vmatpush1.bf16.msra.mxu0 0
    %6032 = vmatprep.subr.bf16.mxu0 0
    %6033 = vmatpush1.bf16.msra.mxu0 0
    %6034 = vmatprep.subr.bf16.mxu0 0
    %6035 = vmatpush1.bf16.msra.mxu0 0
    %6036 = vmatprep.subr.bf16.mxu0 0
    %6037 = vmatpush1.bf16.msra.mxu0 0
    %6038 = vmatprep.subr.bf16.mxu0 0
    %6039 = vmatpush1.bf16.msra.mxu0 0
    %6040 = vmatprep.subr.bf16.mxu0 0
    %6041 = vmatpush1.bf16.msra.mxu0 0
    %6042 = vmatprep.subr.bf16.mxu0 0
    %6043 = vmatpush1.bf16.msra.mxu0 0
    %6044 = vmatprep.subr.bf16.mxu0 0
    %6045 = vmatpush1.bf16.msra.mxu0 0
    %6046 = vmatprep.subr.bf16.mxu0 0
    %6047 = vmatpush1.bf16.msra.mxu0 0
    %6048 = vmatprep.subr.bf16.mxu0 0
    %6049 = vmatpush1.bf16.msra.mxu0 0
    %6050 = vmatprep.subr.bf16.mxu0 0
    %6051 = vmatpush1.bf16.msra.mxu0 0
    %6052 = vmatprep.subr.bf16.mxu0 0
    %6053 = vmatpush1.bf16.msra.mxu0 0
    %6054 = vmatprep.subr.bf16.mxu0 0
    %6055 = vmatpush1.bf16.msra.mxu0 0
    %6056 = vmatprep.subr.bf16.mxu0 0
    %6057 = vmatpush1.bf16.msra.mxu0 0
    %6058 = vmatprep.subr.bf16.mxu0 0
    %6059 = vmatpush1.bf16.msra.mxu0 0
    %6060 = vmatprep.mubr.bf16.mxu0 0
    %6061 = vmatmul.mubr.bf16.gmra.mrb[0].mxu0 %v4919
    %v6062 = vpop.f32.mrb[0].mxu0
    %v6063 = vadd.f32 %v6022, %v6062
    %v6064 = vpop.f32.mrb[0].mxu0
    %v6065 = vadd.f32 %v6024, %v6064
    %v6066 = vpop.f32.mrb[0].mxu0
    %v6067 = vpop.f32.mrb[0].mxu0
    %6068 = vdwg.mxu0
    %6069 = vmatprep.subr.bf16.mxu0 %v3364
    %6070 = vmatpush1.bf16.msra.mxu0 %v3363
    %6071 = vmatprep.subr.bf16.mxu0 %v3380
    %6072 = vmatpush1.bf16.msra.mxu0 %v3379
    %6073 = vmatprep.subr.bf16.mxu0 %v3396
    %6074 = vmatpush1.bf16.msra.mxu0 %v3395
    %6075 = vmatprep.subr.bf16.mxu0 %v3412
    %6076 = vmatpush1.bf16.msra.mxu0 %v3411
    %6077 = vmatprep.subr.bf16.mxu0 %v3428
    %6078 = vmatpush1.bf16.msra.mxu0 %v3427
    %6079 = vmatprep.subr.bf16.mxu0 %v3444
    %6080 = vmatpush1.bf16.msra.mxu0 %v3443
    %6081 = vmatprep.subr.bf16.mxu0 %v3460
    %6082 = vmatpush1.bf16.msra.mxu0 %v3459
    %6083 = vmatprep.subr.bf16.mxu0 %v3476
    %6084 = vmatpush1.bf16.msra.mxu0 %v3475
    %6085 = vmatprep.subr.bf16.mxu0 %v3492
    %6086 = vmatpush1.bf16.msra.mxu0 %v3491
    %6087 = vmatprep.subr.bf16.mxu0 %v3508
    %6088 = vmatpush1.bf16.msra.mxu0 %v3507
    %6089 = vmatprep.subr.bf16.mxu0 %v3524
    %6090 = vmatpush1.bf16.msra.mxu0 %v3523
    %6091 = vmatprep.subr.bf16.mxu0 %v3540
    %6092 = vmatpush1.bf16.msra.mxu0 %v3539
    %6093 = vmatprep.subr.bf16.mxu0 %v3556
    %6094 = vmatpush1.bf16.msra.mxu0 %v3555
    %6095 = vmatprep.subr.bf16.mxu0 %v3572
    %6096 = vmatpush1.bf16.msra.mxu0 %v3571
    %6097 = vmatprep.subr.bf16.mxu0 %v3588
    %6098 = vmatpush1.bf16.msra.mxu0 %v3587
    %6099 = vmatprep.subr.bf16.mxu0 %v3604
    %6100 = vmatpush1.bf16.msra.mxu0 %v3603
    %6101 = vmatprep.mubr.bf16.mxu0 %v123
    %6102 = vmatmul.mubr.bf16.gmra.mrb[0].mxu0 %v122
    %v6103 = vpop.f32.mrb[0].mxu0
    %v6104 = vadd.f32 %v976, %v6103
    %v6105 = vpop.f32.mrb[0].mxu0
    %v6106 = vadd.f32 %v980, %v6105
    %v6107 = vpop.f32.mrb[0].mxu0
    %v6108 = vpop.f32.mrb[0].mxu0
    %6109 = vdwg.mxu0
    %6110 = vmatprep.subr.bf16.mxu0 %v3620
    %6111 = vmatpush1.bf16.msra.mxu0 %v3619
    %6112 = vmatprep.subr.bf16.mxu0 %v3636
    %6113 = vmatpush1.bf16.msra.mxu0 %v3635
    %6114 = vmatprep.subr.bf16.mxu0 %v3652
    %6115 = vmatpush1.bf16.msra.mxu0 %v3651
    %6116 = vmatprep.subr.bf16.mxu0 %v3668
    %6117 = vmatpush1.bf16.msra.mxu0 %v3667
    %6118 = vmatprep.subr.bf16.mxu0 %v3684
    %6119 = vmatpush1.bf16.msra.mxu0 %v3683
    %6120 = vmatprep.subr.bf16.mxu0 %v3700
    %6121 = vmatpush1.bf16.msra.mxu0 %v3699
    %6122 = vmatprep.subr.bf16.mxu0 %v3716
    %6123 = vmatpush1.bf16.msra.mxu0 %v3715
    %6124 = vmatprep.subr.bf16.mxu0 %v3732
    %6125 = vmatpush1.bf16.msra.mxu0 %v3731
    %6126 = vmatprep.subr.bf16.mxu0 %v3748
    %6127 = vmatpush1.bf16.msra.mxu0 %v3747
    %6128 = vmatprep.subr.bf16.mxu0 %v3764
    %6129 = vmatpush1.bf16.msra.mxu0 %v3763
    %6130 = vmatprep.subr.bf16.mxu0 %v3780
    %6131 = vmatpush1.bf16.msra.mxu0 %v3779
    %6132 = vmatprep.subr.bf16.mxu0 %v3796
    %6133 = vmatpush1.bf16.msra.mxu0 %v3795
    %6134 = vmatprep.subr.bf16.mxu0 %v3812
    %6135 = vmatpush1.bf16.msra.mxu0 %v3811
    %6136 = vmatprep.subr.bf16.mxu0 %v3828
    %6137 = vmatpush1.bf16.msra.mxu0 %v3827
    %6138 = vmatprep.subr.bf16.mxu0 %v3844
    %6139 = vmatpush1.bf16.msra.mxu0 %v3843
    %6140 = vmatprep.subr.bf16.mxu0 %v3860
    %6141 = vmatpush1.bf16.msra.mxu0 %v3859
    %6142 = vmatprep.mubr.bf16.mxu0 %v125
    %6143 = vmatmul.mubr.bf16.gmra.mrb[0].mxu0 %v124
    %v6144 = vpop.f32.mrb[0].mxu0
    %v6145 = vadd.f32 %v6104, %v6144
    %v6146 = vpop.f32.mrb[0].mxu0
    %v6147 = vadd.f32 %v6106, %v6146
    %v6148 = vpop.f32.mrb[0].mxu0
    %v6149 = vpop.f32.mrb[0].mxu0
    %6150 = vdwg.mxu0
    %6151 = vmatprep.subr.bf16.mxu0 %v3876
    %6152 = vmatpush1.bf16.msra.mxu0 %v3875
    %6153 = vmatprep.subr.bf16.mxu0 %v3892
    %6154 = vmatpush1.bf16.msra.mxu0 %v3891
    %6155 = vmatprep.subr.bf16.mxu0 %v3908
    %6156 = vmatpush1.bf16.msra.mxu0 %v3907
    %6157 = vmatprep.subr.bf16.mxu0 %v3924
    %6158 = vmatpush1.bf16.msra.mxu0 %v3923
    %6159 = vmatprep.subr.bf16.mxu0 %v3940
    %6160 = vmatpush1.bf16.msra.mxu0 %v3939
    %6161 = vmatprep.subr.bf16.mxu0 %v3956
    %6162 = vmatpush1.bf16.msra.mxu0 %v3955
    %6163 = vmatprep.subr.bf16.mxu0 %v3972
    %6164 = vmatpush1.bf16.msra.mxu0 %v3971
    %6165 = vmatprep.subr.bf16.mxu0 %v3988
    %6166 = vmatpush1.bf16.msra.mxu0 %v3987
    %6167 = vmatprep.subr.bf16.mxu0 %v4004
    %6168 = vmatpush1.bf16.msra.mxu0 %v4003
    %6169 = vmatprep.subr.bf16.mxu0 %v4020
    %6170 = vmatpush1.bf16.msra.mxu0 %v4019
    %6171 = vmatprep.subr.bf16.mxu0 %v4036
    %6172 = vmatpush1.bf16.msra.mxu0 %v4035
    %6173 = vmatprep.subr.bf16.mxu0 %v4052
    %6174 = vmatpush1.bf16.msra.mxu0 %v4051
    %6175 = vmatprep.subr.bf16.mxu0 %v4068
    %6176 = vmatpush1.bf16.msra.mxu0 %v4067
    %6177 = vmatprep.subr.bf16.mxu0 %v4084
    %6178 = vmatpush1.bf16.msra.mxu0 %v4083
    %6179 = vmatprep.subr.bf16.mxu0 %v4100
    %6180 = vmatpush1.bf16.msra.mxu0 %v4099
    %6181 = vmatprep.subr.bf16.mxu0 %v4116
    %6182 = vmatpush1.bf16.msra.mxu0 %v4115
    %6183 = vmatprep.mubr.bf16.mxu0 %v127
    %6184 = vmatmul.mubr.bf16.gmra.mrb[0].mxu0 %v126
    %v6185 = vpop.f32.mrb[0].mxu0
    %v6186 = vadd.f32 %v6145, %v6185
    %v6187 = vpop.f32.mrb[0].mxu0
    %v6188 = vadd.f32 %v6147, %v6187
    %v6189 = vpop.f32.mrb[0].mxu0
    %v6190 = vpop.f32.mrb[0].mxu0
    %6191 = vdwg.mxu0
    %6192 = vmatprep.subr.bf16.mxu0 %v4132
    %6193 = vmatpush1.bf16.msra.mxu0 %v4131
    %6194 = vmatprep.subr.bf16.mxu0 0
    %6195 = vmatpush1.bf16.msra.mxu0 0
    %6196 = vmatprep.subr.bf16.mxu0 0
    %6197 = vmatpush1.bf16.msra.mxu0 0
    %6198 = vmatprep.subr.bf16.mxu0 0
    %6199 = vmatpush1.bf16.msra.mxu0 0
    %6200 = vmatprep.subr.bf16.mxu0 0
    %6201 = vmatpush1.bf16.msra.mxu0 0
    %6202 = vmatprep.subr.bf16.mxu0 0
    %6203 = vmatpush1.bf16.msra.mxu0 0
    %6204 = vmatprep.subr.bf16.mxu0 0
    %6205 = vmatpush1.bf16.msra.mxu0 0
    %6206 = vmatprep.subr.bf16.mxu0 0
    %6207 = vmatpush1.bf16.msra.mxu0 0
    %6208 = vmatprep.subr.bf16.mxu0 0
    %6209 = vmatpush1.bf16.msra.mxu0 0
    %6210 = vmatprep.subr.bf16.mxu0 0
    %6211 = vmatpush1.bf16.msra.mxu0 0
    %6212 = vmatprep.subr.bf16.mxu0 0
    %6213 = vmatpush1.bf16.msra.mxu0 0
    %6214 = vmatprep.subr.bf16.mxu0 0
    %6215 = vmatpush1.bf16.msra.mxu0 0
    %6216 = vmatprep.subr.bf16.mxu0 0
    %6217 = vmatpush1.bf16.msra.mxu0 0
    %6218 = vmatprep.subr.bf16.mxu0 0
    %6219 = vmatpush1.bf16.msra.mxu0 0
    %6220 = vmatprep.subr.bf16.mxu0 0
    %6221 = vmatpush1.bf16.msra.mxu0 0
    %6222 = vmatprep.subr.bf16.mxu0 0
    %6223 = vmatpush1.bf16.msra.mxu0 0
    %6224 = vmatprep.mubr.bf16.mxu0 0
    %6225 = vmatmul.mubr.bf16.gmra.mrb[0].mxu0 %v4919
    %v6226 = vpop.f32.mrb[0].mxu0
    %v6227 = vadd.f32 %v6186, %v6226
    %v6228 = vpop.f32.mrb[0].mxu0
    %v6229 = vadd.f32 %v6188, %v6228
    %v6230 = vpop.f32.mrb[0].mxu0
    %v6231 = vpop.f32.mrb[0].mxu0
    %6232 = vdwg.mxu0
    %v6233 = vmax.f32 %v5079, 0.0
    %v6234 = vmax.f32 %v5081, 0.0
    %v6235 = vmax.f32 %v5243, 0.0
    %v6236 = vmax.f32 %v5245, 0.0
    %v6237 = vmax.f32 %v5407, 0.0
    %v6238 = vmax.f32 %v5409, 0.0
    %v6239 = vmax.f32 %v5571, 0.0
    %v6240 = vmax.f32 %v5573, 0.0
    %v6241 = vmax.f32 %v5735, 0.0
    %v6242 = vmax.f32 %v5737, 0.0
    %v6243 = vmax.f32 %v5899, 0.0
    %v6244 = vmax.f32 %v5901, 0.0
    %v6245 = vmax.f32 %v6063, 0.0
    %v6246 = vmax.f32 %v6065, 0.0
    %v6247 = vmax.f32 %v6227, 0.0
    %v6248 = vmax.f32 %v6229, 0.0
    %v6249 = vpack.c.bf16 %v6233, %v6233
    %v6250 = vpack.c.bf16 %v6234, %v6234
    %v6251 = vpack.c.bf16 %v6235, %v6235
    %v6252 = vpack.c.bf16 %v6236, %v6236
    %v6253 = vpack.c.bf16 %v6237, %v6237
    %v6254 = vpack.c.bf16 %v6238, %v6238
    %v6255 = vpack.c.bf16 %v6239, %v6239
    %v6256 = vpack.c.bf16 %v6240, %v6240
    %v6257 = vpack.c.bf16 %v6241, %v6241
    %v6258 = vpack.c.bf16 %v6242, %v6242
    %v6259 = vpack.c.bf16 %v6243, %v6243
    %v6260 = vpack.c.bf16 %v6244, %v6244
    %v6261 = vpack.c.bf16 %v6245, %v6245
    %v6262 = vpack.c.bf16 %v6246, %v6246
    %v6263 = vpack.c.bf16 %v6247, %v6247
    %v6264 = vpack.c.bf16 %v6248, %v6248
    %v6265 = vld [vmem:[#allocation8] sm:$0xff]
    %v6266 = vld [vmem:[#allocation8 + $0x8] sm:$0xff]
    %v6267 = vld [vmem:[#allocation8 + $0x10] sm:$0xff]
    %v6268 = vld [vmem:[#allocation8 + $0x18] sm:$0xff]
    %v6269 = vld [vmem:[#allocation8 + $0x20] sm:$0xff]
    %v6270 = vld [vmem:[#allocation8 + $0x28] sm:$0xff]
    %v6271 = vld [vmem:[#allocation8 + $0x30] sm:$0xff]
    %v6272 = vld [vmem:[#allocation8 + $0x38] sm:$0xff]
    %v6273 = vld [vmem:[#allocation8 + $0x40] sm:$0xff]
    %v6274 = vld [vmem:[#allocation8 + $0x48] sm:$0xff]
    %v6275 = vld [vmem:[#allocation8 + $0x50] sm:$0xff]
    %v6276 = vld [vmem:[#allocation8 + $0x58] sm:$0xff]
    %v6277 = vld [vmem:[#allocation8 + $0x60] sm:$0xff]
    %v6278 = vld [vmem:[#allocation8 + $0x68] sm:$0xff]
    %v6279 = vld [vmem:[#allocation8 + $0x70] sm:$0xff]
    %v6280 = vld [vmem:[#allocation8 + $0x78] sm:$0xff]
    %v6281 = vld [vmem:[#allocation8 + $0x80] sm:$0xff]
    %v6282 = vld [vmem:[#allocation8 + $0x88] sm:$0xff]
    %v6283 = vld [vmem:[#allocation8 + $0x90] sm:$0xff]
    %v6284 = vld [vmem:[#allocation8 + $0x98] sm:$0xff]
    %v6285 = vld [vmem:[#allocation8 + $0xa0] sm:$0xff]
    %v6286 = vld [vmem:[#allocation8 + $0xa8] sm:$0xff]
    %v6287 = vld [vmem:[#allocation8 + $0xb0] sm:$0xff]
    %v6288 = vld [vmem:[#allocation8 + $0xb8] sm:$0xff]
    %v6289 = vld [vmem:[#allocation8 + $0xc0] sm:$0xff]
    %v6290 = vld [vmem:[#allocation8 + $0xc8] sm:$0xff]
    %v6291 = vld [vmem:[#allocation8 + $0xd0] sm:$0xff]
    %v6292 = vld [vmem:[#allocation8 + $0xd8] sm:$0xff]
    %v6293 = vld [vmem:[#allocation8 + $0xe0] sm:$0xff]
    %v6294 = vld [vmem:[#allocation8 + $0xe8] sm:$0xff]
    %v6295 = vld [vmem:[#allocation8 + $0xf0] sm:$0xff]
    %v6296 = vld [vmem:[#allocation8 + $0xf8] sm:$0xff]
    %v6297 = vld [vmem:[#allocation8 + $0x100] sm:$0xff]
    %v6298 = vld [vmem:[#allocation8 + $0x108] sm:$0xff]
    %v6299 = vld [vmem:[#allocation8 + $0x110] sm:$0xff]
    %v6300 = vld [vmem:[#allocation8 + $0x118] sm:$0xff]
    %v6301 = vld [vmem:[#allocation8 + $0x120] sm:$0xff]
    %v6302 = vld [vmem:[#allocation8 + $0x128] sm:$0xff]
    %v6303 = vld [vmem:[#allocation8 + $0x130] sm:$0xff]
    %v6304 = vld [vmem:[#allocation8 + $0x138] sm:$0xff]
    %v6305 = vld [vmem:[#allocation8 + $0x140] sm:$0xff]
    %v6306 = vld [vmem:[#allocation8 + $0x148] sm:$0xff]
    %v6307 = vld [vmem:[#allocation8 + $0x150] sm:$0xff]
    %v6308 = vld [vmem:[#allocation8 + $0x158] sm:$0xff]
    %v6309 = vld [vmem:[#allocation8 + $0x160] sm:$0xff]
    %v6310 = vld [vmem:[#allocation8 + $0x168] sm:$0xff]
    %v6311 = vld [vmem:[#allocation8 + $0x170] sm:$0xff]
    %v6312 = vld [vmem:[#allocation8 + $0x178] sm:$0xff]
    %v6313 = vld [vmem:[#allocation8 + $0x180] sm:$0xff]
    %v6314 = vld [vmem:[#allocation8 + $0x188] sm:$0xff]
    %v6315 = vld [vmem:[#allocation8 + $0x190] sm:$0xff]
    %v6316 = vld [vmem:[#allocation8 + $0x198] sm:$0xff]
    %v6317 = vld [vmem:[#allocation8 + $0x1a0] sm:$0xff]
    %v6318 = vld [vmem:[#allocation8 + $0x1a8] sm:$0xff]
    %v6319 = vld [vmem:[#allocation8 + $0x1b0] sm:$0xff]
    %v6320 = vld [vmem:[#allocation8 + $0x1b8] sm:$0xff]
    %v6321 = vld [vmem:[#allocation8 + $0x1c0] sm:$0xff]
    %v6322 = vld [vmem:[#allocation8 + $0x1c8] sm:$0xff]
    %v6323 = vld [vmem:[#allocation8 + $0x1d0] sm:$0xff]
    %v6324 = vld [vmem:[#allocation8 + $0x1d8] sm:$0xff]
    %v6325 = vld [vmem:[#allocation8 + $0x1e0] sm:$0xff]
    %v6326 = vld [vmem:[#allocation8 + $0x1e8] sm:$0xff]
    %v6327 = vld [vmem:[#allocation8 + $0x1f0] sm:$0xff]
    %v6328 = vld [vmem:[#allocation8 + $0x1f8] sm:$0xff]
    %v6329 = vld [vmem:[#allocation8 + $0x200] sm:$0xff]
    %v6330 = vld [vmem:[#allocation8 + $0x208] sm:$0xff]
    %v6331 = vld [vmem:[#allocation8 + $0x210] sm:$0xff]
    %v6332 = vld [vmem:[#allocation8 + $0x218] sm:$0xff]
    %v6333 = vld [vmem:[#allocation8 + $0x220] sm:$0xff]
    %v6334 = vld [vmem:[#allocation8 + $0x228] sm:$0xff]
    %v6335 = vld [vmem:[#allocation8 + $0x230] sm:$0xff]
    %v6336 = vld [vmem:[#allocation8 + $0x238] sm:$0xff]
    %v6337 = vld [vmem:[#allocation8 + $0x240] sm:$0xff]
    %v6338 = vld [vmem:[#allocation8 + $0x248] sm:$0xff]
    %v6339 = vld [vmem:[#allocation8 + $0x250] sm:$0xff]
    %v6340 = vld [vmem:[#allocation8 + $0x258] sm:$0xff]
    %v6341 = vld [vmem:[#allocation8 + $0x260] sm:$0xff]
    %v6342 = vld [vmem:[#allocation8 + $0x268] sm:$0xff]
    %v6343 = vld [vmem:[#allocation8 + $0x270] sm:$0xff]
    %v6344 = vld [vmem:[#allocation8 + $0x278] sm:$0xff]
    %v6345 = vld [vmem:[#allocation8 + $0x280] sm:$0xff]
    %v6346 = vld [vmem:[#allocation8 + $0x288] sm:$0xff]
    %v6347 = vld [vmem:[#allocation8 + $0x290] sm:$0xff]
    %v6348 = vld [vmem:[#allocation8 + $0x298] sm:$0xff]
    %v6349 = vld [vmem:[#allocation8 + $0x2a0] sm:$0xff]
    %v6350 = vld [vmem:[#allocation8 + $0x2a8] sm:$0xff]
    %v6351 = vld [vmem:[#allocation8 + $0x2b0] sm:$0xff]
    %v6352 = vld [vmem:[#allocation8 + $0x2b8] sm:$0xff]
    %v6353 = vld [vmem:[#allocation8 + $0x2c0] sm:$0xff]
    %v6354 = vld [vmem:[#allocation8 + $0x2c8] sm:$0xff]
    %v6355 = vld [vmem:[#allocation8 + $0x2d0] sm:$0xff]
    %v6356 = vld [vmem:[#allocation8 + $0x2d8] sm:$0xff]
    %v6357 = vld [vmem:[#allocation8 + $0x2e0] sm:$0xff]
    %v6358 = vld [vmem:[#allocation8 + $0x2e8] sm:$0xff]
    %v6359 = vld [vmem:[#allocation8 + $0x2f0] sm:$0xff]
    %v6360 = vld [vmem:[#allocation8 + $0x2f8] sm:$0xff]
    %v6361 = vld [vmem:[#allocation8 + $0x300] sm:$0xff]
    %v6362 = vld [vmem:[#allocation8 + $0x308] sm:$0xff]
    %v6363 = vld [vmem:[#allocation8 + $0x310] sm:$0xff]
    %v6364 = vld [vmem:[#allocation8 + $0x318] sm:$0xff]
    %v6365 = vld [vmem:[#allocation8 + $0x320] sm:$0xff]
    %v6366 = vld [vmem:[#allocation8 + $0x328] sm:$0xff]
    %v6367 = vld [vmem:[#allocation8 + $0x330] sm:$0xff]
    %v6368 = vld [vmem:[#allocation8 + $0x338] sm:$0xff]
    %v6369 = vld [vmem:[#allocation8 + $0x340] sm:$0xff]
    %v6370 = vld [vmem:[#allocation8 + $0x348] sm:$0xff]
    %v6371 = vld [vmem:[#allocation8 + $0x350] sm:$0xff]
    %v6372 = vld [vmem:[#allocation8 + $0x358] sm:$0xff]
    %v6373 = vld [vmem:[#allocation8 + $0x360] sm:$0xff]
    %v6374 = vld [vmem:[#allocation8 + $0x368] sm:$0xff]
    %v6375 = vld [vmem:[#allocation8 + $0x370] sm:$0xff]
    %v6376 = vld [vmem:[#allocation8 + $0x378] sm:$0xff]
    %v6377 = vld [vmem:[#allocation8 + $0x380] sm:$0xff]
    %v6378 = vld [vmem:[#allocation8 + $0x388] sm:$0xff]
    %v6379 = vld [vmem:[#allocation8 + $0x390] sm:$0xff]
    %v6380 = vld [vmem:[#allocation8 + $0x398] sm:$0xff]
    %v6381 = vld [vmem:[#allocation8 + $0x3a0] sm:$0xff]
    %v6382 = vld [vmem:[#allocation8 + $0x3a8] sm:$0xff]
    %v6383 = vld [vmem:[#allocation8 + $0x3b0] sm:$0xff]
    %v6384 = vld [vmem:[#allocation8 + $0x3b8] sm:$0xff]
    %v6385 = vld [vmem:[#allocation8 + $0x3c0] sm:$0xff]
    %v6386 = vld [vmem:[#allocation8 + $0x3c8] sm:$0xff]
    %v6387 = vld [vmem:[#allocation8 + $0x3d0] sm:$0xff]
    %v6388 = vld [vmem:[#allocation8 + $0x3d8] sm:$0xff]
    %v6389 = vld [vmem:[#allocation8 + $0x3e0] sm:$0xff]
    %v6390 = vld [vmem:[#allocation8 + $0x3e8] sm:$0xff]
    %v6391 = vld [vmem:[#allocation8 + $0x3f0] sm:$0xff]
    %v6392 = vld [vmem:[#allocation8 + $0x3f8] sm:$0xff]
    %v6393 = vld [vmem:[#allocation8 + $0x400] sm:$0xff]
    %v6394 = vld [vmem:[#allocation8 + $0x408] sm:$0xff]
    %v6395 = vld [vmem:[#allocation8 + $0x410] sm:$0xff]
    %v6396 = vld [vmem:[#allocation8 + $0x418] sm:$0xff]
    %v6397 = vld [vmem:[#allocation8 + $0x420] sm:$0xff]
    %v6398 = vld [vmem:[#allocation8 + $0x428] sm:$0xff]
    %v6399 = vld [vmem:[#allocation8 + $0x430] sm:$0xff]
    %v6400 = vld [vmem:[#allocation8 + $0x438] sm:$0xff]
    %v6401 = vld [vmem:[#allocation8 + $0x440] sm:$0xff]
    %v6402 = vld [vmem:[#allocation8 + $0x448] sm:$0xff]
    %v6403 = vld [vmem:[#allocation8 + $0x450] sm:$0xff]
    %v6404 = vld [vmem:[#allocation8 + $0x458] sm:$0xff]
    %v6405 = vld [vmem:[#allocation8 + $0x460] sm:$0xff]
    %v6406 = vld [vmem:[#allocation8 + $0x468] sm:$0xff]
    %v6407 = vld [vmem:[#allocation8 + $0x470] sm:$0xff]
    %v6408 = vld [vmem:[#allocation8 + $0x478] sm:$0xff]
    %v6409 = vld [vmem:[#allocation8 + $0x480] sm:$0xff]
    %v6410 = vld [vmem:[#allocation8 + $0x488] sm:$0xff]
    %v6411 = vld [vmem:[#allocation8 + $0x490] sm:$0xff]
    %v6412 = vld [vmem:[#allocation8 + $0x498] sm:$0xff]
    %v6413 = vld [vmem:[#allocation8 + $0x4a0] sm:$0xff]
    %v6414 = vld [vmem:[#allocation8 + $0x4a8] sm:$0xff]
    %v6415 = vld [vmem:[#allocation8 + $0x4b0] sm:$0xff]
    %v6416 = vld [vmem:[#allocation8 + $0x4b8] sm:$0xff]
    %v6417 = vld [vmem:[#allocation8 + $0x4c0] sm:$0xff]
    %v6418 = vld [vmem:[#allocation8 + $0x4c8] sm:$0xff]
    %v6419 = vld [vmem:[#allocation8 + $0x4d0] sm:$0xff]
    %v6420 = vld [vmem:[#allocation8 + $0x4d8] sm:$0xff]
    %v6421 = vld [vmem:[#allocation8 + $0x4e0] sm:$0xff]
    %v6422 = vld [vmem:[#allocation8 + $0x4e8] sm:$0xff]
    %v6423 = vld [vmem:[#allocation8 + $0x4f0] sm:$0xff]
    %v6424 = vld [vmem:[#allocation8 + $0x4f8] sm:$0xff]
    %v6425 = vld [vmem:[#allocation8 + $0x500] sm:$0xff]
    %v6426 = vld [vmem:[#allocation8 + $0x508] sm:$0xff]
    %v6427 = vld [vmem:[#allocation8 + $0x510] sm:$0xff]
    %v6428 = vld [vmem:[#allocation8 + $0x518] sm:$0xff]
    %v6429 = vld [vmem:[#allocation8 + $0x520] sm:$0xff]
    %v6430 = vld [vmem:[#allocation8 + $0x528] sm:$0xff]
    %v6431 = vld [vmem:[#allocation8 + $0x530] sm:$0xff]
    %v6432 = vld [vmem:[#allocation8 + $0x538] sm:$0xff]
    %v6433 = vld [vmem:[#allocation8 + $0x540] sm:$0xff]
    %v6434 = vld [vmem:[#allocation8 + $0x548] sm:$0xff]
    %v6435 = vld [vmem:[#allocation8 + $0x550] sm:$0xff]
    %v6436 = vld [vmem:[#allocation8 + $0x558] sm:$0xff]
    %v6437 = vld [vmem:[#allocation8 + $0x560] sm:$0xff]
    %v6438 = vld [vmem:[#allocation8 + $0x568] sm:$0xff]
    %v6439 = vld [vmem:[#allocation8 + $0x570] sm:$0xff]
    %v6440 = vld [vmem:[#allocation8 + $0x578] sm:$0xff]
    %v6441 = vld [vmem:[#allocation8 + $0x580] sm:$0xff]
    %v6442 = vld [vmem:[#allocation8 + $0x588] sm:$0xff]
    %v6443 = vld [vmem:[#allocation8 + $0x590] sm:$0xff]
    %v6444 = vld [vmem:[#allocation8 + $0x598] sm:$0xff]
    %v6445 = vld [vmem:[#allocation8 + $0x5a0] sm:$0xff]
    %v6446 = vld [vmem:[#allocation8 + $0x5a8] sm:$0xff]
    %v6447 = vld [vmem:[#allocation8 + $0x5b0] sm:$0xff]
    %v6448 = vld [vmem:[#allocation8 + $0x5b8] sm:$0xff]
    %v6449 = vld [vmem:[#allocation8 + $0x5c0] sm:$0xff]
    %v6450 = vld [vmem:[#allocation8 + $0x5c8] sm:$0xff]
    %v6451 = vld [vmem:[#allocation8 + $0x5d0] sm:$0xff]
    %v6452 = vld [vmem:[#allocation8 + $0x5d8] sm:$0xff]
    %v6453 = vld [vmem:[#allocation8 + $0x5e0] sm:$0xff]
    %v6454 = vld [vmem:[#allocation8 + $0x5e8] sm:$0xff]
    %v6455 = vld [vmem:[#allocation8 + $0x5f0] sm:$0xff]
    %v6456 = vld [vmem:[#allocation8 + $0x5f8] sm:$0xff]
    %v6457 = vld [vmem:[#allocation8 + $0x600] sm:$0xff]
    %v6458 = vld [vmem:[#allocation8 + $0x608] sm:$0xff]
    %v6459 = vld [vmem:[#allocation8 + $0x610] sm:$0xff]
    %v6460 = vld [vmem:[#allocation8 + $0x618] sm:$0xff]
    %v6461 = vld [vmem:[#allocation8 + $0x620] sm:$0xff]
    %v6462 = vld [vmem:[#allocation8 + $0x628] sm:$0xff]
    %v6463 = vld [vmem:[#allocation8 + $0x630] sm:$0xff]
    %v6464 = vld [vmem:[#allocation8 + $0x638] sm:$0xff]
    %v6465 = vld [vmem:[#allocation8 + $0x640] sm:$0xff]
    %v6466 = vld [vmem:[#allocation8 + $0x648] sm:$0xff]
    %v6467 = vld [vmem:[#allocation8 + $0x650] sm:$0xff]
    %v6468 = vld [vmem:[#allocation8 + $0x658] sm:$0xff]
    %v6469 = vld [vmem:[#allocation8 + $0x660] sm:$0xff]
    %v6470 = vld [vmem:[#allocation8 + $0x668] sm:$0xff]
    %v6471 = vld [vmem:[#allocation8 + $0x670] sm:$0xff]
    %v6472 = vld [vmem:[#allocation8 + $0x678] sm:$0xff]
    %v6473 = vld [vmem:[#allocation8 + $0x680] sm:$0xff]
    %v6474 = vld [vmem:[#allocation8 + $0x688] sm:$0xff]
    %v6475 = vld [vmem:[#allocation8 + $0x690] sm:$0xff]
    %v6476 = vld [vmem:[#allocation8 + $0x698] sm:$0xff]
    %v6477 = vld [vmem:[#allocation8 + $0x6a0] sm:$0xff]
    %v6478 = vld [vmem:[#allocation8 + $0x6a8] sm:$0xff]
    %v6479 = vld [vmem:[#allocation8 + $0x6b0] sm:$0xff]
    %v6480 = vld [vmem:[#allocation8 + $0x6b8] sm:$0xff]
    %v6481 = vld [vmem:[#allocation8 + $0x6c0] sm:$0xff]
    %v6482 = vld [vmem:[#allocation8 + $0x6c8] sm:$0xff]
    %v6483 = vld [vmem:[#allocation8 + $0x6d0] sm:$0xff]
    %v6484 = vld [vmem:[#allocation8 + $0x6d8] sm:$0xff]
    %v6485 = vld [vmem:[#allocation8 + $0x6e0] sm:$0xff]
    %v6486 = vld [vmem:[#allocation8 + $0x6e8] sm:$0xff]
    %v6487 = vld [vmem:[#allocation8 + $0x6f0] sm:$0xff]
    %v6488 = vld [vmem:[#allocation8 + $0x6f8] sm:$0xff]
    %v6489 = vld [vmem:[#allocation8 + $0x700] sm:$0xff]
    %v6490 = vld [vmem:[#allocation8 + $0x708] sm:$0xff]
    %v6491 = vld [vmem:[#allocation8 + $0x710] sm:$0xff]
    %v6492 = vld [vmem:[#allocation8 + $0x718] sm:$0xff]
    %v6493 = vld [vmem:[#allocation8 + $0x720] sm:$0xff]
    %v6494 = vld [vmem:[#allocation8 + $0x728] sm:$0xff]
    %v6495 = vld [vmem:[#allocation8 + $0x730] sm:$0xff]
    %v6496 = vld [vmem:[#allocation8 + $0x738] sm:$0xff]
    %v6497 = vld [vmem:[#allocation8 + $0x740] sm:$0xff]
    %v6498 = vld [vmem:[#allocation8 + $0x748] sm:$0xff]
    %v6499 = vld [vmem:[#allocation8 + $0x750] sm:$0xff]
    %v6500 = vld [vmem:[#allocation8 + $0x758] sm:$0xff]
    %v6501 = vld [vmem:[#allocation8 + $0x760] sm:$0xff]
    %v6502 = vld [vmem:[#allocation8 + $0x768] sm:$0xff]
    %v6503 = vld [vmem:[#allocation8 + $0x770] sm:$0xff]
    %v6504 = vld [vmem:[#allocation8 + $0x778] sm:$0xff]
    %v6505 = vld [vmem:[#allocation8 + $0x780] sm:$0xff]
    %v6506 = vld [vmem:[#allocation8 + $0x788] sm:$0xff]
    %v6507 = vld [vmem:[#allocation8 + $0x790] sm:$0xff]
    %v6508 = vld [vmem:[#allocation8 + $0x798] sm:$0xff]
    %v6509 = vld [vmem:[#allocation8 + $0x7a0] sm:$0xff]
    %v6510 = vld [vmem:[#allocation8 + $0x7a8] sm:$0xff]
    %v6511 = vld [vmem:[#allocation8 + $0x7b0] sm:$0xff]
    %v6512 = vld [vmem:[#allocation8 + $0x7b8] sm:$0xff]
    %v6513 = vld [vmem:[#allocation8 + $0x7c0] sm:$0xff]
    %v6514 = vld [vmem:[#allocation8 + $0x7c8] sm:$0xff]
    %v6515 = vld [vmem:[#allocation8 + $0x7d0] sm:$0xff]
    %v6516 = vld [vmem:[#allocation8 + $0x7d8] sm:$0xff]
    %v6517 = vld [vmem:[#allocation8 + $0x7e0] sm:$0xff]
    %v6518 = vld [vmem:[#allocation8 + $0x7e8] sm:$0xff]
    %v6519 = vld [vmem:[#allocation8 + $0x7f0] sm:$0xff]
    %v6520 = vld [vmem:[#allocation8 + $0x7f8] sm:$0xff]
    %v6521 = vld [vmem:[#allocation8 + $0x800] sm:$0xff]
    %v6522 = vld [vmem:[#allocation8 + $0x808] sm:$0xff]
    %v6523 = vld [vmem:[#allocation8 + $0x810] sm:$0xff]
    %v6524 = vld [vmem:[#allocation8 + $0x818] sm:$0xff]
    %v6525 = vld [vmem:[#allocation8 + $0x820] sm:$0xff]
    %v6526 = vld [vmem:[#allocation8 + $0x828] sm:$0xff]
    %v6527 = vld [vmem:[#allocation8 + $0x830] sm:$0xff]
    %v6528 = vld [vmem:[#allocation8 + $0x838] sm:$0xff]
    %v6529 = vld [vmem:[#allocation8 + $0x840] sm:$0xff]
    %v6530 = vld [vmem:[#allocation8 + $0x848] sm:$0xff]
    %v6531 = vld [vmem:[#allocation8 + $0x850] sm:$0xff]
    %v6532 = vld [vmem:[#allocation8 + $0x858] sm:$0xff]
    %v6533 = vld [vmem:[#allocation8 + $0x860] sm:$0xff]
    %v6534 = vld [vmem:[#allocation8 + $0x868] sm:$0xff]
    %v6535 = vld [vmem:[#allocation8 + $0x870] sm:$0xff]
    %v6536 = vld [vmem:[#allocation8 + $0x878] sm:$0xff]
    %v6537 = vld [vmem:[#allocation8 + $0x880] sm:$0xff]
    %v6538 = vld [vmem:[#allocation8 + $0x888] sm:$0xff]
    %v6539 = vld [vmem:[#allocation8 + $0x890] sm:$0xff]
    %v6540 = vld [vmem:[#allocation8 + $0x898] sm:$0xff]
    %v6541 = vld [vmem:[#allocation8 + $0x8a0] sm:$0xff]
    %v6542 = vld [vmem:[#allocation8 + $0x8a8] sm:$0xff]
    %v6543 = vld [vmem:[#allocation8 + $0x8b0] sm:$0xff]
    %v6544 = vld [vmem:[#allocation8 + $0x8b8] sm:$0xff]
    %v6545 = vld [vmem:[#allocation8 + $0x8c0] sm:$0xff]
    %v6546 = vld [vmem:[#allocation8 + $0x8c8] sm:$0xff]
    %v6547 = vld [vmem:[#allocation8 + $0x8d0] sm:$0xff]
    %v6548 = vld [vmem:[#allocation8 + $0x8d8] sm:$0xff]
    %v6549 = vld [vmem:[#allocation8 + $0x8e0] sm:$0xff]
    %v6550 = vld [vmem:[#allocation8 + $0x8e8] sm:$0xff]
    %v6551 = vld [vmem:[#allocation8 + $0x8f0] sm:$0xff]
    %v6552 = vld [vmem:[#allocation8 + $0x8f8] sm:$0xff]
    %v6553 = vld [vmem:[#allocation8 + $0x900] sm:$0xff]
    %v6554 = vld [vmem:[#allocation8 + $0x908] sm:$0xff]
    %v6555 = vld [vmem:[#allocation8 + $0x910] sm:$0xff]
    %v6556 = vld [vmem:[#allocation8 + $0x918] sm:$0xff]
    %v6557 = vld [vmem:[#allocation8 + $0x920] sm:$0xff]
    %v6558 = vld [vmem:[#allocation8 + $0x928] sm:$0xff]
    %v6559 = vld [vmem:[#allocation8 + $0x930] sm:$0xff]
    %v6560 = vld [vmem:[#allocation8 + $0x938] sm:$0xff]
    %v6561 = vld [vmem:[#allocation8 + $0x940] sm:$0xff]
    %v6562 = vld [vmem:[#allocation8 + $0x948] sm:$0xff]
    %v6563 = vld [vmem:[#allocation8 + $0x950] sm:$0xff]
    %v6564 = vld [vmem:[#allocation8 + $0x958] sm:$0xff]
    %v6565 = vld [vmem:[#allocation8 + $0x960] sm:$0xff]
    %v6566 = vld [vmem:[#allocation8 + $0x968] sm:$0xff]
    %v6567 = vld [vmem:[#allocation8 + $0x970] sm:$0xff]
    %v6568 = vld [vmem:[#allocation8 + $0x978] sm:$0xff]
    %v6569 = vld [vmem:[#allocation8 + $0x980] sm:$0xff]
    %v6570 = vld [vmem:[#allocation8 + $0x988] sm:$0xff]
    %v6571 = vld [vmem:[#allocation8 + $0x990] sm:$0xff]
    %v6572 = vld [vmem:[#allocation8 + $0x998] sm:$0xff]
    %v6573 = vld [vmem:[#allocation8 + $0x9a0] sm:$0xff]
    %v6574 = vld [vmem:[#allocation8 + $0x9a8] sm:$0xff]
    %v6575 = vld [vmem:[#allocation8 + $0x9b0] sm:$0xff]
    %v6576 = vld [vmem:[#allocation8 + $0x9b8] sm:$0xff]
    %v6577 = vld [vmem:[#allocation8 + $0x9c0] sm:$0xff]
    %v6578 = vld [vmem:[#allocation8 + $0x9c8] sm:$0xff]
    %v6579 = vld [vmem:[#allocation8 + $0x9d0] sm:$0xff]
    %v6580 = vld [vmem:[#allocation8 + $0x9d8] sm:$0xff]
    %v6581 = vld [vmem:[#allocation8 + $0x9e0] sm:$0xff]
    %v6582 = vld [vmem:[#allocation8 + $0x9e8] sm:$0xff]
    %v6583 = vld [vmem:[#allocation8 + $0x9f0] sm:$0xff]
    %v6584 = vld [vmem:[#allocation8 + $0x9f8] sm:$0xff]
    %v6585 = vld [vmem:[#allocation8 + $0xa00] sm:$0xff]
    %v6586 = vld [vmem:[#allocation8 + $0xa08] sm:$0xff]
    %v6587 = vld [vmem:[#allocation8 + $0xa10] sm:$0xff]
    %v6588 = vld [vmem:[#allocation8 + $0xa18] sm:$0xff]
    %v6589 = vld [vmem:[#allocation8 + $0xa20] sm:$0xff]
    %v6590 = vld [vmem:[#allocation8 + $0xa28] sm:$0xff]
    %v6591 = vld [vmem:[#allocation8 + $0xa30] sm:$0xff]
    %v6592 = vld [vmem:[#allocation8 + $0xa38] sm:$0xff]
    %v6593 = vld [vmem:[#allocation8 + $0xa40] sm:$0xff]
    %v6594 = vld [vmem:[#allocation8 + $0xa48] sm:$0xff]
    %v6595 = vld [vmem:[#allocation8 + $0xa50] sm:$0xff]
    %v6596 = vld [vmem:[#allocation8 + $0xa58] sm:$0xff]
    %v6597 = vld [vmem:[#allocation8 + $0xa60] sm:$0xff]
    %v6598 = vld [vmem:[#allocation8 + $0xa68] sm:$0xff]
    %v6599 = vld [vmem:[#allocation8 + $0xa70] sm:$0xff]
    %v6600 = vld [vmem:[#allocation8 + $0xa78] sm:$0xff]
    %v6601 = vld [vmem:[#allocation8 + $0xa80] sm:$0xff]
    %v6602 = vld [vmem:[#allocation8 + $0xa88] sm:$0xff]
    %v6603 = vld [vmem:[#allocation8 + $0xa90] sm:$0xff]
    %v6604 = vld [vmem:[#allocation8 + $0xa98] sm:$0xff]
    %v6605 = vld [vmem:[#allocation8 + $0xaa0] sm:$0xff]
    %v6606 = vld [vmem:[#allocation8 + $0xaa8] sm:$0xff]
    %v6607 = vld [vmem:[#allocation8 + $0xab0] sm:$0xff]
    %v6608 = vld [vmem:[#allocation8 + $0xab8] sm:$0xff]
    %v6609 = vld [vmem:[#allocation8 + $0xac0] sm:$0xff]
    %v6610 = vld [vmem:[#allocation8 + $0xac8] sm:$0xff]
    %v6611 = vld [vmem:[#allocation8 + $0xad0] sm:$0xff]
    %v6612 = vld [vmem:[#allocation8 + $0xad8] sm:$0xff]
    %v6613 = vld [vmem:[#allocation8 + $0xae0] sm:$0xff]
    %v6614 = vld [vmem:[#allocation8 + $0xae8] sm:$0xff]
    %v6615 = vld [vmem:[#allocation8 + $0xaf0] sm:$0xff]
    %v6616 = vld [vmem:[#allocation8 + $0xaf8] sm:$0xff]
    %v6617 = vld [vmem:[#allocation8 + $0xb00] sm:$0xff]
    %v6618 = vld [vmem:[#allocation8 + $0xb08] sm:$0xff]
    %v6619 = vld [vmem:[#allocation8 + $0xb10] sm:$0xff]
    %v6620 = vld [vmem:[#allocation8 + $0xb18] sm:$0xff]
    %v6621 = vld [vmem:[#allocation8 + $0xb20] sm:$0xff]
    %v6622 = vld [vmem:[#allocation8 + $0xb28] sm:$0xff]
    %v6623 = vld [vmem:[#allocation8 + $0xb30] sm:$0xff]
    %v6624 = vld [vmem:[#allocation8 + $0xb38] sm:$0xff]
    %v6625 = vld [vmem:[#allocation8 + $0xb40] sm:$0xff]
    %v6626 = vld [vmem:[#allocation8 + $0xb48] sm:$0xff]
    %v6627 = vld [vmem:[#allocation8 + $0xb50] sm:$0xff]
    %v6628 = vld [vmem:[#allocation8 + $0xb58] sm:$0xff]
    %v6629 = vld [vmem:[#allocation8 + $0xb60] sm:$0xff]
    %v6630 = vld [vmem:[#allocation8 + $0xb68] sm:$0xff]
    %v6631 = vld [vmem:[#allocation8 + $0xb70] sm:$0xff]
    %v6632 = vld [vmem:[#allocation8 + $0xb78] sm:$0xff]
    %v6633 = vld [vmem:[#allocation8 + $0xb80] sm:$0xff]
    %v6634 = vld [vmem:[#allocation8 + $0xb88] sm:$0xff]
    %v6635 = vld [vmem:[#allocation8 + $0xb90] sm:$0xff]
    %v6636 = vld [vmem:[#allocation8 + $0xb98] sm:$0xff]
    %v6637 = vld [vmem:[#allocation8 + $0xba0] sm:$0xff]
    %v6638 = vld [vmem:[#allocation8 + $0xba8] sm:$0xff]
    %v6639 = vld [vmem:[#allocation8 + $0xbb0] sm:$0xff]
    %v6640 = vld [vmem:[#allocation8 + $0xbb8] sm:$0xff]
    %v6641 = vld [vmem:[#allocation8 + $0xbc0] sm:$0xff]
    %v6642 = vld [vmem:[#allocation8 + $0xbc8] sm:$0xff]
    %v6643 = vld [vmem:[#allocation8 + $0xbd0] sm:$0xff]
    %v6644 = vld [vmem:[#allocation8 + $0xbd8] sm:$0xff]
    %v6645 = vld [vmem:[#allocation8 + $0xbe0] sm:$0xff]
    %v6646 = vld [vmem:[#allocation8 + $0xbe8] sm:$0xff]
    %v6647 = vld [vmem:[#allocation8 + $0xbf0] sm:$0xff]
    %v6648 = vld [vmem:[#allocation8 + $0xbf8] sm:$0xff]
    %v6649 = vld [vmem:[#allocation8 + $0xc00] sm:$0xff]
    %v6650 = vld [vmem:[#allocation8 + $0xc08] sm:$0xff]
    %v6651 = vld [vmem:[#allocation8 + $0xc10] sm:$0xff]
    %v6652 = vld [vmem:[#allocation8 + $0xc18] sm:$0xff]
    %v6653 = vld [vmem:[#allocation8 + $0xc20] sm:$0xff]
    %v6654 = vld [vmem:[#allocation8 + $0xc28] sm:$0xff]
    %v6655 = vld [vmem:[#allocation8 + $0xc30] sm:$0xff]
    %v6656 = vld [vmem:[#allocation8 + $0xc38] sm:$0xff]
    %v6657 = vld [vmem:[#allocation8 + $0xc40] sm:$0xff]
    %v6658 = vld [vmem:[#allocation8 + $0xc48] sm:$0xff]
    %v6659 = vld [vmem:[#allocation8 + $0xc50] sm:$0xff]
    %v6660 = vld [vmem:[#allocation8 + $0xc58] sm:$0xff]
    %v6661 = vld [vmem:[#allocation8 + $0xc60] sm:$0xff]
    %v6662 = vld [vmem:[#allocation8 + $0xc68] sm:$0xff]
    %v6663 = vld [vmem:[#allocation8 + $0xc70] sm:$0xff]
    %v6664 = vld [vmem:[#allocation8 + $0xc78] sm:$0xff]
    %v6665 = vld [vmem:[#allocation8 + $0xc80] sm:$0xff]
    %v6666 = vld [vmem:[#allocation8 + $0xc88] sm:$0xff]
    %v6667 = vld [vmem:[#allocation8 + $0xc90] sm:$0xff]
    %v6668 = vld [vmem:[#allocation8 + $0xc98] sm:$0xff]
    %v6669 = vld [vmem:[#allocation8 + $0xca0] sm:$0xff]
    %v6670 = vld [vmem:[#allocation8 + $0xca8] sm:$0xff]
    %v6671 = vld [vmem:[#allocation8 + $0xcb0] sm:$0xff]
    %v6672 = vld [vmem:[#allocation8 + $0xcb8] sm:$0xff]
    %v6673 = vld [vmem:[#allocation8 + $0xcc0] sm:$0xff]
    %v6674 = vld [vmem:[#allocation8 + $0xcc8] sm:$0xff]
    %v6675 = vld [vmem:[#allocation8 + $0xcd0] sm:$0xff]
    %v6676 = vld [vmem:[#allocation8 + $0xcd8] sm:$0xff]
    %v6677 = vld [vmem:[#allocation8 + $0xce0] sm:$0xff]
    %v6678 = vld [vmem:[#allocation8 + $0xce8] sm:$0xff]
    %v6679 = vld [vmem:[#allocation8 + $0xcf0] sm:$0xff]
    %v6680 = vld [vmem:[#allocation8 + $0xcf8] sm:$0xff]
    %v6681 = vld [vmem:[#allocation8 + $0xd00] sm:$0xff]
    %v6682 = vld [vmem:[#allocation8 + $0xd08] sm:$0xff]
    %v6683 = vld [vmem:[#allocation8 + $0xd10] sm:$0xff]
    %v6684 = vld [vmem:[#allocation8 + $0xd18] sm:$0xff]
    %v6685 = vld [vmem:[#allocation8 + $0xd20] sm:$0xff]
    %v6686 = vld [vmem:[#allocation8 + $0xd28] sm:$0xff]
    %v6687 = vld [vmem:[#allocation8 + $0xd30] sm:$0xff]
    %v6688 = vld [vmem:[#allocation8 + $0xd38] sm:$0xff]
    %v6689 = vld [vmem:[#allocation8 + $0xd40] sm:$0xff]
    %v6690 = vld [vmem:[#allocation8 + $0xd48] sm:$0xff]
    %v6691 = vld [vmem:[#allocation8 + $0xd50] sm:$0xff]
    %v6692 = vld [vmem:[#allocation8 + $0xd58] sm:$0xff]
    %v6693 = vld [vmem:[#allocation8 + $0xd60] sm:$0xff]
    %v6694 = vld [vmem:[#allocation8 + $0xd68] sm:$0xff]
    %v6695 = vld [vmem:[#allocation8 + $0xd70] sm:$0xff]
    %v6696 = vld [vmem:[#allocation8 + $0xd78] sm:$0xff]
    %v6697 = vld [vmem:[#allocation8 + $0xd80] sm:$0xff]
    %v6698 = vld [vmem:[#allocation8 + $0xd88] sm:$0xff]
    %v6699 = vld [vmem:[#allocation8 + $0xd90] sm:$0xff]
    %v6700 = vld [vmem:[#allocation8 + $0xd98] sm:$0xff]
    %v6701 = vld [vmem:[#allocation8 + $0xda0] sm:$0xff]
    %v6702 = vld [vmem:[#allocation8 + $0xda8] sm:$0xff]
    %v6703 = vld [vmem:[#allocation8 + $0xdb0] sm:$0xff]
    %v6704 = vld [vmem:[#allocation8 + $0xdb8] sm:$0xff]
    %v6705 = vld [vmem:[#allocation8 + $0xdc0] sm:$0xff]
    %v6706 = vld [vmem:[#allocation8 + $0xdc8] sm:$0xff]
    %v6707 = vld [vmem:[#allocation8 + $0xdd0] sm:$0xff]
    %v6708 = vld [vmem:[#allocation8 + $0xdd8] sm:$0xff]
    %v6709 = vld [vmem:[#allocation8 + $0xde0] sm:$0xff]
    %v6710 = vld [vmem:[#allocation8 + $0xde8] sm:$0xff]
    %v6711 = vld [vmem:[#allocation8 + $0xdf0] sm:$0xff]
    %v6712 = vld [vmem:[#allocation8 + $0xdf8] sm:$0xff]
    %v6713 = vld [vmem:[#allocation8 + $0xe00] sm:$0xff]
    %v6714 = vld [vmem:[#allocation8 + $0xe08] sm:$0xff]
    %v6715 = vld [vmem:[#allocation8 + $0xe10] sm:$0xff]
    %v6716 = vld [vmem:[#allocation8 + $0xe18] sm:$0xff]
    %v6717 = vld [vmem:[#allocation8 + $0xe20] sm:$0xff]
    %v6718 = vld [vmem:[#allocation8 + $0xe28] sm:$0xff]
    %v6719 = vld [vmem:[#allocation8 + $0xe30] sm:$0xff]
    %v6720 = vld [vmem:[#allocation8 + $0xe38] sm:$0xff]
    %v6721 = vld [vmem:[#allocation8 + $0xe40] sm:$0xff]
    %v6722 = vld [vmem:[#allocation8 + $0xe48] sm:$0xff]
    %v6723 = vld [vmem:[#allocation8 + $0xe50] sm:$0xff]
    %v6724 = vld [vmem:[#allocation8 + $0xe58] sm:$0xff]
    %v6725 = vld [vmem:[#allocation8 + $0xe60] sm:$0xff]
    %v6726 = vld [vmem:[#allocation8 + $0xe68] sm:$0xff]
    %v6727 = vld [vmem:[#allocation8 + $0xe70] sm:$0xff]
    %v6728 = vld [vmem:[#allocation8 + $0xe78] sm:$0xff]
    %v6729 = vld [vmem:[#allocation8 + $0xe80] sm:$0xff]
    %v6730 = vld [vmem:[#allocation8 + $0xe88] sm:$0xff]
    %v6731 = vld [vmem:[#allocation8 + $0xe90] sm:$0xff]
    %v6732 = vld [vmem:[#allocation8 + $0xe98] sm:$0xff]
    %v6733 = vld [vmem:[#allocation8 + $0xea0] sm:$0xff]
    %v6734 = vld [vmem:[#allocation8 + $0xea8] sm:$0xff]
    %v6735 = vld [vmem:[#allocation8 + $0xeb0] sm:$0xff]
    %v6736 = vld [vmem:[#allocation8 + $0xeb8] sm:$0xff]
    %v6737 = vld [vmem:[#allocation8 + $0xec0] sm:$0xff]
    %v6738 = vld [vmem:[#allocation8 + $0xec8] sm:$0xff]
    %v6739 = vld [vmem:[#allocation8 + $0xed0] sm:$0xff]
    %v6740 = vld [vmem:[#allocation8 + $0xed8] sm:$0xff]
    %v6741 = vld [vmem:[#allocation8 + $0xee0] sm:$0xff]
    %v6742 = vld [vmem:[#allocation8 + $0xee8] sm:$0xff]
    %v6743 = vld [vmem:[#allocation8 + $0xef0] sm:$0xff]
    %v6744 = vld [vmem:[#allocation8 + $0xef8] sm:$0xff]
    %v6745 = vld [vmem:[#allocation8 + $0xf00] sm:$0xff]
    %v6746 = vld [vmem:[#allocation8 + $0xf08] sm:$0xff]
    %v6747 = vld [vmem:[#allocation8 + $0xf10] sm:$0xff]
    %v6748 = vld [vmem:[#allocation8 + $0xf18] sm:$0xff]
    %v6749 = vld [vmem:[#allocation8 + $0xf20] sm:$0xff]
    %v6750 = vld [vmem:[#allocation8 + $0xf28] sm:$0xff]
    %v6751 = vld [vmem:[#allocation8 + $0xf30] sm:$0xff]
    %v6752 = vld [vmem:[#allocation8 + $0xf38] sm:$0xff]
    %v6753 = vld [vmem:[#allocation8 + $0xf40] sm:$0xff]
    %v6754 = vld [vmem:[#allocation8 + $0xf48] sm:$0xff]
    %v6755 = vld [vmem:[#allocation8 + $0xf50] sm:$0xff]
    %v6756 = vld [vmem:[#allocation8 + $0xf58] sm:$0xff]
    %v6757 = vld [vmem:[#allocation8 + $0xf60] sm:$0xff]
    %v6758 = vld [vmem:[#allocation8 + $0xf68] sm:$0xff]
    %v6759 = vld [vmem:[#allocation8 + $0xf70] sm:$0xff]
    %v6760 = vld [vmem:[#allocation8 + $0xf78] sm:$0xff]
    %v6761 = vld [vmem:[#allocation8 + $0xf80] sm:$0xff]
    %v6762 = vld [vmem:[#allocation8 + $0xf88] sm:$0xff]
    %v6763 = vld [vmem:[#allocation8 + $0xf90] sm:$0xff]
    %v6764 = vld [vmem:[#allocation8 + $0xf98] sm:$0xff]
    %v6765 = vld [vmem:[#allocation8 + $0xfa0] sm:$0xff]
    %v6766 = vld [vmem:[#allocation8 + $0xfa8] sm:$0xff]
    %v6767 = vld [vmem:[#allocation8 + $0xfb0] sm:$0xff]
    %v6768 = vld [vmem:[#allocation8 + $0xfb8] sm:$0xff]
    %v6769 = vld [vmem:[#allocation8 + $0xfc0] sm:$0xff]
    %v6770 = vld [vmem:[#allocation8 + $0xfc8] sm:$0xff]
    %v6771 = vld [vmem:[#allocation8 + $0xfd0] sm:$0xff]
    %v6772 = vld [vmem:[#allocation8 + $0xfd8] sm:$0xff]
    %v6773 = vld [vmem:[#allocation8 + $0xfe0] sm:$0xff]
    %v6774 = vld [vmem:[#allocation8 + $0xfe8] sm:$0xff]
    %v6775 = vld [vmem:[#allocation8 + $0xff0] sm:$0xff]
    %v6776 = vld [vmem:[#allocation8 + $0xff8] sm:$0xff]
    %v6777 = vld [vmem:[#allocation8 + $0x1000] sm:$0xff]
    %v6778 = vld [vmem:[#allocation8 + $0x1008] sm:$0xff]
    %v6779 = vld [vmem:[#allocation8 + $0x1010] sm:$0xff]
    %v6780 = vld [vmem:[#allocation8 + $0x1018] sm:$0xff]
    %v6781 = vld [vmem:[#allocation8 + $0x1020] sm:$0xff]
    %v6782 = vld [vmem:[#allocation8 + $0x1028] sm:$0xff]
    %v6783 = vld [vmem:[#allocation8 + $0x1030] sm:$0xff]
    %v6784 = vld [vmem:[#allocation8 + $0x1038] sm:$0xff]
    %v6785 = vld [vmem:[#allocation8 + $0x1040] sm:$0xff]
    %v6786 = vld [vmem:[#allocation8 + $0x1048] sm:$0xff]
    %v6787 = vld [vmem:[#allocation8 + $0x1050] sm:$0xff]
    %v6788 = vld [vmem:[#allocation8 + $0x1058] sm:$0xff]
    %v6789 = vld [vmem:[#allocation8 + $0x1060] sm:$0xff]
    %v6790 = vld [vmem:[#allocation8 + $0x1068] sm:$0xff]
    %v6791 = vld [vmem:[#allocation8 + $0x1070] sm:$0xff]
    %v6792 = vld [vmem:[#allocation8 + $0x1078] sm:$0xff]
    %v6793 = vld [vmem:[#allocation8 + $0x1080] sm:$0xff]
    %v6794 = vld [vmem:[#allocation8 + $0x1088] sm:$0xff]
    %v6795 = vld [vmem:[#allocation8 + $0x1090] sm:$0xff]
    %v6796 = vld [vmem:[#allocation8 + $0x1098] sm:$0xff]
    %v6797 = vld [vmem:[#allocation8 + $0x10a0] sm:$0xff]
    %v6798 = vld [vmem:[#allocation8 + $0x10a8] sm:$0xff]
    %v6799 = vld [vmem:[#allocation8 + $0x10b0] sm:$0xff]
    %v6800 = vld [vmem:[#allocation8 + $0x10b8] sm:$0xff]
    %v6801 = vld [vmem:[#allocation8 + $0x10c0] sm:$0xff]
    %v6802 = vld [vmem:[#allocation8 + $0x10c8] sm:$0xff]
    %v6803 = vld [vmem:[#allocation8 + $0x10d0] sm:$0xff]
    %v6804 = vld [vmem:[#allocation8 + $0x10d8] sm:$0xff]
    %v6805 = vld [vmem:[#allocation8 + $0x10e0] sm:$0xff]
    %v6806 = vld [vmem:[#allocation8 + $0x10e8] sm:$0xff]
    %v6807 = vld [vmem:[#allocation8 + $0x10f0] sm:$0xff]
    %v6808 = vld [vmem:[#allocation8 + $0x10f8] sm:$0xff]
    %v6809 = vld [vmem:[#allocation8 + $0x1100] sm:$0xff]
    %v6810 = vld [vmem:[#allocation8 + $0x1108] sm:$0xff]
    %v6811 = vld [vmem:[#allocation8 + $0x1110] sm:$0xff]
    %v6812 = vld [vmem:[#allocation8 + $0x1118] sm:$0xff]
    %v6813 = vld [vmem:[#allocation8 + $0x1120] sm:$0xff]
    %v6814 = vld [vmem:[#allocation8 + $0x1128] sm:$0xff]
    %v6815 = vld [vmem:[#allocation8 + $0x1130] sm:$0xff]
    %v6816 = vld [vmem:[#allocation8 + $0x1138] sm:$0xff]
    %v6817 = vld [vmem:[#allocation8 + $0x1140] sm:$0xff]
    %v6818 = vld [vmem:[#allocation8 + $0x1148] sm:$0xff]
    %v6819 = vld [vmem:[#allocation8 + $0x1150] sm:$0xff]
    %v6820 = vld [vmem:[#allocation8 + $0x1158] sm:$0xff]
    %v6821 = vld [vmem:[#allocation8 + $0x1160] sm:$0xff]
    %v6822 = vld [vmem:[#allocation8 + $0x1168] sm:$0xff]
    %v6823 = vld [vmem:[#allocation8 + $0x1170] sm:$0xff]
    %v6824 = vld [vmem:[#allocation8 + $0x1178] sm:$0xff]
    %v6825 = vld [vmem:[#allocation8 + $0x1180] sm:$0xff]
    %v6826 = vld [vmem:[#allocation8 + $0x1188] sm:$0xff]
    %v6827 = vld [vmem:[#allocation8 + $0x1190] sm:$0xff]
    %v6828 = vld [vmem:[#allocation8 + $0x1198] sm:$0xff]
    %v6829 = vld [vmem:[#allocation8 + $0x11a0] sm:$0xff]
    %v6830 = vld [vmem:[#allocation8 + $0x11a8] sm:$0xff]
    %v6831 = vld [vmem:[#allocation8 + $0x11b0] sm:$0xff]
    %v6832 = vld [vmem:[#allocation8 + $0x11b8] sm:$0xff]
    %v6833 = vld [vmem:[#allocation8 + $0x11c0] sm:$0xff]
    %v6834 = vld [vmem:[#allocation8 + $0x11c8] sm:$0xff]
    %v6835 = vld [vmem:[#allocation8 + $0x11d0] sm:$0xff]
    %v6836 = vld [vmem:[#allocation8 + $0x11d8] sm:$0xff]
    %v6837 = vld [vmem:[#allocation8 + $0x11e0] sm:$0xff]
    %v6838 = vld [vmem:[#allocation8 + $0x11e8] sm:$0xff]
    %v6839 = vld [vmem:[#allocation8 + $0x11f0] sm:$0xff]
    %v6840 = vld [vmem:[#allocation8 + $0x11f8] sm:$0xff]
    %v6841 = vld [vmem:[#allocation8 + $0x1200] sm:$0xff]
    %v6842 = vld [vmem:[#allocation8 + $0x1208] sm:$0xff]
    %v6843 = vld [vmem:[#allocation8 + $0x1210] sm:$0xff]
    %v6844 = vld [vmem:[#allocation8 + $0x1218] sm:$0xff]
    %v6845 = vld [vmem:[#allocation8 + $0x1220] sm:$0xff]
    %v6846 = vld [vmem:[#allocation8 + $0x1228] sm:$0xff]
    %v6847 = vld [vmem:[#allocation8 + $0x1230] sm:$0xff]
    %v6848 = vld [vmem:[#allocation8 + $0x1238] sm:$0xff]
    %v6849 = vld [vmem:[#allocation8 + $0x1240] sm:$0xff]
    %v6850 = vld [vmem:[#allocation8 + $0x1248] sm:$0xff]
    %v6851 = vld [vmem:[#allocation8 + $0x1250] sm:$0xff]
    %v6852 = vld [vmem:[#allocation8 + $0x1258] sm:$0xff]
    %v6853 = vld [vmem:[#allocation8 + $0x1260] sm:$0xff]
    %v6854 = vld [vmem:[#allocation8 + $0x1268] sm:$0xff]
    %v6855 = vld [vmem:[#allocation8 + $0x1270] sm:$0xff]
    %v6856 = vld [vmem:[#allocation8 + $0x1278] sm:$0xff]
    %v6857 = vld [vmem:[#allocation8 + $0x1280] sm:$0xff]
    %v6858 = vld [vmem:[#allocation8 + $0x1288] sm:$0xff]
    %v6859 = vld [vmem:[#allocation8 + $0x1290] sm:$0xff]
    %v6860 = vld [vmem:[#allocation8 + $0x1298] sm:$0xff]
    %v6861 = vld [vmem:[#allocation8 + $0x12a0] sm:$0xff]
    %v6862 = vld [vmem:[#allocation8 + $0x12a8] sm:$0xff]
    %v6863 = vld [vmem:[#allocation8 + $0x12b0] sm:$0xff]
    %v6864 = vld [vmem:[#allocation8 + $0x12b8] sm:$0xff]
    %v6865 = vld [vmem:[#allocation8 + $0x12c0] sm:$0xff]
    %v6866 = vld [vmem:[#allocation8 + $0x12c8] sm:$0xff]
    %v6867 = vld [vmem:[#allocation8 + $0x12d0] sm:$0xff]
    %v6868 = vld [vmem:[#allocation8 + $0x12d8] sm:$0xff]
    %v6869 = vld [vmem:[#allocation8 + $0x12e0] sm:$0xff]
    %v6870 = vld [vmem:[#allocation8 + $0x12e8] sm:$0xff]
    %v6871 = vld [vmem:[#allocation8 + $0x12f0] sm:$0xff]
    %v6872 = vld [vmem:[#allocation8 + $0x12f8] sm:$0xff]
    %v6873 = vld [vmem:[#allocation8 + $0x1300] sm:$0xff]
    %v6874 = vld [vmem:[#allocation8 + $0x1308] sm:$0xff]
    %v6875 = vld [vmem:[#allocation8 + $0x1310] sm:$0xff]
    %v6876 = vld [vmem:[#allocation8 + $0x1318] sm:$0xff]
    %v6877 = vld [vmem:[#allocation8 + $0x1320] sm:$0xff]
    %v6878 = vld [vmem:[#allocation8 + $0x1328] sm:$0xff]
    %v6879 = vld [vmem:[#allocation8 + $0x1330] sm:$0xff]
    %v6880 = vld [vmem:[#allocation8 + $0x1338] sm:$0xff]
    %v6881 = vld [vmem:[#allocation8 + $0x1340] sm:$0xff]
    %v6882 = vld [vmem:[#allocation8 + $0x1348] sm:$0xff]
    %v6883 = vld [vmem:[#allocation8 + $0x1350] sm:$0xff]
    %v6884 = vld [vmem:[#allocation8 + $0x1358] sm:$0xff]
    %v6885 = vld [vmem:[#allocation8 + $0x1360] sm:$0xff]
    %v6886 = vld [vmem:[#allocation8 + $0x1368] sm:$0xff]
    %v6887 = vld [vmem:[#allocation8 + $0x1370] sm:$0xff]
    %v6888 = vld [vmem:[#allocation8 + $0x1378] sm:$0xff]
    %v6889 = vld [vmem:[#allocation8 + $0x1380] sm:$0xff]
    %v6890 = vld [vmem:[#allocation8 + $0x1388] sm:$0xff]
    %v6891 = vld [vmem:[#allocation8 + $0x1390] sm:$0xff]
    %v6892 = vld [vmem:[#allocation8 + $0x1398] sm:$0xff]
    %v6893 = vld [vmem:[#allocation8 + $0x13a0] sm:$0xff]
    %v6894 = vld [vmem:[#allocation8 + $0x13a8] sm:$0xff]
    %v6895 = vld [vmem:[#allocation8 + $0x13b0] sm:$0xff]
    %v6896 = vld [vmem:[#allocation8 + $0x13b8] sm:$0xff]
    %v6897 = vld [vmem:[#allocation8 + $0x13c0] sm:$0xff]
    %v6898 = vld [vmem:[#allocation8 + $0x13c8] sm:$0xff]
    %v6899 = vld [vmem:[#allocation8 + $0x13d0] sm:$0xff]
    %v6900 = vld [vmem:[#allocation8 + $0x13d8] sm:$0xff]
    %v6901 = vld [vmem:[#allocation8 + $0x13e0] sm:$0xff]
    %v6902 = vld [vmem:[#allocation8 + $0x13e8] sm:$0xff]
    %v6903 = vld [vmem:[#allocation8 + $0x13f0] sm:$0xff]
    %v6904 = vld [vmem:[#allocation8 + $0x13f8] sm:$0xff]
    %v6905 = vld [vmem:[#allocation8 + $0x1400] sm:$0xff]
    %v6906 = vld [vmem:[#allocation8 + $0x1408] sm:$0xff]
    %v6907 = vld [vmem:[#allocation8 + $0x1410] sm:$0xff]
    %v6908 = vld [vmem:[#allocation8 + $0x1418] sm:$0xff]
    %v6909 = vld [vmem:[#allocation8 + $0x1420] sm:$0xff]
    %v6910 = vld [vmem:[#allocation8 + $0x1428] sm:$0xff]
    %v6911 = vld [vmem:[#allocation8 + $0x1430] sm:$0xff]
    %v6912 = vld [vmem:[#allocation8 + $0x1438] sm:$0xff]
    %v6913 = vld [vmem:[#allocation8 + $0x1440] sm:$0xff]
    %v6914 = vld [vmem:[#allocation8 + $0x1448] sm:$0xff]
    %v6915 = vld [vmem:[#allocation8 + $0x1450] sm:$0xff]
    %v6916 = vld [vmem:[#allocation8 + $0x1458] sm:$0xff]
    %v6917 = vld [vmem:[#allocation8 + $0x1460] sm:$0xff]
    %v6918 = vld [vmem:[#allocation8 + $0x1468] sm:$0xff]
    %v6919 = vld [vmem:[#allocation8 + $0x1470] sm:$0xff]
    %v6920 = vld [vmem:[#allocation8 + $0x1478] sm:$0xff]
    %v6921 = vld [vmem:[#allocation8 + $0x1480] sm:$0xff]
    %v6922 = vld [vmem:[#allocation8 + $0x1488] sm:$0xff]
    %v6923 = vld [vmem:[#allocation8 + $0x1490] sm:$0xff]
    %v6924 = vld [vmem:[#allocation8 + $0x1498] sm:$0xff]
    %v6925 = vld [vmem:[#allocation8 + $0x14a0] sm:$0xff]
    %v6926 = vld [vmem:[#allocation8 + $0x14a8] sm:$0xff]
    %v6927 = vld [vmem:[#allocation8 + $0x14b0] sm:$0xff]
    %v6928 = vld [vmem:[#allocation8 + $0x14b8] sm:$0xff]
    %v6929 = vld [vmem:[#allocation8 + $0x14c0] sm:$0xff]
    %v6930 = vld [vmem:[#allocation8 + $0x14c8] sm:$0xff]
    %v6931 = vld [vmem:[#allocation8 + $0x14d0] sm:$0xff]
    %v6932 = vld [vmem:[#allocation8 + $0x14d8] sm:$0xff]
    %v6933 = vld [vmem:[#allocation8 + $0x14e0] sm:$0xff]
    %v6934 = vld [vmem:[#allocation8 + $0x14e8] sm:$0xff]
    %v6935 = vld [vmem:[#allocation8 + $0x14f0] sm:$0xff]
    %v6936 = vld [vmem:[#allocation8 + $0x14f8] sm:$0xff]
    %v6937 = vld [vmem:[#allocation8 + $0x1500] sm:$0xff]
    %v6938 = vld [vmem:[#allocation8 + $0x1508] sm:$0xff]
    %v6939 = vld [vmem:[#allocation8 + $0x1510] sm:$0xff]
    %v6940 = vld [vmem:[#allocation8 + $0x1518] sm:$0xff]
    %v6941 = vld [vmem:[#allocation8 + $0x1520] sm:$0xff]
    %v6942 = vld [vmem:[#allocation8 + $0x1528] sm:$0xff]
    %v6943 = vld [vmem:[#allocation8 + $0x1530] sm:$0xff]
    %v6944 = vld [vmem:[#allocation8 + $0x1538] sm:$0xff]
    %v6945 = vld [vmem:[#allocation8 + $0x1540] sm:$0xff]
    %v6946 = vld [vmem:[#allocation8 + $0x1548] sm:$0xff]
    %v6947 = vld [vmem:[#allocation8 + $0x1550] sm:$0xff]
    %v6948 = vld [vmem:[#allocation8 + $0x1558] sm:$0xff]
    %v6949 = vld [vmem:[#allocation8 + $0x1560] sm:$0xff]
    %v6950 = vld [vmem:[#allocation8 + $0x1568] sm:$0xff]
    %v6951 = vld [vmem:[#allocation8 + $0x1570] sm:$0xff]
    %v6952 = vld [vmem:[#allocation8 + $0x1578] sm:$0xff]
    %v6953 = vld [vmem:[#allocation8 + $0x1580] sm:$0xff]
    %v6954 = vld [vmem:[#allocation8 + $0x1588] sm:$0xff]
    %v6955 = vld [vmem:[#allocation8 + $0x1590] sm:$0xff]
    %v6956 = vld [vmem:[#allocation8 + $0x1598] sm:$0xff]
    %v6957 = vld [vmem:[#allocation8 + $0x15a0] sm:$0xff]
    %v6958 = vld [vmem:[#allocation8 + $0x15a8] sm:$0xff]
    %v6959 = vld [vmem:[#allocation8 + $0x15b0] sm:$0xff]
    %v6960 = vld [vmem:[#allocation8 + $0x15b8] sm:$0xff]
    %v6961 = vld [vmem:[#allocation8 + $0x15c0] sm:$0xff]
    %v6962 = vld [vmem:[#allocation8 + $0x15c8] sm:$0xff]
    %v6963 = vld [vmem:[#allocation8 + $0x15d0] sm:$0xff]
    %v6964 = vld [vmem:[#allocation8 + $0x15d8] sm:$0xff]
    %v6965 = vld [vmem:[#allocation8 + $0x15e0] sm:$0xff]
    %v6966 = vld [vmem:[#allocation8 + $0x15e8] sm:$0xff]
    %v6967 = vld [vmem:[#allocation8 + $0x15f0] sm:$0xff]
    %v6968 = vld [vmem:[#allocation8 + $0x15f8] sm:$0xff]
    %v6969 = vld [vmem:[#allocation8 + $0x1600] sm:$0xff]
    %v6970 = vld [vmem:[#allocation8 + $0x1608] sm:$0xff]
    %v6971 = vld [vmem:[#allocation8 + $0x1610] sm:$0xff]
    %v6972 = vld [vmem:[#allocation8 + $0x1618] sm:$0xff]
    %v6973 = vld [vmem:[#allocation8 + $0x1620] sm:$0xff]
    %v6974 = vld [vmem:[#allocation8 + $0x1628] sm:$0xff]
    %v6975 = vld [vmem:[#allocation8 + $0x1630] sm:$0xff]
    %v6976 = vld [vmem:[#allocation8 + $0x1638] sm:$0xff]
    %v6977 = vld [vmem:[#allocation8 + $0x1640] sm:$0xff]
    %v6978 = vld [vmem:[#allocation8 + $0x1648] sm:$0xff]
    %v6979 = vld [vmem:[#allocation8 + $0x1650] sm:$0xff]
    %v6980 = vld [vmem:[#allocation8 + $0x1658] sm:$0xff]
    %v6981 = vld [vmem:[#allocation8 + $0x1660] sm:$0xff]
    %v6982 = vld [vmem:[#allocation8 + $0x1668] sm:$0xff]
    %v6983 = vld [vmem:[#allocation8 + $0x1670] sm:$0xff]
    %v6984 = vld [vmem:[#allocation8 + $0x1678] sm:$0xff]
    %v6985 = vld [vmem:[#allocation8 + $0x1680] sm:$0xff]
    %v6986 = vld [vmem:[#allocation8 + $0x1688] sm:$0xff]
    %v6987 = vld [vmem:[#allocation8 + $0x1690] sm:$0xff]
    %v6988 = vld [vmem:[#allocation8 + $0x1698] sm:$0xff]
    %v6989 = vld [vmem:[#allocation8 + $0x16a0] sm:$0xff]
    %v6990 = vld [vmem:[#allocation8 + $0x16a8] sm:$0xff]
    %v6991 = vld [vmem:[#allocation8 + $0x16b0] sm:$0xff]
    %v6992 = vld [vmem:[#allocation8 + $0x16b8] sm:$0xff]
    %v6993 = vld [vmem:[#allocation8 + $0x16c0] sm:$0xff]
    %v6994 = vld [vmem:[#allocation8 + $0x16c8] sm:$0xff]
    %v6995 = vld [vmem:[#allocation8 + $0x16d0] sm:$0xff]
    %v6996 = vld [vmem:[#allocation8 + $0x16d8] sm:$0xff]
    %v6997 = vld [vmem:[#allocation8 + $0x16e0] sm:$0xff]
    %v6998 = vld [vmem:[#allocation8 + $0x16e8] sm:$0xff]
    %v6999 = vld [vmem:[#allocation8 + $0x16f0] sm:$0xff]
    %v7000 = vld [vmem:[#allocation8 + $0x16f8] sm:$0xff]
    %v7001 = vld [vmem:[#allocation8 + $0x1700] sm:$0xff]
    %v7002 = vld [vmem:[#allocation8 + $0x1708] sm:$0xff]
    %v7003 = vld [vmem:[#allocation8 + $0x1710] sm:$0xff]
    %v7004 = vld [vmem:[#allocation8 + $0x1718] sm:$0xff]
    %v7005 = vld [vmem:[#allocation8 + $0x1720] sm:$0xff]
    %v7006 = vld [vmem:[#allocation8 + $0x1728] sm:$0xff]
    %v7007 = vld [vmem:[#allocation8 + $0x1730] sm:$0xff]
    %v7008 = vld [vmem:[#allocation8 + $0x1738] sm:$0xff]
    %v7009 = vld [vmem:[#allocation8 + $0x1740] sm:$0xff]
    %v7010 = vld [vmem:[#allocation8 + $0x1748] sm:$0xff]
    %v7011 = vld [vmem:[#allocation8 + $0x1750] sm:$0xff]
    %v7012 = vld [vmem:[#allocation8 + $0x1758] sm:$0xff]
    %v7013 = vld [vmem:[#allocation8 + $0x1760] sm:$0xff]
    %v7014 = vld [vmem:[#allocation8 + $0x1768] sm:$0xff]
    %v7015 = vld [vmem:[#allocation8 + $0x1770] sm:$0xff]
    %v7016 = vld [vmem:[#allocation8 + $0x1778] sm:$0xff]
    %v7017 = vld [vmem:[#allocation8 + $0x1780] sm:$0xff]
    %v7018 = vld [vmem:[#allocation8 + $0x1788] sm:$0xff]
    %v7019 = vld [vmem:[#allocation8 + $0x1790] sm:$0xff]
    %v7020 = vld [vmem:[#allocation8 + $0x1798] sm:$0xff]
    %v7021 = vld [vmem:[#allocation8 + $0x17a0] sm:$0xff]
    %v7022 = vld [vmem:[#allocation8 + $0x17a8] sm:$0xff]
    %v7023 = vld [vmem:[#allocation8 + $0x17b0] sm:$0xff]
    %v7024 = vld [vmem:[#allocation8 + $0x17b8] sm:$0xff]
    %v7025 = vld [vmem:[#allocation8 + $0x17c0] sm:$0xff]
    %v7026 = vld [vmem:[#allocation8 + $0x17c8] sm:$0xff]
    %v7027 = vld [vmem:[#allocation8 + $0x17d0] sm:$0xff]
    %v7028 = vld [vmem:[#allocation8 + $0x17d8] sm:$0xff]
    %v7029 = vld [vmem:[#allocation8 + $0x17e0] sm:$0xff]
    %v7030 = vld [vmem:[#allocation8 + $0x17e8] sm:$0xff]
    %v7031 = vld [vmem:[#allocation8 + $0x17f0] sm:$0xff]
    %v7032 = vld [vmem:[#allocation8 + $0x17f8] sm:$0xff]
    %v7033 = vld [vmem:[#allocation8 + $0x1800] sm:$0xff]
    %v7034 = vld [vmem:[#allocation8 + $0x1808] sm:$0xff]
    %v7035 = vld [vmem:[#allocation8 + $0x1810] sm:$0xff]
    %v7036 = vld [vmem:[#allocation8 + $0x1818] sm:$0xff]
    %v7037 = vld [vmem:[#allocation8 + $0x1820] sm:$0xff]
    %v7038 = vld [vmem:[#allocation8 + $0x1828] sm:$0xff]
    %v7039 = vld [vmem:[#allocation8 + $0x1830] sm:$0xff]
    %v7040 = vld [vmem:[#allocation8 + $0x1838] sm:$0xff]
    %v7041 = vld [vmem:[#allocation8 + $0x1840] sm:$0xff]
    %v7042 = vld [vmem:[#allocation8 + $0x1848] sm:$0xff]
    %v7043 = vld [vmem:[#allocation8 + $0x1850] sm:$0xff]
    %v7044 = vld [vmem:[#allocation8 + $0x1858] sm:$0xff]
    %v7045 = vld [vmem:[#allocation8 + $0x1860] sm:$0xff]
    %v7046 = vld [vmem:[#allocation8 + $0x1868] sm:$0xff]
    %v7047 = vld [vmem:[#allocation8 + $0x1870] sm:$0xff]
    %v7048 = vld [vmem:[#allocation8 + $0x1878] sm:$0xff]
    %v7049 = vld [vmem:[#allocation8 + $0x1880] sm:$0xff]
    %v7050 = vld [vmem:[#allocation8 + $0x1888] sm:$0xff]
    %v7051 = vld [vmem:[#allocation8 + $0x1890] sm:$0xff]
    %v7052 = vld [vmem:[#allocation8 + $0x1898] sm:$0xff]
    %v7053 = vld [vmem:[#allocation8 + $0x18a0] sm:$0xff]
    %v7054 = vld [vmem:[#allocation8 + $0x18a8] sm:$0xff]
    %v7055 = vld [vmem:[#allocation8 + $0x18b0] sm:$0xff]
    %v7056 = vld [vmem:[#allocation8 + $0x18b8] sm:$0xff]
    %v7057 = vld [vmem:[#allocation8 + $0x18c0] sm:$0xff]
    %v7058 = vld [vmem:[#allocation8 + $0x18c8] sm:$0xff]
    %v7059 = vld [vmem:[#allocation8 + $0x18d0] sm:$0xff]
    %v7060 = vld [vmem:[#allocation8 + $0x18d8] sm:$0xff]
    %v7061 = vld [vmem:[#allocation8 + $0x18e0] sm:$0xff]
    %v7062 = vld [vmem:[#allocation8 + $0x18e8] sm:$0xff]
    %v7063 = vld [vmem:[#allocation8 + $0x18f0] sm:$0xff]
    %v7064 = vld [vmem:[#allocation8 + $0x18f8] sm:$0xff]
    %v7065 = vld [vmem:[#allocation8 + $0x1900] sm:$0xff]
    %v7066 = vld [vmem:[#allocation8 + $0x1908] sm:$0xff]
    %v7067 = vld [vmem:[#allocation8 + $0x1910] sm:$0xff]
    %v7068 = vld [vmem:[#allocation8 + $0x1918] sm:$0xff]
    %v7069 = vld [vmem:[#allocation8 + $0x1920] sm:$0xff]
    %v7070 = vld [vmem:[#allocation8 + $0x1928] sm:$0xff]
    %v7071 = vld [vmem:[#allocation8 + $0x1930] sm:$0xff]
    %v7072 = vld [vmem:[#allocation8 + $0x1938] sm:$0xff]
    %v7073 = vld [vmem:[#allocation8 + $0x1940] sm:$0xff]
    %v7074 = vld [vmem:[#allocation8 + $0x1948] sm:$0xff]
    %v7075 = vld [vmem:[#allocation8 + $0x1950] sm:$0xff]
    %v7076 = vld [vmem:[#allocation8 + $0x1958] sm:$0xff]
    %v7077 = vld [vmem:[#allocation8 + $0x1960] sm:$0xff]
    %v7078 = vld [vmem:[#allocation8 + $0x1968] sm:$0xff]
    %v7079 = vld [vmem:[#allocation8 + $0x1970] sm:$0xff]
    %v7080 = vld [vmem:[#allocation8 + $0x1978] sm:$0xff]
    %v7081 = vld [vmem:[#allocation8 + $0x1980] sm:$0xff]
    %v7082 = vld [vmem:[#allocation8 + $0x1988] sm:$0xff]
    %v7083 = vld [vmem:[#allocation8 + $0x1990] sm:$0xff]
    %v7084 = vld [vmem:[#allocation8 + $0x1998] sm:$0xff]
    %v7085 = vld [vmem:[#allocation8 + $0x19a0] sm:$0xff]
    %v7086 = vld [vmem:[#allocation8 + $0x19a8] sm:$0xff]
    %v7087 = vld [vmem:[#allocation8 + $0x19b0] sm:$0xff]
    %v7088 = vld [vmem:[#allocation8 + $0x19b8] sm:$0xff]
    %v7089 = vld [vmem:[#allocation8 + $0x19c0] sm:$0xff]
    %v7090 = vld [vmem:[#allocation8 + $0x19c8] sm:$0xff]
    %v7091 = vld [vmem:[#allocation8 + $0x19d0] sm:$0xff]
    %v7092 = vld [vmem:[#allocation8 + $0x19d8] sm:$0xff]
    %v7093 = vld [vmem:[#allocation8 + $0x19e0] sm:$0xff]
    %v7094 = vld [vmem:[#allocation8 + $0x19e8] sm:$0xff]
    %v7095 = vld [vmem:[#allocation8 + $0x19f0] sm:$0xff]
    %v7096 = vld [vmem:[#allocation8 + $0x19f8] sm:$0xff]
    %v7097 = vld [vmem:[#allocation8 + $0x1a00] sm:$0xff]
    %v7098 = vld [vmem:[#allocation8 + $0x1a08] sm:$0xff]
    %v7099 = vld [vmem:[#allocation8 + $0x1a10] sm:$0xff]
    %v7100 = vld [vmem:[#allocation8 + $0x1a18] sm:$0xff]
    %v7101 = vld [vmem:[#allocation8 + $0x1a20] sm:$0xff]
    %v7102 = vld [vmem:[#allocation8 + $0x1a28] sm:$0xff]
    %v7103 = vld [vmem:[#allocation8 + $0x1a30] sm:$0xff]
    %v7104 = vld [vmem:[#allocation8 + $0x1a38] sm:$0xff]
    %v7105 = vld [vmem:[#allocation8 + $0x1a40] sm:$0xff]
    %v7106 = vld [vmem:[#allocation8 + $0x1a48] sm:$0xff]
    %v7107 = vld [vmem:[#allocation8 + $0x1a50] sm:$0xff]
    %v7108 = vld [vmem:[#allocation8 + $0x1a58] sm:$0xff]
    %v7109 = vld [vmem:[#allocation8 + $0x1a60] sm:$0xff]
    %v7110 = vld [vmem:[#allocation8 + $0x1a68] sm:$0xff]
    %v7111 = vld [vmem:[#allocation8 + $0x1a70] sm:$0xff]
    %v7112 = vld [vmem:[#allocation8 + $0x1a78] sm:$0xff]
    %v7113 = vld [vmem:[#allocation8 + $0x1a80] sm:$0xff]
    %v7114 = vld [vmem:[#allocation8 + $0x1a88] sm:$0xff]
    %v7115 = vld [vmem:[#allocation8 + $0x1a90] sm:$0xff]
    %v7116 = vld [vmem:[#allocation8 + $0x1a98] sm:$0xff]
    %v7117 = vld [vmem:[#allocation8 + $0x1aa0] sm:$0xff]
    %v7118 = vld [vmem:[#allocation8 + $0x1aa8] sm:$0xff]
    %v7119 = vld [vmem:[#allocation8 + $0x1ab0] sm:$0xff]
    %v7120 = vld [vmem:[#allocation8 + $0x1ab8] sm:$0xff]
    %v7121 = vld [vmem:[#allocation8 + $0x1ac0] sm:$0xff]
    %v7122 = vld [vmem:[#allocation8 + $0x1ac8] sm:$0xff]
    %v7123 = vld [vmem:[#allocation8 + $0x1ad0] sm:$0xff]
    %v7124 = vld [vmem:[#allocation8 + $0x1ad8] sm:$0xff]
    %v7125 = vld [vmem:[#allocation8 + $0x1ae0] sm:$0xff]
    %v7126 = vld [vmem:[#allocation8 + $0x1ae8] sm:$0xff]
    %v7127 = vld [vmem:[#allocation8 + $0x1af0] sm:$0xff]
    %v7128 = vld [vmem:[#allocation8 + $0x1af8] sm:$0xff]
    %v7129 = vld [vmem:[#allocation8 + $0x1b00] sm:$0xff]
    %v7130 = vld [vmem:[#allocation8 + $0x1b08] sm:$0xff]
    %v7131 = vld [vmem:[#allocation8 + $0x1b10] sm:$0xff]
    %v7132 = vld [vmem:[#allocation8 + $0x1b18] sm:$0xff]
    %v7133 = vld [vmem:[#allocation8 + $0x1b20] sm:$0xff]
    %v7134 = vld [vmem:[#allocation8 + $0x1b28] sm:$0xff]
    %v7135 = vld [vmem:[#allocation8 + $0x1b30] sm:$0xff]
    %v7136 = vld [vmem:[#allocation8 + $0x1b38] sm:$0xff]
    %v7137 = vld [vmem:[#allocation8 + $0x1b40] sm:$0xff]
    %v7138 = vld [vmem:[#allocation8 + $0x1b48] sm:$0xff]
    %v7139 = vld [vmem:[#allocation8 + $0x1b50] sm:$0xff]
    %v7140 = vld [vmem:[#allocation8 + $0x1b58] sm:$0xff]
    %v7141 = vld [vmem:[#allocation8 + $0x1b60] sm:$0xff]
    %v7142 = vld [vmem:[#allocation8 + $0x1b68] sm:$0xff]
    %v7143 = vld [vmem:[#allocation8 + $0x1b70] sm:$0xff]
    %v7144 = vld [vmem:[#allocation8 + $0x1b78] sm:$0xff]
    %v7145 = vld [vmem:[#allocation8 + $0x1b80] sm:$0xff]
    %v7146 = vld [vmem:[#allocation8 + $0x1b88] sm:$0xff]
    %v7147 = vld [vmem:[#allocation8 + $0x1b90] sm:$0xff]
    %v7148 = vld [vmem:[#allocation8 + $0x1b98] sm:$0xff]
    %v7149 = vld [vmem:[#allocation8 + $0x1ba0] sm:$0xff]
    %v7150 = vld [vmem:[#allocation8 + $0x1ba8] sm:$0xff]
    %v7151 = vld [vmem:[#allocation8 + $0x1bb0] sm:$0xff]
    %v7152 = vld [vmem:[#allocation8 + $0x1bb8] sm:$0xff]
    %v7153 = vld [vmem:[#allocation8 + $0x1bc0] sm:$0xff]
    %v7154 = vld [vmem:[#allocation8 + $0x1bc8] sm:$0xff]
    %v7155 = vld [vmem:[#allocation8 + $0x1bd0] sm:$0xff]
    %v7156 = vld [vmem:[#allocation8 + $0x1bd8] sm:$0xff]
    %v7157 = vld [vmem:[#allocation8 + $0x1be0] sm:$0xff]
    %v7158 = vld [vmem:[#allocation8 + $0x1be8] sm:$0xff]
    %v7159 = vld [vmem:[#allocation8 + $0x1bf0] sm:$0xff]
    %v7160 = vld [vmem:[#allocation8 + $0x1bf8] sm:$0xff]
    %v7161 = vld [vmem:[#allocation8 + $0x1c00] sm:$0xff]
    %v7162 = vld [vmem:[#allocation8 + $0x1c08] sm:$0xff]
    %v7163 = vld [vmem:[#allocation8 + $0x1c10] sm:$0xff]
    %v7164 = vld [vmem:[#allocation8 + $0x1c18] sm:$0xff]
    %v7165 = vld [vmem:[#allocation8 + $0x1c20] sm:$0xff]
    %v7166 = vld [vmem:[#allocation8 + $0x1c28] sm:$0xff]
    %v7167 = vld [vmem:[#allocation8 + $0x1c30] sm:$0xff]
    %v7168 = vld [vmem:[#allocation8 + $0x1c38] sm:$0xff]
    %v7169 = vld [vmem:[#allocation8 + $0x1c40] sm:$0xff]
    %v7170 = vld [vmem:[#allocation8 + $0x1c48] sm:$0xff]
    %v7171 = vld [vmem:[#allocation8 + $0x1c50] sm:$0xff]
    %v7172 = vld [vmem:[#allocation8 + $0x1c58] sm:$0xff]
    %v7173 = vld [vmem:[#allocation8 + $0x1c60] sm:$0xff]
    %v7174 = vld [vmem:[#allocation8 + $0x1c68] sm:$0xff]
    %v7175 = vld [vmem:[#allocation8 + $0x1c70] sm:$0xff]
    %v7176 = vld [vmem:[#allocation8 + $0x1c78] sm:$0xff]
    %v7177 = vld [vmem:[#allocation8 + $0x1c80] sm:$0xff]
    %v7178 = vld [vmem:[#allocation8 + $0x1c88] sm:$0xff]
    %v7179 = vld [vmem:[#allocation8 + $0x1c90] sm:$0xff]
    %v7180 = vld [vmem:[#allocation8 + $0x1c98] sm:$0xff]
    %v7181 = vld [vmem:[#allocation8 + $0x1ca0] sm:$0xff]
    %v7182 = vld [vmem:[#allocation8 + $0x1ca8] sm:$0xff]
    %v7183 = vld [vmem:[#allocation8 + $0x1cb0] sm:$0xff]
    %v7184 = vld [vmem:[#allocation8 + $0x1cb8] sm:$0xff]
    %v7185 = vld [vmem:[#allocation8 + $0x1cc0] sm:$0xff]
    %v7186 = vld [vmem:[#allocation8 + $0x1cc8] sm:$0xff]
    %v7187 = vld [vmem:[#allocation8 + $0x1cd0] sm:$0xff]
    %v7188 = vld [vmem:[#allocation8 + $0x1cd8] sm:$0xff]
    %v7189 = vld [vmem:[#allocation8 + $0x1ce0] sm:$0xff]
    %v7190 = vld [vmem:[#allocation8 + $0x1ce8] sm:$0xff]
    %v7191 = vld [vmem:[#allocation8 + $0x1cf0] sm:$0xff]
    %v7192 = vld [vmem:[#allocation8 + $0x1cf8] sm:$0xff]
    %v7193 = vld [vmem:[#allocation8 + $0x1d00] sm:$0xff]
    %v7194 = vld [vmem:[#allocation8 + $0x1d08] sm:$0xff]
    %v7195 = vld [vmem:[#allocation8 + $0x1d10] sm:$0xff]
    %v7196 = vld [vmem:[#allocation8 + $0x1d18] sm:$0xff]
    %v7197 = vld [vmem:[#allocation8 + $0x1d20] sm:$0xff]
    %v7198 = vld [vmem:[#allocation8 + $0x1d28] sm:$0xff]
    %v7199 = vld [vmem:[#allocation8 + $0x1d30] sm:$0xff]
    %v7200 = vld [vmem:[#allocation8 + $0x1d38] sm:$0xff]
    %v7201 = vld [vmem:[#allocation8 + $0x1d40] sm:$0xff]
    %v7202 = vld [vmem:[#allocation8 + $0x1d48] sm:$0xff]
    %v7203 = vld [vmem:[#allocation8 + $0x1d50] sm:$0xff]
    %v7204 = vld [vmem:[#allocation8 + $0x1d58] sm:$0xff]
    %v7205 = vld [vmem:[#allocation8 + $0x1d60] sm:$0xff]
    %v7206 = vld [vmem:[#allocation8 + $0x1d68] sm:$0xff]
    %v7207 = vld [vmem:[#allocation8 + $0x1d70] sm:$0xff]
    %v7208 = vld [vmem:[#allocation8 + $0x1d78] sm:$0xff]
    %v7209 = vld [vmem:[#allocation8 + $0x1d80] sm:$0xff]
    %v7210 = vld [vmem:[#allocation8 + $0x1d88] sm:$0xff]
    %v7211 = vld [vmem:[#allocation8 + $0x1d90] sm:$0xff]
    %v7212 = vld [vmem:[#allocation8 + $0x1d98] sm:$0xff]
    %v7213 = vld [vmem:[#allocation8 + $0x1da0] sm:$0xff]
    %v7214 = vld [vmem:[#allocation8 + $0x1da8] sm:$0xff]
    %v7215 = vld [vmem:[#allocation8 + $0x1db0] sm:$0xff]
    %v7216 = vld [vmem:[#allocation8 + $0x1db8] sm:$0xff]
    %v7217 = vld [vmem:[#allocation8 + $0x1dc0] sm:$0xff]
    %v7218 = vld [vmem:[#allocation8 + $0x1dc8] sm:$0xff]
    %v7219 = vld [vmem:[#allocation8 + $0x1dd0] sm:$0xff]
    %v7220 = vld [vmem:[#allocation8 + $0x1dd8] sm:$0xff]
    %v7221 = vld [vmem:[#allocation8 + $0x1de0] sm:$0xff]
    %v7222 = vld [vmem:[#allocation8 + $0x1de8] sm:$0xff]
    %v7223 = vld [vmem:[#allocation8 + $0x1df0] sm:$0xff]
    %v7224 = vld [vmem:[#allocation8 + $0x1df8] sm:$0xff]
    %v7225 = vld [vmem:[#allocation8 + $0x1e00] sm:$0xff]
    %v7226 = vld [vmem:[#allocation8 + $0x1e08] sm:$0xff]
    %v7227 = vld [vmem:[#allocation8 + $0x1e10] sm:$0xff]
    %v7228 = vld [vmem:[#allocation8 + $0x1e18] sm:$0xff]
    %v7229 = vld [vmem:[#allocation8 + $0x1e20] sm:$0xff]
    %v7230 = vld [vmem:[#allocation8 + $0x1e28] sm:$0xff]
    %v7231 = vld [vmem:[#allocation8 + $0x1e30] sm:$0xff]
    %v7232 = vld [vmem:[#allocation8 + $0x1e38] sm:$0xff]
    %v7233 = vld [vmem:[#allocation8 + $0x1e40] sm:$0xff]
    %v7234 = vld [vmem:[#allocation8 + $0x1e48] sm:$0xff]
    %v7235 = vld [vmem:[#allocation8 + $0x1e50] sm:$0xff]
    %v7236 = vld [vmem:[#allocation8 + $0x1e58] sm:$0xff]
    %v7237 = vld [vmem:[#allocation8 + $0x1e60] sm:$0xff]
    %v7238 = vld [vmem:[#allocation8 + $0x1e68] sm:$0xff]
    %v7239 = vld [vmem:[#allocation8 + $0x1e70] sm:$0xff]
    %v7240 = vld [vmem:[#allocation8 + $0x1e78] sm:$0xff]
    %v7241 = vld [vmem:[#allocation8 + $0x1e80] sm:$0xff]
    %v7242 = vld [vmem:[#allocation8 + $0x1e88] sm:$0xff]
    %v7243 = vld [vmem:[#allocation8 + $0x1e90] sm:$0xff]
    %v7244 = vld [vmem:[#allocation8 + $0x1e98] sm:$0xff]
    %v7245 = vld [vmem:[#allocation8 + $0x1ea0] sm:$0xff]
    %v7246 = vld [vmem:[#allocation8 + $0x1ea8] sm:$0xff]
    %v7247 = vld [vmem:[#allocation8 + $0x1eb0] sm:$0xff]
    %v7248 = vld [vmem:[#allocation8 + $0x1eb8] sm:$0xff]
    %v7249 = vld [vmem:[#allocation8 + $0x1ec0] sm:$0xff]
    %v7250 = vld [vmem:[#allocation8 + $0x1ec8] sm:$0xff]
    %v7251 = vld [vmem:[#allocation8 + $0x1ed0] sm:$0xff]
    %v7252 = vld [vmem:[#allocation8 + $0x1ed8] sm:$0xff]
    %v7253 = vld [vmem:[#allocation8 + $0x1ee0] sm:$0xff]
    %v7254 = vld [vmem:[#allocation8 + $0x1ee8] sm:$0xff]
    %v7255 = vld [vmem:[#allocation8 + $0x1ef0] sm:$0xff]
    %v7256 = vld [vmem:[#allocation8 + $0x1ef8] sm:$0xff]
    %v7257 = vld [vmem:[#allocation8 + $0x1f00] sm:$0xff]
    %v7258 = vld [vmem:[#allocation8 + $0x1f08] sm:$0xff]
    %v7259 = vld [vmem:[#allocation8 + $0x1f10] sm:$0xff]
    %v7260 = vld [vmem:[#allocation8 + $0x1f18] sm:$0xff]
    %v7261 = vld [vmem:[#allocation8 + $0x1f20] sm:$0xff]
    %v7262 = vld [vmem:[#allocation8 + $0x1f28] sm:$0xff]
    %v7263 = vld [vmem:[#allocation8 + $0x1f30] sm:$0xff]
    %v7264 = vld [vmem:[#allocation8 + $0x1f38] sm:$0xff]
    %v7265 = vld [vmem:[#allocation8 + $0x1f40] sm:$0xff]
    %v7266 = vld [vmem:[#allocation8 + $0x1f48] sm:$0xff]
    %v7267 = vld [vmem:[#allocation8 + $0x1f50] sm:$0xff]
    %v7268 = vld [vmem:[#allocation8 + $0x1f58] sm:$0xff]
    %v7269 = vld [vmem:[#allocation8 + $0x1f60] sm:$0xff]
    %v7270 = vld [vmem:[#allocation8 + $0x1f68] sm:$0xff]
    %v7271 = vld [vmem:[#allocation8 + $0x1f70] sm:$0xff]
    %v7272 = vld [vmem:[#allocation8 + $0x1f78] sm:$0xff]
    %v7273 = vld [vmem:[#allocation8 + $0x1f80] sm:$0xff]
    %v7274 = vld [vmem:[#allocation8 + $0x1f88] sm:$0xff]
    %v7275 = vld [vmem:[#allocation8 + $0x1f90] sm:$0xff]
    %v7276 = vld [vmem:[#allocation8 + $0x1f98] sm:$0xff]
    %v7277 = vld [vmem:[#allocation8 + $0x1fa0] sm:$0xff]
    %v7278 = vld [vmem:[#allocation8 + $0x1fa8] sm:$0xff]
    %v7279 = vld [vmem:[#allocation8 + $0x1fb0] sm:$0xff]
    %v7280 = vld [vmem:[#allocation8 + $0x1fb8] sm:$0xff]
    %v7281 = vld [vmem:[#allocation8 + $0x1fc0] sm:$0xff]
    %v7282 = vld [vmem:[#allocation8 + $0x1fc8] sm:$0xff]
    %v7283 = vld [vmem:[#allocation8 + $0x1fd0] sm:$0xff]
    %v7284 = vld [vmem:[#allocation8 + $0x1fd8] sm:$0xff]
    %v7285 = vld [vmem:[#allocation8 + $0x1fe0] sm:$0xff]
    %v7286 = vld [vmem:[#allocation8 + $0x1fe8] sm:$0xff]
    %v7287 = vld [vmem:[#allocation8 + $0x1ff0] sm:$0xff]
    %v7288 = vld [vmem:[#allocation8 + $0x1ff8] sm:$0xff]
    %v7289 = vld [vmem:[#allocation10] sm:$0xff]
    %v7291 = vlaneseq
    %v7292 = vshrl.u32 %v7291, 7
    %v7293 = vsub.s32 0, %v7292
    %v7294 = vrot.slane %v7289, %v7293
    %v7295 = vlaneseq
    %v7296 = vshrl.u32 %v7295, 7
    %v7297 = vsub.s32 1, %v7296
    %v7298 = vrot.slane %v7289, %v7297
    %v7299 = vlaneseq
    %v7300 = vshrl.u32 %v7299, 7
    %v7301 = vsub.s32 2, %v7300
    %v7302 = vrot.slane %v7289, %v7301
    %v7303 = vlaneseq
    %v7304 = vshrl.u32 %v7303, 7
    %v7305 = vsub.s32 3, %v7304
    %v7306 = vrot.slane %v7289, %v7305
    %v7307 = vlaneseq
    %v7308 = vshrl.u32 %v7307, 7
    %v7309 = vsub.s32 4, %v7308
    %v7310 = vrot.slane %v7289, %v7309
    %v7311 = vlaneseq
    %v7312 = vshrl.u32 %v7311, 7
    %v7313 = vsub.s32 5, %v7312
    %v7314 = vrot.slane %v7289, %v7313
    %v7315 = vlaneseq
    %v7316 = vshrl.u32 %v7315, 7
    %v7317 = vsub.s32 6, %v7316
    %v7318 = vrot.slane %v7289, %v7317
    %v7319 = vlaneseq
    %v7320 = vshrl.u32 %v7319, 7
    %v7321 = vsub.s32 7, %v7320
    %v7322 = vrot.slane %v7289, %v7321
    %v8355 = vunpack.c.l.b16 %v6265
    %v8356 = vunpack.c.h.b16 %v6265
    %v8357 = vunpack.c.l.b16 %v6266
    %v8358 = vunpack.c.h.b16 %v6266
    %v8359 = vunpack.c.l.b16 %v6267
    %v8360 = vunpack.c.h.b16 %v6267
    %v8361 = vunpack.c.l.b16 %v6268
    %v8362 = vunpack.c.h.b16 %v6268
    %v8363 = vunpack.c.l.b16 %v6269
    %v8364 = vunpack.c.h.b16 %v6269
    %v8365 = vunpack.c.l.b16 %v6270
    %v8366 = vunpack.c.h.b16 %v6270
    %v8367 = vunpack.c.l.b16 %v6271
    %v8368 = vunpack.c.h.b16 %v6271
    %v8369 = vunpack.c.l.b16 %v6272
    %v8370 = vunpack.c.h.b16 %v6272
    %v8371 = vunpack.c.l.b16 %v6273
    %v8372 = vunpack.c.h.b16 %v6273
    %v8373 = vunpack.c.l.b16 %v6274
    %v8374 = vunpack.c.h.b16 %v6274
    %v8375 = vunpack.c.l.b16 %v6275
    %v8376 = vunpack.c.h.b16 %v6275
    %v8377 = vunpack.c.l.b16 %v6276
    %v8378 = vunpack.c.h.b16 %v6276
    %v8379 = vunpack.c.l.b16 %v6277
    %v8380 = vunpack.c.h.b16 %v6277
    %v8381 = vunpack.c.l.b16 %v6278
    %v8382 = vunpack.c.h.b16 %v6278
    %v8383 = vunpack.c.l.b16 %v6279
    %v8384 = vunpack.c.h.b16 %v6279
    %v8385 = vunpack.c.l.b16 %v6280
    %v8386 = vunpack.c.h.b16 %v6280
    %v8387 = vunpack.c.l.b16 %v6281
    %v8388 = vunpack.c.h.b16 %v6281
    %v8389 = vunpack.c.l.b16 %v6282
    %v8390 = vunpack.c.h.b16 %v6282
    %v8391 = vunpack.c.l.b16 %v6283
    %v8392 = vunpack.c.h.b16 %v6283
    %v8393 = vunpack.c.l.b16 %v6284
    %v8394 = vunpack.c.h.b16 %v6284
    %v8395 = vunpack.c.l.b16 %v6285
    %v8396 = vunpack.c.h.b16 %v6285
    %v8397 = vunpack.c.l.b16 %v6286
    %v8398 = vunpack.c.h.b16 %v6286
    %v8399 = vunpack.c.l.b16 %v6287
    %v8400 = vunpack.c.h.b16 %v6287
    %v8401 = vunpack.c.l.b16 %v6288
    %v8402 = vunpack.c.h.b16 %v6288
    %v8403 = vunpack.c.l.b16 %v6289
    %v8404 = vunpack.c.h.b16 %v6289
    %v8405 = vunpack.c.l.b16 %v6290
    %v8406 = vunpack.c.h.b16 %v6290
    %v8407 = vunpack.c.l.b16 %v6291
    %v8408 = vunpack.c.h.b16 %v6291
    %v8409 = vunpack.c.l.b16 %v6292
    %v8410 = vunpack.c.h.b16 %v6292
    %v8411 = vunpack.c.l.b16 %v6293
    %v8412 = vunpack.c.h.b16 %v6293
    %v8413 = vunpack.c.l.b16 %v6294
    %v8414 = vunpack.c.h.b16 %v6294
    %v8415 = vunpack.c.l.b16 %v6295
    %v8416 = vunpack.c.h.b16 %v6295
    %v8417 = vunpack.c.l.b16 %v6296
    %v8418 = vunpack.c.h.b16 %v6296
    %v8419 = vunpack.c.l.b16 %v6297
    %v8420 = vunpack.c.h.b16 %v6297
    %v8421 = vunpack.c.l.b16 %v6298
    %v8422 = vunpack.c.h.b16 %v6298
    %v8423 = vunpack.c.l.b16 %v6299
    %v8424 = vunpack.c.h.b16 %v6299
    %v8425 = vunpack.c.l.b16 %v6300
    %v8426 = vunpack.c.h.b16 %v6300
    %v8427 = vunpack.c.l.b16 %v6301
    %v8428 = vunpack.c.h.b16 %v6301
    %v8429 = vunpack.c.l.b16 %v6302
    %v8430 = vunpack.c.h.b16 %v6302
    %v8431 = vunpack.c.l.b16 %v6303
    %v8432 = vunpack.c.h.b16 %v6303
    %v8433 = vunpack.c.l.b16 %v6304
    %v8434 = vunpack.c.h.b16 %v6304
    %v8435 = vunpack.c.l.b16 %v6305
    %v8436 = vunpack.c.h.b16 %v6305
    %v8437 = vunpack.c.l.b16 %v6306
    %v8438 = vunpack.c.h.b16 %v6306
    %v8439 = vunpack.c.l.b16 %v6307
    %v8440 = vunpack.c.h.b16 %v6307
    %v8441 = vunpack.c.l.b16 %v6308
    %v8442 = vunpack.c.h.b16 %v6308
    %v8443 = vunpack.c.l.b16 %v6309
    %v8444 = vunpack.c.h.b16 %v6309
    %v8445 = vunpack.c.l.b16 %v6310
    %v8446 = vunpack.c.h.b16 %v6310
    %v8447 = vunpack.c.l.b16 %v6311
    %v8448 = vunpack.c.h.b16 %v6311
    %v8449 = vunpack.c.l.b16 %v6312
    %v8450 = vunpack.c.h.b16 %v6312
    %v8451 = vunpack.c.l.b16 %v6313
    %v8452 = vunpack.c.h.b16 %v6313
    %v8453 = vunpack.c.l.b16 %v6314
    %v8454 = vunpack.c.h.b16 %v6314
    %v8455 = vunpack.c.l.b16 %v6315
    %v8456 = vunpack.c.h.b16 %v6315
    %v8457 = vunpack.c.l.b16 %v6316
    %v8458 = vunpack.c.h.b16 %v6316
    %v8459 = vunpack.c.l.b16 %v6317
    %v8460 = vunpack.c.h.b16 %v6317
    %v8461 = vunpack.c.l.b16 %v6318
    %v8462 = vunpack.c.h.b16 %v6318
    %v8463 = vunpack.c.l.b16 %v6319
    %v8464 = vunpack.c.h.b16 %v6319
    %v8465 = vunpack.c.l.b16 %v6320
    %v8466 = vunpack.c.h.b16 %v6320
    %v8467 = vunpack.c.l.b16 %v6321
    %v8468 = vunpack.c.h.b16 %v6321
    %v8469 = vunpack.c.l.b16 %v6322
    %v8470 = vunpack.c.h.b16 %v6322
    %v8471 = vunpack.c.l.b16 %v6323
    %v8472 = vunpack.c.h.b16 %v6323
    %v8473 = vunpack.c.l.b16 %v6324
    %v8474 = vunpack.c.h.b16 %v6324
    %v8475 = vunpack.c.l.b16 %v6325
    %v8476 = vunpack.c.h.b16 %v6325
    %v8477 = vunpack.c.l.b16 %v6326
    %v8478 = vunpack.c.h.b16 %v6326
    %v8479 = vunpack.c.l.b16 %v6327
    %v8480 = vunpack.c.h.b16 %v6327
    %v8481 = vunpack.c.l.b16 %v6328
    %v8482 = vunpack.c.h.b16 %v6328
    %v8483 = vunpack.c.l.b16 %v6329
    %v8484 = vunpack.c.h.b16 %v6329
    %v8485 = vunpack.c.l.b16 %v6330
    %v8486 = vunpack.c.h.b16 %v6330
    %v8487 = vunpack.c.l.b16 %v6331
    %v8488 = vunpack.c.h.b16 %v6331
    %v8489 = vunpack.c.l.b16 %v6332
    %v8490 = vunpack.c.h.b16 %v6332
    %v8491 = vunpack.c.l.b16 %v6333
    %v8492 = vunpack.c.h.b16 %v6333
    %v8493 = vunpack.c.l.b16 %v6334
    %v8494 = vunpack.c.h.b16 %v6334
    %v8495 = vunpack.c.l.b16 %v6335
    %v8496 = vunpack.c.h.b16 %v6335
    %v8497 = vunpack.c.l.b16 %v6336
    %v8498 = vunpack.c.h.b16 %v6336
    %v8499 = vunpack.c.l.b16 %v6337
    %v8500 = vunpack.c.h.b16 %v6337
    %v8501 = vunpack.c.l.b16 %v6338
    %v8502 = vunpack.c.h.b16 %v6338
    %v8503 = vunpack.c.l.b16 %v6339
    %v8504 = vunpack.c.h.b16 %v6339
    %v8505 = vunpack.c.l.b16 %v6340
    %v8506 = vunpack.c.h.b16 %v6340
    %v8507 = vunpack.c.l.b16 %v6341
    %v8508 = vunpack.c.h.b16 %v6341
    %v8509 = vunpack.c.l.b16 %v6342
    %v8510 = vunpack.c.h.b16 %v6342
    %v8511 = vunpack.c.l.b16 %v6343
    %v8512 = vunpack.c.h.b16 %v6343
    %v8513 = vunpack.c.l.b16 %v6344
    %v8514 = vunpack.c.h.b16 %v6344
    %v8515 = vunpack.c.l.b16 %v6345
    %v8516 = vunpack.c.h.b16 %v6345
    %v8517 = vunpack.c.l.b16 %v6346
    %v8518 = vunpack.c.h.b16 %v6346
    %v8519 = vunpack.c.l.b16 %v6347
    %v8520 = vunpack.c.h.b16 %v6347
    %v8521 = vunpack.c.l.b16 %v6348
    %v8522 = vunpack.c.h.b16 %v6348
    %v8523 = vunpack.c.l.b16 %v6349
    %v8524 = vunpack.c.h.b16 %v6349
    %v8525 = vunpack.c.l.b16 %v6350
    %v8526 = vunpack.c.h.b16 %v6350
    %v8527 = vunpack.c.l.b16 %v6351
    %v8528 = vunpack.c.h.b16 %v6351
    %v8529 = vunpack.c.l.b16 %v6352
    %v8530 = vunpack.c.h.b16 %v6352
    %v8531 = vunpack.c.l.b16 %v6353
    %v8532 = vunpack.c.h.b16 %v6353
    %v8533 = vunpack.c.l.b16 %v6354
    %v8534 = vunpack.c.h.b16 %v6354
    %v8535 = vunpack.c.l.b16 %v6355
    %v8536 = vunpack.c.h.b16 %v6355
    %v8537 = vunpack.c.l.b16 %v6356
    %v8538 = vunpack.c.h.b16 %v6356
    %v8539 = vunpack.c.l.b16 %v6357
    %v8540 = vunpack.c.h.b16 %v6357
    %v8541 = vunpack.c.l.b16 %v6358
    %v8542 = vunpack.c.h.b16 %v6358
    %v8543 = vunpack.c.l.b16 %v6359
    %v8544 = vunpack.c.h.b16 %v6359
    %v8545 = vunpack.c.l.b16 %v6360
    %v8546 = vunpack.c.h.b16 %v6360
    %v8547 = vunpack.c.l.b16 %v6361
    %v8548 = vunpack.c.h.b16 %v6361
    %v8549 = vunpack.c.l.b16 %v6362
    %v8550 = vunpack.c.h.b16 %v6362
    %v8551 = vunpack.c.l.b16 %v6363
    %v8552 = vunpack.c.h.b16 %v6363
    %v8553 = vunpack.c.l.b16 %v6364
    %v8554 = vunpack.c.h.b16 %v6364
    %v8555 = vunpack.c.l.b16 %v6365
    %v8556 = vunpack.c.h.b16 %v6365
    %v8557 = vunpack.c.l.b16 %v6366
    %v8558 = vunpack.c.h.b16 %v6366
    %v8559 = vunpack.c.l.b16 %v6367
    %v8560 = vunpack.c.h.b16 %v6367
    %v8561 = vunpack.c.l.b16 %v6368
    %v8562 = vunpack.c.h.b16 %v6368
    %v8563 = vunpack.c.l.b16 %v6369
    %v8564 = vunpack.c.h.b16 %v6369
    %v8565 = vunpack.c.l.b16 %v6370
    %v8566 = vunpack.c.h.b16 %v6370
    %v8567 = vunpack.c.l.b16 %v6371
    %v8568 = vunpack.c.h.b16 %v6371
    %v8569 = vunpack.c.l.b16 %v6372
    %v8570 = vunpack.c.h.b16 %v6372
    %v8571 = vunpack.c.l.b16 %v6373
    %v8572 = vunpack.c.h.b16 %v6373
    %v8573 = vunpack.c.l.b16 %v6374
    %v8574 = vunpack.c.h.b16 %v6374
    %v8575 = vunpack.c.l.b16 %v6375
    %v8576 = vunpack.c.h.b16 %v6375
    %v8577 = vunpack.c.l.b16 %v6376
    %v8578 = vunpack.c.h.b16 %v6376
    %v8579 = vunpack.c.l.b16 %v6377
    %v8580 = vunpack.c.h.b16 %v6377
    %v8581 = vunpack.c.l.b16 %v6378
    %v8582 = vunpack.c.h.b16 %v6378
    %v8583 = vunpack.c.l.b16 %v6379
    %v8584 = vunpack.c.h.b16 %v6379
    %v8585 = vunpack.c.l.b16 %v6380
    %v8586 = vunpack.c.h.b16 %v6380
    %v8587 = vunpack.c.l.b16 %v6381
    %v8588 = vunpack.c.h.b16 %v6381
    %v8589 = vunpack.c.l.b16 %v6382
    %v8590 = vunpack.c.h.b16 %v6382
    %v8591 = vunpack.c.l.b16 %v6383
    %v8592 = vunpack.c.h.b16 %v6383
    %v8593 = vunpack.c.l.b16 %v6384
    %v8594 = vunpack.c.h.b16 %v6384
    %v8595 = vunpack.c.l.b16 %v6385
    %v8596 = vunpack.c.h.b16 %v6385
    %v8597 = vunpack.c.l.b16 %v6386
    %v8598 = vunpack.c.h.b16 %v6386
    %v8599 = vunpack.c.l.b16 %v6387
    %v8600 = vunpack.c.h.b16 %v6387
    %v8601 = vunpack.c.l.b16 %v6388
    %v8602 = vunpack.c.h.b16 %v6388
    %v8603 = vunpack.c.l.b16 %v6389
    %v8604 = vunpack.c.h.b16 %v6389
    %v8605 = vunpack.c.l.b16 %v6390
    %v8606 = vunpack.c.h.b16 %v6390
    %v8607 = vunpack.c.l.b16 %v6391
    %v8608 = vunpack.c.h.b16 %v6391
    %v8609 = vunpack.c.l.b16 %v6392
    %v8610 = vunpack.c.h.b16 %v6392
    %v8611 = vunpack.c.l.b16 %v6393
    %v8612 = vunpack.c.h.b16 %v6393
    %v8613 = vunpack.c.l.b16 %v6394
    %v8614 = vunpack.c.h.b16 %v6394
    %v8615 = vunpack.c.l.b16 %v6395
    %v8616 = vunpack.c.h.b16 %v6395
    %v8617 = vunpack.c.l.b16 %v6396
    %v8618 = vunpack.c.h.b16 %v6396
    %v8619 = vunpack.c.l.b16 %v6397
    %v8620 = vunpack.c.h.b16 %v6397
    %v8621 = vunpack.c.l.b16 %v6398
    %v8622 = vunpack.c.h.b16 %v6398
    %v8623 = vunpack.c.l.b16 %v6399
    %v8624 = vunpack.c.h.b16 %v6399
    %v8625 = vunpack.c.l.b16 %v6400
    %v8626 = vunpack.c.h.b16 %v6400
    %v8627 = vunpack.c.l.b16 %v6401
    %v8628 = vunpack.c.h.b16 %v6401
    %v8629 = vunpack.c.l.b16 %v6402
    %v8630 = vunpack.c.h.b16 %v6402
    %v8631 = vunpack.c.l.b16 %v6403
    %v8632 = vunpack.c.h.b16 %v6403
    %v8633 = vunpack.c.l.b16 %v6404
    %v8634 = vunpack.c.h.b16 %v6404
    %v8635 = vunpack.c.l.b16 %v6405
    %v8636 = vunpack.c.h.b16 %v6405
    %v8637 = vunpack.c.l.b16 %v6406
    %v8638 = vunpack.c.h.b16 %v6406
    %v8639 = vunpack.c.l.b16 %v6407
    %v8640 = vunpack.c.h.b16 %v6407
    %v8641 = vunpack.c.l.b16 %v6408
    %v8642 = vunpack.c.h.b16 %v6408
    %v8643 = vunpack.c.l.b16 %v6409
    %v8644 = vunpack.c.h.b16 %v6409
    %v8645 = vunpack.c.l.b16 %v6410
    %v8646 = vunpack.c.h.b16 %v6410
    %v8647 = vunpack.c.l.b16 %v6411
    %v8648 = vunpack.c.h.b16 %v6411
    %v8649 = vunpack.c.l.b16 %v6412
    %v8650 = vunpack.c.h.b16 %v6412
    %v8651 = vunpack.c.l.b16 %v6413
    %v8652 = vunpack.c.h.b16 %v6413
    %v8653 = vunpack.c.l.b16 %v6414
    %v8654 = vunpack.c.h.b16 %v6414
    %v8655 = vunpack.c.l.b16 %v6415
    %v8656 = vunpack.c.h.b16 %v6415
    %v8657 = vunpack.c.l.b16 %v6416
    %v8658 = vunpack.c.h.b16 %v6416
    %v8659 = vunpack.c.l.b16 %v6417
    %v8660 = vunpack.c.h.b16 %v6417
    %v8661 = vunpack.c.l.b16 %v6418
    %v8662 = vunpack.c.h.b16 %v6418
    %v8663 = vunpack.c.l.b16 %v6419
    %v8664 = vunpack.c.h.b16 %v6419
    %v8665 = vunpack.c.l.b16 %v6420
    %v8666 = vunpack.c.h.b16 %v6420
    %v8667 = vunpack.c.l.b16 %v6421
    %v8668 = vunpack.c.h.b16 %v6421
    %v8669 = vunpack.c.l.b16 %v6422
    %v8670 = vunpack.c.h.b16 %v6422
    %v8671 = vunpack.c.l.b16 %v6423
    %v8672 = vunpack.c.h.b16 %v6423
    %v8673 = vunpack.c.l.b16 %v6424
    %v8674 = vunpack.c.h.b16 %v6424
    %v8675 = vunpack.c.l.b16 %v6425
    %v8676 = vunpack.c.h.b16 %v6425
    %v8677 = vunpack.c.l.b16 %v6426
    %v8678 = vunpack.c.h.b16 %v6426
    %v8679 = vunpack.c.l.b16 %v6427
    %v8680 = vunpack.c.h.b16 %v6427
    %v8681 = vunpack.c.l.b16 %v6428
    %v8682 = vunpack.c.h.b16 %v6428
    %v8683 = vunpack.c.l.b16 %v6429
    %v8684 = vunpack.c.h.b16 %v6429
    %v8685 = vunpack.c.l.b16 %v6430
    %v8686 = vunpack.c.h.b16 %v6430
    %v8687 = vunpack.c.l.b16 %v6431
    %v8688 = vunpack.c.h.b16 %v6431
    %v8689 = vunpack.c.l.b16 %v6432
    %v8690 = vunpack.c.h.b16 %v6432
    %v8691 = vunpack.c.l.b16 %v6433
    %v8692 = vunpack.c.h.b16 %v6433
    %v8693 = vunpack.c.l.b16 %v6434
    %v8694 = vunpack.c.h.b16 %v6434
    %v8695 = vunpack.c.l.b16 %v6435
    %v8696 = vunpack.c.h.b16 %v6435
    %v8697 = vunpack.c.l.b16 %v6436
    %v8698 = vunpack.c.h.b16 %v6436
    %v8699 = vunpack.c.l.b16 %v6437
    %v8700 = vunpack.c.h.b16 %v6437
    %v8701 = vunpack.c.l.b16 %v6438
    %v8702 = vunpack.c.h.b16 %v6438
    %v8703 = vunpack.c.l.b16 %v6439
    %v8704 = vunpack.c.h.b16 %v6439
    %v8705 = vunpack.c.l.b16 %v6440
    %v8706 = vunpack.c.h.b16 %v6440
    %v8707 = vunpack.c.l.b16 %v6441
    %v8708 = vunpack.c.h.b16 %v6441
    %v8709 = vunpack.c.l.b16 %v6442
    %v8710 = vunpack.c.h.b16 %v6442
    %v8711 = vunpack.c.l.b16 %v6443
    %v8712 = vunpack.c.h.b16 %v6443
    %v8713 = vunpack.c.l.b16 %v6444
    %v8714 = vunpack.c.h.b16 %v6444
    %v8715 = vunpack.c.l.b16 %v6445
    %v8716 = vunpack.c.h.b16 %v6445
    %v8717 = vunpack.c.l.b16 %v6446
    %v8718 = vunpack.c.h.b16 %v6446
    %v8719 = vunpack.c.l.b16 %v6447
    %v8720 = vunpack.c.h.b16 %v6447
    %v8721 = vunpack.c.l.b16 %v6448
    %v8722 = vunpack.c.h.b16 %v6448
    %v8723 = vunpack.c.l.b16 %v6449
    %v8724 = vunpack.c.h.b16 %v6449
    %v8725 = vunpack.c.l.b16 %v6450
    %v8726 = vunpack.c.h.b16 %v6450
    %v8727 = vunpack.c.l.b16 %v6451
    %v8728 = vunpack.c.h.b16 %v6451
    %v8729 = vunpack.c.l.b16 %v6452
    %v8730 = vunpack.c.h.b16 %v6452
    %v8731 = vunpack.c.l.b16 %v6453
    %v8732 = vunpack.c.h.b16 %v6453
    %v8733 = vunpack.c.l.b16 %v6454
    %v8734 = vunpack.c.h.b16 %v6454
    %v8735 = vunpack.c.l.b16 %v6455
    %v8736 = vunpack.c.h.b16 %v6455
    %v8737 = vunpack.c.l.b16 %v6456
    %v8738 = vunpack.c.h.b16 %v6456
    %v8739 = vunpack.c.l.b16 %v6457
    %v8740 = vunpack.c.h.b16 %v6457
    %v8741 = vunpack.c.l.b16 %v6458
    %v8742 = vunpack.c.h.b16 %v6458
    %v8743 = vunpack.c.l.b16 %v6459
    %v8744 = vunpack.c.h.b16 %v6459
    %v8745 = vunpack.c.l.b16 %v6460
    %v8746 = vunpack.c.h.b16 %v6460
    %v8747 = vunpack.c.l.b16 %v6461
    %v8748 = vunpack.c.h.b16 %v6461
    %v8749 = vunpack.c.l.b16 %v6462
    %v8750 = vunpack.c.h.b16 %v6462
    %v8751 = vunpack.c.l.b16 %v6463
    %v8752 = vunpack.c.h.b16 %v6463
    %v8753 = vunpack.c.l.b16 %v6464
    %v8754 = vunpack.c.h.b16 %v6464
    %v8755 = vunpack.c.l.b16 %v6465
    %v8756 = vunpack.c.h.b16 %v6465
    %v8757 = vunpack.c.l.b16 %v6466
    %v8758 = vunpack.c.h.b16 %v6466
    %v8759 = vunpack.c.l.b16 %v6467
    %v8760 = vunpack.c.h.b16 %v6467
    %v8761 = vunpack.c.l.b16 %v6468
    %v8762 = vunpack.c.h.b16 %v6468
    %v8763 = vunpack.c.l.b16 %v6469
    %v8764 = vunpack.c.h.b16 %v6469
    %v8765 = vunpack.c.l.b16 %v6470
    %v8766 = vunpack.c.h.b16 %v6470
    %v8767 = vunpack.c.l.b16 %v6471
    %v8768 = vunpack.c.h.b16 %v6471
    %v8769 = vunpack.c.l.b16 %v6472
    %v8770 = vunpack.c.h.b16 %v6472
    %v8771 = vunpack.c.l.b16 %v6473
    %v8772 = vunpack.c.h.b16 %v6473
    %v8773 = vunpack.c.l.b16 %v6474
    %v8774 = vunpack.c.h.b16 %v6474
    %v8775 = vunpack.c.l.b16 %v6475
    %v8776 = vunpack.c.h.b16 %v6475
    %v8777 = vunpack.c.l.b16 %v6476
    %v8778 = vunpack.c.h.b16 %v6476
    %v8779 = vunpack.c.l.b16 %v6477
    %v8780 = vunpack.c.h.b16 %v6477
    %v8781 = vunpack.c.l.b16 %v6478
    %v8782 = vunpack.c.h.b16 %v6478
    %v8783 = vunpack.c.l.b16 %v6479
    %v8784 = vunpack.c.h.b16 %v6479
    %v8785 = vunpack.c.l.b16 %v6480
    %v8786 = vunpack.c.h.b16 %v6480
    %v8787 = vunpack.c.l.b16 %v6481
    %v8788 = vunpack.c.h.b16 %v6481
    %v8789 = vunpack.c.l.b16 %v6482
    %v8790 = vunpack.c.h.b16 %v6482
    %v8791 = vunpack.c.l.b16 %v6483
    %v8792 = vunpack.c.h.b16 %v6483
    %v8793 = vunpack.c.l.b16 %v6484
    %v8794 = vunpack.c.h.b16 %v6484
    %v8795 = vunpack.c.l.b16 %v6485
    %v8796 = vunpack.c.h.b16 %v6485
    %v8797 = vunpack.c.l.b16 %v6486
    %v8798 = vunpack.c.h.b16 %v6486
    %v8799 = vunpack.c.l.b16 %v6487
    %v8800 = vunpack.c.h.b16 %v6487
    %v8801 = vunpack.c.l.b16 %v6488
    %v8802 = vunpack.c.h.b16 %v6488
    %v8803 = vunpack.c.l.b16 %v6489
    %v8804 = vunpack.c.h.b16 %v6489
    %v8805 = vunpack.c.l.b16 %v6490
    %v8806 = vunpack.c.h.b16 %v6490
    %v8807 = vunpack.c.l.b16 %v6491
    %v8808 = vunpack.c.h.b16 %v6491
    %v8809 = vunpack.c.l.b16 %v6492
    %v8810 = vunpack.c.h.b16 %v6492
    %v8811 = vunpack.c.l.b16 %v6493
    %v8812 = vunpack.c.h.b16 %v6493
    %v8813 = vunpack.c.l.b16 %v6494
    %v8814 = vunpack.c.h.b16 %v6494
    %v8815 = vunpack.c.l.b16 %v6495
    %v8816 = vunpack.c.h.b16 %v6495
    %v8817 = vunpack.c.l.b16 %v6496
    %v8818 = vunpack.c.h.b16 %v6496
    %v8819 = vunpack.c.l.b16 %v6497
    %v8820 = vunpack.c.h.b16 %v6497
    %v8821 = vunpack.c.l.b16 %v6498
    %v8822 = vunpack.c.h.b16 %v6498
    %v8823 = vunpack.c.l.b16 %v6499
    %v8824 = vunpack.c.h.b16 %v6499
    %v8825 = vunpack.c.l.b16 %v6500
    %v8826 = vunpack.c.h.b16 %v6500
    %v8827 = vunpack.c.l.b16 %v6501
    %v8828 = vunpack.c.h.b16 %v6501
    %v8829 = vunpack.c.l.b16 %v6502
    %v8830 = vunpack.c.h.b16 %v6502
    %v8831 = vunpack.c.l.b16 %v6503
    %v8832 = vunpack.c.h.b16 %v6503
    %v8833 = vunpack.c.l.b16 %v6504
    %v8834 = vunpack.c.h.b16 %v6504
    %v8835 = vunpack.c.l.b16 %v6505
    %v8836 = vunpack.c.h.b16 %v6505
    %v8837 = vunpack.c.l.b16 %v6506
    %v8838 = vunpack.c.h.b16 %v6506
    %v8839 = vunpack.c.l.b16 %v6507
    %v8840 = vunpack.c.h.b16 %v6507
    %v8841 = vunpack.c.l.b16 %v6508
    %v8842 = vunpack.c.h.b16 %v6508
    %v8843 = vunpack.c.l.b16 %v6509
    %v8844 = vunpack.c.h.b16 %v6509
    %v8845 = vunpack.c.l.b16 %v6510
    %v8846 = vunpack.c.h.b16 %v6510
    %v8847 = vunpack.c.l.b16 %v6511
    %v8848 = vunpack.c.h.b16 %v6511
    %v8849 = vunpack.c.l.b16 %v6512
    %v8850 = vunpack.c.h.b16 %v6512
    %v8851 = vunpack.c.l.b16 %v6513
    %v8852 = vunpack.c.h.b16 %v6513
    %v8853 = vunpack.c.l.b16 %v6514
    %v8854 = vunpack.c.h.b16 %v6514
    %v8855 = vunpack.c.l.b16 %v6515
    %v8856 = vunpack.c.h.b16 %v6515
    %v8857 = vunpack.c.l.b16 %v6516
    %v8858 = vunpack.c.h.b16 %v6516
    %v8859 = vunpack.c.l.b16 %v6517
    %v8860 = vunpack.c.h.b16 %v6517
    %v8861 = vunpack.c.l.b16 %v6518
    %v8862 = vunpack.c.h.b16 %v6518
    %v8863 = vunpack.c.l.b16 %v6519
    %v8864 = vunpack.c.h.b16 %v6519
    %v8865 = vunpack.c.l.b16 %v6520
    %v8866 = vunpack.c.h.b16 %v6520
    %v8867 = vunpack.c.l.b16 %v6521
    %v8868 = vunpack.c.h.b16 %v6521
    %v8869 = vunpack.c.l.b16 %v6522
    %v8870 = vunpack.c.h.b16 %v6522
    %v8871 = vunpack.c.l.b16 %v6523
    %v8872 = vunpack.c.h.b16 %v6523
    %v8873 = vunpack.c.l.b16 %v6524
    %v8874 = vunpack.c.h.b16 %v6524
    %v8875 = vunpack.c.l.b16 %v6525
    %v8876 = vunpack.c.h.b16 %v6525
    %v8877 = vunpack.c.l.b16 %v6526
    %v8878 = vunpack.c.h.b16 %v6526
    %v8879 = vunpack.c.l.b16 %v6527
    %v8880 = vunpack.c.h.b16 %v6527
    %v8881 = vunpack.c.l.b16 %v6528
    %v8882 = vunpack.c.h.b16 %v6528
    %v8883 = vunpack.c.l.b16 %v6529
    %v8884 = vunpack.c.h.b16 %v6529
    %v8885 = vunpack.c.l.b16 %v6530
    %v8886 = vunpack.c.h.b16 %v6530
    %v8887 = vunpack.c.l.b16 %v6531
    %v8888 = vunpack.c.h.b16 %v6531
    %v8889 = vunpack.c.l.b16 %v6532
    %v8890 = vunpack.c.h.b16 %v6532
    %v8891 = vunpack.c.l.b16 %v6533
    %v8892 = vunpack.c.h.b16 %v6533
    %v8893 = vunpack.c.l.b16 %v6534
    %v8894 = vunpack.c.h.b16 %v6534
    %v8895 = vunpack.c.l.b16 %v6535
    %v8896 = vunpack.c.h.b16 %v6535
    %v8897 = vunpack.c.l.b16 %v6536
    %v8898 = vunpack.c.h.b16 %v6536
    %v8899 = vunpack.c.l.b16 %v6537
    %v8900 = vunpack.c.h.b16 %v6537
    %v8901 = vunpack.c.l.b16 %v6538
    %v8902 = vunpack.c.h.b16 %v6538
    %v8903 = vunpack.c.l.b16 %v6539
    %v8904 = vunpack.c.h.b16 %v6539
    %v8905 = vunpack.c.l.b16 %v6540
    %v8906 = vunpack.c.h.b16 %v6540
    %v8907 = vunpack.c.l.b16 %v6541
    %v8908 = vunpack.c.h.b16 %v6541
    %v8909 = vunpack.c.l.b16 %v6542
    %v8910 = vunpack.c.h.b16 %v6542
    %v8911 = vunpack.c.l.b16 %v6543
    %v8912 = vunpack.c.h.b16 %v6543
    %v8913 = vunpack.c.l.b16 %v6544
    %v8914 = vunpack.c.h.b16 %v6544
    %v8915 = vunpack.c.l.b16 %v6545
    %v8916 = vunpack.c.h.b16 %v6545
    %v8917 = vunpack.c.l.b16 %v6546
    %v8918 = vunpack.c.h.b16 %v6546
    %v8919 = vunpack.c.l.b16 %v6547
    %v8920 = vunpack.c.h.b16 %v6547
    %v8921 = vunpack.c.l.b16 %v6548
    %v8922 = vunpack.c.h.b16 %v6548
    %v8923 = vunpack.c.l.b16 %v6549
    %v8924 = vunpack.c.h.b16 %v6549
    %v8925 = vunpack.c.l.b16 %v6550
    %v8926 = vunpack.c.h.b16 %v6550
    %v8927 = vunpack.c.l.b16 %v6551
    %v8928 = vunpack.c.h.b16 %v6551
    %v8929 = vunpack.c.l.b16 %v6552
    %v8930 = vunpack.c.h.b16 %v6552
    %v8931 = vunpack.c.l.b16 %v6553
    %v8932 = vunpack.c.h.b16 %v6553
    %v8933 = vunpack.c.l.b16 %v6554
    %v8934 = vunpack.c.h.b16 %v6554
    %v8935 = vunpack.c.l.b16 %v6555
    %v8936 = vunpack.c.h.b16 %v6555
    %v8937 = vunpack.c.l.b16 %v6556
    %v8938 = vunpack.c.h.b16 %v6556
    %v8939 = vunpack.c.l.b16 %v6557
    %v8940 = vunpack.c.h.b16 %v6557
    %v8941 = vunpack.c.l.b16 %v6558
    %v8942 = vunpack.c.h.b16 %v6558
    %v8943 = vunpack.c.l.b16 %v6559
    %v8944 = vunpack.c.h.b16 %v6559
    %v8945 = vunpack.c.l.b16 %v6560
    %v8946 = vunpack.c.h.b16 %v6560
    %v8947 = vunpack.c.l.b16 %v6561
    %v8948 = vunpack.c.h.b16 %v6561
    %v8949 = vunpack.c.l.b16 %v6562
    %v8950 = vunpack.c.h.b16 %v6562
    %v8951 = vunpack.c.l.b16 %v6563
    %v8952 = vunpack.c.h.b16 %v6563
    %v8953 = vunpack.c.l.b16 %v6564
    %v8954 = vunpack.c.h.b16 %v6564
    %v8955 = vunpack.c.l.b16 %v6565
    %v8956 = vunpack.c.h.b16 %v6565
    %v8957 = vunpack.c.l.b16 %v6566
    %v8958 = vunpack.c.h.b16 %v6566
    %v8959 = vunpack.c.l.b16 %v6567
    %v8960 = vunpack.c.h.b16 %v6567
    %v8961 = vunpack.c.l.b16 %v6568
    %v8962 = vunpack.c.h.b16 %v6568
    %v8963 = vunpack.c.l.b16 %v6569
    %v8964 = vunpack.c.h.b16 %v6569
    %v8965 = vunpack.c.l.b16 %v6570
    %v8966 = vunpack.c.h.b16 %v6570
    %v8967 = vunpack.c.l.b16 %v6571
    %v8968 = vunpack.c.h.b16 %v6571
    %v8969 = vunpack.c.l.b16 %v6572
    %v8970 = vunpack.c.h.b16 %v6572
    %v8971 = vunpack.c.l.b16 %v6573
    %v8972 = vunpack.c.h.b16 %v6573
    %v8973 = vunpack.c.l.b16 %v6574
    %v8974 = vunpack.c.h.b16 %v6574
    %v8975 = vunpack.c.l.b16 %v6575
    %v8976 = vunpack.c.h.b16 %v6575
    %v8977 = vunpack.c.l.b16 %v6576
    %v8978 = vunpack.c.h.b16 %v6576
    %v8979 = vunpack.c.l.b16 %v6577
    %v8980 = vunpack.c.h.b16 %v6577
    %v8981 = vunpack.c.l.b16 %v6578
    %v8982 = vunpack.c.h.b16 %v6578
    %v8983 = vunpack.c.l.b16 %v6579
    %v8984 = vunpack.c.h.b16 %v6579
    %v8985 = vunpack.c.l.b16 %v6580
    %v8986 = vunpack.c.h.b16 %v6580
    %v8987 = vunpack.c.l.b16 %v6581
    %v8988 = vunpack.c.h.b16 %v6581
    %v8989 = vunpack.c.l.b16 %v6582
    %v8990 = vunpack.c.h.b16 %v6582
    %v8991 = vunpack.c.l.b16 %v6583
    %v8992 = vunpack.c.h.b16 %v6583
    %v8993 = vunpack.c.l.b16 %v6584
    %v8994 = vunpack.c.h.b16 %v6584
    %v8995 = vunpack.c.l.b16 %v6585
    %v8996 = vunpack.c.h.b16 %v6585
    %v8997 = vunpack.c.l.b16 %v6586
    %v8998 = vunpack.c.h.b16 %v6586
    %v8999 = vunpack.c.l.b16 %v6587
    %v9000 = vunpack.c.h.b16 %v6587
    %v9001 = vunpack.c.l.b16 %v6588
    %v9002 = vunpack.c.h.b16 %v6588
    %v9003 = vunpack.c.l.b16 %v6589
    %v9004 = vunpack.c.h.b16 %v6589
    %v9005 = vunpack.c.l.b16 %v6590
    %v9006 = vunpack.c.h.b16 %v6590
    %v9007 = vunpack.c.l.b16 %v6591
    %v9008 = vunpack.c.h.b16 %v6591
    %v9009 = vunpack.c.l.b16 %v6592
    %v9010 = vunpack.c.h.b16 %v6592
    %v9011 = vunpack.c.l.b16 %v6593
    %v9012 = vunpack.c.h.b16 %v6593
    %v9013 = vunpack.c.l.b16 %v6594
    %v9014 = vunpack.c.h.b16 %v6594
    %v9015 = vunpack.c.l.b16 %v6595
    %v9016 = vunpack.c.h.b16 %v6595
    %v9017 = vunpack.c.l.b16 %v6596
    %v9018 = vunpack.c.h.b16 %v6596
    %v9019 = vunpack.c.l.b16 %v6597
    %v9020 = vunpack.c.h.b16 %v6597
    %v9021 = vunpack.c.l.b16 %v6598
    %v9022 = vunpack.c.h.b16 %v6598
    %v9023 = vunpack.c.l.b16 %v6599
    %v9024 = vunpack.c.h.b16 %v6599
    %v9025 = vunpack.c.l.b16 %v6600
    %v9026 = vunpack.c.h.b16 %v6600
    %v9027 = vunpack.c.l.b16 %v6601
    %v9028 = vunpack.c.h.b16 %v6601
    %v9029 = vunpack.c.l.b16 %v6602
    %v9030 = vunpack.c.h.b16 %v6602
    %v9031 = vunpack.c.l.b16 %v6603
    %v9032 = vunpack.c.h.b16 %v6603
    %v9033 = vunpack.c.l.b16 %v6604
    %v9034 = vunpack.c.h.b16 %v6604
    %v9035 = vunpack.c.l.b16 %v6605
    %v9036 = vunpack.c.h.b16 %v6605
    %v9037 = vunpack.c.l.b16 %v6606
    %v9038 = vunpack.c.h.b16 %v6606
    %v9039 = vunpack.c.l.b16 %v6607
    %v9040 = vunpack.c.h.b16 %v6607
    %v9041 = vunpack.c.l.b16 %v6608
    %v9042 = vunpack.c.h.b16 %v6608
    %v9043 = vunpack.c.l.b16 %v6609
    %v9044 = vunpack.c.h.b16 %v6609
    %v9045 = vunpack.c.l.b16 %v6610
    %v9046 = vunpack.c.h.b16 %v6610
    %v9047 = vunpack.c.l.b16 %v6611
    %v9048 = vunpack.c.h.b16 %v6611
    %v9049 = vunpack.c.l.b16 %v6612
    %v9050 = vunpack.c.h.b16 %v6612
    %v9051 = vunpack.c.l.b16 %v6613
    %v9052 = vunpack.c.h.b16 %v6613
    %v9053 = vunpack.c.l.b16 %v6614
    %v9054 = vunpack.c.h.b16 %v6614
    %v9055 = vunpack.c.l.b16 %v6615
    %v9056 = vunpack.c.h.b16 %v6615
    %v9057 = vunpack.c.l.b16 %v6616
    %v9058 = vunpack.c.h.b16 %v6616
    %v9059 = vunpack.c.l.b16 %v6617
    %v9060 = vunpack.c.h.b16 %v6617
    %v9061 = vunpack.c.l.b16 %v6618
    %v9062 = vunpack.c.h.b16 %v6618
    %v9063 = vunpack.c.l.b16 %v6619
    %v9064 = vunpack.c.h.b16 %v6619
    %v9065 = vunpack.c.l.b16 %v6620
    %v9066 = vunpack.c.h.b16 %v6620
    %v9067 = vunpack.c.l.b16 %v6621
    %v9068 = vunpack.c.h.b16 %v6621
    %v9069 = vunpack.c.l.b16 %v6622
    %v9070 = vunpack.c.h.b16 %v6622
    %v9071 = vunpack.c.l.b16 %v6623
    %v9072 = vunpack.c.h.b16 %v6623
    %v9073 = vunpack.c.l.b16 %v6624
    %v9074 = vunpack.c.h.b16 %v6624
    %v9075 = vunpack.c.l.b16 %v6625
    %v9076 = vunpack.c.h.b16 %v6625
    %v9077 = vunpack.c.l.b16 %v6626
    %v9078 = vunpack.c.h.b16 %v6626
    %v9079 = vunpack.c.l.b16 %v6627
    %v9080 = vunpack.c.h.b16 %v6627
    %v9081 = vunpack.c.l.b16 %v6628
    %v9082 = vunpack.c.h.b16 %v6628
    %v9083 = vunpack.c.l.b16 %v6629
    %v9084 = vunpack.c.h.b16 %v6629
    %v9085 = vunpack.c.l.b16 %v6630
    %v9086 = vunpack.c.h.b16 %v6630
    %v9087 = vunpack.c.l.b16 %v6631
    %v9088 = vunpack.c.h.b16 %v6631
    %v9089 = vunpack.c.l.b16 %v6632
    %v9090 = vunpack.c.h.b16 %v6632
    %v9091 = vunpack.c.l.b16 %v6633
    %v9092 = vunpack.c.h.b16 %v6633
    %v9093 = vunpack.c.l.b16 %v6634
    %v9094 = vunpack.c.h.b16 %v6634
    %v9095 = vunpack.c.l.b16 %v6635
    %v9096 = vunpack.c.h.b16 %v6635
    %v9097 = vunpack.c.l.b16 %v6636
    %v9098 = vunpack.c.h.b16 %v6636
    %v9099 = vunpack.c.l.b16 %v6637
    %v9100 = vunpack.c.h.b16 %v6637
    %v9101 = vunpack.c.l.b16 %v6638
    %v9102 = vunpack.c.h.b16 %v6638
    %v9103 = vunpack.c.l.b16 %v6639
    %v9104 = vunpack.c.h.b16 %v6639
    %v9105 = vunpack.c.l.b16 %v6640
    %v9106 = vunpack.c.h.b16 %v6640
    %v9107 = vunpack.c.l.b16 %v6641
    %v9108 = vunpack.c.h.b16 %v6641
    %v9109 = vunpack.c.l.b16 %v6642
    %v9110 = vunpack.c.h.b16 %v6642
    %v9111 = vunpack.c.l.b16 %v6643
    %v9112 = vunpack.c.h.b16 %v6643
    %v9113 = vunpack.c.l.b16 %v6644
    %v9114 = vunpack.c.h.b16 %v6644
    %v9115 = vunpack.c.l.b16 %v6645
    %v9116 = vunpack.c.h.b16 %v6645
    %v9117 = vunpack.c.l.b16 %v6646
    %v9118 = vunpack.c.h.b16 %v6646
    %v9119 = vunpack.c.l.b16 %v6647
    %v9120 = vunpack.c.h.b16 %v6647
    %v9121 = vunpack.c.l.b16 %v6648
    %v9122 = vunpack.c.h.b16 %v6648
    %v9123 = vunpack.c.l.b16 %v6649
    %v9124 = vunpack.c.h.b16 %v6649
    %v9125 = vunpack.c.l.b16 %v6650
    %v9126 = vunpack.c.h.b16 %v6650
    %v9127 = vunpack.c.l.b16 %v6651
    %v9128 = vunpack.c.h.b16 %v6651
    %v9129 = vunpack.c.l.b16 %v6652
    %v9130 = vunpack.c.h.b16 %v6652
    %v9131 = vunpack.c.l.b16 %v6653
    %v9132 = vunpack.c.h.b16 %v6653
    %v9133 = vunpack.c.l.b16 %v6654
    %v9134 = vunpack.c.h.b16 %v6654
    %v9135 = vunpack.c.l.b16 %v6655
    %v9136 = vunpack.c.h.b16 %v6655
    %v9137 = vunpack.c.l.b16 %v6656
    %v9138 = vunpack.c.h.b16 %v6656
    %v9139 = vunpack.c.l.b16 %v6657
    %v9140 = vunpack.c.h.b16 %v6657
    %v9141 = vunpack.c.l.b16 %v6658
    %v9142 = vunpack.c.h.b16 %v6658
    %v9143 = vunpack.c.l.b16 %v6659
    %v9144 = vunpack.c.h.b16 %v6659
    %v9145 = vunpack.c.l.b16 %v6660
    %v9146 = vunpack.c.h.b16 %v6660
    %v9147 = vunpack.c.l.b16 %v6661
    %v9148 = vunpack.c.h.b16 %v6661
    %v9149 = vunpack.c.l.b16 %v6662
    %v9150 = vunpack.c.h.b16 %v6662
    %v9151 = vunpack.c.l.b16 %v6663
    %v9152 = vunpack.c.h.b16 %v6663
    %v9153 = vunpack.c.l.b16 %v6664
    %v9154 = vunpack.c.h.b16 %v6664
    %v9155 = vunpack.c.l.b16 %v6665
    %v9156 = vunpack.c.h.b16 %v6665
    %v9157 = vunpack.c.l.b16 %v6666
    %v9158 = vunpack.c.h.b16 %v6666
    %v9159 = vunpack.c.l.b16 %v6667
    %v9160 = vunpack.c.h.b16 %v6667
    %v9161 = vunpack.c.l.b16 %v6668
    %v9162 = vunpack.c.h.b16 %v6668
    %v9163 = vunpack.c.l.b16 %v6669
    %v9164 = vunpack.c.h.b16 %v6669
    %v9165 = vunpack.c.l.b16 %v6670
    %v9166 = vunpack.c.h.b16 %v6670
    %v9167 = vunpack.c.l.b16 %v6671
    %v9168 = vunpack.c.h.b16 %v6671
    %v9169 = vunpack.c.l.b16 %v6672
    %v9170 = vunpack.c.h.b16 %v6672
    %v9171 = vunpack.c.l.b16 %v6673
    %v9172 = vunpack.c.h.b16 %v6673
    %v9173 = vunpack.c.l.b16 %v6674
    %v9174 = vunpack.c.h.b16 %v6674
    %v9175 = vunpack.c.l.b16 %v6675
    %v9176 = vunpack.c.h.b16 %v6675
    %v9177 = vunpack.c.l.b16 %v6676
    %v9178 = vunpack.c.h.b16 %v6676
    %v9179 = vunpack.c.l.b16 %v6677
    %v9180 = vunpack.c.h.b16 %v6677
    %v9181 = vunpack.c.l.b16 %v6678
    %v9182 = vunpack.c.h.b16 %v6678
    %v9183 = vunpack.c.l.b16 %v6679
    %v9184 = vunpack.c.h.b16 %v6679
    %v9185 = vunpack.c.l.b16 %v6680
    %v9186 = vunpack.c.h.b16 %v6680
    %v9187 = vunpack.c.l.b16 %v6681
    %v9188 = vunpack.c.h.b16 %v6681
    %v9189 = vunpack.c.l.b16 %v6682
    %v9190 = vunpack.c.h.b16 %v6682
    %v9191 = vunpack.c.l.b16 %v6683
    %v9192 = vunpack.c.h.b16 %v6683
    %v9193 = vunpack.c.l.b16 %v6684
    %v9194 = vunpack.c.h.b16 %v6684
    %v9195 = vunpack.c.l.b16 %v6685
    %v9196 = vunpack.c.h.b16 %v6685
    %v9197 = vunpack.c.l.b16 %v6686
    %v9198 = vunpack.c.h.b16 %v6686
    %v9199 = vunpack.c.l.b16 %v6687
    %v9200 = vunpack.c.h.b16 %v6687
    %v9201 = vunpack.c.l.b16 %v6688
    %v9202 = vunpack.c.h.b16 %v6688
    %v9203 = vunpack.c.l.b16 %v6689
    %v9204 = vunpack.c.h.b16 %v6689
    %v9205 = vunpack.c.l.b16 %v6690
    %v9206 = vunpack.c.h.b16 %v6690
    %v9207 = vunpack.c.l.b16 %v6691
    %v9208 = vunpack.c.h.b16 %v6691
    %v9209 = vunpack.c.l.b16 %v6692
    %v9210 = vunpack.c.h.b16 %v6692
    %v9211 = vunpack.c.l.b16 %v6693
    %v9212 = vunpack.c.h.b16 %v6693
    %v9213 = vunpack.c.l.b16 %v6694
    %v9214 = vunpack.c.h.b16 %v6694
    %v9215 = vunpack.c.l.b16 %v6695
    %v9216 = vunpack.c.h.b16 %v6695
    %v9217 = vunpack.c.l.b16 %v6696
    %v9218 = vunpack.c.h.b16 %v6696
    %v9219 = vunpack.c.l.b16 %v6697
    %v9220 = vunpack.c.h.b16 %v6697
    %v9221 = vunpack.c.l.b16 %v6698
    %v9222 = vunpack.c.h.b16 %v6698
    %v9223 = vunpack.c.l.b16 %v6699
    %v9224 = vunpack.c.h.b16 %v6699
    %v9225 = vunpack.c.l.b16 %v6700
    %v9226 = vunpack.c.h.b16 %v6700
    %v9227 = vunpack.c.l.b16 %v6701
    %v9228 = vunpack.c.h.b16 %v6701
    %v9229 = vunpack.c.l.b16 %v6702
    %v9230 = vunpack.c.h.b16 %v6702
    %v9231 = vunpack.c.l.b16 %v6703
    %v9232 = vunpack.c.h.b16 %v6703
    %v9233 = vunpack.c.l.b16 %v6704
    %v9234 = vunpack.c.h.b16 %v6704
    %v9235 = vunpack.c.l.b16 %v6705
    %v9236 = vunpack.c.h.b16 %v6705
    %v9237 = vunpack.c.l.b16 %v6706
    %v9238 = vunpack.c.h.b16 %v6706
    %v9239 = vunpack.c.l.b16 %v6707
    %v9240 = vunpack.c.h.b16 %v6707
    %v9241 = vunpack.c.l.b16 %v6708
    %v9242 = vunpack.c.h.b16 %v6708
    %v9243 = vunpack.c.l.b16 %v6709
    %v9244 = vunpack.c.h.b16 %v6709
    %v9245 = vunpack.c.l.b16 %v6710
    %v9246 = vunpack.c.h.b16 %v6710
    %v9247 = vunpack.c.l.b16 %v6711
    %v9248 = vunpack.c.h.b16 %v6711
    %v9249 = vunpack.c.l.b16 %v6712
    %v9250 = vunpack.c.h.b16 %v6712
    %v9251 = vunpack.c.l.b16 %v6713
    %v9252 = vunpack.c.h.b16 %v6713
    %v9253 = vunpack.c.l.b16 %v6714
    %v9254 = vunpack.c.h.b16 %v6714
    %v9255 = vunpack.c.l.b16 %v6715
    %v9256 = vunpack.c.h.b16 %v6715
    %v9257 = vunpack.c.l.b16 %v6716
    %v9258 = vunpack.c.h.b16 %v6716
    %v9259 = vunpack.c.l.b16 %v6717
    %v9260 = vunpack.c.h.b16 %v6717
    %v9261 = vunpack.c.l.b16 %v6718
    %v9262 = vunpack.c.h.b16 %v6718
    %v9263 = vunpack.c.l.b16 %v6719
    %v9264 = vunpack.c.h.b16 %v6719
    %v9265 = vunpack.c.l.b16 %v6720
    %v9266 = vunpack.c.h.b16 %v6720
    %v9267 = vunpack.c.l.b16 %v6721
    %v9268 = vunpack.c.h.b16 %v6721
    %v9269 = vunpack.c.l.b16 %v6722
    %v9270 = vunpack.c.h.b16 %v6722
    %v9271 = vunpack.c.l.b16 %v6723
    %v9272 = vunpack.c.h.b16 %v6723
    %v9273 = vunpack.c.l.b16 %v6724
    %v9274 = vunpack.c.h.b16 %v6724
    %v9275 = vunpack.c.l.b16 %v6725
    %v9276 = vunpack.c.h.b16 %v6725
    %v9277 = vunpack.c.l.b16 %v6726
    %v9278 = vunpack.c.h.b16 %v6726
    %v9279 = vunpack.c.l.b16 %v6727
    %v9280 = vunpack.c.h.b16 %v6727
    %v9281 = vunpack.c.l.b16 %v6728
    %v9282 = vunpack.c.h.b16 %v6728
    %v9283 = vunpack.c.l.b16 %v6729
    %v9284 = vunpack.c.h.b16 %v6729
    %v9285 = vunpack.c.l.b16 %v6730
    %v9286 = vunpack.c.h.b16 %v6730
    %v9287 = vunpack.c.l.b16 %v6731
    %v9288 = vunpack.c.h.b16 %v6731
    %v9289 = vunpack.c.l.b16 %v6732
    %v9290 = vunpack.c.h.b16 %v6732
    %v9291 = vunpack.c.l.b16 %v6733
    %v9292 = vunpack.c.h.b16 %v6733
    %v9293 = vunpack.c.l.b16 %v6734
    %v9294 = vunpack.c.h.b16 %v6734
    %v9295 = vunpack.c.l.b16 %v6735
    %v9296 = vunpack.c.h.b16 %v6735
    %v9297 = vunpack.c.l.b16 %v6736
    %v9298 = vunpack.c.h.b16 %v6736
    %v9299 = vunpack.c.l.b16 %v6737
    %v9300 = vunpack.c.h.b16 %v6737
    %v9301 = vunpack.c.l.b16 %v6738
    %v9302 = vunpack.c.h.b16 %v6738
    %v9303 = vunpack.c.l.b16 %v6739
    %v9304 = vunpack.c.h.b16 %v6739
    %v9305 = vunpack.c.l.b16 %v6740
    %v9306 = vunpack.c.h.b16 %v6740
    %v9307 = vunpack.c.l.b16 %v6741
    %v9308 = vunpack.c.h.b16 %v6741
    %v9309 = vunpack.c.l.b16 %v6742
    %v9310 = vunpack.c.h.b16 %v6742
    %v9311 = vunpack.c.l.b16 %v6743
    %v9312 = vunpack.c.h.b16 %v6743
    %v9313 = vunpack.c.l.b16 %v6744
    %v9314 = vunpack.c.h.b16 %v6744
    %v9315 = vunpack.c.l.b16 %v6745
    %v9316 = vunpack.c.h.b16 %v6745
    %v9317 = vunpack.c.l.b16 %v6746
    %v9318 = vunpack.c.h.b16 %v6746
    %v9319 = vunpack.c.l.b16 %v6747
    %v9320 = vunpack.c.h.b16 %v6747
    %v9321 = vunpack.c.l.b16 %v6748
    %v9322 = vunpack.c.h.b16 %v6748
    %v9323 = vunpack.c.l.b16 %v6749
    %v9324 = vunpack.c.h.b16 %v6749
    %v9325 = vunpack.c.l.b16 %v6750
    %v9326 = vunpack.c.h.b16 %v6750
    %v9327 = vunpack.c.l.b16 %v6751
    %v9328 = vunpack.c.h.b16 %v6751
    %v9329 = vunpack.c.l.b16 %v6752
    %v9330 = vunpack.c.h.b16 %v6752
    %v9331 = vunpack.c.l.b16 %v6753
    %v9332 = vunpack.c.h.b16 %v6753
    %v9333 = vunpack.c.l.b16 %v6754
    %v9334 = vunpack.c.h.b16 %v6754
    %v9335 = vunpack.c.l.b16 %v6755
    %v9336 = vunpack.c.h.b16 %v6755
    %v9337 = vunpack.c.l.b16 %v6756
    %v9338 = vunpack.c.h.b16 %v6756
    %v9339 = vunpack.c.l.b16 %v6757
    %v9340 = vunpack.c.h.b16 %v6757
    %v9341 = vunpack.c.l.b16 %v6758
    %v9342 = vunpack.c.h.b16 %v6758
    %v9343 = vunpack.c.l.b16 %v6759
    %v9344 = vunpack.c.h.b16 %v6759
    %v9345 = vunpack.c.l.b16 %v6760
    %v9346 = vunpack.c.h.b16 %v6760
    %v9347 = vunpack.c.l.b16 %v6761
    %v9348 = vunpack.c.h.b16 %v6761
    %v9349 = vunpack.c.l.b16 %v6762
    %v9350 = vunpack.c.h.b16 %v6762
    %v9351 = vunpack.c.l.b16 %v6763
    %v9352 = vunpack.c.h.b16 %v6763
    %v9353 = vunpack.c.l.b16 %v6764
    %v9354 = vunpack.c.h.b16 %v6764
    %v9355 = vunpack.c.l.b16 %v6765
    %v9356 = vunpack.c.h.b16 %v6765
    %v9357 = vunpack.c.l.b16 %v6766
    %v9358 = vunpack.c.h.b16 %v6766
    %v9359 = vunpack.c.l.b16 %v6767
    %v9360 = vunpack.c.h.b16 %v6767
    %v9361 = vunpack.c.l.b16 %v6768
    %v9362 = vunpack.c.h.b16 %v6768
    %v9363 = vunpack.c.l.b16 %v6769
    %v9364 = vunpack.c.h.b16 %v6769
    %v9365 = vunpack.c.l.b16 %v6770
    %v9366 = vunpack.c.h.b16 %v6770
    %v9367 = vunpack.c.l.b16 %v6771
    %v9368 = vunpack.c.h.b16 %v6771
    %v9369 = vunpack.c.l.b16 %v6772
    %v9370 = vunpack.c.h.b16 %v6772
    %v9371 = vunpack.c.l.b16 %v6773
    %v9372 = vunpack.c.h.b16 %v6773
    %v9373 = vunpack.c.l.b16 %v6774
    %v9374 = vunpack.c.h.b16 %v6774
    %v9375 = vunpack.c.l.b16 %v6775
    %v9376 = vunpack.c.h.b16 %v6775
    %v9377 = vunpack.c.l.b16 %v6776
    %v9378 = vunpack.c.h.b16 %v6776
    %v9379 = vunpack.c.l.b16 %v6777
    %v9380 = vunpack.c.h.b16 %v6777
    %v9381 = vunpack.c.l.b16 %v6778
    %v9382 = vunpack.c.h.b16 %v6778
    %v9383 = vunpack.c.l.b16 %v6779
    %v9384 = vunpack.c.h.b16 %v6779
    %v9385 = vunpack.c.l.b16 %v6780
    %v9386 = vunpack.c.h.b16 %v6780
    %v9387 = vunpack.c.l.b16 %v6781
    %v9388 = vunpack.c.h.b16 %v6781
    %v9389 = vunpack.c.l.b16 %v6782
    %v9390 = vunpack.c.h.b16 %v6782
    %v9391 = vunpack.c.l.b16 %v6783
    %v9392 = vunpack.c.h.b16 %v6783
    %v9393 = vunpack.c.l.b16 %v6784
    %v9394 = vunpack.c.h.b16 %v6784
    %v9395 = vunpack.c.l.b16 %v6785
    %v9396 = vunpack.c.h.b16 %v6785
    %v9397 = vunpack.c.l.b16 %v6786
    %v9398 = vunpack.c.h.b16 %v6786
    %v9399 = vunpack.c.l.b16 %v6787
    %v9400 = vunpack.c.h.b16 %v6787
    %v9401 = vunpack.c.l.b16 %v6788
    %v9402 = vunpack.c.h.b16 %v6788
    %v9403 = vunpack.c.l.b16 %v6789
    %v9404 = vunpack.c.h.b16 %v6789
    %v9405 = vunpack.c.l.b16 %v6790
    %v9406 = vunpack.c.h.b16 %v6790
    %v9407 = vunpack.c.l.b16 %v6791
    %v9408 = vunpack.c.h.b16 %v6791
    %v9409 = vunpack.c.l.b16 %v6792
    %v9410 = vunpack.c.h.b16 %v6792
    %v9411 = vunpack.c.l.b16 %v6793
    %v9412 = vunpack.c.h.b16 %v6793
    %v9413 = vunpack.c.l.b16 %v6794
    %v9414 = vunpack.c.h.b16 %v6794
    %v9415 = vunpack.c.l.b16 %v6795
    %v9416 = vunpack.c.h.b16 %v6795
    %v9417 = vunpack.c.l.b16 %v6796
    %v9418 = vunpack.c.h.b16 %v6796
    %v9419 = vunpack.c.l.b16 %v6797
    %v9420 = vunpack.c.h.b16 %v6797
    %v9421 = vunpack.c.l.b16 %v6798
    %v9422 = vunpack.c.h.b16 %v6798
    %v9423 = vunpack.c.l.b16 %v6799
    %v9424 = vunpack.c.h.b16 %v6799
    %v9425 = vunpack.c.l.b16 %v6800
    %v9426 = vunpack.c.h.b16 %v6800
    %v9427 = vunpack.c.l.b16 %v6801
    %v9428 = vunpack.c.h.b16 %v6801
    %v9429 = vunpack.c.l.b16 %v6802
    %v9430 = vunpack.c.h.b16 %v6802
    %v9431 = vunpack.c.l.b16 %v6803
    %v9432 = vunpack.c.h.b16 %v6803
    %v9433 = vunpack.c.l.b16 %v6804
    %v9434 = vunpack.c.h.b16 %v6804
    %v9435 = vunpack.c.l.b16 %v6805
    %v9436 = vunpack.c.h.b16 %v6805
    %v9437 = vunpack.c.l.b16 %v6806
    %v9438 = vunpack.c.h.b16 %v6806
    %v9439 = vunpack.c.l.b16 %v6807
    %v9440 = vunpack.c.h.b16 %v6807
    %v9441 = vunpack.c.l.b16 %v6808
    %v9442 = vunpack.c.h.b16 %v6808
    %v9443 = vunpack.c.l.b16 %v6809
    %v9444 = vunpack.c.h.b16 %v6809
    %v9445 = vunpack.c.l.b16 %v6810
    %v9446 = vunpack.c.h.b16 %v6810
    %v9447 = vunpack.c.l.b16 %v6811
    %v9448 = vunpack.c.h.b16 %v6811
    %v9449 = vunpack.c.l.b16 %v6812
    %v9450 = vunpack.c.h.b16 %v6812
    %v9451 = vunpack.c.l.b16 %v6813
    %v9452 = vunpack.c.h.b16 %v6813
    %v9453 = vunpack.c.l.b16 %v6814
    %v9454 = vunpack.c.h.b16 %v6814
    %v9455 = vunpack.c.l.b16 %v6815
    %v9456 = vunpack.c.h.b16 %v6815
    %v9457 = vunpack.c.l.b16 %v6816
    %v9458 = vunpack.c.h.b16 %v6816
    %v9459 = vunpack.c.l.b16 %v6817
    %v9460 = vunpack.c.h.b16 %v6817
    %v9461 = vunpack.c.l.b16 %v6818
    %v9462 = vunpack.c.h.b16 %v6818
    %v9463 = vunpack.c.l.b16 %v6819
    %v9464 = vunpack.c.h.b16 %v6819
    %v9465 = vunpack.c.l.b16 %v6820
    %v9466 = vunpack.c.h.b16 %v6820
    %v9467 = vunpack.c.l.b16 %v6821
    %v9468 = vunpack.c.h.b16 %v6821
    %v9469 = vunpack.c.l.b16 %v6822
    %v9470 = vunpack.c.h.b16 %v6822
    %v9471 = vunpack.c.l.b16 %v6823
    %v9472 = vunpack.c.h.b16 %v6823
    %v9473 = vunpack.c.l.b16 %v6824
    %v9474 = vunpack.c.h.b16 %v6824
    %v9475 = vunpack.c.l.b16 %v6825
    %v9476 = vunpack.c.h.b16 %v6825
    %v9477 = vunpack.c.l.b16 %v6826
    %v9478 = vunpack.c.h.b16 %v6826
    %v9479 = vunpack.c.l.b16 %v6827
    %v9480 = vunpack.c.h.b16 %v6827
    %v9481 = vunpack.c.l.b16 %v6828
    %v9482 = vunpack.c.h.b16 %v6828
    %v9483 = vunpack.c.l.b16 %v6829
    %v9484 = vunpack.c.h.b16 %v6829
    %v9485 = vunpack.c.l.b16 %v6830
    %v9486 = vunpack.c.h.b16 %v6830
    %v9487 = vunpack.c.l.b16 %v6831
    %v9488 = vunpack.c.h.b16 %v6831
    %v9489 = vunpack.c.l.b16 %v6832
    %v9490 = vunpack.c.h.b16 %v6832
    %v9491 = vunpack.c.l.b16 %v6833
    %v9492 = vunpack.c.h.b16 %v6833
    %v9493 = vunpack.c.l.b16 %v6834
    %v9494 = vunpack.c.h.b16 %v6834
    %v9495 = vunpack.c.l.b16 %v6835
    %v9496 = vunpack.c.h.b16 %v6835
    %v9497 = vunpack.c.l.b16 %v6836
    %v9498 = vunpack.c.h.b16 %v6836
    %v9499 = vunpack.c.l.b16 %v6837
    %v9500 = vunpack.c.h.b16 %v6837
    %v9501 = vunpack.c.l.b16 %v6838
    %v9502 = vunpack.c.h.b16 %v6838
    %v9503 = vunpack.c.l.b16 %v6839
    %v9504 = vunpack.c.h.b16 %v6839
    %v9505 = vunpack.c.l.b16 %v6840
    %v9506 = vunpack.c.h.b16 %v6840
    %v9507 = vunpack.c.l.b16 %v6841
    %v9508 = vunpack.c.h.b16 %v6841
    %v9509 = vunpack.c.l.b16 %v6842
    %v9510 = vunpack.c.h.b16 %v6842
    %v9511 = vunpack.c.l.b16 %v6843
    %v9512 = vunpack.c.h.b16 %v6843
    %v9513 = vunpack.c.l.b16 %v6844
    %v9514 = vunpack.c.h.b16 %v6844
    %v9515 = vunpack.c.l.b16 %v6845
    %v9516 = vunpack.c.h.b16 %v6845
    %v9517 = vunpack.c.l.b16 %v6846
    %v9518 = vunpack.c.h.b16 %v6846
    %v9519 = vunpack.c.l.b16 %v6847
    %v9520 = vunpack.c.h.b16 %v6847
    %v9521 = vunpack.c.l.b16 %v6848
    %v9522 = vunpack.c.h.b16 %v6848
    %v9523 = vunpack.c.l.b16 %v6849
    %v9524 = vunpack.c.h.b16 %v6849
    %v9525 = vunpack.c.l.b16 %v6850
    %v9526 = vunpack.c.h.b16 %v6850
    %v9527 = vunpack.c.l.b16 %v6851
    %v9528 = vunpack.c.h.b16 %v6851
    %v9529 = vunpack.c.l.b16 %v6852
    %v9530 = vunpack.c.h.b16 %v6852
    %v9531 = vunpack.c.l.b16 %v6853
    %v9532 = vunpack.c.h.b16 %v6853
    %v9533 = vunpack.c.l.b16 %v6854
    %v9534 = vunpack.c.h.b16 %v6854
    %v9535 = vunpack.c.l.b16 %v6855
    %v9536 = vunpack.c.h.b16 %v6855
    %v9537 = vunpack.c.l.b16 %v6856
    %v9538 = vunpack.c.h.b16 %v6856
    %v9539 = vunpack.c.l.b16 %v6857
    %v9540 = vunpack.c.h.b16 %v6857
    %v9541 = vunpack.c.l.b16 %v6858
    %v9542 = vunpack.c.h.b16 %v6858
    %v9543 = vunpack.c.l.b16 %v6859
    %v9544 = vunpack.c.h.b16 %v6859
    %v9545 = vunpack.c.l.b16 %v6860
    %v9546 = vunpack.c.h.b16 %v6860
    %v9547 = vunpack.c.l.b16 %v6861
    %v9548 = vunpack.c.h.b16 %v6861
    %v9549 = vunpack.c.l.b16 %v6862
    %v9550 = vunpack.c.h.b16 %v6862
    %v9551 = vunpack.c.l.b16 %v6863
    %v9552 = vunpack.c.h.b16 %v6863
    %v9553 = vunpack.c.l.b16 %v6864
    %v9554 = vunpack.c.h.b16 %v6864
    %v9555 = vunpack.c.l.b16 %v6865
    %v9556 = vunpack.c.h.b16 %v6865
    %v9557 = vunpack.c.l.b16 %v6866
    %v9558 = vunpack.c.h.b16 %v6866
    %v9559 = vunpack.c.l.b16 %v6867
    %v9560 = vunpack.c.h.b16 %v6867
    %v9561 = vunpack.c.l.b16 %v6868
    %v9562 = vunpack.c.h.b16 %v6868
    %v9563 = vunpack.c.l.b16 %v6869
    %v9564 = vunpack.c.h.b16 %v6869
    %v9565 = vunpack.c.l.b16 %v6870
    %v9566 = vunpack.c.h.b16 %v6870
    %v9567 = vunpack.c.l.b16 %v6871
    %v9568 = vunpack.c.h.b16 %v6871
    %v9569 = vunpack.c.l.b16 %v6872
    %v9570 = vunpack.c.h.b16 %v6872
    %v9571 = vunpack.c.l.b16 %v6873
    %v9572 = vunpack.c.h.b16 %v6873
    %v9573 = vunpack.c.l.b16 %v6874
    %v9574 = vunpack.c.h.b16 %v6874
    %v9575 = vunpack.c.l.b16 %v6875
    %v9576 = vunpack.c.h.b16 %v6875
    %v9577 = vunpack.c.l.b16 %v6876
    %v9578 = vunpack.c.h.b16 %v6876
    %v9579 = vunpack.c.l.b16 %v6877
    %v9580 = vunpack.c.h.b16 %v6877
    %v9581 = vunpack.c.l.b16 %v6878
    %v9582 = vunpack.c.h.b16 %v6878
    %v9583 = vunpack.c.l.b16 %v6879
    %v9584 = vunpack.c.h.b16 %v6879
    %v9585 = vunpack.c.l.b16 %v6880
    %v9586 = vunpack.c.h.b16 %v6880
    %v9587 = vunpack.c.l.b16 %v6881
    %v9588 = vunpack.c.h.b16 %v6881
    %v9589 = vunpack.c.l.b16 %v6882
    %v9590 = vunpack.c.h.b16 %v6882
    %v9591 = vunpack.c.l.b16 %v6883
    %v9592 = vunpack.c.h.b16 %v6883
    %v9593 = vunpack.c.l.b16 %v6884
    %v9594 = vunpack.c.h.b16 %v6884
    %v9595 = vunpack.c.l.b16 %v6885
    %v9596 = vunpack.c.h.b16 %v6885
    %v9597 = vunpack.c.l.b16 %v6886
    %v9598 = vunpack.c.h.b16 %v6886
    %v9599 = vunpack.c.l.b16 %v6887
    %v9600 = vunpack.c.h.b16 %v6887
    %v9601 = vunpack.c.l.b16 %v6888
    %v9602 = vunpack.c.h.b16 %v6888
    %v9603 = vunpack.c.l.b16 %v6889
    %v9604 = vunpack.c.h.b16 %v6889
    %v9605 = vunpack.c.l.b16 %v6890
    %v9606 = vunpack.c.h.b16 %v6890
    %v9607 = vunpack.c.l.b16 %v6891
    %v9608 = vunpack.c.h.b16 %v6891
    %v9609 = vunpack.c.l.b16 %v6892
    %v9610 = vunpack.c.h.b16 %v6892
    %v9611 = vunpack.c.l.b16 %v6893
    %v9612 = vunpack.c.h.b16 %v6893
    %v9613 = vunpack.c.l.b16 %v6894
    %v9614 = vunpack.c.h.b16 %v6894
    %v9615 = vunpack.c.l.b16 %v6895
    %v9616 = vunpack.c.h.b16 %v6895
    %v9617 = vunpack.c.l.b16 %v6896
    %v9618 = vunpack.c.h.b16 %v6896
    %v9619 = vunpack.c.l.b16 %v6897
    %v9620 = vunpack.c.h.b16 %v6897
    %v9621 = vunpack.c.l.b16 %v6898
    %v9622 = vunpack.c.h.b16 %v6898
    %v9623 = vunpack.c.l.b16 %v6899
    %v9624 = vunpack.c.h.b16 %v6899
    %v9625 = vunpack.c.l.b16 %v6900
    %v9626 = vunpack.c.h.b16 %v6900
    %v9627 = vunpack.c.l.b16 %v6901
    %v9628 = vunpack.c.h.b16 %v6901
    %v9629 = vunpack.c.l.b16 %v6902
    %v9630 = vunpack.c.h.b16 %v6902
    %v9631 = vunpack.c.l.b16 %v6903
    %v9632 = vunpack.c.h.b16 %v6903
    %v9633 = vunpack.c.l.b16 %v6904
    %v9634 = vunpack.c.h.b16 %v6904
    %v9635 = vunpack.c.l.b16 %v6905
    %v9636 = vunpack.c.h.b16 %v6905
    %v9637 = vunpack.c.l.b16 %v6906
    %v9638 = vunpack.c.h.b16 %v6906
    %v9639 = vunpack.c.l.b16 %v6907
    %v9640 = vunpack.c.h.b16 %v6907
    %v9641 = vunpack.c.l.b16 %v6908
    %v9642 = vunpack.c.h.b16 %v6908
    %v9643 = vunpack.c.l.b16 %v6909
    %v9644 = vunpack.c.h.b16 %v6909
    %v9645 = vunpack.c.l.b16 %v6910
    %v9646 = vunpack.c.h.b16 %v6910
    %v9647 = vunpack.c.l.b16 %v6911
    %v9648 = vunpack.c.h.b16 %v6911
    %v9649 = vunpack.c.l.b16 %v6912
    %v9650 = vunpack.c.h.b16 %v6912
    %v9651 = vunpack.c.l.b16 %v6913
    %v9652 = vunpack.c.h.b16 %v6913
    %v9653 = vunpack.c.l.b16 %v6914
    %v9654 = vunpack.c.h.b16 %v6914
    %v9655 = vunpack.c.l.b16 %v6915
    %v9656 = vunpack.c.h.b16 %v6915
    %v9657 = vunpack.c.l.b16 %v6916
    %v9658 = vunpack.c.h.b16 %v6916
    %v9659 = vunpack.c.l.b16 %v6917
    %v9660 = vunpack.c.h.b16 %v6917
    %v9661 = vunpack.c.l.b16 %v6918
    %v9662 = vunpack.c.h.b16 %v6918
    %v9663 = vunpack.c.l.b16 %v6919
    %v9664 = vunpack.c.h.b16 %v6919
    %v9665 = vunpack.c.l.b16 %v6920
    %v9666 = vunpack.c.h.b16 %v6920
    %v9667 = vunpack.c.l.b16 %v6921
    %v9668 = vunpack.c.h.b16 %v6921
    %v9669 = vunpack.c.l.b16 %v6922
    %v9670 = vunpack.c.h.b16 %v6922
    %v9671 = vunpack.c.l.b16 %v6923
    %v9672 = vunpack.c.h.b16 %v6923
    %v9673 = vunpack.c.l.b16 %v6924
    %v9674 = vunpack.c.h.b16 %v6924
    %v9675 = vunpack.c.l.b16 %v6925
    %v9676 = vunpack.c.h.b16 %v6925
    %v9677 = vunpack.c.l.b16 %v6926
    %v9678 = vunpack.c.h.b16 %v6926
    %v9679 = vunpack.c.l.b16 %v6927
    %v9680 = vunpack.c.h.b16 %v6927
    %v9681 = vunpack.c.l.b16 %v6928
    %v9682 = vunpack.c.h.b16 %v6928
    %v9683 = vunpack.c.l.b16 %v6929
    %v9684 = vunpack.c.h.b16 %v6929
    %v9685 = vunpack.c.l.b16 %v6930
    %v9686 = vunpack.c.h.b16 %v6930
    %v9687 = vunpack.c.l.b16 %v6931
    %v9688 = vunpack.c.h.b16 %v6931
    %v9689 = vunpack.c.l.b16 %v6932
    %v9690 = vunpack.c.h.b16 %v6932
    %v9691 = vunpack.c.l.b16 %v6933
    %v9692 = vunpack.c.h.b16 %v6933
    %v9693 = vunpack.c.l.b16 %v6934
    %v9694 = vunpack.c.h.b16 %v6934
    %v9695 = vunpack.c.l.b16 %v6935
    %v9696 = vunpack.c.h.b16 %v6935
    %v9697 = vunpack.c.l.b16 %v6936
    %v9698 = vunpack.c.h.b16 %v6936
    %v9699 = vunpack.c.l.b16 %v6937
    %v9700 = vunpack.c.h.b16 %v6937
    %v9701 = vunpack.c.l.b16 %v6938
    %v9702 = vunpack.c.h.b16 %v6938
    %v9703 = vunpack.c.l.b16 %v6939
    %v9704 = vunpack.c.h.b16 %v6939
    %v9705 = vunpack.c.l.b16 %v6940
    %v9706 = vunpack.c.h.b16 %v6940
    %v9707 = vunpack.c.l.b16 %v6941
    %v9708 = vunpack.c.h.b16 %v6941
    %v9709 = vunpack.c.l.b16 %v6942
    %v9710 = vunpack.c.h.b16 %v6942
    %v9711 = vunpack.c.l.b16 %v6943
    %v9712 = vunpack.c.h.b16 %v6943
    %v9713 = vunpack.c.l.b16 %v6944
    %v9714 = vunpack.c.h.b16 %v6944
    %v9715 = vunpack.c.l.b16 %v6945
    %v9716 = vunpack.c.h.b16 %v6945
    %v9717 = vunpack.c.l.b16 %v6946
    %v9718 = vunpack.c.h.b16 %v6946
    %v9719 = vunpack.c.l.b16 %v6947
    %v9720 = vunpack.c.h.b16 %v6947
    %v9721 = vunpack.c.l.b16 %v6948
    %v9722 = vunpack.c.h.b16 %v6948
    %v9723 = vunpack.c.l.b16 %v6949
    %v9724 = vunpack.c.h.b16 %v6949
    %v9725 = vunpack.c.l.b16 %v6950
    %v9726 = vunpack.c.h.b16 %v6950
    %v9727 = vunpack.c.l.b16 %v6951
    %v9728 = vunpack.c.h.b16 %v6951
    %v9729 = vunpack.c.l.b16 %v6952
    %v9730 = vunpack.c.h.b16 %v6952
    %v9731 = vunpack.c.l.b16 %v6953
    %v9732 = vunpack.c.h.b16 %v6953
    %v9733 = vunpack.c.l.b16 %v6954
    %v9734 = vunpack.c.h.b16 %v6954
    %v9735 = vunpack.c.l.b16 %v6955
    %v9736 = vunpack.c.h.b16 %v6955
    %v9737 = vunpack.c.l.b16 %v6956
    %v9738 = vunpack.c.h.b16 %v6956
    %v9739 = vunpack.c.l.b16 %v6957
    %v9740 = vunpack.c.h.b16 %v6957
    %v9741 = vunpack.c.l.b16 %v6958
    %v9742 = vunpack.c.h.b16 %v6958
    %v9743 = vunpack.c.l.b16 %v6959
    %v9744 = vunpack.c.h.b16 %v6959
    %v9745 = vunpack.c.l.b16 %v6960
    %v9746 = vunpack.c.h.b16 %v6960
    %v9747 = vunpack.c.l.b16 %v6961
    %v9748 = vunpack.c.h.b16 %v6961
    %v9749 = vunpack.c.l.b16 %v6962
    %v9750 = vunpack.c.h.b16 %v6962
    %v9751 = vunpack.c.l.b16 %v6963
    %v9752 = vunpack.c.h.b16 %v6963
    %v9753 = vunpack.c.l.b16 %v6964
    %v9754 = vunpack.c.h.b16 %v6964
    %v9755 = vunpack.c.l.b16 %v6965
    %v9756 = vunpack.c.h.b16 %v6965
    %v9757 = vunpack.c.l.b16 %v6966
    %v9758 = vunpack.c.h.b16 %v6966
    %v9759 = vunpack.c.l.b16 %v6967
    %v9760 = vunpack.c.h.b16 %v6967
    %v9761 = vunpack.c.l.b16 %v6968
    %v9762 = vunpack.c.h.b16 %v6968
    %v9763 = vunpack.c.l.b16 %v6969
    %v9764 = vunpack.c.h.b16 %v6969
    %v9765 = vunpack.c.l.b16 %v6970
    %v9766 = vunpack.c.h.b16 %v6970
    %v9767 = vunpack.c.l.b16 %v6971
    %v9768 = vunpack.c.h.b16 %v6971
    %v9769 = vunpack.c.l.b16 %v6972
    %v9770 = vunpack.c.h.b16 %v6972
    %v9771 = vunpack.c.l.b16 %v6973
    %v9772 = vunpack.c.h.b16 %v6973
    %v9773 = vunpack.c.l.b16 %v6974
    %v9774 = vunpack.c.h.b16 %v6974
    %v9775 = vunpack.c.l.b16 %v6975
    %v9776 = vunpack.c.h.b16 %v6975
    %v9777 = vunpack.c.l.b16 %v6976
    %v9778 = vunpack.c.h.b16 %v6976
    %v9779 = vunpack.c.l.b16 %v6977
    %v9780 = vunpack.c.h.b16 %v6977
    %v9781 = vunpack.c.l.b16 %v6978
    %v9782 = vunpack.c.h.b16 %v6978
    %v9783 = vunpack.c.l.b16 %v6979
    %v9784 = vunpack.c.h.b16 %v6979
    %v9785 = vunpack.c.l.b16 %v6980
    %v9786 = vunpack.c.h.b16 %v6980
    %v9787 = vunpack.c.l.b16 %v6981
    %v9788 = vunpack.c.h.b16 %v6981
    %v9789 = vunpack.c.l.b16 %v6982
    %v9790 = vunpack.c.h.b16 %v6982
    %v9791 = vunpack.c.l.b16 %v6983
    %v9792 = vunpack.c.h.b16 %v6983
    %v9793 = vunpack.c.l.b16 %v6984
    %v9794 = vunpack.c.h.b16 %v6984
    %v9795 = vunpack.c.l.b16 %v6985
    %v9796 = vunpack.c.h.b16 %v6985
    %v9797 = vunpack.c.l.b16 %v6986
    %v9798 = vunpack.c.h.b16 %v6986
    %v9799 = vunpack.c.l.b16 %v6987
    %v9800 = vunpack.c.h.b16 %v6987
    %v9801 = vunpack.c.l.b16 %v6988
    %v9802 = vunpack.c.h.b16 %v6988
    %v9803 = vunpack.c.l.b16 %v6989
    %v9804 = vunpack.c.h.b16 %v6989
    %v9805 = vunpack.c.l.b16 %v6990
    %v9806 = vunpack.c.h.b16 %v6990
    %v9807 = vunpack.c.l.b16 %v6991
    %v9808 = vunpack.c.h.b16 %v6991
    %v9809 = vunpack.c.l.b16 %v6992
    %v9810 = vunpack.c.h.b16 %v6992
    %v9811 = vunpack.c.l.b16 %v6993
    %v9812 = vunpack.c.h.b16 %v6993
    %v9813 = vunpack.c.l.b16 %v6994
    %v9814 = vunpack.c.h.b16 %v6994
    %v9815 = vunpack.c.l.b16 %v6995
    %v9816 = vunpack.c.h.b16 %v6995
    %v9817 = vunpack.c.l.b16 %v6996
    %v9818 = vunpack.c.h.b16 %v6996
    %v9819 = vunpack.c.l.b16 %v6997
    %v9820 = vunpack.c.h.b16 %v6997
    %v9821 = vunpack.c.l.b16 %v6998
    %v9822 = vunpack.c.h.b16 %v6998
    %v9823 = vunpack.c.l.b16 %v6999
    %v9824 = vunpack.c.h.b16 %v6999
    %v9825 = vunpack.c.l.b16 %v7000
    %v9826 = vunpack.c.h.b16 %v7000
    %v9827 = vunpack.c.l.b16 %v7001
    %v9828 = vunpack.c.h.b16 %v7001
    %v9829 = vunpack.c.l.b16 %v7002
    %v9830 = vunpack.c.h.b16 %v7002
    %v9831 = vunpack.c.l.b16 %v7003
    %v9832 = vunpack.c.h.b16 %v7003
    %v9833 = vunpack.c.l.b16 %v7004
    %v9834 = vunpack.c.h.b16 %v7004
    %v9835 = vunpack.c.l.b16 %v7005
    %v9836 = vunpack.c.h.b16 %v7005
    %v9837 = vunpack.c.l.b16 %v7006
    %v9838 = vunpack.c.h.b16 %v7006
    %v9839 = vunpack.c.l.b16 %v7007
    %v9840 = vunpack.c.h.b16 %v7007
    %v9841 = vunpack.c.l.b16 %v7008
    %v9842 = vunpack.c.h.b16 %v7008
    %v9843 = vunpack.c.l.b16 %v7009
    %v9844 = vunpack.c.h.b16 %v7009
    %v9845 = vunpack.c.l.b16 %v7010
    %v9846 = vunpack.c.h.b16 %v7010
    %v9847 = vunpack.c.l.b16 %v7011
    %v9848 = vunpack.c.h.b16 %v7011
    %v9849 = vunpack.c.l.b16 %v7012
    %v9850 = vunpack.c.h.b16 %v7012
    %v9851 = vunpack.c.l.b16 %v7013
    %v9852 = vunpack.c.h.b16 %v7013
    %v9853 = vunpack.c.l.b16 %v7014
    %v9854 = vunpack.c.h.b16 %v7014
    %v9855 = vunpack.c.l.b16 %v7015
    %v9856 = vunpack.c.h.b16 %v7015
    %v9857 = vunpack.c.l.b16 %v7016
    %v9858 = vunpack.c.h.b16 %v7016
    %v9859 = vunpack.c.l.b16 %v7017
    %v9860 = vunpack.c.h.b16 %v7017
    %v9861 = vunpack.c.l.b16 %v7018
    %v9862 = vunpack.c.h.b16 %v7018
    %v9863 = vunpack.c.l.b16 %v7019
    %v9864 = vunpack.c.h.b16 %v7019
    %v9865 = vunpack.c.l.b16 %v7020
    %v9866 = vunpack.c.h.b16 %v7020
    %v9867 = vunpack.c.l.b16 %v7021
    %v9868 = vunpack.c.h.b16 %v7021
    %v9869 = vunpack.c.l.b16 %v7022
    %v9870 = vunpack.c.h.b16 %v7022
    %v9871 = vunpack.c.l.b16 %v7023
    %v9872 = vunpack.c.h.b16 %v7023
    %v9873 = vunpack.c.l.b16 %v7024
    %v9874 = vunpack.c.h.b16 %v7024
    %v9875 = vunpack.c.l.b16 %v7025
    %v9876 = vunpack.c.h.b16 %v7025
    %v9877 = vunpack.c.l.b16 %v7026
    %v9878 = vunpack.c.h.b16 %v7026
    %v9879 = vunpack.c.l.b16 %v7027
    %v9880 = vunpack.c.h.b16 %v7027
    %v9881 = vunpack.c.l.b16 %v7028
    %v9882 = vunpack.c.h.b16 %v7028
    %v9883 = vunpack.c.l.b16 %v7029
    %v9884 = vunpack.c.h.b16 %v7029
    %v9885 = vunpack.c.l.b16 %v7030
    %v9886 = vunpack.c.h.b16 %v7030
    %v9887 = vunpack.c.l.b16 %v7031
    %v9888 = vunpack.c.h.b16 %v7031
    %v9889 = vunpack.c.l.b16 %v7032
    %v9890 = vunpack.c.h.b16 %v7032
    %v9891 = vunpack.c.l.b16 %v7033
    %v9892 = vunpack.c.h.b16 %v7033
    %v9893 = vunpack.c.l.b16 %v7034
    %v9894 = vunpack.c.h.b16 %v7034
    %v9895 = vunpack.c.l.b16 %v7035
    %v9896 = vunpack.c.h.b16 %v7035
    %v9897 = vunpack.c.l.b16 %v7036
    %v9898 = vunpack.c.h.b16 %v7036
    %v9899 = vunpack.c.l.b16 %v7037
    %v9900 = vunpack.c.h.b16 %v7037
    %v9901 = vunpack.c.l.b16 %v7038
    %v9902 = vunpack.c.h.b16 %v7038
    %v9903 = vunpack.c.l.b16 %v7039
    %v9904 = vunpack.c.h.b16 %v7039
    %v9905 = vunpack.c.l.b16 %v7040
    %v9906 = vunpack.c.h.b16 %v7040
    %v9907 = vunpack.c.l.b16 %v7041
    %v9908 = vunpack.c.h.b16 %v7041
    %v9909 = vunpack.c.l.b16 %v7042
    %v9910 = vunpack.c.h.b16 %v7042
    %v9911 = vunpack.c.l.b16 %v7043
    %v9912 = vunpack.c.h.b16 %v7043
    %v9913 = vunpack.c.l.b16 %v7044
    %v9914 = vunpack.c.h.b16 %v7044
    %v9915 = vunpack.c.l.b16 %v7045
    %v9916 = vunpack.c.h.b16 %v7045
    %v9917 = vunpack.c.l.b16 %v7046
    %v9918 = vunpack.c.h.b16 %v7046
    %v9919 = vunpack.c.l.b16 %v7047
    %v9920 = vunpack.c.h.b16 %v7047
    %v9921 = vunpack.c.l.b16 %v7048
    %v9922 = vunpack.c.h.b16 %v7048
    %v9923 = vunpack.c.l.b16 %v7049
    %v9924 = vunpack.c.h.b16 %v7049
    %v9925 = vunpack.c.l.b16 %v7050
    %v9926 = vunpack.c.h.b16 %v7050
    %v9927 = vunpack.c.l.b16 %v7051
    %v9928 = vunpack.c.h.b16 %v7051
    %v9929 = vunpack.c.l.b16 %v7052
    %v9930 = vunpack.c.h.b16 %v7052
    %v9931 = vunpack.c.l.b16 %v7053
    %v9932 = vunpack.c.h.b16 %v7053
    %v9933 = vunpack.c.l.b16 %v7054
    %v9934 = vunpack.c.h.b16 %v7054
    %v9935 = vunpack.c.l.b16 %v7055
    %v9936 = vunpack.c.h.b16 %v7055
    %v9937 = vunpack.c.l.b16 %v7056
    %v9938 = vunpack.c.h.b16 %v7056
    %v9939 = vunpack.c.l.b16 %v7057
    %v9940 = vunpack.c.h.b16 %v7057
    %v9941 = vunpack.c.l.b16 %v7058
    %v9942 = vunpack.c.h.b16 %v7058
    %v9943 = vunpack.c.l.b16 %v7059
    %v9944 = vunpack.c.h.b16 %v7059
    %v9945 = vunpack.c.l.b16 %v7060
    %v9946 = vunpack.c.h.b16 %v7060
    %v9947 = vunpack.c.l.b16 %v7061
    %v9948 = vunpack.c.h.b16 %v7061
    %v9949 = vunpack.c.l.b16 %v7062
    %v9950 = vunpack.c.h.b16 %v7062
    %v9951 = vunpack.c.l.b16 %v7063
    %v9952 = vunpack.c.h.b16 %v7063
    %v9953 = vunpack.c.l.b16 %v7064
    %v9954 = vunpack.c.h.b16 %v7064
    %v9955 = vunpack.c.l.b16 %v7065
    %v9956 = vunpack.c.h.b16 %v7065
    %v9957 = vunpack.c.l.b16 %v7066
    %v9958 = vunpack.c.h.b16 %v7066
    %v9959 = vunpack.c.l.b16 %v7067
    %v9960 = vunpack.c.h.b16 %v7067
    %v9961 = vunpack.c.l.b16 %v7068
    %v9962 = vunpack.c.h.b16 %v7068
    %v9963 = vunpack.c.l.b16 %v7069
    %v9964 = vunpack.c.h.b16 %v7069
    %v9965 = vunpack.c.l.b16 %v7070
    %v9966 = vunpack.c.h.b16 %v7070
    %v9967 = vunpack.c.l.b16 %v7071
    %v9968 = vunpack.c.h.b16 %v7071
    %v9969 = vunpack.c.l.b16 %v7072
    %v9970 = vunpack.c.h.b16 %v7072
    %v9971 = vunpack.c.l.b16 %v7073
    %v9972 = vunpack.c.h.b16 %v7073
    %v9973 = vunpack.c.l.b16 %v7074
    %v9974 = vunpack.c.h.b16 %v7074
    %v9975 = vunpack.c.l.b16 %v7075
    %v9976 = vunpack.c.h.b16 %v7075
    %v9977 = vunpack.c.l.b16 %v7076
    %v9978 = vunpack.c.h.b16 %v7076
    %v9979 = vunpack.c.l.b16 %v7077
    %v9980 = vunpack.c.h.b16 %v7077
    %v9981 = vunpack.c.l.b16 %v7078
    %v9982 = vunpack.c.h.b16 %v7078
    %v9983 = vunpack.c.l.b16 %v7079
    %v9984 = vunpack.c.h.b16 %v7079
    %v9985 = vunpack.c.l.b16 %v7080
    %v9986 = vunpack.c.h.b16 %v7080
    %v9987 = vunpack.c.l.b16 %v7081
    %v9988 = vunpack.c.h.b16 %v7081
    %v9989 = vunpack.c.l.b16 %v7082
    %v9990 = vunpack.c.h.b16 %v7082
    %v9991 = vunpack.c.l.b16 %v7083
    %v9992 = vunpack.c.h.b16 %v7083
    %v9993 = vunpack.c.l.b16 %v7084
    %v9994 = vunpack.c.h.b16 %v7084
    %v9995 = vunpack.c.l.b16 %v7085
    %v9996 = vunpack.c.h.b16 %v7085
    %v9997 = vunpack.c.l.b16 %v7086
    %v9998 = vunpack.c.h.b16 %v7086
    %v9999 = vunpack.c.l.b16 %v7087
    %v10000 = vunpack.c.h.b16 %v7087
    %v10001 = vunpack.c.l.b16 %v7088
    %v10002 = vunpack.c.h.b16 %v7088
    %v10003 = vunpack.c.l.b16 %v7089
    %v10004 = vunpack.c.h.b16 %v7089
    %v10005 = vunpack.c.l.b16 %v7090
    %v10006 = vunpack.c.h.b16 %v7090
    %v10007 = vunpack.c.l.b16 %v7091
    %v10008 = vunpack.c.h.b16 %v7091
    %v10009 = vunpack.c.l.b16 %v7092
    %v10010 = vunpack.c.h.b16 %v7092
    %v10011 = vunpack.c.l.b16 %v7093
    %v10012 = vunpack.c.h.b16 %v7093
    %v10013 = vunpack.c.l.b16 %v7094
    %v10014 = vunpack.c.h.b16 %v7094
    %v10015 = vunpack.c.l.b16 %v7095
    %v10016 = vunpack.c.h.b16 %v7095
    %v10017 = vunpack.c.l.b16 %v7096
    %v10018 = vunpack.c.h.b16 %v7096
    %v10019 = vunpack.c.l.b16 %v7097
    %v10020 = vunpack.c.h.b16 %v7097
    %v10021 = vunpack.c.l.b16 %v7098
    %v10022 = vunpack.c.h.b16 %v7098
    %v10023 = vunpack.c.l.b16 %v7099
    %v10024 = vunpack.c.h.b16 %v7099
    %v10025 = vunpack.c.l.b16 %v7100
    %v10026 = vunpack.c.h.b16 %v7100
    %v10027 = vunpack.c.l.b16 %v7101
    %v10028 = vunpack.c.h.b16 %v7101
    %v10029 = vunpack.c.l.b16 %v7102
    %v10030 = vunpack.c.h.b16 %v7102
    %v10031 = vunpack.c.l.b16 %v7103
    %v10032 = vunpack.c.h.b16 %v7103
    %v10033 = vunpack.c.l.b16 %v7104
    %v10034 = vunpack.c.h.b16 %v7104
    %v10035 = vunpack.c.l.b16 %v7105
    %v10036 = vunpack.c.h.b16 %v7105
    %v10037 = vunpack.c.l.b16 %v7106
    %v10038 = vunpack.c.h.b16 %v7106
    %v10039 = vunpack.c.l.b16 %v7107
    %v10040 = vunpack.c.h.b16 %v7107
    %v10041 = vunpack.c.l.b16 %v7108
    %v10042 = vunpack.c.h.b16 %v7108
    %v10043 = vunpack.c.l.b16 %v7109
    %v10044 = vunpack.c.h.b16 %v7109
    %v10045 = vunpack.c.l.b16 %v7110
    %v10046 = vunpack.c.h.b16 %v7110
    %v10047 = vunpack.c.l.b16 %v7111
    %v10048 = vunpack.c.h.b16 %v7111
    %v10049 = vunpack.c.l.b16 %v7112
    %v10050 = vunpack.c.h.b16 %v7112
    %v10051 = vunpack.c.l.b16 %v7113
    %v10052 = vunpack.c.h.b16 %v7113
    %v10053 = vunpack.c.l.b16 %v7114
    %v10054 = vunpack.c.h.b16 %v7114
    %v10055 = vunpack.c.l.b16 %v7115
    %v10056 = vunpack.c.h.b16 %v7115
    %v10057 = vunpack.c.l.b16 %v7116
    %v10058 = vunpack.c.h.b16 %v7116
    %v10059 = vunpack.c.l.b16 %v7117
    %v10060 = vunpack.c.h.b16 %v7117
    %v10061 = vunpack.c.l.b16 %v7118
    %v10062 = vunpack.c.h.b16 %v7118
    %v10063 = vunpack.c.l.b16 %v7119
    %v10064 = vunpack.c.h.b16 %v7119
    %v10065 = vunpack.c.l.b16 %v7120
    %v10066 = vunpack.c.h.b16 %v7120
    %v10067 = vunpack.c.l.b16 %v7121
    %v10068 = vunpack.c.h.b16 %v7121
    %v10069 = vunpack.c.l.b16 %v7122
    %v10070 = vunpack.c.h.b16 %v7122
    %v10071 = vunpack.c.l.b16 %v7123
    %v10072 = vunpack.c.h.b16 %v7123
    %v10073 = vunpack.c.l.b16 %v7124
    %v10074 = vunpack.c.h.b16 %v7124
    %v10075 = vunpack.c.l.b16 %v7125
    %v10076 = vunpack.c.h.b16 %v7125
    %v10077 = vunpack.c.l.b16 %v7126
    %v10078 = vunpack.c.h.b16 %v7126
    %v10079 = vunpack.c.l.b16 %v7127
    %v10080 = vunpack.c.h.b16 %v7127
    %v10081 = vunpack.c.l.b16 %v7128
    %v10082 = vunpack.c.h.b16 %v7128
    %v10083 = vunpack.c.l.b16 %v7129
    %v10084 = vunpack.c.h.b16 %v7129
    %v10085 = vunpack.c.l.b16 %v7130
    %v10086 = vunpack.c.h.b16 %v7130
    %v10087 = vunpack.c.l.b16 %v7131
    %v10088 = vunpack.c.h.b16 %v7131
    %v10089 = vunpack.c.l.b16 %v7132
    %v10090 = vunpack.c.h.b16 %v7132
    %v10091 = vunpack.c.l.b16 %v7133
    %v10092 = vunpack.c.h.b16 %v7133
    %v10093 = vunpack.c.l.b16 %v7134
    %v10094 = vunpack.c.h.b16 %v7134
    %v10095 = vunpack.c.l.b16 %v7135
    %v10096 = vunpack.c.h.b16 %v7135
    %v10097 = vunpack.c.l.b16 %v7136
    %v10098 = vunpack.c.h.b16 %v7136
    %v10099 = vunpack.c.l.b16 %v7137
    %v10100 = vunpack.c.h.b16 %v7137
    %v10101 = vunpack.c.l.b16 %v7138
    %v10102 = vunpack.c.h.b16 %v7138
    %v10103 = vunpack.c.l.b16 %v7139
    %v10104 = vunpack.c.h.b16 %v7139
    %v10105 = vunpack.c.l.b16 %v7140
    %v10106 = vunpack.c.h.b16 %v7140
    %v10107 = vunpack.c.l.b16 %v7141
    %v10108 = vunpack.c.h.b16 %v7141
    %v10109 = vunpack.c.l.b16 %v7142
    %v10110 = vunpack.c.h.b16 %v7142
    %v10111 = vunpack.c.l.b16 %v7143
    %v10112 = vunpack.c.h.b16 %v7143
    %v10113 = vunpack.c.l.b16 %v7144
    %v10114 = vunpack.c.h.b16 %v7144
    %v10115 = vunpack.c.l.b16 %v7145
    %v10116 = vunpack.c.h.b16 %v7145
    %v10117 = vunpack.c.l.b16 %v7146
    %v10118 = vunpack.c.h.b16 %v7146
    %v10119 = vunpack.c.l.b16 %v7147
    %v10120 = vunpack.c.h.b16 %v7147
    %v10121 = vunpack.c.l.b16 %v7148
    %v10122 = vunpack.c.h.b16 %v7148
    %v10123 = vunpack.c.l.b16 %v7149
    %v10124 = vunpack.c.h.b16 %v7149
    %v10125 = vunpack.c.l.b16 %v7150
    %v10126 = vunpack.c.h.b16 %v7150
    %v10127 = vunpack.c.l.b16 %v7151
    %v10128 = vunpack.c.h.b16 %v7151
    %v10129 = vunpack.c.l.b16 %v7152
    %v10130 = vunpack.c.h.b16 %v7152
    %v10131 = vunpack.c.l.b16 %v7153
    %v10132 = vunpack.c.h.b16 %v7153
    %v10133 = vunpack.c.l.b16 %v7154
    %v10134 = vunpack.c.h.b16 %v7154
    %v10135 = vunpack.c.l.b16 %v7155
    %v10136 = vunpack.c.h.b16 %v7155
    %v10137 = vunpack.c.l.b16 %v7156
    %v10138 = vunpack.c.h.b16 %v7156
    %v10139 = vunpack.c.l.b16 %v7157
    %v10140 = vunpack.c.h.b16 %v7157
    %v10141 = vunpack.c.l.b16 %v7158
    %v10142 = vunpack.c.h.b16 %v7158
    %v10143 = vunpack.c.l.b16 %v7159
    %v10144 = vunpack.c.h.b16 %v7159
    %v10145 = vunpack.c.l.b16 %v7160
    %v10146 = vunpack.c.h.b16 %v7160
    %v10147 = vunpack.c.l.b16 %v7161
    %v10148 = vunpack.c.h.b16 %v7161
    %v10149 = vunpack.c.l.b16 %v7162
    %v10150 = vunpack.c.h.b16 %v7162
    %v10151 = vunpack.c.l.b16 %v7163
    %v10152 = vunpack.c.h.b16 %v7163
    %v10153 = vunpack.c.l.b16 %v7164
    %v10154 = vunpack.c.h.b16 %v7164
    %v10155 = vunpack.c.l.b16 %v7165
    %v10156 = vunpack.c.h.b16 %v7165
    %v10157 = vunpack.c.l.b16 %v7166
    %v10158 = vunpack.c.h.b16 %v7166
    %v10159 = vunpack.c.l.b16 %v7167
    %v10160 = vunpack.c.h.b16 %v7167
    %v10161 = vunpack.c.l.b16 %v7168
    %v10162 = vunpack.c.h.b16 %v7168
    %v10163 = vunpack.c.l.b16 %v7169
    %v10164 = vunpack.c.h.b16 %v7169
    %v10165 = vunpack.c.l.b16 %v7170
    %v10166 = vunpack.c.h.b16 %v7170
    %v10167 = vunpack.c.l.b16 %v7171
    %v10168 = vunpack.c.h.b16 %v7171
    %v10169 = vunpack.c.l.b16 %v7172
    %v10170 = vunpack.c.h.b16 %v7172
    %v10171 = vunpack.c.l.b16 %v7173
    %v10172 = vunpack.c.h.b16 %v7173
    %v10173 = vunpack.c.l.b16 %v7174
    %v10174 = vunpack.c.h.b16 %v7174
    %v10175 = vunpack.c.l.b16 %v7175
    %v10176 = vunpack.c.h.b16 %v7175
    %v10177 = vunpack.c.l.b16 %v7176
    %v10178 = vunpack.c.h.b16 %v7176
    %v10179 = vunpack.c.l.b16 %v7177
    %v10180 = vunpack.c.h.b16 %v7177
    %v10181 = vunpack.c.l.b16 %v7178
    %v10182 = vunpack.c.h.b16 %v7178
    %v10183 = vunpack.c.l.b16 %v7179
    %v10184 = vunpack.c.h.b16 %v7179
    %v10185 = vunpack.c.l.b16 %v7180
    %v10186 = vunpack.c.h.b16 %v7180
    %v10187 = vunpack.c.l.b16 %v7181
    %v10188 = vunpack.c.h.b16 %v7181
    %v10189 = vunpack.c.l.b16 %v7182
    %v10190 = vunpack.c.h.b16 %v7182
    %v10191 = vunpack.c.l.b16 %v7183
    %v10192 = vunpack.c.h.b16 %v7183
    %v10193 = vunpack.c.l.b16 %v7184
    %v10194 = vunpack.c.h.b16 %v7184
    %v10195 = vunpack.c.l.b16 %v7185
    %v10196 = vunpack.c.h.b16 %v7185
    %v10197 = vunpack.c.l.b16 %v7186
    %v10198 = vunpack.c.h.b16 %v7186
    %v10199 = vunpack.c.l.b16 %v7187
    %v10200 = vunpack.c.h.b16 %v7187
    %v10201 = vunpack.c.l.b16 %v7188
    %v10202 = vunpack.c.h.b16 %v7188
    %v10203 = vunpack.c.l.b16 %v7189
    %v10204 = vunpack.c.h.b16 %v7189
    %v10205 = vunpack.c.l.b16 %v7190
    %v10206 = vunpack.c.h.b16 %v7190
    %v10207 = vunpack.c.l.b16 %v7191
    %v10208 = vunpack.c.h.b16 %v7191
    %v10209 = vunpack.c.l.b16 %v7192
    %v10210 = vunpack.c.h.b16 %v7192
    %v10211 = vunpack.c.l.b16 %v7193
    %v10212 = vunpack.c.h.b16 %v7193
    %v10213 = vunpack.c.l.b16 %v7194
    %v10214 = vunpack.c.h.b16 %v7194
    %v10215 = vunpack.c.l.b16 %v7195
    %v10216 = vunpack.c.h.b16 %v7195
    %v10217 = vunpack.c.l.b16 %v7196
    %v10218 = vunpack.c.h.b16 %v7196
    %v10219 = vunpack.c.l.b16 %v7197
    %v10220 = vunpack.c.h.b16 %v7197
    %v10221 = vunpack.c.l.b16 %v7198
    %v10222 = vunpack.c.h.b16 %v7198
    %v10223 = vunpack.c.l.b16 %v7199
    %v10224 = vunpack.c.h.b16 %v7199
    %v10225 = vunpack.c.l.b16 %v7200
    %v10226 = vunpack.c.h.b16 %v7200
    %v10227 = vunpack.c.l.b16 %v7201
    %v10228 = vunpack.c.h.b16 %v7201
    %v10229 = vunpack.c.l.b16 %v7202
    %v10230 = vunpack.c.h.b16 %v7202
    %v10231 = vunpack.c.l.b16 %v7203
    %v10232 = vunpack.c.h.b16 %v7203
    %v10233 = vunpack.c.l.b16 %v7204
    %v10234 = vunpack.c.h.b16 %v7204
    %v10235 = vunpack.c.l.b16 %v7205
    %v10236 = vunpack.c.h.b16 %v7205
    %v10237 = vunpack.c.l.b16 %v7206
    %v10238 = vunpack.c.h.b16 %v7206
    %v10239 = vunpack.c.l.b16 %v7207
    %v10240 = vunpack.c.h.b16 %v7207
    %v10241 = vunpack.c.l.b16 %v7208
    %v10242 = vunpack.c.h.b16 %v7208
    %v10243 = vunpack.c.l.b16 %v7209
    %v10244 = vunpack.c.h.b16 %v7209
    %v10245 = vunpack.c.l.b16 %v7210
    %v10246 = vunpack.c.h.b16 %v7210
    %v10247 = vunpack.c.l.b16 %v7211
    %v10248 = vunpack.c.h.b16 %v7211
    %v10249 = vunpack.c.l.b16 %v7212
    %v10250 = vunpack.c.h.b16 %v7212
    %v10251 = vunpack.c.l.b16 %v7213
    %v10252 = vunpack.c.h.b16 %v7213
    %v10253 = vunpack.c.l.b16 %v7214
    %v10254 = vunpack.c.h.b16 %v7214
    %v10255 = vunpack.c.l.b16 %v7215
    %v10256 = vunpack.c.h.b16 %v7215
    %v10257 = vunpack.c.l.b16 %v7216
    %v10258 = vunpack.c.h.b16 %v7216
    %v10259 = vunpack.c.l.b16 %v7217
    %v10260 = vunpack.c.h.b16 %v7217
    %v10261 = vunpack.c.l.b16 %v7218
    %v10262 = vunpack.c.h.b16 %v7218
    %v10263 = vunpack.c.l.b16 %v7219
    %v10264 = vunpack.c.h.b16 %v7219
    %v10265 = vunpack.c.l.b16 %v7220
    %v10266 = vunpack.c.h.b16 %v7220
    %v10267 = vunpack.c.l.b16 %v7221
    %v10268 = vunpack.c.h.b16 %v7221
    %v10269 = vunpack.c.l.b16 %v7222
    %v10270 = vunpack.c.h.b16 %v7222
    %v10271 = vunpack.c.l.b16 %v7223
    %v10272 = vunpack.c.h.b16 %v7223
    %v10273 = vunpack.c.l.b16 %v7224
    %v10274 = vunpack.c.h.b16 %v7224
    %v10275 = vunpack.c.l.b16 %v7225
    %v10276 = vunpack.c.h.b16 %v7225
    %v10277 = vunpack.c.l.b16 %v7226
    %v10278 = vunpack.c.h.b16 %v7226
    %v10279 = vunpack.c.l.b16 %v7227
    %v10280 = vunpack.c.h.b16 %v7227
    %v10281 = vunpack.c.l.b16 %v7228
    %v10282 = vunpack.c.h.b16 %v7228
    %v10283 = vunpack.c.l.b16 %v7229
    %v10284 = vunpack.c.h.b16 %v7229
    %v10285 = vunpack.c.l.b16 %v7230
    %v10286 = vunpack.c.h.b16 %v7230
    %v10287 = vunpack.c.l.b16 %v7231
    %v10288 = vunpack.c.h.b16 %v7231
    %v10289 = vunpack.c.l.b16 %v7232
    %v10290 = vunpack.c.h.b16 %v7232
    %v10291 = vunpack.c.l.b16 %v7233
    %v10292 = vunpack.c.h.b16 %v7233
    %v10293 = vunpack.c.l.b16 %v7234
    %v10294 = vunpack.c.h.b16 %v7234
    %v10295 = vunpack.c.l.b16 %v7235
    %v10296 = vunpack.c.h.b16 %v7235
    %v10297 = vunpack.c.l.b16 %v7236
    %v10298 = vunpack.c.h.b16 %v7236
    %v10299 = vunpack.c.l.b16 %v7237
    %v10300 = vunpack.c.h.b16 %v7237
    %v10301 = vunpack.c.l.b16 %v7238
    %v10302 = vunpack.c.h.b16 %v7238
    %v10303 = vunpack.c.l.b16 %v7239
    %v10304 = vunpack.c.h.b16 %v7239
    %v10305 = vunpack.c.l.b16 %v7240
    %v10306 = vunpack.c.h.b16 %v7240
    %v10307 = vunpack.c.l.b16 %v7241
    %v10308 = vunpack.c.h.b16 %v7241
    %v10309 = vunpack.c.l.b16 %v7242
    %v10310 = vunpack.c.h.b16 %v7242
    %v10311 = vunpack.c.l.b16 %v7243
    %v10312 = vunpack.c.h.b16 %v7243
    %v10313 = vunpack.c.l.b16 %v7244
    %v10314 = vunpack.c.h.b16 %v7244
    %v10315 = vunpack.c.l.b16 %v7245
    %v10316 = vunpack.c.h.b16 %v7245
    %v10317 = vunpack.c.l.b16 %v7246
    %v10318 = vunpack.c.h.b16 %v7246
    %v10319 = vunpack.c.l.b16 %v7247
    %v10320 = vunpack.c.h.b16 %v7247
    %v10321 = vunpack.c.l.b16 %v7248
    %v10322 = vunpack.c.h.b16 %v7248
    %v10323 = vunpack.c.l.b16 %v7249
    %v10324 = vunpack.c.h.b16 %v7249
    %v10325 = vunpack.c.l.b16 %v7250
    %v10326 = vunpack.c.h.b16 %v7250
    %v10327 = vunpack.c.l.b16 %v7251
    %v10328 = vunpack.c.h.b16 %v7251
    %v10329 = vunpack.c.l.b16 %v7252
    %v10330 = vunpack.c.h.b16 %v7252
    %v10331 = vunpack.c.l.b16 %v7253
    %v10332 = vunpack.c.h.b16 %v7253
    %v10333 = vunpack.c.l.b16 %v7254
    %v10334 = vunpack.c.h.b16 %v7254
    %v10335 = vunpack.c.l.b16 %v7255
    %v10336 = vunpack.c.h.b16 %v7255
    %v10337 = vunpack.c.l.b16 %v7256
    %v10338 = vunpack.c.h.b16 %v7256
    %v10339 = vunpack.c.l.b16 %v7257
    %v10340 = vunpack.c.h.b16 %v7257
    %v10341 = vunpack.c.l.b16 %v7258
    %v10342 = vunpack.c.h.b16 %v7258
    %v10343 = vunpack.c.l.b16 %v7259
    %v10344 = vunpack.c.h.b16 %v7259
    %v10345 = vunpack.c.l.b16 %v7260
    %v10346 = vunpack.c.h.b16 %v7260
    %v10347 = vunpack.c.l.b16 %v7261
    %v10348 = vunpack.c.h.b16 %v7261
    %v10349 = vunpack.c.l.b16 %v7262
    %v10350 = vunpack.c.h.b16 %v7262
    %v10351 = vunpack.c.l.b16 %v7263
    %v10352 = vunpack.c.h.b16 %v7263
    %v10353 = vunpack.c.l.b16 %v7264
    %v10354 = vunpack.c.h.b16 %v7264
    %v10355 = vunpack.c.l.b16 %v7265
    %v10356 = vunpack.c.h.b16 %v7265
    %v10357 = vunpack.c.l.b16 %v7266
    %v10358 = vunpack.c.h.b16 %v7266
    %v10359 = vunpack.c.l.b16 %v7267
    %v10360 = vunpack.c.h.b16 %v7267
    %v10361 = vunpack.c.l.b16 %v7268
    %v10362 = vunpack.c.h.b16 %v7268
    %v10363 = vunpack.c.l.b16 %v7269
    %v10364 = vunpack.c.h.b16 %v7269
    %v10365 = vunpack.c.l.b16 %v7270
    %v10366 = vunpack.c.h.b16 %v7270
    %v10367 = vunpack.c.l.b16 %v7271
    %v10368 = vunpack.c.h.b16 %v7271
    %v10369 = vunpack.c.l.b16 %v7272
    %v10370 = vunpack.c.h.b16 %v7272
    %v10371 = vunpack.c.l.b16 %v7273
    %v10372 = vunpack.c.h.b16 %v7273
    %v10373 = vunpack.c.l.b16 %v7274
    %v10374 = vunpack.c.h.b16 %v7274
    %v10375 = vunpack.c.l.b16 %v7275
    %v10376 = vunpack.c.h.b16 %v7275
    %v10377 = vunpack.c.l.b16 %v7276
    %v10378 = vunpack.c.h.b16 %v7276
    %v10379 = vunpack.c.l.b16 %v7277
    %v10380 = vunpack.c.h.b16 %v7277
    %v10381 = vunpack.c.l.b16 %v7278
    %v10382 = vunpack.c.h.b16 %v7278
    %v10383 = vunpack.c.l.b16 %v7279
    %v10384 = vunpack.c.h.b16 %v7279
    %v10385 = vunpack.c.l.b16 %v7280
    %v10386 = vunpack.c.h.b16 %v7280
    %v10387 = vunpack.c.l.b16 %v7281
    %v10388 = vunpack.c.h.b16 %v7281
    %v10389 = vunpack.c.l.b16 %v7282
    %v10390 = vunpack.c.h.b16 %v7282
    %v10391 = vunpack.c.l.b16 %v7283
    %v10392 = vunpack.c.h.b16 %v7283
    %v10393 = vunpack.c.l.b16 %v7284
    %v10394 = vunpack.c.h.b16 %v7284
    %v10395 = vunpack.c.l.b16 %v7285
    %v10396 = vunpack.c.h.b16 %v7285
    %v10397 = vunpack.c.l.b16 %v7286
    %v10398 = vunpack.c.h.b16 %v7286
    %v10399 = vunpack.c.l.b16 %v7287
    %v10400 = vunpack.c.h.b16 %v7287
    %v10401 = vunpack.c.l.b16 %v7288
    %v10402 = vunpack.c.h.b16 %v7288
    %v10403 = vpack.c.b16 %v8363, %v8355
    %v10404 = vpack.c.b16 %v8364, %v8356
    %v10405 = vpack.c.b16 %v8365, %v8357
    %v10406 = vpack.c.b16 %v8366, %v8358
    %v10407 = vpack.c.b16 %v8367, %v8359
    %v10408 = vpack.c.b16 %v8368, %v8360
    %v10409 = vpack.c.b16 %v8369, %v8361
    %v10410 = vpack.c.b16 %v8370, %v8362
    %v10411 = vpack.c.b16 %v8379, %v8371
    %v10412 = vpack.c.b16 %v8380, %v8372
    %v10413 = vpack.c.b16 %v8381, %v8373
    %v10414 = vpack.c.b16 %v8382, %v8374
    %v10415 = vpack.c.b16 %v8383, %v8375
    %v10416 = vpack.c.b16 %v8384, %v8376
    %v10417 = vpack.c.b16 %v8385, %v8377
    %v10418 = vpack.c.b16 %v8386, %v8378
    %v10419 = vpack.c.b16 %v8395, %v8387
    %v10420 = vpack.c.b16 %v8396, %v8388
    %v10421 = vpack.c.b16 %v8397, %v8389
    %v10422 = vpack.c.b16 %v8398, %v8390
    %v10423 = vpack.c.b16 %v8399, %v8391
    %v10424 = vpack.c.b16 %v8400, %v8392
    %v10425 = vpack.c.b16 %v8401, %v8393
    %v10426 = vpack.c.b16 %v8402, %v8394
    %v10427 = vpack.c.b16 %v8411, %v8403
    %v10428 = vpack.c.b16 %v8412, %v8404
    %v10429 = vpack.c.b16 %v8413, %v8405
    %v10430 = vpack.c.b16 %v8414, %v8406
    %v10431 = vpack.c.b16 %v8415, %v8407
    %v10432 = vpack.c.b16 %v8416, %v8408
    %v10433 = vpack.c.b16 %v8417, %v8409
    %v10434 = vpack.c.b16 %v8418, %v8410
    %v10435 = vpack.c.b16 %v8427, %v8419
    %v10436 = vpack.c.b16 %v8428, %v8420
    %v10437 = vpack.c.b16 %v8429, %v8421
    %v10438 = vpack.c.b16 %v8430, %v8422
    %v10439 = vpack.c.b16 %v8431, %v8423
    %v10440 = vpack.c.b16 %v8432, %v8424
    %v10441 = vpack.c.b16 %v8433, %v8425
    %v10442 = vpack.c.b16 %v8434, %v8426
    %v10443 = vpack.c.b16 %v8443, %v8435
    %v10444 = vpack.c.b16 %v8444, %v8436
    %v10445 = vpack.c.b16 %v8445, %v8437
    %v10446 = vpack.c.b16 %v8446, %v8438
    %v10447 = vpack.c.b16 %v8447, %v8439
    %v10448 = vpack.c.b16 %v8448, %v8440
    %v10449 = vpack.c.b16 %v8449, %v8441
    %v10450 = vpack.c.b16 %v8450, %v8442
    %v10451 = vpack.c.b16 %v8459, %v8451
    %v10452 = vpack.c.b16 %v8460, %v8452
    %v10453 = vpack.c.b16 %v8461, %v8453
    %v10454 = vpack.c.b16 %v8462, %v8454
    %v10455 = vpack.c.b16 %v8463, %v8455
    %v10456 = vpack.c.b16 %v8464, %v8456
    %v10457 = vpack.c.b16 %v8465, %v8457
    %v10458 = vpack.c.b16 %v8466, %v8458
    %v10459 = vpack.c.b16 %v8475, %v8467
    %v10460 = vpack.c.b16 %v8476, %v8468
    %v10461 = vpack.c.b16 %v8477, %v8469
    %v10462 = vpack.c.b16 %v8478, %v8470
    %v10463 = vpack.c.b16 %v8479, %v8471
    %v10464 = vpack.c.b16 %v8480, %v8472
    %v10465 = vpack.c.b16 %v8481, %v8473
    %v10466 = vpack.c.b16 %v8482, %v8474
    %v10467 = vpack.c.b16 %v8491, %v8483
    %v10468 = vpack.c.b16 %v8492, %v8484
    %v10469 = vpack.c.b16 %v8493, %v8485
    %v10470 = vpack.c.b16 %v8494, %v8486
    %v10471 = vpack.c.b16 %v8495, %v8487
    %v10472 = vpack.c.b16 %v8496, %v8488
    %v10473 = vpack.c.b16 %v8497, %v8489
    %v10474 = vpack.c.b16 %v8498, %v8490
    %v10475 = vpack.c.b16 %v8507, %v8499
    %v10476 = vpack.c.b16 %v8508, %v8500
    %v10477 = vpack.c.b16 %v8509, %v8501
    %v10478 = vpack.c.b16 %v8510, %v8502
    %v10479 = vpack.c.b16 %v8511, %v8503
    %v10480 = vpack.c.b16 %v8512, %v8504
    %v10481 = vpack.c.b16 %v8513, %v8505
    %v10482 = vpack.c.b16 %v8514, %v8506
    %v10483 = vpack.c.b16 %v8523, %v8515
    %v10484 = vpack.c.b16 %v8524, %v8516
    %v10485 = vpack.c.b16 %v8525, %v8517
    %v10486 = vpack.c.b16 %v8526, %v8518
    %v10487 = vpack.c.b16 %v8527, %v8519
    %v10488 = vpack.c.b16 %v8528, %v8520
    %v10489 = vpack.c.b16 %v8529, %v8521
    %v10490 = vpack.c.b16 %v8530, %v8522
    %v10491 = vpack.c.b16 %v8539, %v8531
    %v10492 = vpack.c.b16 %v8540, %v8532
    %v10493 = vpack.c.b16 %v8541, %v8533
    %v10494 = vpack.c.b16 %v8542, %v8534
    %v10495 = vpack.c.b16 %v8543, %v8535
    %v10496 = vpack.c.b16 %v8544, %v8536
    %v10497 = vpack.c.b16 %v8545, %v8537
    %v10498 = vpack.c.b16 %v8546, %v8538
    %v10499 = vpack.c.b16 %v8555, %v8547
    %v10500 = vpack.c.b16 %v8556, %v8548
    %v10501 = vpack.c.b16 %v8557, %v8549
    %v10502 = vpack.c.b16 %v8558, %v8550
    %v10503 = vpack.c.b16 %v8559, %v8551
    %v10504 = vpack.c.b16 %v8560, %v8552
    %v10505 = vpack.c.b16 %v8561, %v8553
    %v10506 = vpack.c.b16 %v8562, %v8554
    %v10507 = vpack.c.b16 %v8571, %v8563
    %v10508 = vpack.c.b16 %v8572, %v8564
    %v10509 = vpack.c.b16 %v8573, %v8565
    %v10510 = vpack.c.b16 %v8574, %v8566
    %v10511 = vpack.c.b16 %v8575, %v8567
    %v10512 = vpack.c.b16 %v8576, %v8568
    %v10513 = vpack.c.b16 %v8577, %v8569
    %v10514 = vpack.c.b16 %v8578, %v8570
    %v10515 = vpack.c.b16 %v8587, %v8579
    %v10516 = vpack.c.b16 %v8588, %v8580
    %v10517 = vpack.c.b16 %v8589, %v8581
    %v10518 = vpack.c.b16 %v8590, %v8582
    %v10519 = vpack.c.b16 %v8591, %v8583
    %v10520 = vpack.c.b16 %v8592, %v8584
    %v10521 = vpack.c.b16 %v8593, %v8585
    %v10522 = vpack.c.b16 %v8594, %v8586
    %v10523 = vpack.c.b16 %v8603, %v8595
    %v10524 = vpack.c.b16 %v8604, %v8596
    %v10525 = vpack.c.b16 %v8605, %v8597
    %v10526 = vpack.c.b16 %v8606, %v8598
    %v10527 = vpack.c.b16 %v8607, %v8599
    %v10528 = vpack.c.b16 %v8608, %v8600
    %v10529 = vpack.c.b16 %v8609, %v8601
    %v10530 = vpack.c.b16 %v8610, %v8602
    %v10531 = vpack.c.b16 %v8619, %v8611
    %v10532 = vpack.c.b16 %v8620, %v8612
    %v10533 = vpack.c.b16 %v8621, %v8613
    %v10534 = vpack.c.b16 %v8622, %v8614
    %v10535 = vpack.c.b16 %v8623, %v8615
    %v10536 = vpack.c.b16 %v8624, %v8616
    %v10537 = vpack.c.b16 %v8625, %v8617
    %v10538 = vpack.c.b16 %v8626, %v8618
    %v10539 = vpack.c.b16 %v8635, %v8627
    %v10540 = vpack.c.b16 %v8636, %v8628
    %v10541 = vpack.c.b16 %v8637, %v8629
    %v10542 = vpack.c.b16 %v8638, %v8630
    %v10543 = vpack.c.b16 %v8639, %v8631
    %v10544 = vpack.c.b16 %v8640, %v8632
    %v10545 = vpack.c.b16 %v8641, %v8633
    %v10546 = vpack.c.b16 %v8642, %v8634
    %v10547 = vpack.c.b16 %v8651, %v8643
    %v10548 = vpack.c.b16 %v8652, %v8644
    %v10549 = vpack.c.b16 %v8653, %v8645
    %v10550 = vpack.c.b16 %v8654, %v8646
    %v10551 = vpack.c.b16 %v8655, %v8647
    %v10552 = vpack.c.b16 %v8656, %v8648
    %v10553 = vpack.c.b16 %v8657, %v8649
    %v10554 = vpack.c.b16 %v8658, %v8650
    %v10555 = vpack.c.b16 %v8667, %v8659
    %v10556 = vpack.c.b16 %v8668, %v8660
    %v10557 = vpack.c.b16 %v8669, %v8661
    %v10558 = vpack.c.b16 %v8670, %v8662
    %v10559 = vpack.c.b16 %v8671, %v8663
    %v10560 = vpack.c.b16 %v8672, %v8664
    %v10561 = vpack.c.b16 %v8673, %v8665
    %v10562 = vpack.c.b16 %v8674, %v8666
    %v10563 = vpack.c.b16 %v8683, %v8675
    %v10564 = vpack.c.b16 %v8684, %v8676
    %v10565 = vpack.c.b16 %v8685, %v8677
    %v10566 = vpack.c.b16 %v8686, %v8678
    %v10567 = vpack.c.b16 %v8687, %v8679
    %v10568 = vpack.c.b16 %v8688, %v8680
    %v10569 = vpack.c.b16 %v8689, %v8681
    %v10570 = vpack.c.b16 %v8690, %v8682
    %v10571 = vpack.c.b16 %v8699, %v8691
    %v10572 = vpack.c.b16 %v8700, %v8692
    %v10573 = vpack.c.b16 %v8701, %v8693
    %v10574 = vpack.c.b16 %v8702, %v8694
    %v10575 = vpack.c.b16 %v8703, %v8695
    %v10576 = vpack.c.b16 %v8704, %v8696
    %v10577 = vpack.c.b16 %v8705, %v8697
    %v10578 = vpack.c.b16 %v8706, %v8698
    %v10579 = vpack.c.b16 %v8715, %v8707
    %v10580 = vpack.c.b16 %v8716, %v8708
    %v10581 = vpack.c.b16 %v8717, %v8709
    %v10582 = vpack.c.b16 %v8718, %v8710
    %v10583 = vpack.c.b16 %v8719, %v8711
    %v10584 = vpack.c.b16 %v8720, %v8712
    %v10585 = vpack.c.b16 %v8721, %v8713
    %v10586 = vpack.c.b16 %v8722, %v8714
    %v10587 = vpack.c.b16 %v8731, %v8723
    %v10588 = vpack.c.b16 %v8732, %v8724
    %v10589 = vpack.c.b16 %v8733, %v8725
    %v10590 = vpack.c.b16 %v8734, %v8726
    %v10591 = vpack.c.b16 %v8735, %v8727
    %v10592 = vpack.c.b16 %v8736, %v8728
    %v10593 = vpack.c.b16 %v8737, %v8729
    %v10594 = vpack.c.b16 %v8738, %v8730
    %v10595 = vpack.c.b16 %v8747, %v8739
    %v10596 = vpack.c.b16 %v8748, %v8740
    %v10597 = vpack.c.b16 %v8749, %v8741
    %v10598 = vpack.c.b16 %v8750, %v8742
    %v10599 = vpack.c.b16 %v8751, %v8743
    %v10600 = vpack.c.b16 %v8752, %v8744
    %v10601 = vpack.c.b16 %v8753, %v8745
    %v10602 = vpack.c.b16 %v8754, %v8746
    %v10603 = vpack.c.b16 %v8763, %v8755
    %v10604 = vpack.c.b16 %v8764, %v8756
    %v10605 = vpack.c.b16 %v8765, %v8757
    %v10606 = vpack.c.b16 %v8766, %v8758
    %v10607 = vpack.c.b16 %v8767, %v8759
    %v10608 = vpack.c.b16 %v8768, %v8760
    %v10609 = vpack.c.b16 %v8769, %v8761
    %v10610 = vpack.c.b16 %v8770, %v8762
    %v10611 = vpack.c.b16 %v8779, %v8771
    %v10612 = vpack.c.b16 %v8780, %v8772
    %v10613 = vpack.c.b16 %v8781, %v8773
    %v10614 = vpack.c.b16 %v8782, %v8774
    %v10615 = vpack.c.b16 %v8783, %v8775
    %v10616 = vpack.c.b16 %v8784, %v8776
    %v10617 = vpack.c.b16 %v8785, %v8777
    %v10618 = vpack.c.b16 %v8786, %v8778
    %v10619 = vpack.c.b16 %v8795, %v8787
    %v10620 = vpack.c.b16 %v8796, %v8788
    %v10621 = vpack.c.b16 %v8797, %v8789
    %v10622 = vpack.c.b16 %v8798, %v8790
    %v10623 = vpack.c.b16 %v8799, %v8791
    %v10624 = vpack.c.b16 %v8800, %v8792
    %v10625 = vpack.c.b16 %v8801, %v8793
    %v10626 = vpack.c.b16 %v8802, %v8794
    %v10627 = vpack.c.b16 %v8811, %v8803
    %v10628 = vpack.c.b16 %v8812, %v8804
    %v10629 = vpack.c.b16 %v8813, %v8805
    %v10630 = vpack.c.b16 %v8814, %v8806
    %v10631 = vpack.c.b16 %v8815, %v8807
    %v10632 = vpack.c.b16 %v8816, %v8808
    %v10633 = vpack.c.b16 %v8817, %v8809
    %v10634 = vpack.c.b16 %v8818, %v8810
    %v10635 = vpack.c.b16 %v8827, %v8819
    %v10636 = vpack.c.b16 %v8828, %v8820
    %v10637 = vpack.c.b16 %v8829, %v8821
    %v10638 = vpack.c.b16 %v8830, %v8822
    %v10639 = vpack.c.b16 %v8831, %v8823
    %v10640 = vpack.c.b16 %v8832, %v8824
    %v10641 = vpack.c.b16 %v8833, %v8825
    %v10642 = vpack.c.b16 %v8834, %v8826
    %v10643 = vpack.c.b16 %v8843, %v8835
    %v10644 = vpack.c.b16 %v8844, %v8836
    %v10645 = vpack.c.b16 %v8845, %v8837
    %v10646 = vpack.c.b16 %v8846, %v8838
    %v10647 = vpack.c.b16 %v8847, %v8839
    %v10648 = vpack.c.b16 %v8848, %v8840
    %v10649 = vpack.c.b16 %v8849, %v8841
    %v10650 = vpack.c.b16 %v8850, %v8842
    %v10651 = vpack.c.b16 %v8859, %v8851
    %v10652 = vpack.c.b16 %v8860, %v8852
    %v10653 = vpack.c.b16 %v8861, %v8853
    %v10654 = vpack.c.b16 %v8862, %v8854
    %v10655 = vpack.c.b16 %v8863, %v8855
    %v10656 = vpack.c.b16 %v8864, %v8856
    %v10657 = vpack.c.b16 %v8865, %v8857
    %v10658 = vpack.c.b16 %v8866, %v8858
    %v10659 = vpack.c.b16 %v8875, %v8867
    %v10660 = vpack.c.b16 %v8876, %v8868
    %v10661 = vpack.c.b16 %v8877, %v8869
    %v10662 = vpack.c.b16 %v8878, %v8870
    %v10663 = vpack.c.b16 %v8879, %v8871
    %v10664 = vpack.c.b16 %v8880, %v8872
    %v10665 = vpack.c.b16 %v8881, %v8873
    %v10666 = vpack.c.b16 %v8882, %v8874
    %v10667 = vpack.c.b16 %v8891, %v8883
    %v10668 = vpack.c.b16 %v8892, %v8884
    %v10669 = vpack.c.b16 %v8893, %v8885
    %v10670 = vpack.c.b16 %v8894, %v8886
    %v10671 = vpack.c.b16 %v8895, %v8887
    %v10672 = vpack.c.b16 %v8896, %v8888
    %v10673 = vpack.c.b16 %v8897, %v8889
    %v10674 = vpack.c.b16 %v8898, %v8890
    %v10675 = vpack.c.b16 %v8907, %v8899
    %v10676 = vpack.c.b16 %v8908, %v8900
    %v10677 = vpack.c.b16 %v8909, %v8901
    %v10678 = vpack.c.b16 %v8910, %v8902
    %v10679 = vpack.c.b16 %v8911, %v8903
    %v10680 = vpack.c.b16 %v8912, %v8904
    %v10681 = vpack.c.b16 %v8913, %v8905
    %v10682 = vpack.c.b16 %v8914, %v8906
    %v10683 = vpack.c.b16 %v8923, %v8915
    %v10684 = vpack.c.b16 %v8924, %v8916
    %v10685 = vpack.c.b16 %v8925, %v8917
    %v10686 = vpack.c.b16 %v8926, %v8918
    %v10687 = vpack.c.b16 %v8927, %v8919
    %v10688 = vpack.c.b16 %v8928, %v8920
    %v10689 = vpack.c.b16 %v8929, %v8921
    %v10690 = vpack.c.b16 %v8930, %v8922
    %v10691 = vpack.c.b16 %v8939, %v8931
    %v10692 = vpack.c.b16 %v8940, %v8932
    %v10693 = vpack.c.b16 %v8941, %v8933
    %v10694 = vpack.c.b16 %v8942, %v8934
    %v10695 = vpack.c.b16 %v8943, %v8935
    %v10696 = vpack.c.b16 %v8944, %v8936
    %v10697 = vpack.c.b16 %v8945, %v8937
    %v10698 = vpack.c.b16 %v8946, %v8938
    %v10699 = vpack.c.b16 %v8955, %v8947
    %v10700 = vpack.c.b16 %v8956, %v8948
    %v10701 = vpack.c.b16 %v8957, %v8949
    %v10702 = vpack.c.b16 %v8958, %v8950
    %v10703 = vpack.c.b16 %v8959, %v8951
    %v10704 = vpack.c.b16 %v8960, %v8952
    %v10705 = vpack.c.b16 %v8961, %v8953
    %v10706 = vpack.c.b16 %v8962, %v8954
    %v10707 = vpack.c.b16 %v8971, %v8963
    %v10708 = vpack.c.b16 %v8972, %v8964
    %v10709 = vpack.c.b16 %v8973, %v8965
    %v10710 = vpack.c.b16 %v8974, %v8966
    %v10711 = vpack.c.b16 %v8975, %v8967
    %v10712 = vpack.c.b16 %v8976, %v8968
    %v10713 = vpack.c.b16 %v8977, %v8969
    %v10714 = vpack.c.b16 %v8978, %v8970
    %v10715 = vpack.c.b16 %v8987, %v8979
    %v10716 = vpack.c.b16 %v8988, %v8980
    %v10717 = vpack.c.b16 %v8989, %v8981
    %v10718 = vpack.c.b16 %v8990, %v8982
    %v10719 = vpack.c.b16 %v8991, %v8983
    %v10720 = vpack.c.b16 %v8992, %v8984
    %v10721 = vpack.c.b16 %v8993, %v8985
    %v10722 = vpack.c.b16 %v8994, %v8986
    %v10723 = vpack.c.b16 %v9003, %v8995
    %v10724 = vpack.c.b16 %v9004, %v8996
    %v10725 = vpack.c.b16 %v9005, %v8997
    %v10726 = vpack.c.b16 %v9006, %v8998
    %v10727 = vpack.c.b16 %v9007, %v8999
    %v10728 = vpack.c.b16 %v9008, %v9000
    %v10729 = vpack.c.b16 %v9009, %v9001
    %v10730 = vpack.c.b16 %v9010, %v9002
    %v10731 = vpack.c.b16 %v9019, %v9011
    %v10732 = vpack.c.b16 %v9020, %v9012
    %v10733 = vpack.c.b16 %v9021, %v9013
    %v10734 = vpack.c.b16 %v9022, %v9014
    %v10735 = vpack.c.b16 %v9023, %v9015
    %v10736 = vpack.c.b16 %v9024, %v9016
    %v10737 = vpack.c.b16 %v9025, %v9017
    %v10738 = vpack.c.b16 %v9026, %v9018
    %v10739 = vpack.c.b16 %v9035, %v9027
    %v10740 = vpack.c.b16 %v9036, %v9028
    %v10741 = vpack.c.b16 %v9037, %v9029
    %v10742 = vpack.c.b16 %v9038, %v9030
    %v10743 = vpack.c.b16 %v9039, %v9031
    %v10744 = vpack.c.b16 %v9040, %v9032
    %v10745 = vpack.c.b16 %v9041, %v9033
    %v10746 = vpack.c.b16 %v9042, %v9034
    %v10747 = vpack.c.b16 %v9051, %v9043
    %v10748 = vpack.c.b16 %v9052, %v9044
    %v10749 = vpack.c.b16 %v9053, %v9045
    %v10750 = vpack.c.b16 %v9054, %v9046
    %v10751 = vpack.c.b16 %v9055, %v9047
    %v10752 = vpack.c.b16 %v9056, %v9048
    %v10753 = vpack.c.b16 %v9057, %v9049
    %v10754 = vpack.c.b16 %v9058, %v9050
    %v10755 = vpack.c.b16 %v9067, %v9059
    %v10756 = vpack.c.b16 %v9068, %v9060
    %v10757 = vpack.c.b16 %v9069, %v9061
    %v10758 = vpack.c.b16 %v9070, %v9062
    %v10759 = vpack.c.b16 %v9071, %v9063
    %v10760 = vpack.c.b16 %v9072, %v9064
    %v10761 = vpack.c.b16 %v9073, %v9065
    %v10762 = vpack.c.b16 %v9074, %v9066
    %v10763 = vpack.c.b16 %v9083, %v9075
    %v10764 = vpack.c.b16 %v9084, %v9076
    %v10765 = vpack.c.b16 %v9085, %v9077
    %v10766 = vpack.c.b16 %v9086, %v9078
    %v10767 = vpack.c.b16 %v9087, %v9079
    %v10768 = vpack.c.b16 %v9088, %v9080
    %v10769 = vpack.c.b16 %v9089, %v9081
    %v10770 = vpack.c.b16 %v9090, %v9082
    %v10771 = vpack.c.b16 %v9099, %v9091
    %v10772 = vpack.c.b16 %v9100, %v9092
    %v10773 = vpack.c.b16 %v9101, %v9093
    %v10774 = vpack.c.b16 %v9102, %v9094
    %v10775 = vpack.c.b16 %v9103, %v9095
    %v10776 = vpack.c.b16 %v9104, %v9096
    %v10777 = vpack.c.b16 %v9105, %v9097
    %v10778 = vpack.c.b16 %v9106, %v9098
    %v10779 = vpack.c.b16 %v9115, %v9107
    %v10780 = vpack.c.b16 %v9116, %v9108
    %v10781 = vpack.c.b16 %v9117, %v9109
    %v10782 = vpack.c.b16 %v9118, %v9110
    %v10783 = vpack.c.b16 %v9119, %v9111
    %v10784 = vpack.c.b16 %v9120, %v9112
    %v10785 = vpack.c.b16 %v9121, %v9113
    %v10786 = vpack.c.b16 %v9122, %v9114
    %v10787 = vpack.c.b16 %v9131, %v9123
    %v10788 = vpack.c.b16 %v9132, %v9124
    %v10789 = vpack.c.b16 %v9133, %v9125
    %v10790 = vpack.c.b16 %v9134, %v9126
    %v10791 = vpack.c.b16 %v9135, %v9127
    %v10792 = vpack.c.b16 %v9136, %v9128
    %v10793 = vpack.c.b16 %v9137, %v9129
    %v10794 = vpack.c.b16 %v9138, %v9130
    %v10795 = vpack.c.b16 %v9147, %v9139
    %v10796 = vpack.c.b16 %v9148, %v9140
    %v10797 = vpack.c.b16 %v9149, %v9141
    %v10798 = vpack.c.b16 %v9150, %v9142
    %v10799 = vpack.c.b16 %v9151, %v9143
    %v10800 = vpack.c.b16 %v9152, %v9144
    %v10801 = vpack.c.b16 %v9153, %v9145
    %v10802 = vpack.c.b16 %v9154, %v9146
    %v10803 = vpack.c.b16 %v9163, %v9155
    %v10804 = vpack.c.b16 %v9164, %v9156
    %v10805 = vpack.c.b16 %v9165, %v9157
    %v10806 = vpack.c.b16 %v9166, %v9158
    %v10807 = vpack.c.b16 %v9167, %v9159
    %v10808 = vpack.c.b16 %v9168, %v9160
    %v10809 = vpack.c.b16 %v9169, %v9161
    %v10810 = vpack.c.b16 %v9170, %v9162
    %v10811 = vpack.c.b16 %v9179, %v9171
    %v10812 = vpack.c.b16 %v9180, %v9172
    %v10813 = vpack.c.b16 %v9181, %v9173
    %v10814 = vpack.c.b16 %v9182, %v9174
    %v10815 = vpack.c.b16 %v9183, %v9175
    %v10816 = vpack.c.b16 %v9184, %v9176
    %v10817 = vpack.c.b16 %v9185, %v9177
    %v10818 = vpack.c.b16 %v9186, %v9178
    %v10819 = vpack.c.b16 %v9195, %v9187
    %v10820 = vpack.c.b16 %v9196, %v9188
    %v10821 = vpack.c.b16 %v9197, %v9189
    %v10822 = vpack.c.b16 %v9198, %v9190
    %v10823 = vpack.c.b16 %v9199, %v9191
    %v10824 = vpack.c.b16 %v9200, %v9192
    %v10825 = vpack.c.b16 %v9201, %v9193
    %v10826 = vpack.c.b16 %v9202, %v9194
    %v10827 = vpack.c.b16 %v9211, %v9203
    %v10828 = vpack.c.b16 %v9212, %v9204
    %v10829 = vpack.c.b16 %v9213, %v9205
    %v10830 = vpack.c.b16 %v9214, %v9206
    %v10831 = vpack.c.b16 %v9215, %v9207
    %v10832 = vpack.c.b16 %v9216, %v9208
    %v10833 = vpack.c.b16 %v9217, %v9209
    %v10834 = vpack.c.b16 %v9218, %v9210
    %v10835 = vpack.c.b16 %v9227, %v9219
    %v10836 = vpack.c.b16 %v9228, %v9220
    %v10837 = vpack.c.b16 %v9229, %v9221
    %v10838 = vpack.c.b16 %v9230, %v9222
    %v10839 = vpack.c.b16 %v9231, %v9223
    %v10840 = vpack.c.b16 %v9232, %v9224
    %v10841 = vpack.c.b16 %v9233, %v9225
    %v10842 = vpack.c.b16 %v9234, %v9226
    %v10843 = vpack.c.b16 %v9243, %v9235
    %v10844 = vpack.c.b16 %v9244, %v9236
    %v10845 = vpack.c.b16 %v9245, %v9237
    %v10846 = vpack.c.b16 %v9246, %v9238
    %v10847 = vpack.c.b16 %v9247, %v9239
    %v10848 = vpack.c.b16 %v9248, %v9240
    %v10849 = vpack.c.b16 %v9249, %v9241
    %v10850 = vpack.c.b16 %v9250, %v9242
    %v10851 = vpack.c.b16 %v9259, %v9251
    %v10852 = vpack.c.b16 %v9260, %v9252
    %v10853 = vpack.c.b16 %v9261, %v9253
    %v10854 = vpack.c.b16 %v9262, %v9254
    %v10855 = vpack.c.b16 %v9263, %v9255
    %v10856 = vpack.c.b16 %v9264, %v9256
    %v10857 = vpack.c.b16 %v9265, %v9257
    %v10858 = vpack.c.b16 %v9266, %v9258
    %v10859 = vpack.c.b16 %v9275, %v9267
    %v10860 = vpack.c.b16 %v9276, %v9268
    %v10861 = vpack.c.b16 %v9277, %v9269
    %v10862 = vpack.c.b16 %v9278, %v9270
    %v10863 = vpack.c.b16 %v9279, %v9271
    %v10864 = vpack.c.b16 %v9280, %v9272
    %v10865 = vpack.c.b16 %v9281, %v9273
    %v10866 = vpack.c.b16 %v9282, %v9274
    %v10867 = vpack.c.b16 %v9291, %v9283
    %v10868 = vpack.c.b16 %v9292, %v9284
    %v10869 = vpack.c.b16 %v9293, %v9285
    %v10870 = vpack.c.b16 %v9294, %v9286
    %v10871 = vpack.c.b16 %v9295, %v9287
    %v10872 = vpack.c.b16 %v9296, %v9288
    %v10873 = vpack.c.b16 %v9297, %v9289
    %v10874 = vpack.c.b16 %v9298, %v9290
    %v10875 = vpack.c.b16 %v9307, %v9299
    %v10876 = vpack.c.b16 %v9308, %v9300
    %v10877 = vpack.c.b16 %v9309, %v9301
    %v10878 = vpack.c.b16 %v9310, %v9302
    %v10879 = vpack.c.b16 %v9311, %v9303
    %v10880 = vpack.c.b16 %v9312, %v9304
    %v10881 = vpack.c.b16 %v9313, %v9305
    %v10882 = vpack.c.b16 %v9314, %v9306
    %v10883 = vpack.c.b16 %v9323, %v9315
    %v10884 = vpack.c.b16 %v9324, %v9316
    %v10885 = vpack.c.b16 %v9325, %v9317
    %v10886 = vpack.c.b16 %v9326, %v9318
    %v10887 = vpack.c.b16 %v9327, %v9319
    %v10888 = vpack.c.b16 %v9328, %v9320
    %v10889 = vpack.c.b16 %v9329, %v9321
    %v10890 = vpack.c.b16 %v9330, %v9322
    %v10891 = vpack.c.b16 %v9339, %v9331
    %v10892 = vpack.c.b16 %v9340, %v9332
    %v10893 = vpack.c.b16 %v9341, %v9333
    %v10894 = vpack.c.b16 %v9342, %v9334
    %v10895 = vpack.c.b16 %v9343, %v9335
    %v10896 = vpack.c.b16 %v9344, %v9336
    %v10897 = vpack.c.b16 %v9345, %v9337
    %v10898 = vpack.c.b16 %v9346, %v9338
    %v10899 = vpack.c.b16 %v9355, %v9347
    %v10900 = vpack.c.b16 %v9356, %v9348
    %v10901 = vpack.c.b16 %v9357, %v9349
    %v10902 = vpack.c.b16 %v9358, %v9350
    %v10903 = vpack.c.b16 %v9359, %v9351
    %v10904 = vpack.c.b16 %v9360, %v9352
    %v10905 = vpack.c.b16 %v9361, %v9353
    %v10906 = vpack.c.b16 %v9362, %v9354
    %v10907 = vpack.c.b16 %v9371, %v9363
    %v10908 = vpack.c.b16 %v9372, %v9364
    %v10909 = vpack.c.b16 %v9373, %v9365
    %v10910 = vpack.c.b16 %v9374, %v9366
    %v10911 = vpack.c.b16 %v9375, %v9367
    %v10912 = vpack.c.b16 %v9376, %v9368
    %v10913 = vpack.c.b16 %v9377, %v9369
    %v10914 = vpack.c.b16 %v9378, %v9370
    %v10915 = vpack.c.b16 %v9387, %v9379
    %v10916 = vpack.c.b16 %v9388, %v9380
    %v10917 = vpack.c.b16 %v9389, %v9381
    %v10918 = vpack.c.b16 %v9390, %v9382
    %v10919 = vpack.c.b16 %v9391, %v9383
    %v10920 = vpack.c.b16 %v9392, %v9384
    %v10921 = vpack.c.b16 %v9393, %v9385
    %v10922 = vpack.c.b16 %v9394, %v9386
    %v10923 = vpack.c.b16 %v9403, %v9395
    %v10924 = vpack.c.b16 %v9404, %v9396
    %v10925 = vpack.c.b16 %v9405, %v9397
    %v10926 = vpack.c.b16 %v9406, %v9398
    %v10927 = vpack.c.b16 %v9407, %v9399
    %v10928 = vpack.c.b16 %v9408, %v9400
    %v10929 = vpack.c.b16 %v9409, %v9401
    %v10930 = vpack.c.b16 %v9410, %v9402
    %v10931 = vpack.c.b16 %v9419, %v9411
    %v10932 = vpack.c.b16 %v9420, %v9412
    %v10933 = vpack.c.b16 %v9421, %v9413
    %v10934 = vpack.c.b16 %v9422, %v9414
    %v10935 = vpack.c.b16 %v9423, %v9415
    %v10936 = vpack.c.b16 %v9424, %v9416
    %v10937 = vpack.c.b16 %v9425, %v9417
    %v10938 = vpack.c.b16 %v9426, %v9418
    %v10939 = vpack.c.b16 %v9435, %v9427
    %v10940 = vpack.c.b16 %v9436, %v9428
    %v10941 = vpack.c.b16 %v9437, %v9429
    %v10942 = vpack.c.b16 %v9438, %v9430
    %v10943 = vpack.c.b16 %v9439, %v9431
    %v10944 = vpack.c.b16 %v9440, %v9432
    %v10945 = vpack.c.b16 %v9441, %v9433
    %v10946 = vpack.c.b16 %v9442, %v9434
    %v10947 = vpack.c.b16 %v9451, %v9443
    %v10948 = vpack.c.b16 %v9452, %v9444
    %v10949 = vpack.c.b16 %v9453, %v9445
    %v10950 = vpack.c.b16 %v9454, %v9446
    %v10951 = vpack.c.b16 %v9455, %v9447
    %v10952 = vpack.c.b16 %v9456, %v9448
    %v10953 = vpack.c.b16 %v9457, %v9449
    %v10954 = vpack.c.b16 %v9458, %v9450
    %v10955 = vpack.c.b16 %v9467, %v9459
    %v10956 = vpack.c.b16 %v9468, %v9460
    %v10957 = vpack.c.b16 %v9469, %v9461
    %v10958 = vpack.c.b16 %v9470, %v9462
    %v10959 = vpack.c.b16 %v9471, %v9463
    %v10960 = vpack.c.b16 %v9472, %v9464
    %v10961 = vpack.c.b16 %v9473, %v9465
    %v10962 = vpack.c.b16 %v9474, %v9466
    %v10963 = vpack.c.b16 %v9483, %v9475
    %v10964 = vpack.c.b16 %v9484, %v9476
    %v10965 = vpack.c.b16 %v9485, %v9477
    %v10966 = vpack.c.b16 %v9486, %v9478
    %v10967 = vpack.c.b16 %v9487, %v9479
    %v10968 = vpack.c.b16 %v9488, %v9480
    %v10969 = vpack.c.b16 %v9489, %v9481
    %v10970 = vpack.c.b16 %v9490, %v9482
    %v10971 = vpack.c.b16 %v9499, %v9491
    %v10972 = vpack.c.b16 %v9500, %v9492
    %v10973 = vpack.c.b16 %v9501, %v9493
    %v10974 = vpack.c.b16 %v9502, %v9494
    %v10975 = vpack.c.b16 %v9503, %v9495
    %v10976 = vpack.c.b16 %v9504, %v9496
    %v10977 = vpack.c.b16 %v9505, %v9497
    %v10978 = vpack.c.b16 %v9506, %v9498
    %v10979 = vpack.c.b16 %v9515, %v9507
    %v10980 = vpack.c.b16 %v9516, %v9508
    %v10981 = vpack.c.b16 %v9517, %v9509
    %v10982 = vpack.c.b16 %v9518, %v9510
    %v10983 = vpack.c.b16 %v9519, %v9511
    %v10984 = vpack.c.b16 %v9520, %v9512
    %v10985 = vpack.c.b16 %v9521, %v9513
    %v10986 = vpack.c.b16 %v9522, %v9514
    %v10987 = vpack.c.b16 %v9531, %v9523
    %v10988 = vpack.c.b16 %v9532, %v9524
    %v10989 = vpack.c.b16 %v9533, %v9525
    %v10990 = vpack.c.b16 %v9534, %v9526
    %v10991 = vpack.c.b16 %v9535, %v9527
    %v10992 = vpack.c.b16 %v9536, %v9528
    %v10993 = vpack.c.b16 %v9537, %v9529
    %v10994 = vpack.c.b16 %v9538, %v9530
    %v10995 = vpack.c.b16 %v9547, %v9539
    %v10996 = vpack.c.b16 %v9548, %v9540
    %v10997 = vpack.c.b16 %v9549, %v9541
    %v10998 = vpack.c.b16 %v9550, %v9542
    %v10999 = vpack.c.b16 %v9551, %v9543
    %v11000 = vpack.c.b16 %v9552, %v9544
    %v11001 = vpack.c.b16 %v9553, %v9545
    %v11002 = vpack.c.b16 %v9554, %v9546
    %v11003 = vpack.c.b16 %v9563, %v9555
    %v11004 = vpack.c.b16 %v9564, %v9556
    %v11005 = vpack.c.b16 %v9565, %v9557
    %v11006 = vpack.c.b16 %v9566, %v9558
    %v11007 = vpack.c.b16 %v9567, %v9559
    %v11008 = vpack.c.b16 %v9568, %v9560
    %v11009 = vpack.c.b16 %v9569, %v9561
    %v11010 = vpack.c.b16 %v9570, %v9562
    %v11011 = vpack.c.b16 %v9579, %v9571
    %v11012 = vpack.c.b16 %v9580, %v9572
    %v11013 = vpack.c.b16 %v9581, %v9573
    %v11014 = vpack.c.b16 %v9582, %v9574
    %v11015 = vpack.c.b16 %v9583, %v9575
    %v11016 = vpack.c.b16 %v9584, %v9576
    %v11017 = vpack.c.b16 %v9585, %v9577
    %v11018 = vpack.c.b16 %v9586, %v9578
    %v11019 = vpack.c.b16 %v9595, %v9587
    %v11020 = vpack.c.b16 %v9596, %v9588
    %v11021 = vpack.c.b16 %v9597, %v9589
    %v11022 = vpack.c.b16 %v9598, %v9590
    %v11023 = vpack.c.b16 %v9599, %v9591
    %v11024 = vpack.c.b16 %v9600, %v9592
    %v11025 = vpack.c.b16 %v9601, %v9593
    %v11026 = vpack.c.b16 %v9602, %v9594
    %v11027 = vpack.c.b16 %v9611, %v9603
    %v11028 = vpack.c.b16 %v9612, %v9604
    %v11029 = vpack.c.b16 %v9613, %v9605
    %v11030 = vpack.c.b16 %v9614, %v9606
    %v11031 = vpack.c.b16 %v9615, %v9607
    %v11032 = vpack.c.b16 %v9616, %v9608
    %v11033 = vpack.c.b16 %v9617, %v9609
    %v11034 = vpack.c.b16 %v9618, %v9610
    %v11035 = vpack.c.b16 %v9627, %v9619
    %v11036 = vpack.c.b16 %v9628, %v9620
    %v11037 = vpack.c.b16 %v9629, %v9621
    %v11038 = vpack.c.b16 %v9630, %v9622
    %v11039 = vpack.c.b16 %v9631, %v9623
    %v11040 = vpack.c.b16 %v9632, %v9624
    %v11041 = vpack.c.b16 %v9633, %v9625
    %v11042 = vpack.c.b16 %v9634, %v9626
    %v11043 = vpack.c.b16 %v9643, %v9635
    %v11044 = vpack.c.b16 %v9644, %v9636
    %v11045 = vpack.c.b16 %v9645, %v9637
    %v11046 = vpack.c.b16 %v9646, %v9638
    %v11047 = vpack.c.b16 %v9647, %v9639
    %v11048 = vpack.c.b16 %v9648, %v9640
    %v11049 = vpack.c.b16 %v9649, %v9641
    %v11050 = vpack.c.b16 %v9650, %v9642
    %v11051 = vpack.c.b16 %v9659, %v9651
    %v11052 = vpack.c.b16 %v9660, %v9652
    %v11053 = vpack.c.b16 %v9661, %v9653
    %v11054 = vpack.c.b16 %v9662, %v9654
    %v11055 = vpack.c.b16 %v9663, %v9655
    %v11056 = vpack.c.b16 %v9664, %v9656
    %v11057 = vpack.c.b16 %v9665, %v9657
    %v11058 = vpack.c.b16 %v9666, %v9658
    %v11059 = vpack.c.b16 %v9675, %v9667
    %v11060 = vpack.c.b16 %v9676, %v9668
    %v11061 = vpack.c.b16 %v9677, %v9669
    %v11062 = vpack.c.b16 %v9678, %v9670
    %v11063 = vpack.c.b16 %v9679, %v9671
    %v11064 = vpack.c.b16 %v9680, %v9672
    %v11065 = vpack.c.b16 %v9681, %v9673
    %v11066 = vpack.c.b16 %v9682, %v9674
    %v11067 = vpack.c.b16 %v9691, %v9683
    %v11068 = vpack.c.b16 %v9692, %v9684
    %v11069 = vpack.c.b16 %v9693, %v9685
    %v11070 = vpack.c.b16 %v9694, %v9686
    %v11071 = vpack.c.b16 %v9695, %v9687
    %v11072 = vpack.c.b16 %v9696, %v9688
    %v11073 = vpack.c.b16 %v9697, %v9689
    %v11074 = vpack.c.b16 %v9698, %v9690
    %v11075 = vpack.c.b16 %v9707, %v9699
    %v11076 = vpack.c.b16 %v9708, %v9700
    %v11077 = vpack.c.b16 %v9709, %v9701
    %v11078 = vpack.c.b16 %v9710, %v9702
    %v11079 = vpack.c.b16 %v9711, %v9703
    %v11080 = vpack.c.b16 %v9712, %v9704
    %v11081 = vpack.c.b16 %v9713, %v9705
    %v11082 = vpack.c.b16 %v9714, %v9706
    %v11083 = vpack.c.b16 %v9723, %v9715
    %v11084 = vpack.c.b16 %v9724, %v9716
    %v11085 = vpack.c.b16 %v9725, %v9717
    %v11086 = vpack.c.b16 %v9726, %v9718
    %v11087 = vpack.c.b16 %v9727, %v9719
    %v11088 = vpack.c.b16 %v9728, %v9720
    %v11089 = vpack.c.b16 %v9729, %v9721
    %v11090 = vpack.c.b16 %v9730, %v9722
    %v11091 = vpack.c.b16 %v9739, %v9731
    %v11092 = vpack.c.b16 %v9740, %v9732
    %v11093 = vpack.c.b16 %v9741, %v9733
    %v11094 = vpack.c.b16 %v9742, %v9734
    %v11095 = vpack.c.b16 %v9743, %v9735
    %v11096 = vpack.c.b16 %v9744, %v9736
    %v11097 = vpack.c.b16 %v9745, %v9737
    %v11098 = vpack.c.b16 %v9746, %v9738
    %v11099 = vpack.c.b16 %v9755, %v9747
    %v11100 = vpack.c.b16 %v9756, %v9748
    %v11101 = vpack.c.b16 %v9757, %v9749
    %v11102 = vpack.c.b16 %v9758, %v9750
    %v11103 = vpack.c.b16 %v9759, %v9751
    %v11104 = vpack.c.b16 %v9760, %v9752
    %v11105 = vpack.c.b16 %v9761, %v9753
    %v11106 = vpack.c.b16 %v9762, %v9754
    %v11107 = vpack.c.b16 %v9771, %v9763
    %v11108 = vpack.c.b16 %v9772, %v9764
    %v11109 = vpack.c.b16 %v9773, %v9765
    %v11110 = vpack.c.b16 %v9774, %v9766
    %v11111 = vpack.c.b16 %v9775, %v9767
    %v11112 = vpack.c.b16 %v9776, %v9768
    %v11113 = vpack.c.b16 %v9777, %v9769
    %v11114 = vpack.c.b16 %v9778, %v9770
    %v11115 = vpack.c.b16 %v9787, %v9779
    %v11116 = vpack.c.b16 %v9788, %v9780
    %v11117 = vpack.c.b16 %v9789, %v9781
    %v11118 = vpack.c.b16 %v9790, %v9782
    %v11119 = vpack.c.b16 %v9791, %v9783
    %v11120 = vpack.c.b16 %v9792, %v9784
    %v11121 = vpack.c.b16 %v9793, %v9785
    %v11122 = vpack.c.b16 %v9794, %v9786
    %v11123 = vpack.c.b16 %v9803, %v9795
    %v11124 = vpack.c.b16 %v9804, %v9796
    %v11125 = vpack.c.b16 %v9805, %v9797
    %v11126 = vpack.c.b16 %v9806, %v9798
    %v11127 = vpack.c.b16 %v9807, %v9799
    %v11128 = vpack.c.b16 %v9808, %v9800
    %v11129 = vpack.c.b16 %v9809, %v9801
    %v11130 = vpack.c.b16 %v9810, %v9802
    %v11131 = vpack.c.b16 %v9819, %v9811
    %v11132 = vpack.c.b16 %v9820, %v9812
    %v11133 = vpack.c.b16 %v9821, %v9813
    %v11134 = vpack.c.b16 %v9822, %v9814
    %v11135 = vpack.c.b16 %v9823, %v9815
    %v11136 = vpack.c.b16 %v9824, %v9816
    %v11137 = vpack.c.b16 %v9825, %v9817
    %v11138 = vpack.c.b16 %v9826, %v9818
    %v11139 = vpack.c.b16 %v9835, %v9827
    %v11140 = vpack.c.b16 %v9836, %v9828
    %v11141 = vpack.c.b16 %v9837, %v9829
    %v11142 = vpack.c.b16 %v9838, %v9830
    %v11143 = vpack.c.b16 %v9839, %v9831
    %v11144 = vpack.c.b16 %v9840, %v9832
    %v11145 = vpack.c.b16 %v9841, %v9833
    %v11146 = vpack.c.b16 %v9842, %v9834
    %v11147 = vpack.c.b16 %v9851, %v9843
    %v11148 = vpack.c.b16 %v9852, %v9844
    %v11149 = vpack.c.b16 %v9853, %v9845
    %v11150 = vpack.c.b16 %v9854, %v9846
    %v11151 = vpack.c.b16 %v9855, %v9847
    %v11152 = vpack.c.b16 %v9856, %v9848
    %v11153 = vpack.c.b16 %v9857, %v9849
    %v11154 = vpack.c.b16 %v9858, %v9850
    %v11155 = vpack.c.b16 %v9867, %v9859
    %v11156 = vpack.c.b16 %v9868, %v9860
    %v11157 = vpack.c.b16 %v9869, %v9861
    %v11158 = vpack.c.b16 %v9870, %v9862
    %v11159 = vpack.c.b16 %v9871, %v9863
    %v11160 = vpack.c.b16 %v9872, %v9864
    %v11161 = vpack.c.b16 %v9873, %v9865
    %v11162 = vpack.c.b16 %v9874, %v9866
    %v11163 = vpack.c.b16 %v9883, %v9875
    %v11164 = vpack.c.b16 %v9884, %v9876
    %v11165 = vpack.c.b16 %v9885, %v9877
    %v11166 = vpack.c.b16 %v9886, %v9878
    %v11167 = vpack.c.b16 %v9887, %v9879
    %v11168 = vpack.c.b16 %v9888, %v9880
    %v11169 = vpack.c.b16 %v9889, %v9881
    %v11170 = vpack.c.b16 %v9890, %v9882
    %v11171 = vpack.c.b16 %v9899, %v9891
    %v11172 = vpack.c.b16 %v9900, %v9892
    %v11173 = vpack.c.b16 %v9901, %v9893
    %v11174 = vpack.c.b16 %v9902, %v9894
    %v11175 = vpack.c.b16 %v9903, %v9895
    %v11176 = vpack.c.b16 %v9904, %v9896
    %v11177 = vpack.c.b16 %v9905, %v9897
    %v11178 = vpack.c.b16 %v9906, %v9898
    %v11179 = vpack.c.b16 %v9915, %v9907
    %v11180 = vpack.c.b16 %v9916, %v9908
    %v11181 = vpack.c.b16 %v9917, %v9909
    %v11182 = vpack.c.b16 %v9918, %v9910
    %v11183 = vpack.c.b16 %v9919, %v9911
    %v11184 = vpack.c.b16 %v9920, %v9912
    %v11185 = vpack.c.b16 %v9921, %v9913
    %v11186 = vpack.c.b16 %v9922, %v9914
    %v11187 = vpack.c.b16 %v9931, %v9923
    %v11188 = vpack.c.b16 %v9932, %v9924
    %v11189 = vpack.c.b16 %v9933, %v9925
    %v11190 = vpack.c.b16 %v9934, %v9926
    %v11191 = vpack.c.b16 %v9935, %v9927
    %v11192 = vpack.c.b16 %v9936, %v9928
    %v11193 = vpack.c.b16 %v9937, %v9929
    %v11194 = vpack.c.b16 %v9938, %v9930
    %v11195 = vpack.c.b16 %v9947, %v9939
    %v11196 = vpack.c.b16 %v9948, %v9940
    %v11197 = vpack.c.b16 %v9949, %v9941
    %v11198 = vpack.c.b16 %v9950, %v9942
    %v11199 = vpack.c.b16 %v9951, %v9943
    %v11200 = vpack.c.b16 %v9952, %v9944
    %v11201 = vpack.c.b16 %v9953, %v9945
    %v11202 = vpack.c.b16 %v9954, %v9946
    %v11203 = vpack.c.b16 %v9963, %v9955
    %v11204 = vpack.c.b16 %v9964, %v9956
    %v11205 = vpack.c.b16 %v9965, %v9957
    %v11206 = vpack.c.b16 %v9966, %v9958
    %v11207 = vpack.c.b16 %v9967, %v9959
    %v11208 = vpack.c.b16 %v9968, %v9960
    %v11209 = vpack.c.b16 %v9969, %v9961
    %v11210 = vpack.c.b16 %v9970, %v9962
    %v11211 = vpack.c.b16 %v9979, %v9971
    %v11212 = vpack.c.b16 %v9980, %v9972
    %v11213 = vpack.c.b16 %v9981, %v9973
    %v11214 = vpack.c.b16 %v9982, %v9974
    %v11215 = vpack.c.b16 %v9983, %v9975
    %v11216 = vpack.c.b16 %v9984, %v9976
    %v11217 = vpack.c.b16 %v9985, %v9977
    %v11218 = vpack.c.b16 %v9986, %v9978
    %v11219 = vpack.c.b16 %v9995, %v9987
    %v11220 = vpack.c.b16 %v9996, %v9988
    %v11221 = vpack.c.b16 %v9997, %v9989
    %v11222 = vpack.c.b16 %v9998, %v9990
    %v11223 = vpack.c.b16 %v9999, %v9991
    %v11224 = vpack.c.b16 %v10000, %v9992
    %v11225 = vpack.c.b16 %v10001, %v9993
    %v11226 = vpack.c.b16 %v10002, %v9994
    %v11227 = vpack.c.b16 %v10011, %v10003
    %v11228 = vpack.c.b16 %v10012, %v10004
    %v11229 = vpack.c.b16 %v10013, %v10005
    %v11230 = vpack.c.b16 %v10014, %v10006
    %v11231 = vpack.c.b16 %v10015, %v10007
    %v11232 = vpack.c.b16 %v10016, %v10008
    %v11233 = vpack.c.b16 %v10017, %v10009
    %v11234 = vpack.c.b16 %v10018, %v10010
    %v11235 = vpack.c.b16 %v10027, %v10019
    %v11236 = vpack.c.b16 %v10028, %v10020
    %v11237 = vpack.c.b16 %v10029, %v10021
    %v11238 = vpack.c.b16 %v10030, %v10022
    %v11239 = vpack.c.b16 %v10031, %v10023
    %v11240 = vpack.c.b16 %v10032, %v10024
    %v11241 = vpack.c.b16 %v10033, %v10025
    %v11242 = vpack.c.b16 %v10034, %v10026
    %v11243 = vpack.c.b16 %v10043, %v10035
    %v11244 = vpack.c.b16 %v10044, %v10036
    %v11245 = vpack.c.b16 %v10045, %v10037
    %v11246 = vpack.c.b16 %v10046, %v10038
    %v11247 = vpack.c.b16 %v10047, %v10039
    %v11248 = vpack.c.b16 %v10048, %v10040
    %v11249 = vpack.c.b16 %v10049, %v10041
    %v11250 = vpack.c.b16 %v10050, %v10042
    %v11251 = vpack.c.b16 %v10059, %v10051
    %v11252 = vpack.c.b16 %v10060, %v10052
    %v11253 = vpack.c.b16 %v10061, %v10053
    %v11254 = vpack.c.b16 %v10062, %v10054
    %v11255 = vpack.c.b16 %v10063, %v10055
    %v11256 = vpack.c.b16 %v10064, %v10056
    %v11257 = vpack.c.b16 %v10065, %v10057
    %v11258 = vpack.c.b16 %v10066, %v10058
    %v11259 = vpack.c.b16 %v10075, %v10067
    %v11260 = vpack.c.b16 %v10076, %v10068
    %v11261 = vpack.c.b16 %v10077, %v10069
    %v11262 = vpack.c.b16 %v10078, %v10070
    %v11263 = vpack.c.b16 %v10079, %v10071
    %v11264 = vpack.c.b16 %v10080, %v10072
    %v11265 = vpack.c.b16 %v10081, %v10073
    %v11266 = vpack.c.b16 %v10082, %v10074
    %v11267 = vpack.c.b16 %v10091, %v10083
    %v11268 = vpack.c.b16 %v10092, %v10084
    %v11269 = vpack.c.b16 %v10093, %v10085
    %v11270 = vpack.c.b16 %v10094, %v10086
    %v11271 = vpack.c.b16 %v10095, %v10087
    %v11272 = vpack.c.b16 %v10096, %v10088
    %v11273 = vpack.c.b16 %v10097, %v10089
    %v11274 = vpack.c.b16 %v10098, %v10090
    %v11275 = vpack.c.b16 %v10107, %v10099
    %v11276 = vpack.c.b16 %v10108, %v10100
    %v11277 = vpack.c.b16 %v10109, %v10101
    %v11278 = vpack.c.b16 %v10110, %v10102
    %v11279 = vpack.c.b16 %v10111, %v10103
    %v11280 = vpack.c.b16 %v10112, %v10104
    %v11281 = vpack.c.b16 %v10113, %v10105
    %v11282 = vpack.c.b16 %v10114, %v10106
    %v11283 = vpack.c.b16 %v10123, %v10115
    %v11284 = vpack.c.b16 %v10124, %v10116
    %v11285 = vpack.c.b16 %v10125, %v10117
    %v11286 = vpack.c.b16 %v10126, %v10118
    %v11287 = vpack.c.b16 %v10127, %v10119
    %v11288 = vpack.c.b16 %v10128, %v10120
    %v11289 = vpack.c.b16 %v10129, %v10121
    %v11290 = vpack.c.b16 %v10130, %v10122
    %v11291 = vpack.c.b16 %v10139, %v10131
    %v11292 = vpack.c.b16 %v10140, %v10132
    %v11293 = vpack.c.b16 %v10141, %v10133
    %v11294 = vpack.c.b16 %v10142, %v10134
    %v11295 = vpack.c.b16 %v10143, %v10135
    %v11296 = vpack.c.b16 %v10144, %v10136
    %v11297 = vpack.c.b16 %v10145, %v10137
    %v11298 = vpack.c.b16 %v10146, %v10138
    %v11299 = vpack.c.b16 %v10155, %v10147
    %v11300 = vpack.c.b16 %v10156, %v10148
    %v11301 = vpack.c.b16 %v10157, %v10149
    %v11302 = vpack.c.b16 %v10158, %v10150
    %v11303 = vpack.c.b16 %v10159, %v10151
    %v11304 = vpack.c.b16 %v10160, %v10152
    %v11305 = vpack.c.b16 %v10161, %v10153
    %v11306 = vpack.c.b16 %v10162, %v10154
    %v11307 = vpack.c.b16 %v10171, %v10163
    %v11308 = vpack.c.b16 %v10172, %v10164
    %v11309 = vpack.c.b16 %v10173, %v10165
    %v11310 = vpack.c.b16 %v10174, %v10166
    %v11311 = vpack.c.b16 %v10175, %v10167
    %v11312 = vpack.c.b16 %v10176, %v10168
    %v11313 = vpack.c.b16 %v10177, %v10169
    %v11314 = vpack.c.b16 %v10178, %v10170
    %v11315 = vpack.c.b16 %v10187, %v10179
    %v11316 = vpack.c.b16 %v10188, %v10180
    %v11317 = vpack.c.b16 %v10189, %v10181
    %v11318 = vpack.c.b16 %v10190, %v10182
    %v11319 = vpack.c.b16 %v10191, %v10183
    %v11320 = vpack.c.b16 %v10192, %v10184
    %v11321 = vpack.c.b16 %v10193, %v10185
    %v11322 = vpack.c.b16 %v10194, %v10186
    %v11323 = vpack.c.b16 %v10203, %v10195
    %v11324 = vpack.c.b16 %v10204, %v10196
    %v11325 = vpack.c.b16 %v10205, %v10197
    %v11326 = vpack.c.b16 %v10206, %v10198
    %v11327 = vpack.c.b16 %v10207, %v10199
    %v11328 = vpack.c.b16 %v10208, %v10200
    %v11329 = vpack.c.b16 %v10209, %v10201
    %v11330 = vpack.c.b16 %v10210, %v10202
    %v11331 = vpack.c.b16 %v10219, %v10211
    %v11332 = vpack.c.b16 %v10220, %v10212
    %v11333 = vpack.c.b16 %v10221, %v10213
    %v11334 = vpack.c.b16 %v10222, %v10214
    %v11335 = vpack.c.b16 %v10223, %v10215
    %v11336 = vpack.c.b16 %v10224, %v10216
    %v11337 = vpack.c.b16 %v10225, %v10217
    %v11338 = vpack.c.b16 %v10226, %v10218
    %v11339 = vpack.c.b16 %v10235, %v10227
    %v11340 = vpack.c.b16 %v10236, %v10228
    %v11341 = vpack.c.b16 %v10237, %v10229
    %v11342 = vpack.c.b16 %v10238, %v10230
    %v11343 = vpack.c.b16 %v10239, %v10231
    %v11344 = vpack.c.b16 %v10240, %v10232
    %v11345 = vpack.c.b16 %v10241, %v10233
    %v11346 = vpack.c.b16 %v10242, %v10234
    %v11347 = vpack.c.b16 %v10251, %v10243
    %v11348 = vpack.c.b16 %v10252, %v10244
    %v11349 = vpack.c.b16 %v10253, %v10245
    %v11350 = vpack.c.b16 %v10254, %v10246
    %v11351 = vpack.c.b16 %v10255, %v10247
    %v11352 = vpack.c.b16 %v10256, %v10248
    %v11353 = vpack.c.b16 %v10257, %v10249
    %v11354 = vpack.c.b16 %v10258, %v10250
    %v11355 = vpack.c.b16 %v10267, %v10259
    %v11356 = vpack.c.b16 %v10268, %v10260
    %v11357 = vpack.c.b16 %v10269, %v10261
    %v11358 = vpack.c.b16 %v10270, %v10262
    %v11359 = vpack.c.b16 %v10271, %v10263
    %v11360 = vpack.c.b16 %v10272, %v10264
    %v11361 = vpack.c.b16 %v10273, %v10265
    %v11362 = vpack.c.b16 %v10274, %v10266
    %v11363 = vpack.c.b16 %v10283, %v10275
    %v11364 = vpack.c.b16 %v10284, %v10276
    %v11365 = vpack.c.b16 %v10285, %v10277
    %v11366 = vpack.c.b16 %v10286, %v10278
    %v11367 = vpack.c.b16 %v10287, %v10279
    %v11368 = vpack.c.b16 %v10288, %v10280
    %v11369 = vpack.c.b16 %v10289, %v10281
    %v11370 = vpack.c.b16 %v10290, %v10282
    %v11371 = vpack.c.b16 %v10299, %v10291
    %v11372 = vpack.c.b16 %v10300, %v10292
    %v11373 = vpack.c.b16 %v10301, %v10293
    %v11374 = vpack.c.b16 %v10302, %v10294
    %v11375 = vpack.c.b16 %v10303, %v10295
    %v11376 = vpack.c.b16 %v10304, %v10296
    %v11377 = vpack.c.b16 %v10305, %v10297
    %v11378 = vpack.c.b16 %v10306, %v10298
    %v11379 = vpack.c.b16 %v10315, %v10307
    %v11380 = vpack.c.b16 %v10316, %v10308
    %v11381 = vpack.c.b16 %v10317, %v10309
    %v11382 = vpack.c.b16 %v10318, %v10310
    %v11383 = vpack.c.b16 %v10319, %v10311
    %v11384 = vpack.c.b16 %v10320, %v10312
    %v11385 = vpack.c.b16 %v10321, %v10313
    %v11386 = vpack.c.b16 %v10322, %v10314
    %v11387 = vpack.c.b16 %v10331, %v10323
    %v11388 = vpack.c.b16 %v10332, %v10324
    %v11389 = vpack.c.b16 %v10333, %v10325
    %v11390 = vpack.c.b16 %v10334, %v10326
    %v11391 = vpack.c.b16 %v10335, %v10327
    %v11392 = vpack.c.b16 %v10336, %v10328
    %v11393 = vpack.c.b16 %v10337, %v10329
    %v11394 = vpack.c.b16 %v10338, %v10330
    %v11395 = vpack.c.b16 %v10347, %v10339
    %v11396 = vpack.c.b16 %v10348, %v10340
    %v11397 = vpack.c.b16 %v10349, %v10341
    %v11398 = vpack.c.b16 %v10350, %v10342
    %v11399 = vpack.c.b16 %v10351, %v10343
    %v11400 = vpack.c.b16 %v10352, %v10344
    %v11401 = vpack.c.b16 %v10353, %v10345
    %v11402 = vpack.c.b16 %v10354, %v10346
    %v11403 = vpack.c.b16 %v10363, %v10355
    %v11404 = vpack.c.b16 %v10364, %v10356
    %v11405 = vpack.c.b16 %v10365, %v10357
    %v11406 = vpack.c.b16 %v10366, %v10358
    %v11407 = vpack.c.b16 %v10367, %v10359
    %v11408 = vpack.c.b16 %v10368, %v10360
    %v11409 = vpack.c.b16 %v10369, %v10361
    %v11410 = vpack.c.b16 %v10370, %v10362
    %v11411 = vpack.c.b16 %v10379, %v10371
    %v11412 = vpack.c.b16 %v10380, %v10372
    %v11413 = vpack.c.b16 %v10381, %v10373
    %v11414 = vpack.c.b16 %v10382, %v10374
    %v11415 = vpack.c.b16 %v10383, %v10375
    %v11416 = vpack.c.b16 %v10384, %v10376
    %v11417 = vpack.c.b16 %v10385, %v10377
    %v11418 = vpack.c.b16 %v10386, %v10378
    %v11419 = vpack.c.b16 %v10395, %v10387
    %v11420 = vpack.c.b16 %v10396, %v10388
    %v11421 = vpack.c.b16 %v10397, %v10389
    %v11422 = vpack.c.b16 %v10398, %v10390
    %v11423 = vpack.c.b16 %v10399, %v10391
    %v11424 = vpack.c.b16 %v10400, %v10392
    %v11425 = vpack.c.b16 %v10401, %v10393
    %v11426 = vpack.c.b16 %v10402, %v10394
    %12451 = vmatprep.subr.bf16.mxu0 %v10404
    %12452 = vmatpush1.bf16.msra.mxu0 %v10403
    %12453 = vmatprep.subr.bf16.mxu0 %v10412
    %12454 = vmatpush1.bf16.msra.mxu0 %v10411
    %12455 = vmatprep.subr.bf16.mxu0 %v10420
    %12456 = vmatpush1.bf16.msra.mxu0 %v10419
    %12457 = vmatprep.subr.bf16.mxu0 %v10428
    %12458 = vmatpush1.bf16.msra.mxu0 %v10427
    %12459 = vmatprep.subr.bf16.mxu0 %v10436
    %12460 = vmatpush1.bf16.msra.mxu0 %v10435
    %12461 = vmatprep.subr.bf16.mxu0 %v10444
    %12462 = vmatpush1.bf16.msra.mxu0 %v10443
    %12463 = vmatprep.subr.bf16.mxu0 %v10452
    %12464 = vmatpush1.bf16.msra.mxu0 %v10451
    %12465 = vmatprep.subr.bf16.mxu0 %v10460
    %12466 = vmatpush1.bf16.msra.mxu0 %v10459
    %12467 = vmatprep.subr.bf16.mxu0 %v10468
    %12468 = vmatpush1.bf16.msra.mxu0 %v10467
    %12469 = vmatprep.subr.bf16.mxu0 %v10476
    %12470 = vmatpush1.bf16.msra.mxu0 %v10475
    %12471 = vmatprep.subr.bf16.mxu0 %v10484
    %12472 = vmatpush1.bf16.msra.mxu0 %v10483
    %12473 = vmatprep.subr.bf16.mxu0 %v10492
    %12474 = vmatpush1.bf16.msra.mxu0 %v10491
    %12475 = vmatprep.subr.bf16.mxu0 %v10500
    %12476 = vmatpush1.bf16.msra.mxu0 %v10499
    %12477 = vmatprep.subr.bf16.mxu0 %v10508
    %12478 = vmatpush1.bf16.msra.mxu0 %v10507
    %12479 = vmatprep.subr.bf16.mxu0 %v10516
    %12480 = vmatpush1.bf16.msra.mxu0 %v10515
    %12481 = vmatprep.subr.bf16.mxu0 %v10524
    %12482 = vmatpush1.bf16.msra.mxu0 %v10523
    %12483 = vmatprep.mubr.bf16.mxu0 %v6250
    %12484 = vmatmul.mubr.bf16.gmra.mrb[0].mxu0 %v6249
    %v12485 = vpop.f32.mrb[0].mxu0
    %v12486 = vadd.f32 %v7294, %v12485
    %v12487 = vpop.f32.mrb[0].mxu0
    %v12488 = vadd.f32 %v7298, %v12487
    %v12489 = vpop.f32.mrb[0].mxu0
    %v12490 = vpop.f32.mrb[0].mxu0
    %12491 = vdwg.mxu0
    %12492 = vmatprep.subr.bf16.mxu0 %v10532
    %12493 = vmatpush1.bf16.msra.mxu0 %v10531
    %12494 = vmatprep.subr.bf16.mxu0 %v10540
    %12495 = vmatpush1.bf16.msra.mxu0 %v10539
    %12496 = vmatprep.subr.bf16.mxu0 %v10548
    %12497 = vmatpush1.bf16.msra.mxu0 %v10547
    %12498 = vmatprep.subr.bf16.mxu0 %v10556
    %12499 = vmatpush1.bf16.msra.mxu0 %v10555
    %12500 = vmatprep.subr.bf16.mxu0 %v10564
    %12501 = vmatpush1.bf16.msra.mxu0 %v10563
    %12502 = vmatprep.subr.bf16.mxu0 %v10572
    %12503 = vmatpush1.bf16.msra.mxu0 %v10571
    %12504 = vmatprep.subr.bf16.mxu0 %v10580
    %12505 = vmatpush1.bf16.msra.mxu0 %v10579
    %12506 = vmatprep.subr.bf16.mxu0 %v10588
    %12507 = vmatpush1.bf16.msra.mxu0 %v10587
    %12508 = vmatprep.subr.bf16.mxu0 %v10596
    %12509 = vmatpush1.bf16.msra.mxu0 %v10595
    %12510 = vmatprep.subr.bf16.mxu0 %v10604
    %12511 = vmatpush1.bf16.msra.mxu0 %v10603
    %12512 = vmatprep.subr.bf16.mxu0 %v10612
    %12513 = vmatpush1.bf16.msra.mxu0 %v10611
    %12514 = vmatprep.subr.bf16.mxu0 %v10620
    %12515 = vmatpush1.bf16.msra.mxu0 %v10619
    %12516 = vmatprep.subr.bf16.mxu0 %v10628
    %12517 = vmatpush1.bf16.msra.mxu0 %v10627
    %12518 = vmatprep.subr.bf16.mxu0 %v10636
    %12519 = vmatpush1.bf16.msra.mxu0 %v10635
    %12520 = vmatprep.subr.bf16.mxu0 %v10644
    %12521 = vmatpush1.bf16.msra.mxu0 %v10643
    %12522 = vmatprep.subr.bf16.mxu0 %v10652
    %12523 = vmatpush1.bf16.msra.mxu0 %v10651
    %12524 = vmatprep.mubr.bf16.mxu0 %v6252
    %12525 = vmatmul.mubr.bf16.gmra.mrb[0].mxu0 %v6251
    %v12526 = vpop.f32.mrb[0].mxu0
    %v12527 = vadd.f32 %v12486, %v12526
    %v12528 = vpop.f32.mrb[0].mxu0
    %v12529 = vadd.f32 %v12488, %v12528
    %v12530 = vpop.f32.mrb[0].mxu0
    %v12531 = vpop.f32.mrb[0].mxu0
    %12532 = vdwg.mxu0
    %12533 = vmatprep.subr.bf16.mxu0 %v10660
    %12534 = vmatpush1.bf16.msra.mxu0 %v10659
    %12535 = vmatprep.subr.bf16.mxu0 %v10668
    %12536 = vmatpush1.bf16.msra.mxu0 %v10667
    %12537 = vmatprep.subr.bf16.mxu0 %v10676
    %12538 = vmatpush1.bf16.msra.mxu0 %v10675
    %12539 = vmatprep.subr.bf16.mxu0 %v10684
    %12540 = vmatpush1.bf16.msra.mxu0 %v10683
    %12541 = vmatprep.subr.bf16.mxu0 %v10692
    %12542 = vmatpush1.bf16.msra.mxu0 %v10691
    %12543 = vmatprep.subr.bf16.mxu0 %v10700
    %12544 = vmatpush1.bf16.msra.mxu0 %v10699
    %12545 = vmatprep.subr.bf16.mxu0 %v10708
    %12546 = vmatpush1.bf16.msra.mxu0 %v10707
    %12547 = vmatprep.subr.bf16.mxu0 %v10716
    %12548 = vmatpush1.bf16.msra.mxu0 %v10715
    %12549 = vmatprep.subr.bf16.mxu0 %v10724
    %12550 = vmatpush1.bf16.msra.mxu0 %v10723
    %12551 = vmatprep.subr.bf16.mxu0 %v10732
    %12552 = vmatpush1.bf16.msra.mxu0 %v10731
    %12553 = vmatprep.subr.bf16.mxu0 %v10740
    %12554 = vmatpush1.bf16.msra.mxu0 %v10739
    %12555 = vmatprep.subr.bf16.mxu0 %v10748
    %12556 = vmatpush1.bf16.msra.mxu0 %v10747
    %12557 = vmatprep.subr.bf16.mxu0 %v10756
    %12558 = vmatpush1.bf16.msra.mxu0 %v10755
    %12559 = vmatprep.subr.bf16.mxu0 %v10764
    %12560 = vmatpush1.bf16.msra.mxu0 %v10763
    %12561 = vmatprep.subr.bf16.mxu0 %v10772
    %12562 = vmatpush1.bf16.msra.mxu0 %v10771
    %12563 = vmatprep.subr.bf16.mxu0 %v10780
    %12564 = vmatpush1.bf16.msra.mxu0 %v10779
    %12565 = vmatprep.mubr.bf16.mxu0 %v6254
    %12566 = vmatmul.mubr.bf16.gmra.mrb[0].mxu0 %v6253
    %v12567 = vpop.f32.mrb[0].mxu0
    %v12568 = vadd.f32 %v12527, %v12567
    %v12569 = vpop.f32.mrb[0].mxu0
    %v12570 = vadd.f32 %v12529, %v12569
    %v12571 = vpop.f32.mrb[0].mxu0
    %v12572 = vpop.f32.mrb[0].mxu0
    %12573 = vdwg.mxu0
    %12574 = vmatprep.subr.bf16.mxu0 %v10788
    %12575 = vmatpush1.bf16.msra.mxu0 %v10787
    %12576 = vmatprep.subr.bf16.mxu0 %v10796
    %12577 = vmatpush1.bf16.msra.mxu0 %v10795
    %12578 = vmatprep.subr.bf16.mxu0 %v10804
    %12579 = vmatpush1.bf16.msra.mxu0 %v10803
    %12580 = vmatprep.subr.bf16.mxu0 %v10812
    %12581 = vmatpush1.bf16.msra.mxu0 %v10811
    %12582 = vmatprep.subr.bf16.mxu0 %v10820
    %12583 = vmatpush1.bf16.msra.mxu0 %v10819
    %12584 = vmatprep.subr.bf16.mxu0 %v10828
    %12585 = vmatpush1.bf16.msra.mxu0 %v10827
    %12586 = vmatprep.subr.bf16.mxu0 %v10836
    %12587 = vmatpush1.bf16.msra.mxu0 %v10835
    %12588 = vmatprep.subr.bf16.mxu0 %v10844
    %12589 = vmatpush1.bf16.msra.mxu0 %v10843
    %12590 = vmatprep.subr.bf16.mxu0 %v10852
    %12591 = vmatpush1.bf16.msra.mxu0 %v10851
    %12592 = vmatprep.subr.bf16.mxu0 %v10860
    %12593 = vmatpush1.bf16.msra.mxu0 %v10859
    %12594 = vmatprep.subr.bf16.mxu0 %v10868
    %12595 = vmatpush1.bf16.msra.mxu0 %v10867
    %12596 = vmatprep.subr.bf16.mxu0 %v10876
    %12597 = vmatpush1.bf16.msra.mxu0 %v10875
    %12598 = vmatprep.subr.bf16.mxu0 %v10884
    %12599 = vmatpush1.bf16.msra.mxu0 %v10883
    %12600 = vmatprep.subr.bf16.mxu0 %v10892
    %12601 = vmatpush1.bf16.msra.mxu0 %v10891
    %12602 = vmatprep.subr.bf16.mxu0 %v10900
    %12603 = vmatpush1.bf16.msra.mxu0 %v10899
    %12604 = vmatprep.subr.bf16.mxu0 %v10908
    %12605 = vmatpush1.bf16.msra.mxu0 %v10907
    %12606 = vmatprep.mubr.bf16.mxu0 %v6256
    %12607 = vmatmul.mubr.bf16.gmra.mrb[0].mxu0 %v6255
    %v12608 = vpop.f32.mrb[0].mxu0
    %v12609 = vadd.f32 %v12568, %v12608
    %v12610 = vpop.f32.mrb[0].mxu0
    %v12611 = vadd.f32 %v12570, %v12610
    %v12612 = vpop.f32.mrb[0].mxu0
    %v12613 = vpop.f32.mrb[0].mxu0
    %12614 = vdwg.mxu0
    %12615 = vmatprep.subr.bf16.mxu0 %v10916
    %12616 = vmatpush1.bf16.msra.mxu0 %v10915
    %12617 = vmatprep.subr.bf16.mxu0 %v10924
    %12618 = vmatpush1.bf16.msra.mxu0 %v10923
    %12619 = vmatprep.subr.bf16.mxu0 %v10932
    %12620 = vmatpush1.bf16.msra.mxu0 %v10931
    %12621 = vmatprep.subr.bf16.mxu0 %v10940
    %12622 = vmatpush1.bf16.msra.mxu0 %v10939
    %12623 = vmatprep.subr.bf16.mxu0 %v10948
    %12624 = vmatpush1.bf16.msra.mxu0 %v10947
    %12625 = vmatprep.subr.bf16.mxu0 %v10956
    %12626 = vmatpush1.bf16.msra.mxu0 %v10955
    %12627 = vmatprep.subr.bf16.mxu0 %v10964
    %12628 = vmatpush1.bf16.msra.mxu0 %v10963
    %12629 = vmatprep.subr.bf16.mxu0 %v10972
    %12630 = vmatpush1.bf16.msra.mxu0 %v10971
    %12631 = vmatprep.subr.bf16.mxu0 %v10980
    %12632 = vmatpush1.bf16.msra.mxu0 %v10979
    %12633 = vmatprep.subr.bf16.mxu0 %v10988
    %12634 = vmatpush1.bf16.msra.mxu0 %v10987
    %12635 = vmatprep.subr.bf16.mxu0 %v10996
    %12636 = vmatpush1.bf16.msra.mxu0 %v10995
    %12637 = vmatprep.subr.bf16.mxu0 %v11004
    %12638 = vmatpush1.bf16.msra.mxu0 %v11003
    %12639 = vmatprep.subr.bf16.mxu0 %v11012
    %12640 = vmatpush1.bf16.msra.mxu0 %v11011
    %12641 = vmatprep.subr.bf16.mxu0 %v11020
    %12642 = vmatpush1.bf16.msra.mxu0 %v11019
    %12643 = vmatprep.subr.bf16.mxu0 %v11028
    %12644 = vmatpush1.bf16.msra.mxu0 %v11027
    %12645 = vmatprep.subr.bf16.mxu0 %v11036
    %12646 = vmatpush1.bf16.msra.mxu0 %v11035
    %12647 = vmatprep.mubr.bf16.mxu0 %v6258
    %12648 = vmatmul.mubr.bf16.gmra.mrb[0].mxu0 %v6257
    %v12649 = vpop.f32.mrb[0].mxu0
    %v12650 = vadd.f32 %v12609, %v12649
    %v12651 = vpop.f32.mrb[0].mxu0
    %v12652 = vadd.f32 %v12611, %v12651
    %v12653 = vpop.f32.mrb[0].mxu0
    %v12654 = vpop.f32.mrb[0].mxu0
    %12655 = vdwg.mxu0
    %12656 = vmatprep.subr.bf16.mxu0 %v11044
    %12657 = vmatpush1.bf16.msra.mxu0 %v11043
    %12658 = vmatprep.subr.bf16.mxu0 %v11052
    %12659 = vmatpush1.bf16.msra.mxu0 %v11051
    %12660 = vmatprep.subr.bf16.mxu0 %v11060
    %12661 = vmatpush1.bf16.msra.mxu0 %v11059
    %12662 = vmatprep.subr.bf16.mxu0 %v11068
    %12663 = vmatpush1.bf16.msra.mxu0 %v11067
    %12664 = vmatprep.subr.bf16.mxu0 %v11076
    %12665 = vmatpush1.bf16.msra.mxu0 %v11075
    %12666 = vmatprep.subr.bf16.mxu0 %v11084
    %12667 = vmatpush1.bf16.msra.mxu0 %v11083
    %12668 = vmatprep.subr.bf16.mxu0 %v11092
    %12669 = vmatpush1.bf16.msra.mxu0 %v11091
    %12670 = vmatprep.subr.bf16.mxu0 %v11100
    %12671 = vmatpush1.bf16.msra.mxu0 %v11099
    %12672 = vmatprep.subr.bf16.mxu0 %v11108
    %12673 = vmatpush1.bf16.msra.mxu0 %v11107
    %12674 = vmatprep.subr.bf16.mxu0 %v11116
    %12675 = vmatpush1.bf16.msra.mxu0 %v11115
    %12676 = vmatprep.subr.bf16.mxu0 %v11124
    %12677 = vmatpush1.bf16.msra.mxu0 %v11123
    %12678 = vmatprep.subr.bf16.mxu0 %v11132
    %12679 = vmatpush1.bf16.msra.mxu0 %v11131
    %12680 = vmatprep.subr.bf16.mxu0 %v11140
    %12681 = vmatpush1.bf16.msra.mxu0 %v11139
    %12682 = vmatprep.subr.bf16.mxu0 %v11148
    %12683 = vmatpush1.bf16.msra.mxu0 %v11147
    %12684 = vmatprep.subr.bf16.mxu0 %v11156
    %12685 = vmatpush1.bf16.msra.mxu0 %v11155
    %12686 = vmatprep.subr.bf16.mxu0 %v11164
    %12687 = vmatpush1.bf16.msra.mxu0 %v11163
    %12688 = vmatprep.mubr.bf16.mxu0 %v6260
    %12689 = vmatmul.mubr.bf16.gmra.mrb[0].mxu0 %v6259
    %v12690 = vpop.f32.mrb[0].mxu0
    %v12691 = vadd.f32 %v12650, %v12690
    %v12692 = vpop.f32.mrb[0].mxu0
    %v12693 = vadd.f32 %v12652, %v12692
    %v12694 = vpop.f32.mrb[0].mxu0
    %v12695 = vpop.f32.mrb[0].mxu0
    %12696 = vdwg.mxu0
    %12697 = vmatprep.subr.bf16.mxu0 %v11172
    %12698 = vmatpush1.bf16.msra.mxu0 %v11171
    %12699 = vmatprep.subr.bf16.mxu0 %v11180
    %12700 = vmatpush1.bf16.msra.mxu0 %v11179
    %12701 = vmatprep.subr.bf16.mxu0 %v11188
    %12702 = vmatpush1.bf16.msra.mxu0 %v11187
    %12703 = vmatprep.subr.bf16.mxu0 %v11196
    %12704 = vmatpush1.bf16.msra.mxu0 %v11195
    %12705 = vmatprep.subr.bf16.mxu0 %v11204
    %12706 = vmatpush1.bf16.msra.mxu0 %v11203
    %12707 = vmatprep.subr.bf16.mxu0 %v11212
    %12708 = vmatpush1.bf16.msra.mxu0 %v11211
    %12709 = vmatprep.subr.bf16.mxu0 %v11220
    %12710 = vmatpush1.bf16.msra.mxu0 %v11219
    %12711 = vmatprep.subr.bf16.mxu0 %v11228
    %12712 = vmatpush1.bf16.msra.mxu0 %v11227
    %12713 = vmatprep.subr.bf16.mxu0 %v11236
    %12714 = vmatpush1.bf16.msra.mxu0 %v11235
    %12715 = vmatprep.subr.bf16.mxu0 %v11244
    %12716 = vmatpush1.bf16.msra.mxu0 %v11243
    %12717 = vmatprep.subr.bf16.mxu0 %v11252
    %12718 = vmatpush1.bf16.msra.mxu0 %v11251
    %12719 = vmatprep.subr.bf16.mxu0 %v11260
    %12720 = vmatpush1.bf16.msra.mxu0 %v11259
    %12721 = vmatprep.subr.bf16.mxu0 %v11268
    %12722 = vmatpush1.bf16.msra.mxu0 %v11267
    %12723 = vmatprep.subr.bf16.mxu0 %v11276
    %12724 = vmatpush1.bf16.msra.mxu0 %v11275
    %12725 = vmatprep.subr.bf16.mxu0 %v11284
    %12726 = vmatpush1.bf16.msra.mxu0 %v11283
    %12727 = vmatprep.subr.bf16.mxu0 %v11292
    %12728 = vmatpush1.bf16.msra.mxu0 %v11291
    %12729 = vmatprep.mubr.bf16.mxu0 %v6262
    %12730 = vmatmul.mubr.bf16.gmra.mrb[0].mxu0 %v6261
    %v12731 = vpop.f32.mrb[0].mxu0
    %v12732 = vadd.f32 %v12691, %v12731
    %v12733 = vpop.f32.mrb[0].mxu0
    %v12734 = vadd.f32 %v12693, %v12733
    %v12735 = vpop.f32.mrb[0].mxu0
    %v12736 = vpop.f32.mrb[0].mxu0
    %12737 = vdwg.mxu0
    %12738 = vmatprep.subr.bf16.mxu0 %v11300
    %12739 = vmatpush1.bf16.msra.mxu0 %v11299
    %12740 = vmatprep.subr.bf16.mxu0 %v11308
    %12741 = vmatpush1.bf16.msra.mxu0 %v11307
    %12742 = vmatprep.subr.bf16.mxu0 %v11316
    %12743 = vmatpush1.bf16.msra.mxu0 %v11315
    %12744 = vmatprep.subr.bf16.mxu0 %v11324
    %12745 = vmatpush1.bf16.msra.mxu0 %v11323
    %12746 = vmatprep.subr.bf16.mxu0 %v11332
    %12747 = vmatpush1.bf16.msra.mxu0 %v11331
    %12748 = vmatprep.subr.bf16.mxu0 %v11340
    %12749 = vmatpush1.bf16.msra.mxu0 %v11339
    %12750 = vmatprep.subr.bf16.mxu0 %v11348
    %12751 = vmatpush1.bf16.msra.mxu0 %v11347
    %12752 = vmatprep.subr.bf16.mxu0 %v11356
    %12753 = vmatpush1.bf16.msra.mxu0 %v11355
    %12754 = vmatprep.subr.bf16.mxu0 %v11364
    %12755 = vmatpush1.bf16.msra.mxu0 %v11363
    %12756 = vmatprep.subr.bf16.mxu0 %v11372
    %12757 = vmatpush1.bf16.msra.mxu0 %v11371
    %12758 = vmatprep.subr.bf16.mxu0 %v11380
    %12759 = vmatpush1.bf16.msra.mxu0 %v11379
    %12760 = vmatprep.subr.bf16.mxu0 %v11388
    %12761 = vmatpush1.bf16.msra.mxu0 %v11387
    %12762 = vmatprep.subr.bf16.mxu0 %v11396
    %12763 = vmatpush1.bf16.msra.mxu0 %v11395
    %12764 = vmatprep.subr.bf16.mxu0 %v11404
    %12765 = vmatpush1.bf16.msra.mxu0 %v11403
    %12766 = vmatprep.subr.bf16.mxu0 %v11412
    %12767 = vmatpush1.bf16.msra.mxu0 %v11411
    %12768 = vmatprep.subr.bf16.mxu0 %v11420
    %12769 = vmatpush1.bf16.msra.mxu0 %v11419
    %12770 = vmatprep.mubr.bf16.mxu0 %v6264
    %12771 = vmatmul.mubr.bf16.gmra.mrb[0].mxu0 %v6263
    %v12772 = vpop.f32.mrb[0].mxu0
    %v12773 = vadd.f32 %v12732, %v12772
    %v12774 = vpop.f32.mrb[0].mxu0
    %v12775 = vadd.f32 %v12734, %v12774
    %v12776 = vpop.f32.mrb[0].mxu0
    %v12777 = vpop.f32.mrb[0].mxu0
    %12778 = vdwg.mxu0
    %12779 = vmatprep.subr.bf16.mxu0 %v10406
    %12780 = vmatpush1.bf16.msra.mxu0 %v10405
    %12781 = vmatprep.subr.bf16.mxu0 %v10414
    %12782 = vmatpush1.bf16.msra.mxu0 %v10413
    %12783 = vmatprep.subr.bf16.mxu0 %v10422
    %12784 = vmatpush1.bf16.msra.mxu0 %v10421
    %12785 = vmatprep.subr.bf16.mxu0 %v10430
    %12786 = vmatpush1.bf16.msra.mxu0 %v10429
    %12787 = vmatprep.subr.bf16.mxu0 %v10438
    %12788 = vmatpush1.bf16.msra.mxu0 %v10437
    %12789 = vmatprep.subr.bf16.mxu0 %v10446
    %12790 = vmatpush1.bf16.msra.mxu0 %v10445
    %12791 = vmatprep.subr.bf16.mxu0 %v10454
    %12792 = vmatpush1.bf16.msra.mxu0 %v10453
    %12793 = vmatprep.subr.bf16.mxu0 %v10462
    %12794 = vmatpush1.bf16.msra.mxu0 %v10461
    %12795 = vmatprep.subr.bf16.mxu0 %v10470
    %12796 = vmatpush1.bf16.msra.mxu0 %v10469
    %12797 = vmatprep.subr.bf16.mxu0 %v10478
    %12798 = vmatpush1.bf16.msra.mxu0 %v10477
    %12799 = vmatprep.subr.bf16.mxu0 %v10486
    %12800 = vmatpush1.bf16.msra.mxu0 %v10485
    %12801 = vmatprep.subr.bf16.mxu0 %v10494
    %12802 = vmatpush1.bf16.msra.mxu0 %v10493
    %12803 = vmatprep.subr.bf16.mxu0 %v10502
    %12804 = vmatpush1.bf16.msra.mxu0 %v10501
    %12805 = vmatprep.subr.bf16.mxu0 %v10510
    %12806 = vmatpush1.bf16.msra.mxu0 %v10509
    %12807 = vmatprep.subr.bf16.mxu0 %v10518
    %12808 = vmatpush1.bf16.msra.mxu0 %v10517
    %12809 = vmatprep.subr.bf16.mxu0 %v10526
    %12810 = vmatpush1.bf16.msra.mxu0 %v10525
    %12811 = vmatprep.mubr.bf16.mxu0 %v6250
    %12812 = vmatmul.mubr.bf16.gmra.mrb[0].mxu0 %v6249
    %v12813 = vpop.f32.mrb[0].mxu0
    %v12814 = vadd.f32 %v7302, %v12813
    %v12815 = vpop.f32.mrb[0].mxu0
    %v12816 = vadd.f32 %v7306, %v12815
    %v12817 = vpop.f32.mrb[0].mxu0
    %v12818 = vpop.f32.mrb[0].mxu0
    %12819 = vdwg.mxu0
    %12820 = vmatprep.subr.bf16.mxu0 %v10534
    %12821 = vmatpush1.bf16.msra.mxu0 %v10533
    %12822 = vmatprep.subr.bf16.mxu0 %v10542
    %12823 = vmatpush1.bf16.msra.mxu0 %v10541
    %12824 = vmatprep.subr.bf16.mxu0 %v10550
    %12825 = vmatpush1.bf16.msra.mxu0 %v10549
    %12826 = vmatprep.subr.bf16.mxu0 %v10558
    %12827 = vmatpush1.bf16.msra.mxu0 %v10557
    %12828 = vmatprep.subr.bf16.mxu0 %v10566
    %12829 = vmatpush1.bf16.msra.mxu0 %v10565
    %12830 = vmatprep.subr.bf16.mxu0 %v10574
    %12831 = vmatpush1.bf16.msra.mxu0 %v10573
    %12832 = vmatprep.subr.bf16.mxu0 %v10582
    %12833 = vmatpush1.bf16.msra.mxu0 %v10581
    %12834 = vmatprep.subr.bf16.mxu0 %v10590
    %12835 = vmatpush1.bf16.msra.mxu0 %v10589
    %12836 = vmatprep.subr.bf16.mxu0 %v10598
    %12837 = vmatpush1.bf16.msra.mxu0 %v10597
    %12838 = vmatprep.subr.bf16.mxu0 %v10606
    %12839 = vmatpush1.bf16.msra.mxu0 %v10605
    %12840 = vmatprep.subr.bf16.mxu0 %v10614
    %12841 = vmatpush1.bf16.msra.mxu0 %v10613
    %12842 = vmatprep.subr.bf16.mxu0 %v10622
    %12843 = vmatpush1.bf16.msra.mxu0 %v10621
    %12844 = vmatprep.subr.bf16.mxu0 %v10630
    %12845 = vmatpush1.bf16.msra.mxu0 %v10629
    %12846 = vmatprep.subr.bf16.mxu0 %v10638
    %12847 = vmatpush1.bf16.msra.mxu0 %v10637
    %12848 = vmatprep.subr.bf16.mxu0 %v10646
    %12849 = vmatpush1.bf16.msra.mxu0 %v10645
    %12850 = vmatprep.subr.bf16.mxu0 %v10654
    %12851 = vmatpush1.bf16.msra.mxu0 %v10653
    %12852 = vmatprep.mubr.bf16.mxu0 %v6252
    %12853 = vmatmul.mubr.bf16.gmra.mrb[0].mxu0 %v6251
    %v12854 = vpop.f32.mrb[0].mxu0
    %v12855 = vadd.f32 %v12814, %v12854
    %v12856 = vpop.f32.mrb[0].mxu0
    %v12857 = vadd.f32 %v12816, %v12856
    %v12858 = vpop.f32.mrb[0].mxu0
    %v12859 = vpop.f32.mrb[0].mxu0
    %12860 = vdwg.mxu0
    %12861 = vmatprep.subr.bf16.mxu0 %v10662
    %12862 = vmatpush1.bf16.msra.mxu0 %v10661
    %12863 = vmatprep.subr.bf16.mxu0 %v10670
    %12864 = vmatpush1.bf16.msra.mxu0 %v10669
    %12865 = vmatprep.subr.bf16.mxu0 %v10678
    %12866 = vmatpush1.bf16.msra.mxu0 %v10677
    %12867 = vmatprep.subr.bf16.mxu0 %v10686
    %12868 = vmatpush1.bf16.msra.mxu0 %v10685
    %12869 = vmatprep.subr.bf16.mxu0 %v10694
    %12870 = vmatpush1.bf16.msra.mxu0 %v10693
    %12871 = vmatprep.subr.bf16.mxu0 %v10702
    %12872 = vmatpush1.bf16.msra.mxu0 %v10701
    %12873 = vmatprep.subr.bf16.mxu0 %v10710
    %12874 = vmatpush1.bf16.msra.mxu0 %v10709
    %12875 = vmatprep.subr.bf16.mxu0 %v10718
    %12876 = vmatpush1.bf16.msra.mxu0 %v10717
    %12877 = vmatprep.subr.bf16.mxu0 %v10726
    %12878 = vmatpush1.bf16.msra.mxu0 %v10725
    %12879 = vmatprep.subr.bf16.mxu0 %v10734
    %12880 = vmatpush1.bf16.msra.mxu0 %v10733
    %12881 = vmatprep.subr.bf16.mxu0 %v10742
    %12882 = vmatpush1.bf16.msra.mxu0 %v10741
    %12883 = vmatprep.subr.bf16.mxu0 %v10750
    %12884 = vmatpush1.bf16.msra.mxu0 %v10749
    %12885 = vmatprep.subr.bf16.mxu0 %v10758
    %12886 = vmatpush1.bf16.msra.mxu0 %v10757
    %12887 = vmatprep.subr.bf16.mxu0 %v10766
    %12888 = vmatpush1.bf16.msra.mxu0 %v10765
    %12889 = vmatprep.subr.bf16.mxu0 %v10774
    %12890 = vmatpush1.bf16.msra.mxu0 %v10773
    %12891 = vmatprep.subr.bf16.mxu0 %v10782
    %12892 = vmatpush1.bf16.msra.mxu0 %v10781
    %12893 = vmatprep.mubr.bf16.mxu0 %v6254
    %12894 = vmatmul.mubr.bf16.gmra.mrb[0].mxu0 %v6253
    %v12895 = vpop.f32.mrb[0].mxu0
    %v12896 = vadd.f32 %v12855, %v12895
    %v12897 = vpop.f32.mrb[0].mxu0
    %v12898 = vadd.f32 %v12857, %v12897
    %v12899 = vpop.f32.mrb[0].mxu0
    %v12900 = vpop.f32.mrb[0].mxu0
    %12901 = vdwg.mxu0
    %12902 = vmatprep.subr.bf16.mxu0 %v10790
    %12903 = vmatpush1.bf16.msra.mxu0 %v10789
    %12904 = vmatprep.subr.bf16.mxu0 %v10798
    %12905 = vmatpush1.bf16.msra.mxu0 %v10797
    %12906 = vmatprep.subr.bf16.mxu0 %v10806
    %12907 = vmatpush1.bf16.msra.mxu0 %v10805
    %12908 = vmatprep.subr.bf16.mxu0 %v10814
    %12909 = vmatpush1.bf16.msra.mxu0 %v10813
    %12910 = vmatprep.subr.bf16.mxu0 %v10822
    %12911 = vmatpush1.bf16.msra.mxu0 %v10821
    %12912 = vmatprep.subr.bf16.mxu0 %v10830
    %12913 = vmatpush1.bf16.msra.mxu0 %v10829
    %12914 = vmatprep.subr.bf16.mxu0 %v10838
    %12915 = vmatpush1.bf16.msra.mxu0 %v10837
    %12916 = vmatprep.subr.bf16.mxu0 %v10846
    %12917 = vmatpush1.bf16.msra.mxu0 %v10845
    %12918 = vmatprep.subr.bf16.mxu0 %v10854
    %12919 = vmatpush1.bf16.msra.mxu0 %v10853
    %12920 = vmatprep.subr.bf16.mxu0 %v10862
    %12921 = vmatpush1.bf16.msra.mxu0 %v10861
    %12922 = vmatprep.subr.bf16.mxu0 %v10870
    %12923 = vmatpush1.bf16.msra.mxu0 %v10869
    %12924 = vmatprep.subr.bf16.mxu0 %v10878
    %12925 = vmatpush1.bf16.msra.mxu0 %v10877
    %12926 = vmatprep.subr.bf16.mxu0 %v10886
    %12927 = vmatpush1.bf16.msra.mxu0 %v10885
    %12928 = vmatprep.subr.bf16.mxu0 %v10894
    %12929 = vmatpush1.bf16.msra.mxu0 %v10893
    %12930 = vmatprep.subr.bf16.mxu0 %v10902
    %12931 = vmatpush1.bf16.msra.mxu0 %v10901
    %12932 = vmatprep.subr.bf16.mxu0 %v10910
    %12933 = vmatpush1.bf16.msra.mxu0 %v10909
    %12934 = vmatprep.mubr.bf16.mxu0 %v6256
    %12935 = vmatmul.mubr.bf16.gmra.mrb[0].mxu0 %v6255
    %v12936 = vpop.f32.mrb[0].mxu0
    %v12937 = vadd.f32 %v12896, %v12936
    %v12938 = vpop.f32.mrb[0].mxu0
    %v12939 = vadd.f32 %v12898, %v12938
    %v12940 = vpop.f32.mrb[0].mxu0
    %v12941 = vpop.f32.mrb[0].mxu0
    %12942 = vdwg.mxu0
    %12943 = vmatprep.subr.bf16.mxu0 %v10918
    %12944 = vmatpush1.bf16.msra.mxu0 %v10917
    %12945 = vmatprep.subr.bf16.mxu0 %v10926
    %12946 = vmatpush1.bf16.msra.mxu0 %v10925
    %12947 = vmatprep.subr.bf16.mxu0 %v10934
    %12948 = vmatpush1.bf16.msra.mxu0 %v10933
    %12949 = vmatprep.subr.bf16.mxu0 %v10942
    %12950 = vmatpush1.bf16.msra.mxu0 %v10941
    %12951 = vmatprep.subr.bf16.mxu0 %v10950
    %12952 = vmatpush1.bf16.msra.mxu0 %v10949
    %12953 = vmatprep.subr.bf16.mxu0 %v10958
    %12954 = vmatpush1.bf16.msra.mxu0 %v10957
    %12955 = vmatprep.subr.bf16.mxu0 %v10966
    %12956 = vmatpush1.bf16.msra.mxu0 %v10965
    %12957 = vmatprep.subr.bf16.mxu0 %v10974
    %12958 = vmatpush1.bf16.msra.mxu0 %v10973
    %12959 = vmatprep.subr.bf16.mxu0 %v10982
    %12960 = vmatpush1.bf16.msra.mxu0 %v10981
    %12961 = vmatprep.subr.bf16.mxu0 %v10990
    %12962 = vmatpush1.bf16.msra.mxu0 %v10989
    %12963 = vmatprep.subr.bf16.mxu0 %v10998
    %12964 = vmatpush1.bf16.msra.mxu0 %v10997
    %12965 = vmatprep.subr.bf16.mxu0 %v11006
    %12966 = vmatpush1.bf16.msra.mxu0 %v11005
    %12967 = vmatprep.subr.bf16.mxu0 %v11014
    %12968 = vmatpush1.bf16.msra.mxu0 %v11013
    %12969 = vmatprep.subr.bf16.mxu0 %v11022
    %12970 = vmatpush1.bf16.msra.mxu0 %v11021
    %12971 = vmatprep.subr.bf16.mxu0 %v11030
    %12972 = vmatpush1.bf16.msra.mxu0 %v11029
    %12973 = vmatprep.subr.bf16.mxu0 %v11038
    %12974 = vmatpush1.bf16.msra.mxu0 %v11037
    %12975 = vmatprep.mubr.bf16.mxu0 %v6258
    %12976 = vmatmul.mubr.bf16.gmra.mrb[0].mxu0 %v6257
    %v12977 = vpop.f32.mrb[0].mxu0
    %v12978 = vadd.f32 %v12937, %v12977
    %v12979 = vpop.f32.mrb[0].mxu0
    %v12980 = vadd.f32 %v12939, %v12979
    %v12981 = vpop.f32.mrb[0].mxu0
    %v12982 = vpop.f32.mrb[0].mxu0
    %12983 = vdwg.mxu0
    %12984 = vmatprep.subr.bf16.mxu0 %v11046
    %12985 = vmatpush1.bf16.msra.mxu0 %v11045
    %12986 = vmatprep.subr.bf16.mxu0 %v11054
    %12987 = vmatpush1.bf16.msra.mxu0 %v11053
    %12988 = vmatprep.subr.bf16.mxu0 %v11062
    %12989 = vmatpush1.bf16.msra.mxu0 %v11061
    %12990 = vmatprep.subr.bf16.mxu0 %v11070
    %12991 = vmatpush1.bf16.msra.mxu0 %v11069
    %12992 = vmatprep.subr.bf16.mxu0 %v11078
    %12993 = vmatpush1.bf16.msra.mxu0 %v11077
    %12994 = vmatprep.subr.bf16.mxu0 %v11086
    %12995 = vmatpush1.bf16.msra.mxu0 %v11085
    %12996 = vmatprep.subr.bf16.mxu0 %v11094
    %12997 = vmatpush1.bf16.msra.mxu0 %v11093
    %12998 = vmatprep.subr.bf16.mxu0 %v11102
    %12999 = vmatpush1.bf16.msra.mxu0 %v11101
    %13000 = vmatprep.subr.bf16.mxu0 %v11110
    %13001 = vmatpush1.bf16.msra.mxu0 %v11109
    %13002 = vmatprep.subr.bf16.mxu0 %v11118
    %13003 = vmatpush1.bf16.msra.mxu0 %v11117
    %13004 = vmatprep.subr.bf16.mxu0 %v11126
    %13005 = vmatpush1.bf16.msra.mxu0 %v11125
    %13006 = vmatprep.subr.bf16.mxu0 %v11134
    %13007 = vmatpush1.bf16.msra.mxu0 %v11133
    %13008 = vmatprep.subr.bf16.mxu0 %v11142
    %13009 = vmatpush1.bf16.msra.mxu0 %v11141
    %13010 = vmatprep.subr.bf16.mxu0 %v11150
    %13011 = vmatpush1.bf16.msra.mxu0 %v11149
    %13012 = vmatprep.subr.bf16.mxu0 %v11158
    %13013 = vmatpush1.bf16.msra.mxu0 %v11157
    %13014 = vmatprep.subr.bf16.mxu0 %v11166
    %13015 = vmatpush1.bf16.msra.mxu0 %v11165
    %13016 = vmatprep.mubr.bf16.mxu0 %v6260
    %13017 = vmatmul.mubr.bf16.gmra.mrb[0].mxu0 %v6259
    %v13018 = vpop.f32.mrb[0].mxu0
    %v13019 = vadd.f32 %v12978, %v13018
    %v13020 = vpop.f32.mrb[0].mxu0
    %v13021 = vadd.f32 %v12980, %v13020
    %v13022 = vpop.f32.mrb[0].mxu0
    %v13023 = vpop.f32.mrb[0].mxu0
    %13024 = vdwg.mxu0
    %13025 = vmatprep.subr.bf16.mxu0 %v11174
    %13026 = vmatpush1.bf16.msra.mxu0 %v11173
    %13027 = vmatprep.subr.bf16.mxu0 %v11182
    %13028 = vmatpush1.bf16.msra.mxu0 %v11181
    %13029 = vmatprep.subr.bf16.mxu0 %v11190
    %13030 = vmatpush1.bf16.msra.mxu0 %v11189
    %13031 = vmatprep.subr.bf16.mxu0 %v11198
    %13032 = vmatpush1.bf16.msra.mxu0 %v11197
    %13033 = vmatprep.subr.bf16.mxu0 %v11206
    %13034 = vmatpush1.bf16.msra.mxu0 %v11205
    %13035 = vmatprep.subr.bf16.mxu0 %v11214
    %13036 = vmatpush1.bf16.msra.mxu0 %v11213
    %13037 = vmatprep.subr.bf16.mxu0 %v11222
    %13038 = vmatpush1.bf16.msra.mxu0 %v11221
    %13039 = vmatprep.subr.bf16.mxu0 %v11230
    %13040 = vmatpush1.bf16.msra.mxu0 %v11229
    %13041 = vmatprep.subr.bf16.mxu0 %v11238
    %13042 = vmatpush1.bf16.msra.mxu0 %v11237
    %13043 = vmatprep.subr.bf16.mxu0 %v11246
    %13044 = vmatpush1.bf16.msra.mxu0 %v11245
    %13045 = vmatprep.subr.bf16.mxu0 %v11254
    %13046 = vmatpush1.bf16.msra.mxu0 %v11253
    %13047 = vmatprep.subr.bf16.mxu0 %v11262
    %13048 = vmatpush1.bf16.msra.mxu0 %v11261
    %13049 = vmatprep.subr.bf16.mxu0 %v11270
    %13050 = vmatpush1.bf16.msra.mxu0 %v11269
    %13051 = vmatprep.subr.bf16.mxu0 %v11278
    %13052 = vmatpush1.bf16.msra.mxu0 %v11277
    %13053 = vmatprep.subr.bf16.mxu0 %v11286
    %13054 = vmatpush1.bf16.msra.mxu0 %v11285
    %13055 = vmatprep.subr.bf16.mxu0 %v11294
    %13056 = vmatpush1.bf16.msra.mxu0 %v11293
    %13057 = vmatprep.mubr.bf16.mxu0 %v6262
    %13058 = vmatmul.mubr.bf16.gmra.mrb[0].mxu0 %v6261
    %v13059 = vpop.f32.mrb[0].mxu0
    %v13060 = vadd.f32 %v13019, %v13059
    %v13061 = vpop.f32.mrb[0].mxu0
    %v13062 = vadd.f32 %v13021, %v13061
    %v13063 = vpop.f32.mrb[0].mxu0
    %v13064 = vpop.f32.mrb[0].mxu0
    %13065 = vdwg.mxu0
    %13066 = vmatprep.subr.bf16.mxu0 %v11302
    %13067 = vmatpush1.bf16.msra.mxu0 %v11301
    %13068 = vmatprep.subr.bf16.mxu0 %v11310
    %13069 = vmatpush1.bf16.msra.mxu0 %v11309
    %13070 = vmatprep.subr.bf16.mxu0 %v11318
    %13071 = vmatpush1.bf16.msra.mxu0 %v11317
    %13072 = vmatprep.subr.bf16.mxu0 %v11326
    %13073 = vmatpush1.bf16.msra.mxu0 %v11325
    %13074 = vmatprep.subr.bf16.mxu0 %v11334
    %13075 = vmatpush1.bf16.msra.mxu0 %v11333
    %13076 = vmatprep.subr.bf16.mxu0 %v11342
    %13077 = vmatpush1.bf16.msra.mxu0 %v11341
    %13078 = vmatprep.subr.bf16.mxu0 %v11350
    %13079 = vmatpush1.bf16.msra.mxu0 %v11349
    %13080 = vmatprep.subr.bf16.mxu0 %v11358
    %13081 = vmatpush1.bf16.msra.mxu0 %v11357
    %13082 = vmatprep.subr.bf16.mxu0 %v11366
    %13083 = vmatpush1.bf16.msra.mxu0 %v11365
    %13084 = vmatprep.subr.bf16.mxu0 %v11374
    %13085 = vmatpush1.bf16.msra.mxu0 %v11373
    %13086 = vmatprep.subr.bf16.mxu0 %v11382
    %13087 = vmatpush1.bf16.msra.mxu0 %v11381
    %13088 = vmatprep.subr.bf16.mxu0 %v11390
    %13089 = vmatpush1.bf16.msra.mxu0 %v11389
    %13090 = vmatprep.subr.bf16.mxu0 %v11398
    %13091 = vmatpush1.bf16.msra.mxu0 %v11397
    %13092 = vmatprep.subr.bf16.mxu0 %v11406
    %13093 = vmatpush1.bf16.msra.mxu0 %v11405
    %13094 = vmatprep.subr.bf16.mxu0 %v11414
    %13095 = vmatpush1.bf16.msra.mxu0 %v11413
    %13096 = vmatprep.subr.bf16.mxu0 %v11422
    %13097 = vmatpush1.bf16.msra.mxu0 %v11421
    %13098 = vmatprep.mubr.bf16.mxu0 %v6264
    %13099 = vmatmul.mubr.bf16.gmra.mrb[0].mxu0 %v6263
    %v13100 = vpop.f32.mrb[0].mxu0
    %v13101 = vadd.f32 %v13060, %v13100
    %v13102 = vpop.f32.mrb[0].mxu0
    %v13103 = vadd.f32 %v13062, %v13102
    %v13104 = vpop.f32.mrb[0].mxu0
    %v13105 = vpop.f32.mrb[0].mxu0
    %13106 = vdwg.mxu0
    %13107 = vmatprep.subr.bf16.mxu0 %v10408
    %13108 = vmatpush1.bf16.msra.mxu0 %v10407
    %13109 = vmatprep.subr.bf16.mxu0 %v10416
    %13110 = vmatpush1.bf16.msra.mxu0 %v10415
    %13111 = vmatprep.subr.bf16.mxu0 %v10424
    %13112 = vmatpush1.bf16.msra.mxu0 %v10423
    %13113 = vmatprep.subr.bf16.mxu0 %v10432
    %13114 = vmatpush1.bf16.msra.mxu0 %v10431
    %13115 = vmatprep.subr.bf16.mxu0 %v10440
    %13116 = vmatpush1.bf16.msra.mxu0 %v10439
    %13117 = vmatprep.subr.bf16.mxu0 %v10448
    %13118 = vmatpush1.bf16.msra.mxu0 %v10447
    %13119 = vmatprep.subr.bf16.mxu0 %v10456
    %13120 = vmatpush1.bf16.msra.mxu0 %v10455
    %13121 = vmatprep.subr.bf16.mxu0 %v10464
    %13122 = vmatpush1.bf16.msra.mxu0 %v10463
    %13123 = vmatprep.subr.bf16.mxu0 %v10472
    %13124 = vmatpush1.bf16.msra.mxu0 %v10471
    %13125 = vmatprep.subr.bf16.mxu0 %v10480
    %13126 = vmatpush1.bf16.msra.mxu0 %v10479
    %13127 = vmatprep.subr.bf16.mxu0 %v10488
    %13128 = vmatpush1.bf16.msra.mxu0 %v10487
    %13129 = vmatprep.subr.bf16.mxu0 %v10496
    %13130 = vmatpush1.bf16.msra.mxu0 %v10495
    %13131 = vmatprep.subr.bf16.mxu0 %v10504
    %13132 = vmatpush1.bf16.msra.mxu0 %v10503
    %13133 = vmatprep.subr.bf16.mxu0 %v10512
    %13134 = vmatpush1.bf16.msra.mxu0 %v10511
    %13135 = vmatprep.subr.bf16.mxu0 %v10520
    %13136 = vmatpush1.bf16.msra.mxu0 %v10519
    %13137 = vmatprep.subr.bf16.mxu0 %v10528
    %13138 = vmatpush1.bf16.msra.mxu0 %v10527
    %13139 = vmatprep.mubr.bf16.mxu0 %v6250
    %13140 = vmatmul.mubr.bf16.gmra.mrb[0].mxu0 %v6249
    %v13141 = vpop.f32.mrb[0].mxu0
    %v13142 = vadd.f32 %v7310, %v13141
    %v13143 = vpop.f32.mrb[0].mxu0
    %v13144 = vadd.f32 %v7314, %v13143
    %v13145 = vpop.f32.mrb[0].mxu0
    %v13146 = vpop.f32.mrb[0].mxu0
    %13147 = vdwg.mxu0
    %13148 = vmatprep.subr.bf16.mxu0 %v10536
    %13149 = vmatpush1.bf16.msra.mxu0 %v10535
    %13150 = vmatprep.subr.bf16.mxu0 %v10544
    %13151 = vmatpush1.bf16.msra.mxu0 %v10543
    %13152 = vmatprep.subr.bf16.mxu0 %v10552
    %13153 = vmatpush1.bf16.msra.mxu0 %v10551
    %13154 = vmatprep.subr.bf16.mxu0 %v10560
    %13155 = vmatpush1.bf16.msra.mxu0 %v10559
    %13156 = vmatprep.subr.bf16.mxu0 %v10568
    %13157 = vmatpush1.bf16.msra.mxu0 %v10567
    %13158 = vmatprep.subr.bf16.mxu0 %v10576
    %13159 = vmatpush1.bf16.msra.mxu0 %v10575
    %13160 = vmatprep.subr.bf16.mxu0 %v10584
    %13161 = vmatpush1.bf16.msra.mxu0 %v10583
    %13162 = vmatprep.subr.bf16.mxu0 %v10592
    %13163 = vmatpush1.bf16.msra.mxu0 %v10591
    %13164 = vmatprep.subr.bf16.mxu0 %v10600
    %13165 = vmatpush1.bf16.msra.mxu0 %v10599
    %13166 = vmatprep.subr.bf16.mxu0 %v10608
    %13167 = vmatpush1.bf16.msra.mxu0 %v10607
    %13168 = vmatprep.subr.bf16.mxu0 %v10616
    %13169 = vmatpush1.bf16.msra.mxu0 %v10615
    %13170 = vmatprep.subr.bf16.mxu0 %v10624
    %13171 = vmatpush1.bf16.msra.mxu0 %v10623
    %13172 = vmatprep.subr.bf16.mxu0 %v10632
    %13173 = vmatpush1.bf16.msra.mxu0 %v10631
    %13174 = vmatprep.subr.bf16.mxu0 %v10640
    %13175 = vmatpush1.bf16.msra.mxu0 %v10639
    %13176 = vmatprep.subr.bf16.mxu0 %v10648
    %13177 = vmatpush1.bf16.msra.mxu0 %v10647
    %13178 = vmatprep.subr.bf16.mxu0 %v10656
    %13179 = vmatpush1.bf16.msra.mxu0 %v10655
    %13180 = vmatprep.mubr.bf16.mxu0 %v6252
    %13181 = vmatmul.mubr.bf16.gmra.mrb[0].mxu0 %v6251
    %v13182 = vpop.f32.mrb[0].mxu0
    %v13183 = vadd.f32 %v13142, %v13182
    %v13184 = vpop.f32.mrb[0].mxu0
    %v13185 = vadd.f32 %v13144, %v13184
    %v13186 = vpop.f32.mrb[0].mxu0
    %v13187 = vpop.f32.mrb[0].mxu0
    %13188 = vdwg.mxu0
    %13189 = vmatprep.subr.bf16.mxu0 %v10664
    %13190 = vmatpush1.bf16.msra.mxu0 %v10663
    %13191 = vmatprep.subr.bf16.mxu0 %v10672
    %13192 = vmatpush1.bf16.msra.mxu0 %v10671
    %13193 = vmatprep.subr.bf16.mxu0 %v10680
    %13194 = vmatpush1.bf16.msra.mxu0 %v10679
    %13195 = vmatprep.subr.bf16.mxu0 %v10688
    %13196 = vmatpush1.bf16.msra.mxu0 %v10687
    %13197 = vmatprep.subr.bf16.mxu0 %v10696
    %13198 = vmatpush1.bf16.msra.mxu0 %v10695
    %13199 = vmatprep.subr.bf16.mxu0 %v10704
    %13200 = vmatpush1.bf16.msra.mxu0 %v10703
    %13201 = vmatprep.subr.bf16.mxu0 %v10712
    %13202 = vmatpush1.bf16.msra.mxu0 %v10711
    %13203 = vmatprep.subr.bf16.mxu0 %v10720
    %13204 = vmatpush1.bf16.msra.mxu0 %v10719
    %13205 = vmatprep.subr.bf16.mxu0 %v10728
    %13206 = vmatpush1.bf16.msra.mxu0 %v10727
    %13207 = vmatprep.subr.bf16.mxu0 %v10736
    %13208 = vmatpush1.bf16.msra.mxu0 %v10735
    %13209 = vmatprep.subr.bf16.mxu0 %v10744
    %13210 = vmatpush1.bf16.msra.mxu0 %v10743
    %13211 = vmatprep.subr.bf16.mxu0 %v10752
    %13212 = vmatpush1.bf16.msra.mxu0 %v10751
    %13213 = vmatprep.subr.bf16.mxu0 %v10760
    %13214 = vmatpush1.bf16.msra.mxu0 %v10759
    %13215 = vmatprep.subr.bf16.mxu0 %v10768
    %13216 = vmatpush1.bf16.msra.mxu0 %v10767
    %13217 = vmatprep.subr.bf16.mxu0 %v10776
    %13218 = vmatpush1.bf16.msra.mxu0 %v10775
    %13219 = vmatprep.subr.bf16.mxu0 %v10784
    %13220 = vmatpush1.bf16.msra.mxu0 %v10783
    %13221 = vmatprep.mubr.bf16.mxu0 %v6254
    %13222 = vmatmul.mubr.bf16.gmra.mrb[0].mxu0 %v6253
    %v13223 = vpop.f32.mrb[0].mxu0
    %v13224 = vadd.f32 %v13183, %v13223
    %v13225 = vpop.f32.mrb[0].mxu0
    %v13226 = vadd.f32 %v13185, %v13225
    %v13227 = vpop.f32.mrb[0].mxu0
    %v13228 = vpop.f32.mrb[0].mxu0
    %13229 = vdwg.mxu0
    %13230 = vmatprep.subr.bf16.mxu0 %v10792
    %13231 = vmatpush1.bf16.msra.mxu0 %v10791
    %13232 = vmatprep.subr.bf16.mxu0 %v10800
    %13233 = vmatpush1.bf16.msra.mxu0 %v10799
    %13234 = vmatprep.subr.bf16.mxu0 %v10808
    %13235 = vmatpush1.bf16.msra.mxu0 %v10807
    %13236 = vmatprep.subr.bf16.mxu0 %v10816
    %13237 = vmatpush1.bf16.msra.mxu0 %v10815
    %13238 = vmatprep.subr.bf16.mxu0 %v10824
    %13239 = vmatpush1.bf16.msra.mxu0 %v10823
    %13240 = vmatprep.subr.bf16.mxu0 %v10832
    %13241 = vmatpush1.bf16.msra.mxu0 %v10831
    %13242 = vmatprep.subr.bf16.mxu0 %v10840
    %13243 = vmatpush1.bf16.msra.mxu0 %v10839
    %13244 = vmatprep.subr.bf16.mxu0 %v10848
    %13245 = vmatpush1.bf16.msra.mxu0 %v10847
    %13246 = vmatprep.subr.bf16.mxu0 %v10856
    %13247 = vmatpush1.bf16.msra.mxu0 %v10855
    %13248 = vmatprep.subr.bf16.mxu0 %v10864
    %13249 = vmatpush1.bf16.msra.mxu0 %v10863
    %13250 = vmatprep.subr.bf16.mxu0 %v10872
    %13251 = vmatpush1.bf16.msra.mxu0 %v10871
    %13252 = vmatprep.subr.bf16.mxu0 %v10880
    %13253 = vmatpush1.bf16.msra.mxu0 %v10879
    %13254 = vmatprep.subr.bf16.mxu0 %v10888
    %13255 = vmatpush1.bf16.msra.mxu0 %v10887
    %13256 = vmatprep.subr.bf16.mxu0 %v10896
    %13257 = vmatpush1.bf16.msra.mxu0 %v10895
    %13258 = vmatprep.subr.bf16.mxu0 %v10904
    %13259 = vmatpush1.bf16.msra.mxu0 %v10903
    %13260 = vmatprep.subr.bf16.mxu0 %v10912
    %13261 = vmatpush1.bf16.msra.mxu0 %v10911
    %13262 = vmatprep.mubr.bf16.mxu0 %v6256
    %13263 = vmatmul.mubr.bf16.gmra.mrb[0].mxu0 %v6255
    %v13264 = vpop.f32.mrb[0].mxu0
    %v13265 = vadd.f32 %v13224, %v13264
    %v13266 = vpop.f32.mrb[0].mxu0
    %v13267 = vadd.f32 %v13226, %v13266
    %v13268 = vpop.f32.mrb[0].mxu0
    %v13269 = vpop.f32.mrb[0].mxu0
    %13270 = vdwg.mxu0
    %13271 = vmatprep.subr.bf16.mxu0 %v10920
    %13272 = vmatpush1.bf16.msra.mxu0 %v10919
    %13273 = vmatprep.subr.bf16.mxu0 %v10928
    %13274 = vmatpush1.bf16.msra.mxu0 %v10927
    %13275 = vmatprep.subr.bf16.mxu0 %v10936
    %13276 = vmatpush1.bf16.msra.mxu0 %v10935
    %13277 = vmatprep.subr.bf16.mxu0 %v10944
    %13278 = vmatpush1.bf16.msra.mxu0 %v10943
    %13279 = vmatprep.subr.bf16.mxu0 %v10952
    %13280 = vmatpush1.bf16.msra.mxu0 %v10951
    %13281 = vmatprep.subr.bf16.mxu0 %v10960
    %13282 = vmatpush1.bf16.msra.mxu0 %v10959
    %13283 = vmatprep.subr.bf16.mxu0 %v10968
    %13284 = vmatpush1.bf16.msra.mxu0 %v10967
    %13285 = vmatprep.subr.bf16.mxu0 %v10976
    %13286 = vmatpush1.bf16.msra.mxu0 %v10975
    %13287 = vmatprep.subr.bf16.mxu0 %v10984
    %13288 = vmatpush1.bf16.msra.mxu0 %v10983
    %13289 = vmatprep.subr.bf16.mxu0 %v10992
    %13290 = vmatpush1.bf16.msra.mxu0 %v10991
    %13291 = vmatprep.subr.bf16.mxu0 %v11000
    %13292 = vmatpush1.bf16.msra.mxu0 %v10999
    %13293 = vmatprep.subr.bf16.mxu0 %v11008
    %13294 = vmatpush1.bf16.msra.mxu0 %v11007
    %13295 = vmatprep.subr.bf16.mxu0 %v11016
    %13296 = vmatpush1.bf16.msra.mxu0 %v11015
    %13297 = vmatprep.subr.bf16.mxu0 %v11024
    %13298 = vmatpush1.bf16.msra.mxu0 %v11023
    %13299 = vmatprep.subr.bf16.mxu0 %v11032
    %13300 = vmatpush1.bf16.msra.mxu0 %v11031
    %13301 = vmatprep.subr.bf16.mxu0 %v11040
    %13302 = vmatpush1.bf16.msra.mxu0 %v11039
    %13303 = vmatprep.mubr.bf16.mxu0 %v6258
    %13304 = vmatmul.mubr.bf16.gmra.mrb[0].mxu0 %v6257
    %v13305 = vpop.f32.mrb[0].mxu0
    %v13306 = vadd.f32 %v13265, %v13305
    %v13307 = vpop.f32.mrb[0].mxu0
    %v13308 = vadd.f32 %v13267, %v13307
    %v13309 = vpop.f32.mrb[0].mxu0
    %v13310 = vpop.f32.mrb[0].mxu0
    %13311 = vdwg.mxu0
    %13312 = vmatprep.subr.bf16.mxu0 %v11048
    %13313 = vmatpush1.bf16.msra.mxu0 %v11047
    %13314 = vmatprep.subr.bf16.mxu0 %v11056
    %13315 = vmatpush1.bf16.msra.mxu0 %v11055
    %13316 = vmatprep.subr.bf16.mxu0 %v11064
    %13317 = vmatpush1.bf16.msra.mxu0 %v11063
    %13318 = vmatprep.subr.bf16.mxu0 %v11072
    %13319 = vmatpush1.bf16.msra.mxu0 %v11071
    %13320 = vmatprep.subr.bf16.mxu0 %v11080
    %13321 = vmatpush1.bf16.msra.mxu0 %v11079
    %13322 = vmatprep.subr.bf16.mxu0 %v11088
    %13323 = vmatpush1.bf16.msra.mxu0 %v11087
    %13324 = vmatprep.subr.bf16.mxu0 %v11096
    %13325 = vmatpush1.bf16.msra.mxu0 %v11095
    %13326 = vmatprep.subr.bf16.mxu0 %v11104
    %13327 = vmatpush1.bf16.msra.mxu0 %v11103
    %13328 = vmatprep.subr.bf16.mxu0 %v11112
    %13329 = vmatpush1.bf16.msra.mxu0 %v11111
    %13330 = vmatprep.subr.bf16.mxu0 %v11120
    %13331 = vmatpush1.bf16.msra.mxu0 %v11119
    %13332 = vmatprep.subr.bf16.mxu0 %v11128
    %13333 = vmatpush1.bf16.msra.mxu0 %v11127
    %13334 = vmatprep.subr.bf16.mxu0 %v11136
    %13335 = vmatpush1.bf16.msra.mxu0 %v11135
    %13336 = vmatprep.subr.bf16.mxu0 %v11144
    %13337 = vmatpush1.bf16.msra.mxu0 %v11143
    %13338 = vmatprep.subr.bf16.mxu0 %v11152
    %13339 = vmatpush1.bf16.msra.mxu0 %v11151
    %13340 = vmatprep.subr.bf16.mxu0 %v11160
    %13341 = vmatpush1.bf16.msra.mxu0 %v11159
    %13342 = vmatprep.subr.bf16.mxu0 %v11168
    %13343 = vmatpush1.bf16.msra.mxu0 %v11167
    %13344 = vmatprep.mubr.bf16.mxu0 %v6260
    %13345 = vmatmul.mubr.bf16.gmra.mrb[0].mxu0 %v6259
    %v13346 = vpop.f32.mrb[0].mxu0
    %v13347 = vadd.f32 %v13306, %v13346
    %v13348 = vpop.f32.mrb[0].mxu0
    %v13349 = vadd.f32 %v13308, %v13348
    %v13350 = vpop.f32.mrb[0].mxu0
    %v13351 = vpop.f32.mrb[0].mxu0
    %13352 = vdwg.mxu0
    %13353 = vmatprep.subr.bf16.mxu0 %v11176
    %13354 = vmatpush1.bf16.msra.mxu0 %v11175
    %13355 = vmatprep.subr.bf16.mxu0 %v11184
    %13356 = vmatpush1.bf16.msra.mxu0 %v11183
    %13357 = vmatprep.subr.bf16.mxu0 %v11192
    %13358 = vmatpush1.bf16.msra.mxu0 %v11191
    %13359 = vmatprep.subr.bf16.mxu0 %v11200
    %13360 = vmatpush1.bf16.msra.mxu0 %v11199
    %13361 = vmatprep.subr.bf16.mxu0 %v11208
    %13362 = vmatpush1.bf16.msra.mxu0 %v11207
    %13363 = vmatprep.subr.bf16.mxu0 %v11216
    %13364 = vmatpush1.bf16.msra.mxu0 %v11215
    %13365 = vmatprep.subr.bf16.mxu0 %v11224
    %13366 = vmatpush1.bf16.msra.mxu0 %v11223
    %13367 = vmatprep.subr.bf16.mxu0 %v11232
    %13368 = vmatpush1.bf16.msra.mxu0 %v11231
    %13369 = vmatprep.subr.bf16.mxu0 %v11240
    %13370 = vmatpush1.bf16.msra.mxu0 %v11239
    %13371 = vmatprep.subr.bf16.mxu0 %v11248
    %13372 = vmatpush1.bf16.msra.mxu0 %v11247
    %13373 = vmatprep.subr.bf16.mxu0 %v11256
    %13374 = vmatpush1.bf16.msra.mxu0 %v11255
    %13375 = vmatprep.subr.bf16.mxu0 %v11264
    %13376 = vmatpush1.bf16.msra.mxu0 %v11263
    %13377 = vmatprep.subr.bf16.mxu0 %v11272
    %13378 = vmatpush1.bf16.msra.mxu0 %v11271
    %13379 = vmatprep.subr.bf16.mxu0 %v11280
    %13380 = vmatpush1.bf16.msra.mxu0 %v11279
    %13381 = vmatprep.subr.bf16.mxu0 %v11288
    %13382 = vmatpush1.bf16.msra.mxu0 %v11287
    %13383 = vmatprep.subr.bf16.mxu0 %v11296
    %13384 = vmatpush1.bf16.msra.mxu0 %v11295
    %13385 = vmatprep.mubr.bf16.mxu0 %v6262
    %13386 = vmatmul.mubr.bf16.gmra.mrb[0].mxu0 %v6261
    %v13387 = vpop.f32.mrb[0].mxu0
    %v13388 = vadd.f32 %v13347, %v13387
    %v13389 = vpop.f32.mrb[0].mxu0
    %v13390 = vadd.f32 %v13349, %v13389
    %v13391 = vpop.f32.mrb[0].mxu0
    %v13392 = vpop.f32.mrb[0].mxu0
    %13393 = vdwg.mxu0
    %13394 = vmatprep.subr.bf16.mxu0 %v11304
    %13395 = vmatpush1.bf16.msra.mxu0 %v11303
    %13396 = vmatprep.subr.bf16.mxu0 %v11312
    %13397 = vmatpush1.bf16.msra.mxu0 %v11311
    %13398 = vmatprep.subr.bf16.mxu0 %v11320
    %13399 = vmatpush1.bf16.msra.mxu0 %v11319
    %13400 = vmatprep.subr.bf16.mxu0 %v11328
    %13401 = vmatpush1.bf16.msra.mxu0 %v11327
    %13402 = vmatprep.subr.bf16.mxu0 %v11336
    %13403 = vmatpush1.bf16.msra.mxu0 %v11335
    %13404 = vmatprep.subr.bf16.mxu0 %v11344
    %13405 = vmatpush1.bf16.msra.mxu0 %v11343
    %13406 = vmatprep.subr.bf16.mxu0 %v11352
    %13407 = vmatpush1.bf16.msra.mxu0 %v11351
    %13408 = vmatprep.subr.bf16.mxu0 %v11360
    %13409 = vmatpush1.bf16.msra.mxu0 %v11359
    %13410 = vmatprep.subr.bf16.mxu0 %v11368
    %13411 = vmatpush1.bf16.msra.mxu0 %v11367
    %13412 = vmatprep.subr.bf16.mxu0 %v11376
    %13413 = vmatpush1.bf16.msra.mxu0 %v11375
    %13414 = vmatprep.subr.bf16.mxu0 %v11384
    %13415 = vmatpush1.bf16.msra.mxu0 %v11383
    %13416 = vmatprep.subr.bf16.mxu0 %v11392
    %13417 = vmatpush1.bf16.msra.mxu0 %v11391
    %13418 = vmatprep.subr.bf16.mxu0 %v11400
    %13419 = vmatpush1.bf16.msra.mxu0 %v11399
    %13420 = vmatprep.subr.bf16.mxu0 %v11408
    %13421 = vmatpush1.bf16.msra.mxu0 %v11407
    %13422 = vmatprep.subr.bf16.mxu0 %v11416
    %13423 = vmatpush1.bf16.msra.mxu0 %v11415
    %13424 = vmatprep.subr.bf16.mxu0 %v11424
    %13425 = vmatpush1.bf16.msra.mxu0 %v11423
    %13426 = vmatprep.mubr.bf16.mxu0 %v6264
    %13427 = vmatmul.mubr.bf16.gmra.mrb[0].mxu0 %v6263
    %v13428 = vpop.f32.mrb[0].mxu0
    %v13429 = vadd.f32 %v13388, %v13428
    %v13430 = vpop.f32.mrb[0].mxu0
    %v13431 = vadd.f32 %v13390, %v13430
    %v13432 = vpop.f32.mrb[0].mxu0
    %v13433 = vpop.f32.mrb[0].mxu0
    %13434 = vdwg.mxu0
    %13435 = vmatprep.subr.bf16.mxu0 %v10410
    %13436 = vmatpush1.bf16.msra.mxu0 %v10409
    %13437 = vmatprep.subr.bf16.mxu0 %v10418
    %13438 = vmatpush1.bf16.msra.mxu0 %v10417
    %13439 = vmatprep.subr.bf16.mxu0 %v10426
    %13440 = vmatpush1.bf16.msra.mxu0 %v10425
    %13441 = vmatprep.subr.bf16.mxu0 %v10434
    %13442 = vmatpush1.bf16.msra.mxu0 %v10433
    %13443 = vmatprep.subr.bf16.mxu0 %v10442
    %13444 = vmatpush1.bf16.msra.mxu0 %v10441
    %13445 = vmatprep.subr.bf16.mxu0 %v10450
    %13446 = vmatpush1.bf16.msra.mxu0 %v10449
    %13447 = vmatprep.subr.bf16.mxu0 %v10458
    %13448 = vmatpush1.bf16.msra.mxu0 %v10457
    %13449 = vmatprep.subr.bf16.mxu0 %v10466
    %13450 = vmatpush1.bf16.msra.mxu0 %v10465
    %13451 = vmatprep.subr.bf16.mxu0 %v10474
    %13452 = vmatpush1.bf16.msra.mxu0 %v10473
    %13453 = vmatprep.subr.bf16.mxu0 %v10482
    %13454 = vmatpush1.bf16.msra.mxu0 %v10481
    %13455 = vmatprep.subr.bf16.mxu0 %v10490
    %13456 = vmatpush1.bf16.msra.mxu0 %v10489
    %13457 = vmatprep.subr.bf16.mxu0 %v10498
    %13458 = vmatpush1.bf16.msra.mxu0 %v10497
    %13459 = vmatprep.subr.bf16.mxu0 %v10506
    %13460 = vmatpush1.bf16.msra.mxu0 %v10505
    %13461 = vmatprep.subr.bf16.mxu0 %v10514
    %13462 = vmatpush1.bf16.msra.mxu0 %v10513
    %13463 = vmatprep.subr.bf16.mxu0 %v10522
    %13464 = vmatpush1.bf16.msra.mxu0 %v10521
    %13465 = vmatprep.subr.bf16.mxu0 %v10530
    %13466 = vmatpush1.bf16.msra.mxu0 %v10529
    %13467 = vmatprep.mubr.bf16.mxu0 %v6250
    %13468 = vmatmul.mubr.bf16.gmra.mrb[0].mxu0 %v6249
    %v13469 = vpop.f32.mrb[0].mxu0
    %v13470 = vadd.f32 %v7318, %v13469
    %v13471 = vpop.f32.mrb[0].mxu0
    %v13472 = vadd.f32 %v7322, %v13471
    %v13473 = vpop.f32.mrb[0].mxu0
    %v13474 = vpop.f32.mrb[0].mxu0
    %13475 = vdwg.mxu0
    %13476 = vmatprep.subr.bf16.mxu0 %v10538
    %13477 = vmatpush1.bf16.msra.mxu0 %v10537
    %13478 = vmatprep.subr.bf16.mxu0 %v10546
    %13479 = vmatpush1.bf16.msra.mxu0 %v10545
    %13480 = vmatprep.subr.bf16.mxu0 %v10554
    %13481 = vmatpush1.bf16.msra.mxu0 %v10553
    %13482 = vmatprep.subr.bf16.mxu0 %v10562
    %13483 = vmatpush1.bf16.msra.mxu0 %v10561
    %13484 = vmatprep.subr.bf16.mxu0 %v10570
    %13485 = vmatpush1.bf16.msra.mxu0 %v10569
    %13486 = vmatprep.subr.bf16.mxu0 %v10578
    %13487 = vmatpush1.bf16.msra.mxu0 %v10577
    %13488 = vmatprep.subr.bf16.mxu0 %v10586
    %13489 = vmatpush1.bf16.msra.mxu0 %v10585
    %13490 = vmatprep.subr.bf16.mxu0 %v10594
    %13491 = vmatpush1.bf16.msra.mxu0 %v10593
    %13492 = vmatprep.subr.bf16.mxu0 %v10602
    %13493 = vmatpush1.bf16.msra.mxu0 %v10601
    %13494 = vmatprep.subr.bf16.mxu0 %v10610
    %13495 = vmatpush1.bf16.msra.mxu0 %v10609
    %13496 = vmatprep.subr.bf16.mxu0 %v10618
    %13497 = vmatpush1.bf16.msra.mxu0 %v10617
    %13498 = vmatprep.subr.bf16.mxu0 %v10626
    %13499 = vmatpush1.bf16.msra.mxu0 %v10625
    %13500 = vmatprep.subr.bf16.mxu0 %v10634
    %13501 = vmatpush1.bf16.msra.mxu0 %v10633
    %13502 = vmatprep.subr.bf16.mxu0 %v10642
    %13503 = vmatpush1.bf16.msra.mxu0 %v10641
    %13504 = vmatprep.subr.bf16.mxu0 %v10650
    %13505 = vmatpush1.bf16.msra.mxu0 %v10649
    %13506 = vmatprep.subr.bf16.mxu0 %v10658
    %13507 = vmatpush1.bf16.msra.mxu0 %v10657
    %13508 = vmatprep.mubr.bf16.mxu0 %v6252
    %13509 = vmatmul.mubr.bf16.gmra.mrb[0].mxu0 %v6251
    %v13510 = vpop.f32.mrb[0].mxu0
    %v13511 = vadd.f32 %v13470, %v13510
    %v13512 = vpop.f32.mrb[0].mxu0
    %v13513 = vadd.f32 %v13472, %v13512
    %v13514 = vpop.f32.mrb[0].mxu0
    %v13515 = vpop.f32.mrb[0].mxu0
    %13516 = vdwg.mxu0
    %13517 = vmatprep.subr.bf16.mxu0 %v10666
    %13518 = vmatpush1.bf16.msra.mxu0 %v10665
    %13519 = vmatprep.subr.bf16.mxu0 %v10674
    %13520 = vmatpush1.bf16.msra.mxu0 %v10673
    %13521 = vmatprep.subr.bf16.mxu0 %v10682
    %13522 = vmatpush1.bf16.msra.mxu0 %v10681
    %13523 = vmatprep.subr.bf16.mxu0 %v10690
    %13524 = vmatpush1.bf16.msra.mxu0 %v10689
    %13525 = vmatprep.subr.bf16.mxu0 %v10698
    %13526 = vmatpush1.bf16.msra.mxu0 %v10697
    %13527 = vmatprep.subr.bf16.mxu0 %v10706
    %13528 = vmatpush1.bf16.msra.mxu0 %v10705
    %13529 = vmatprep.subr.bf16.mxu0 %v10714
    %13530 = vmatpush1.bf16.msra.mxu0 %v10713
    %13531 = vmatprep.subr.bf16.mxu0 %v10722
    %13532 = vmatpush1.bf16.msra.mxu0 %v10721
    %13533 = vmatprep.subr.bf16.mxu0 %v10730
    %13534 = vmatpush1.bf16.msra.mxu0 %v10729
    %13535 = vmatprep.subr.bf16.mxu0 %v10738
    %13536 = vmatpush1.bf16.msra.mxu0 %v10737
    %13537 = vmatprep.subr.bf16.mxu0 %v10746
    %13538 = vmatpush1.bf16.msra.mxu0 %v10745
    %13539 = vmatprep.subr.bf16.mxu0 %v10754
    %13540 = vmatpush1.bf16.msra.mxu0 %v10753
    %13541 = vmatprep.subr.bf16.mxu0 %v10762
    %13542 = vmatpush1.bf16.msra.mxu0 %v10761
    %13543 = vmatprep.subr.bf16.mxu0 %v10770
    %13544 = vmatpush1.bf16.msra.mxu0 %v10769
    %13545 = vmatprep.subr.bf16.mxu0 %v10778
    %13546 = vmatpush1.bf16.msra.mxu0 %v10777
    %13547 = vmatprep.subr.bf16.mxu0 %v10786
    %13548 = vmatpush1.bf16.msra.mxu0 %v10785
    %13549 = vmatprep.mubr.bf16.mxu0 %v6254
    %13550 = vmatmul.mubr.bf16.gmra.mrb[0].mxu0 %v6253
    %v13551 = vpop.f32.mrb[0].mxu0
    %v13552 = vadd.f32 %v13511, %v13551
    %v13553 = vpop.f32.mrb[0].mxu0
    %v13554 = vadd.f32 %v13513, %v13553
    %v13555 = vpop.f32.mrb[0].mxu0
    %v13556 = vpop.f32.mrb[0].mxu0
    %13557 = vdwg.mxu0
    %13558 = vmatprep.subr.bf16.mxu0 %v10794
    %13559 = vmatpush1.bf16.msra.mxu0 %v10793
    %13560 = vmatprep.subr.bf16.mxu0 %v10802
    %13561 = vmatpush1.bf16.msra.mxu0 %v10801
    %13562 = vmatprep.subr.bf16.mxu0 %v10810
    %13563 = vmatpush1.bf16.msra.mxu0 %v10809
    %13564 = vmatprep.subr.bf16.mxu0 %v10818
    %13565 = vmatpush1.bf16.msra.mxu0 %v10817
    %13566 = vmatprep.subr.bf16.mxu0 %v10826
    %13567 = vmatpush1.bf16.msra.mxu0 %v10825
    %13568 = vmatprep.subr.bf16.mxu0 %v10834
    %13569 = vmatpush1.bf16.msra.mxu0 %v10833
    %13570 = vmatprep.subr.bf16.mxu0 %v10842
    %13571 = vmatpush1.bf16.msra.mxu0 %v10841
    %13572 = vmatprep.subr.bf16.mxu0 %v10850
    %13573 = vmatpush1.bf16.msra.mxu0 %v10849
    %13574 = vmatprep.subr.bf16.mxu0 %v10858
    %13575 = vmatpush1.bf16.msra.mxu0 %v10857
    %13576 = vmatprep.subr.bf16.mxu0 %v10866
    %13577 = vmatpush1.bf16.msra.mxu0 %v10865
    %13578 = vmatprep.subr.bf16.mxu0 %v10874
    %13579 = vmatpush1.bf16.msra.mxu0 %v10873
    %13580 = vmatprep.subr.bf16.mxu0 %v10882
    %13581 = vmatpush1.bf16.msra.mxu0 %v10881
    %13582 = vmatprep.subr.bf16.mxu0 %v10890
    %13583 = vmatpush1.bf16.msra.mxu0 %v10889
    %13584 = vmatprep.subr.bf16.mxu0 %v10898
    %13585 = vmatpush1.bf16.msra.mxu0 %v10897
    %13586 = vmatprep.subr.bf16.mxu0 %v10906
    %13587 = vmatpush1.bf16.msra.mxu0 %v10905
    %13588 = vmatprep.subr.bf16.mxu0 %v10914
    %13589 = vmatpush1.bf16.msra.mxu0 %v10913
    %13590 = vmatprep.mubr.bf16.mxu0 %v6256
    %13591 = vmatmul.mubr.bf16.gmra.mrb[0].mxu0 %v6255
    %v13592 = vpop.f32.mrb[0].mxu0
    %v13593 = vadd.f32 %v13552, %v13592
    %v13594 = vpop.f32.mrb[0].mxu0
    %v13595 = vadd.f32 %v13554, %v13594
    %v13596 = vpop.f32.mrb[0].mxu0
    %v13597 = vpop.f32.mrb[0].mxu0
    %13598 = vdwg.mxu0
    %13599 = vmatprep.subr.bf16.mxu0 %v10922
    %13600 = vmatpush1.bf16.msra.mxu0 %v10921
    %13601 = vmatprep.subr.bf16.mxu0 %v10930
    %13602 = vmatpush1.bf16.msra.mxu0 %v10929
    %13603 = vmatprep.subr.bf16.mxu0 %v10938
    %13604 = vmatpush1.bf16.msra.mxu0 %v10937
    %13605 = vmatprep.subr.bf16.mxu0 %v10946
    %13606 = vmatpush1.bf16.msra.mxu0 %v10945
    %13607 = vmatprep.subr.bf16.mxu0 %v10954
    %13608 = vmatpush1.bf16.msra.mxu0 %v10953
    %13609 = vmatprep.subr.bf16.mxu0 %v10962
    %13610 = vmatpush1.bf16.msra.mxu0 %v10961
    %13611 = vmatprep.subr.bf16.mxu0 %v10970
    %13612 = vmatpush1.bf16.msra.mxu0 %v10969
    %13613 = vmatprep.subr.bf16.mxu0 %v10978
    %13614 = vmatpush1.bf16.msra.mxu0 %v10977
    %13615 = vmatprep.subr.bf16.mxu0 %v10986
    %13616 = vmatpush1.bf16.msra.mxu0 %v10985
    %13617 = vmatprep.subr.bf16.mxu0 %v10994
    %13618 = vmatpush1.bf16.msra.mxu0 %v10993
    %13619 = vmatprep.subr.bf16.mxu0 %v11002
    %13620 = vmatpush1.bf16.msra.mxu0 %v11001
    %13621 = vmatprep.subr.bf16.mxu0 %v11010
    %13622 = vmatpush1.bf16.msra.mxu0 %v11009
    %13623 = vmatprep.subr.bf16.mxu0 %v11018
    %13624 = vmatpush1.bf16.msra.mxu0 %v11017
    %13625 = vmatprep.subr.bf16.mxu0 %v11026
    %13626 = vmatpush1.bf16.msra.mxu0 %v11025
    %13627 = vmatprep.subr.bf16.mxu0 %v11034
    %13628 = vmatpush1.bf16.msra.mxu0 %v11033
    %13629 = vmatprep.subr.bf16.mxu0 %v11042
    %13630 = vmatpush1.bf16.msra.mxu0 %v11041
    %13631 = vmatprep.mubr.bf16.mxu0 %v6258
    %13632 = vmatmul.mubr.bf16.gmra.mrb[0].mxu0 %v6257
    %v13633 = vpop.f32.mrb[0].mxu0
    %v13634 = vadd.f32 %v13593, %v13633
    %v13635 = vpop.f32.mrb[0].mxu0
    %v13636 = vadd.f32 %v13595, %v13635
    %v13637 = vpop.f32.mrb[0].mxu0
    %v13638 = vpop.f32.mrb[0].mxu0
    %13639 = vdwg.mxu0
    %13640 = vmatprep.subr.bf16.mxu0 %v11050
    %13641 = vmatpush1.bf16.msra.mxu0 %v11049
    %13642 = vmatprep.subr.bf16.mxu0 %v11058
    %13643 = vmatpush1.bf16.msra.mxu0 %v11057
    %13644 = vmatprep.subr.bf16.mxu0 %v11066
    %13645 = vmatpush1.bf16.msra.mxu0 %v11065
    %13646 = vmatprep.subr.bf16.mxu0 %v11074
    %13647 = vmatpush1.bf16.msra.mxu0 %v11073
    %13648 = vmatprep.subr.bf16.mxu0 %v11082
    %13649 = vmatpush1.bf16.msra.mxu0 %v11081
    %13650 = vmatprep.subr.bf16.mxu0 %v11090
    %13651 = vmatpush1.bf16.msra.mxu0 %v11089
    %13652 = vmatprep.subr.bf16.mxu0 %v11098
    %13653 = vmatpush1.bf16.msra.mxu0 %v11097
    %13654 = vmatprep.subr.bf16.mxu0 %v11106
    %13655 = vmatpush1.bf16.msra.mxu0 %v11105
    %13656 = vmatprep.subr.bf16.mxu0 %v11114
    %13657 = vmatpush1.bf16.msra.mxu0 %v11113
    %13658 = vmatprep.subr.bf16.mxu0 %v11122
    %13659 = vmatpush1.bf16.msra.mxu0 %v11121
    %13660 = vmatprep.subr.bf16.mxu0 %v11130
    %13661 = vmatpush1.bf16.msra.mxu0 %v11129
    %13662 = vmatprep.subr.bf16.mxu0 %v11138
    %13663 = vmatpush1.bf16.msra.mxu0 %v11137
    %13664 = vmatprep.subr.bf16.mxu0 %v11146
    %13665 = vmatpush1.bf16.msra.mxu0 %v11145
    %13666 = vmatprep.subr.bf16.mxu0 %v11154
    %13667 = vmatpush1.bf16.msra.mxu0 %v11153
    %13668 = vmatprep.subr.bf16.mxu0 %v11162
    %13669 = vmatpush1.bf16.msra.mxu0 %v11161
    %13670 = vmatprep.subr.bf16.mxu0 %v11170
    %13671 = vmatpush1.bf16.msra.mxu0 %v11169
    %13672 = vmatprep.mubr.bf16.mxu0 %v6260
    %13673 = vmatmul.mubr.bf16.gmra.mrb[0].mxu0 %v6259
    %v13674 = vpop.f32.mrb[0].mxu0
    %v13675 = vadd.f32 %v13634, %v13674
    %v13676 = vpop.f32.mrb[0].mxu0
    %v13677 = vadd.f32 %v13636, %v13676
    %v13678 = vpop.f32.mrb[0].mxu0
    %v13679 = vpop.f32.mrb[0].mxu0
    %13680 = vdwg.mxu0
    %13681 = vmatprep.subr.bf16.mxu0 %v11178
    %13682 = vmatpush1.bf16.msra.mxu0 %v11177
    %13683 = vmatprep.subr.bf16.mxu0 %v11186
    %13684 = vmatpush1.bf16.msra.mxu0 %v11185
    %13685 = vmatprep.subr.bf16.mxu0 %v11194
    %13686 = vmatpush1.bf16.msra.mxu0 %v11193
    %13687 = vmatprep.subr.bf16.mxu0 %v11202
    %13688 = vmatpush1.bf16.msra.mxu0 %v11201
    %13689 = vmatprep.subr.bf16.mxu0 %v11210
    %13690 = vmatpush1.bf16.msra.mxu0 %v11209
    %13691 = vmatprep.subr.bf16.mxu0 %v11218
    %13692 = vmatpush1.bf16.msra.mxu0 %v11217
    %13693 = vmatprep.subr.bf16.mxu0 %v11226
    %13694 = vmatpush1.bf16.msra.mxu0 %v11225
    %13695 = vmatprep.subr.bf16.mxu0 %v11234
    %13696 = vmatpush1.bf16.msra.mxu0 %v11233
    %13697 = vmatprep.subr.bf16.mxu0 %v11242
    %13698 = vmatpush1.bf16.msra.mxu0 %v11241
    %13699 = vmatprep.subr.bf16.mxu0 %v11250
    %13700 = vmatpush1.bf16.msra.mxu0 %v11249
    %13701 = vmatprep.subr.bf16.mxu0 %v11258
    %13702 = vmatpush1.bf16.msra.mxu0 %v11257
    %13703 = vmatprep.subr.bf16.mxu0 %v11266
    %13704 = vmatpush1.bf16.msra.mxu0 %v11265
    %13705 = vmatprep.subr.bf16.mxu0 %v11274
    %13706 = vmatpush1.bf16.msra.mxu0 %v11273
    %13707 = vmatprep.subr.bf16.mxu0 %v11282
    %13708 = vmatpush1.bf16.msra.mxu0 %v11281
    %13709 = vmatprep.subr.bf16.mxu0 %v11290
    %13710 = vmatpush1.bf16.msra.mxu0 %v11289
    %13711 = vmatprep.subr.bf16.mxu0 %v11298
    %13712 = vmatpush1.bf16.msra.mxu0 %v11297
    %13713 = vmatprep.mubr.bf16.mxu0 %v6262
    %13714 = vmatmul.mubr.bf16.gmra.mrb[0].mxu0 %v6261
    %v13715 = vpop.f32.mrb[0].mxu0
    %v13716 = vadd.f32 %v13675, %v13715
    %v13717 = vpop.f32.mrb[0].mxu0
    %v13718 = vadd.f32 %v13677, %v13717
    %v13719 = vpop.f32.mrb[0].mxu0
    %v13720 = vpop.f32.mrb[0].mxu0
    %13721 = vdwg.mxu0
    %13722 = vmatprep.subr.bf16.mxu0 %v11306
    %13723 = vmatpush1.bf16.msra.mxu0 %v11305
    %13724 = vmatprep.subr.bf16.mxu0 %v11314
    %13725 = vmatpush1.bf16.msra.mxu0 %v11313
    %13726 = vmatprep.subr.bf16.mxu0 %v11322
    %13727 = vmatpush1.bf16.msra.mxu0 %v11321
    %13728 = vmatprep.subr.bf16.mxu0 %v11330
    %13729 = vmatpush1.bf16.msra.mxu0 %v11329
    %13730 = vmatprep.subr.bf16.mxu0 %v11338
    %13731 = vmatpush1.bf16.msra.mxu0 %v11337
    %13732 = vmatprep.subr.bf16.mxu0 %v11346
    %13733 = vmatpush1.bf16.msra.mxu0 %v11345
    %13734 = vmatprep.subr.bf16.mxu0 %v11354
    %13735 = vmatpush1.bf16.msra.mxu0 %v11353
    %13736 = vmatprep.subr.bf16.mxu0 %v11362
    %13737 = vmatpush1.bf16.msra.mxu0 %v11361
    %13738 = vmatprep.subr.bf16.mxu0 %v11370
    %13739 = vmatpush1.bf16.msra.mxu0 %v11369
    %13740 = vmatprep.subr.bf16.mxu0 %v11378
    %13741 = vmatpush1.bf16.msra.mxu0 %v11377
    %13742 = vmatprep.subr.bf16.mxu0 %v11386
    %13743 = vmatpush1.bf16.msra.mxu0 %v11385
    %13744 = vmatprep.subr.bf16.mxu0 %v11394
    %13745 = vmatpush1.bf16.msra.mxu0 %v11393
    %13746 = vmatprep.subr.bf16.mxu0 %v11402
    %13747 = vmatpush1.bf16.msra.mxu0 %v11401
    %13748 = vmatprep.subr.bf16.mxu0 %v11410
    %13749 = vmatpush1.bf16.msra.mxu0 %v11409
    %13750 = vmatprep.subr.bf16.mxu0 %v11418
    %13751 = vmatpush1.bf16.msra.mxu0 %v11417
    %13752 = vmatprep.subr.bf16.mxu0 %v11426
    %13753 = vmatpush1.bf16.msra.mxu0 %v11425
    %13754 = vmatprep.mubr.bf16.mxu0 %v6264
    %13755 = vmatmul.mubr.bf16.gmra.mrb[0].mxu0 %v6263
    %v13756 = vpop.f32.mrb[0].mxu0
    %v13757 = vadd.f32 %v13716, %v13756
    %v13758 = vpop.f32.mrb[0].mxu0
    %v13759 = vadd.f32 %v13718, %v13758
    %v13760 = vpop.f32.mrb[0].mxu0
    %v13761 = vpop.f32.mrb[0].mxu0
    %13762 = vdwg.mxu0
    %v13763 = vmax.f32 %v12773, 0.0
    %v13764 = vmax.f32 %v12775, 0.0
    %v13765 = vmax.f32 %v13101, 0.0
    %v13766 = vmax.f32 %v13103, 0.0
    %v13767 = vmax.f32 %v13429, 0.0
    %v13768 = vmax.f32 %v13431, 0.0
    %v13769 = vmax.f32 %v13757, 0.0
    %v13770 = vmax.f32 %v13759, 0.0
    %v13771 = vpack.c.bf16 %v13763, %v13763
    %v13772 = vpack.c.bf16 %v13764, %v13764
    %v13773 = vpack.c.bf16 %v13765, %v13765
    %v13774 = vpack.c.bf16 %v13766, %v13766
    %v13775 = vpack.c.bf16 %v13767, %v13767
    %v13776 = vpack.c.bf16 %v13768, %v13768
    %v13777 = vpack.c.bf16 %v13769, %v13769
    %v13778 = vpack.c.bf16 %v13770, %v13770
    %v13779 = vld [vmem:[#allocation11] sm:$0xf]
    %v13780 = vld [vmem:[#allocation11 + $0x4] sm:$0xf]
    %v13781 = vld [vmem:[#allocation11 + $0x8] sm:$0xf]
    %v13782 = vld [vmem:[#allocation11 + $0xc] sm:$0xf]
    %v13783 = vld [vmem:[#allocation11 + $0x10] sm:$0xf]
    %v13784 = vld [vmem:[#allocation11 + $0x14] sm:$0xf]
    %v13785 = vld [vmem:[#allocation11 + $0x18] sm:$0xf]
    %v13786 = vld [vmem:[#allocation11 + $0x1c] sm:$0xf]
    %v13787 = vld [vmem:[#allocation11 + $0x20] sm:$0xf]
    %v13788 = vld [vmem:[#allocation11 + $0x24] sm:$0xf]
    %v13789 = vld [vmem:[#allocation11 + $0x28] sm:$0xf]
    %v13790 = vld [vmem:[#allocation11 + $0x2c] sm:$0xf]
    %v13791 = vld [vmem:[#allocation11 + $0x30] sm:$0xf]
    %v13792 = vld [vmem:[#allocation11 + $0x34] sm:$0xf]
    %v13793 = vld [vmem:[#allocation11 + $0x38] sm:$0xf]
    %v13794 = vld [vmem:[#allocation11 + $0x3c] sm:$0xf]
    %v13795 = vld [vmem:[#allocation11 + $0x40] sm:$0xf]
    %v13796 = vld [vmem:[#allocation11 + $0x44] sm:$0xf]
    %v13797 = vld [vmem:[#allocation11 + $0x48] sm:$0xf]
    %v13798 = vld [vmem:[#allocation11 + $0x4c] sm:$0xf]
    %v13799 = vld [vmem:[#allocation11 + $0x50] sm:$0xf]
    %v13800 = vld [vmem:[#allocation11 + $0x54] sm:$0xf]
    %v13801 = vld [vmem:[#allocation11 + $0x58] sm:$0xf]
    %v13802 = vld [vmem:[#allocation11 + $0x5c] sm:$0xf]
    %v13803 = vld [vmem:[#allocation11 + $0x60] sm:$0xf]
    %v13804 = vld [vmem:[#allocation11 + $0x64] sm:$0xf]
    %v13805 = vld [vmem:[#allocation11 + $0x68] sm:$0xf]
    %v13806 = vld [vmem:[#allocation11 + $0x6c] sm:$0xf]
    %v13807 = vld [vmem:[#allocation11 + $0x70] sm:$0xf]
    %v13808 = vld [vmem:[#allocation11 + $0x74] sm:$0xf]
    %v13809 = vld [vmem:[#allocation11 + $0x78] sm:$0xf]
    %v13810 = vld [vmem:[#allocation11 + $0x7c] sm:$0xf]
    %v13811 = vld [vmem:[#allocation11 + $0x80] sm:$0xf]
    %v13812 = vld [vmem:[#allocation11 + $0x84] sm:$0xf]
    %v13813 = vld [vmem:[#allocation11 + $0x88] sm:$0xf]
    %v13814 = vld [vmem:[#allocation11 + $0x8c] sm:$0xf]
    %v13815 = vld [vmem:[#allocation11 + $0x90] sm:$0xf]
    %v13816 = vld [vmem:[#allocation11 + $0x94] sm:$0xf]
    %v13817 = vld [vmem:[#allocation11 + $0x98] sm:$0xf]
    %v13818 = vld [vmem:[#allocation11 + $0x9c] sm:$0xf]
    %v13819 = vld [vmem:[#allocation11 + $0xa0] sm:$0xf]
    %v13820 = vld [vmem:[#allocation11 + $0xa4] sm:$0xf]
    %v13821 = vld [vmem:[#allocation11 + $0xa8] sm:$0xf]
    %v13822 = vld [vmem:[#allocation11 + $0xac] sm:$0xf]
    %v13823 = vld [vmem:[#allocation11 + $0xb0] sm:$0xf]
    %v13824 = vld [vmem:[#allocation11 + $0xb4] sm:$0xf]
    %v13825 = vld [vmem:[#allocation11 + $0xb8] sm:$0xf]
    %v13826 = vld [vmem:[#allocation11 + $0xbc] sm:$0xf]
    %v13827 = vld [vmem:[#allocation11 + $0xc0] sm:$0xf]
    %v13828 = vld [vmem:[#allocation11 + $0xc4] sm:$0xf]
    %v13829 = vld [vmem:[#allocation11 + $0xc8] sm:$0xf]
    %v13830 = vld [vmem:[#allocation11 + $0xcc] sm:$0xf]
    %v13831 = vld [vmem:[#allocation11 + $0xd0] sm:$0xf]
    %v13832 = vld [vmem:[#allocation11 + $0xd4] sm:$0xf]
    %v13833 = vld [vmem:[#allocation11 + $0xd8] sm:$0xf]
    %v13834 = vld [vmem:[#allocation11 + $0xdc] sm:$0xf]
    %v13835 = vld [vmem:[#allocation11 + $0xe0] sm:$0xf]
    %v13836 = vld [vmem:[#allocation11 + $0xe4] sm:$0xf]
    %v13837 = vld [vmem:[#allocation11 + $0xe8] sm:$0xf]
    %v13838 = vld [vmem:[#allocation11 + $0xec] sm:$0xf]
    %v13839 = vld [vmem:[#allocation11 + $0xf0] sm:$0xf]
    %v13840 = vld [vmem:[#allocation11 + $0xf4] sm:$0xf]
    %v13841 = vld [vmem:[#allocation11 + $0xf8] sm:$0xf]
    %v13842 = vld [vmem:[#allocation11 + $0xfc] sm:$0xf]
    %v13843 = vld [vmem:[#allocation11 + $0x100] sm:$0xf]
    %v13844 = vld [vmem:[#allocation11 + $0x104] sm:$0xf]
    %v13845 = vld [vmem:[#allocation11 + $0x108] sm:$0xf]
    %v13846 = vld [vmem:[#allocation11 + $0x10c] sm:$0xf]
    %v13847 = vld [vmem:[#allocation11 + $0x110] sm:$0xf]
    %v13848 = vld [vmem:[#allocation11 + $0x114] sm:$0xf]
    %v13849 = vld [vmem:[#allocation11 + $0x118] sm:$0xf]
    %v13850 = vld [vmem:[#allocation11 + $0x11c] sm:$0xf]
    %v13851 = vld [vmem:[#allocation11 + $0x120] sm:$0xf]
    %v13852 = vld [vmem:[#allocation11 + $0x124] sm:$0xf]
    %v13853 = vld [vmem:[#allocation11 + $0x128] sm:$0xf]
    %v13854 = vld [vmem:[#allocation11 + $0x12c] sm:$0xf]
    %v13855 = vld [vmem:[#allocation11 + $0x130] sm:$0xf]
    %v13856 = vld [vmem:[#allocation11 + $0x134] sm:$0xf]
    %v13857 = vld [vmem:[#allocation11 + $0x138] sm:$0xf]
    %v13858 = vld [vmem:[#allocation11 + $0x13c] sm:$0xf]
    %v13859 = vld [vmem:[#allocation11 + $0x140] sm:$0xf]
    %v13860 = vld [vmem:[#allocation11 + $0x144] sm:$0xf]
    %v13861 = vld [vmem:[#allocation11 + $0x148] sm:$0xf]
    %v13862 = vld [vmem:[#allocation11 + $0x14c] sm:$0xf]
    %v13863 = vld [vmem:[#allocation11 + $0x150] sm:$0xf]
    %v13864 = vld [vmem:[#allocation11 + $0x154] sm:$0xf]
    %v13865 = vld [vmem:[#allocation11 + $0x158] sm:$0xf]
    %v13866 = vld [vmem:[#allocation11 + $0x15c] sm:$0xf]
    %v13867 = vld [vmem:[#allocation11 + $0x160] sm:$0xf]
    %v13868 = vld [vmem:[#allocation11 + $0x164] sm:$0xf]
    %v13869 = vld [vmem:[#allocation11 + $0x168] sm:$0xf]
    %v13870 = vld [vmem:[#allocation11 + $0x16c] sm:$0xf]
    %v13871 = vld [vmem:[#allocation11 + $0x170] sm:$0xf]
    %v13872 = vld [vmem:[#allocation11 + $0x174] sm:$0xf]
    %v13873 = vld [vmem:[#allocation11 + $0x178] sm:$0xf]
    %v13874 = vld [vmem:[#allocation11 + $0x17c] sm:$0xf]
    %v13875 = vld [vmem:[#allocation11 + $0x180] sm:$0xf]
    %v13876 = vld [vmem:[#allocation11 + $0x184] sm:$0xf]
    %v13877 = vld [vmem:[#allocation11 + $0x188] sm:$0xf]
    %v13878 = vld [vmem:[#allocation11 + $0x18c] sm:$0xf]
    %v13879 = vld [vmem:[#allocation11 + $0x190] sm:$0xf]
    %v13880 = vld [vmem:[#allocation11 + $0x194] sm:$0xf]
    %v13881 = vld [vmem:[#allocation11 + $0x198] sm:$0xf]
    %v13882 = vld [vmem:[#allocation11 + $0x19c] sm:$0xf]
    %v13883 = vld [vmem:[#allocation11 + $0x1a0] sm:$0xf]
    %v13884 = vld [vmem:[#allocation11 + $0x1a4] sm:$0xf]
    %v13885 = vld [vmem:[#allocation11 + $0x1a8] sm:$0xf]
    %v13886 = vld [vmem:[#allocation11 + $0x1ac] sm:$0xf]
    %v13887 = vld [vmem:[#allocation11 + $0x1b0] sm:$0xf]
    %v13888 = vld [vmem:[#allocation11 + $0x1b4] sm:$0xf]
    %v13889 = vld [vmem:[#allocation11 + $0x1b8] sm:$0xf]
    %v13890 = vld [vmem:[#allocation11 + $0x1bc] sm:$0xf]
    %v13891 = vld [vmem:[#allocation11 + $0x1c0] sm:$0xf]
    %v13892 = vld [vmem:[#allocation11 + $0x1c4] sm:$0xf]
    %v13893 = vld [vmem:[#allocation11 + $0x1c8] sm:$0xf]
    %v13894 = vld [vmem:[#allocation11 + $0x1cc] sm:$0xf]
    %v13895 = vld [vmem:[#allocation11 + $0x1d0] sm:$0xf]
    %v13896 = vld [vmem:[#allocation11 + $0x1d4] sm:$0xf]
    %v13897 = vld [vmem:[#allocation11 + $0x1d8] sm:$0xf]
    %v13898 = vld [vmem:[#allocation11 + $0x1dc] sm:$0xf]
    %v13899 = vld [vmem:[#allocation11 + $0x1e0] sm:$0xf]
    %v13900 = vld [vmem:[#allocation11 + $0x1e4] sm:$0xf]
    %v13901 = vld [vmem:[#allocation11 + $0x1e8] sm:$0xf]
    %v13902 = vld [vmem:[#allocation11 + $0x1ec] sm:$0xf]
    %v13903 = vld [vmem:[#allocation11 + $0x1f0] sm:$0xf]
    %v13904 = vld [vmem:[#allocation11 + $0x1f4] sm:$0xf]
    %v13905 = vld [vmem:[#allocation11 + $0x1f8] sm:$0xf]
    %v13906 = vld [vmem:[#allocation11 + $0x1fc] sm:$0xf]
    %v13907 = vld [vmem:[#allocation13] sm:$0x1]
    %v13909 = vlaneseq
    %v13910 = vshrl.u32 %v13909, 7
    %v13911 = vsub.s32 0, %v13910
    %v13912 = vrot.slane %v13907, %v13911
    %v14042 = vunpack.c.l.b16 %v13779
    %v14043 = vunpack.c.l.b16 %v13780
    %v14044 = vunpack.c.l.b16 %v13781
    %v14045 = vunpack.c.l.b16 %v13782
    %v14046 = vunpack.c.l.b16 %v13783
    %v14047 = vunpack.c.l.b16 %v13784
    %v14048 = vunpack.c.l.b16 %v13785
    %v14049 = vunpack.c.l.b16 %v13786
    %v14050 = vunpack.c.l.b16 %v13787
    %v14051 = vunpack.c.l.b16 %v13788
    %v14052 = vunpack.c.l.b16 %v13789
    %v14053 = vunpack.c.l.b16 %v13790
    %v14054 = vunpack.c.l.b16 %v13791
    %v14055 = vunpack.c.l.b16 %v13792
    %v14056 = vunpack.c.l.b16 %v13793
    %v14057 = vunpack.c.l.b16 %v13794
    %v14058 = vunpack.c.l.b16 %v13795
    %v14059 = vunpack.c.l.b16 %v13796
    %v14060 = vunpack.c.l.b16 %v13797
    %v14061 = vunpack.c.l.b16 %v13798
    %v14062 = vunpack.c.l.b16 %v13799
    %v14063 = vunpack.c.l.b16 %v13800
    %v14064 = vunpack.c.l.b16 %v13801
    %v14065 = vunpack.c.l.b16 %v13802
    %v14066 = vunpack.c.l.b16 %v13803
    %v14067 = vunpack.c.l.b16 %v13804
    %v14068 = vunpack.c.l.b16 %v13805
    %v14069 = vunpack.c.l.b16 %v13806
    %v14070 = vunpack.c.l.b16 %v13807
    %v14071 = vunpack.c.l.b16 %v13808
    %v14072 = vunpack.c.l.b16 %v13809
    %v14073 = vunpack.c.l.b16 %v13810
    %v14074 = vunpack.c.l.b16 %v13811
    %v14075 = vunpack.c.l.b16 %v13812
    %v14076 = vunpack.c.l.b16 %v13813
    %v14077 = vunpack.c.l.b16 %v13814
    %v14078 = vunpack.c.l.b16 %v13815
    %v14079 = vunpack.c.l.b16 %v13816
    %v14080 = vunpack.c.l.b16 %v13817
    %v14081 = vunpack.c.l.b16 %v13818
    %v14082 = vunpack.c.l.b16 %v13819
    %v14083 = vunpack.c.l.b16 %v13820
    %v14084 = vunpack.c.l.b16 %v13821
    %v14085 = vunpack.c.l.b16 %v13822
    %v14086 = vunpack.c.l.b16 %v13823
    %v14087 = vunpack.c.l.b16 %v13824
    %v14088 = vunpack.c.l.b16 %v13825
    %v14089 = vunpack.c.l.b16 %v13826
    %v14090 = vunpack.c.l.b16 %v13827
    %v14091 = vunpack.c.l.b16 %v13828
    %v14092 = vunpack.c.l.b16 %v13829
    %v14093 = vunpack.c.l.b16 %v13830
    %v14094 = vunpack.c.l.b16 %v13831
    %v14095 = vunpack.c.l.b16 %v13832
    %v14096 = vunpack.c.l.b16 %v13833
    %v14097 = vunpack.c.l.b16 %v13834
    %v14098 = vunpack.c.l.b16 %v13835
    %v14099 = vunpack.c.l.b16 %v13836
    %v14100 = vunpack.c.l.b16 %v13837
    %v14101 = vunpack.c.l.b16 %v13838
    %v14102 = vunpack.c.l.b16 %v13839
    %v14103 = vunpack.c.l.b16 %v13840
    %v14104 = vunpack.c.l.b16 %v13841
    %v14105 = vunpack.c.l.b16 %v13842
    %v14106 = vunpack.c.l.b16 %v13843
    %v14107 = vunpack.c.l.b16 %v13844
    %v14108 = vunpack.c.l.b16 %v13845
    %v14109 = vunpack.c.l.b16 %v13846
    %v14110 = vunpack.c.l.b16 %v13847
    %v14111 = vunpack.c.l.b16 %v13848
    %v14112 = vunpack.c.l.b16 %v13849
    %v14113 = vunpack.c.l.b16 %v13850
    %v14114 = vunpack.c.l.b16 %v13851
    %v14115 = vunpack.c.l.b16 %v13852
    %v14116 = vunpack.c.l.b16 %v13853
    %v14117 = vunpack.c.l.b16 %v13854
    %v14118 = vunpack.c.l.b16 %v13855
    %v14119 = vunpack.c.l.b16 %v13856
    %v14120 = vunpack.c.l.b16 %v13857
    %v14121 = vunpack.c.l.b16 %v13858
    %v14122 = vunpack.c.l.b16 %v13859
    %v14123 = vunpack.c.l.b16 %v13860
    %v14124 = vunpack.c.l.b16 %v13861
    %v14125 = vunpack.c.l.b16 %v13862
    %v14126 = vunpack.c.l.b16 %v13863
    %v14127 = vunpack.c.l.b16 %v13864
    %v14128 = vunpack.c.l.b16 %v13865
    %v14129 = vunpack.c.l.b16 %v13866
    %v14130 = vunpack.c.l.b16 %v13867
    %v14131 = vunpack.c.l.b16 %v13868
    %v14132 = vunpack.c.l.b16 %v13869
    %v14133 = vunpack.c.l.b16 %v13870
    %v14134 = vunpack.c.l.b16 %v13871
    %v14135 = vunpack.c.l.b16 %v13872
    %v14136 = vunpack.c.l.b16 %v13873
    %v14137 = vunpack.c.l.b16 %v13874
    %v14138 = vunpack.c.l.b16 %v13875
    %v14139 = vunpack.c.l.b16 %v13876
    %v14140 = vunpack.c.l.b16 %v13877
    %v14141 = vunpack.c.l.b16 %v13878
    %v14142 = vunpack.c.l.b16 %v13879
    %v14143 = vunpack.c.l.b16 %v13880
    %v14144 = vunpack.c.l.b16 %v13881
    %v14145 = vunpack.c.l.b16 %v13882
    %v14146 = vunpack.c.l.b16 %v13883
    %v14147 = vunpack.c.l.b16 %v13884
    %v14148 = vunpack.c.l.b16 %v13885
    %v14149 = vunpack.c.l.b16 %v13886
    %v14150 = vunpack.c.l.b16 %v13887
    %v14151 = vunpack.c.l.b16 %v13888
    %v14152 = vunpack.c.l.b16 %v13889
    %v14153 = vunpack.c.l.b16 %v13890
    %v14154 = vunpack.c.l.b16 %v13891
    %v14155 = vunpack.c.l.b16 %v13892
    %v14156 = vunpack.c.l.b16 %v13893
    %v14157 = vunpack.c.l.b16 %v13894
    %v14158 = vunpack.c.l.b16 %v13895
    %v14159 = vunpack.c.l.b16 %v13896
    %v14160 = vunpack.c.l.b16 %v13897
    %v14161 = vunpack.c.l.b16 %v13898
    %v14162 = vunpack.c.l.b16 %v13899
    %v14163 = vunpack.c.l.b16 %v13900
    %v14164 = vunpack.c.l.b16 %v13901
    %v14165 = vunpack.c.l.b16 %v13902
    %v14166 = vunpack.c.l.b16 %v13903
    %v14167 = vunpack.c.l.b16 %v13904
    %v14168 = vunpack.c.l.b16 %v13905
    %v14169 = vunpack.c.l.b16 %v13906
    %v14170 = vpack.c.b16 %v14043, %v14042
    %v14171 = vpack.c.b16 %v14045, %v14044
    %v14172 = vpack.c.b16 %v14047, %v14046
    %v14173 = vpack.c.b16 %v14049, %v14048
    %v14174 = vpack.c.b16 %v14051, %v14050
    %v14175 = vpack.c.b16 %v14053, %v14052
    %v14176 = vpack.c.b16 %v14055, %v14054
    %v14177 = vpack.c.b16 %v14057, %v14056
    %v14178 = vpack.c.b16 %v14059, %v14058
    %v14179 = vpack.c.b16 %v14061, %v14060
    %v14180 = vpack.c.b16 %v14063, %v14062
    %v14181 = vpack.c.b16 %v14065, %v14064
    %v14182 = vpack.c.b16 %v14067, %v14066
    %v14183 = vpack.c.b16 %v14069, %v14068
    %v14184 = vpack.c.b16 %v14071, %v14070
    %v14185 = vpack.c.b16 %v14073, %v14072
    %v14186 = vpack.c.b16 %v14075, %v14074
    %v14187 = vpack.c.b16 %v14077, %v14076
    %v14188 = vpack.c.b16 %v14079, %v14078
    %v14189 = vpack.c.b16 %v14081, %v14080
    %v14190 = vpack.c.b16 %v14083, %v14082
    %v14191 = vpack.c.b16 %v14085, %v14084
    %v14192 = vpack.c.b16 %v14087, %v14086
    %v14193 = vpack.c.b16 %v14089, %v14088
    %v14194 = vpack.c.b16 %v14091, %v14090
    %v14195 = vpack.c.b16 %v14093, %v14092
    %v14196 = vpack.c.b16 %v14095, %v14094
    %v14197 = vpack.c.b16 %v14097, %v14096
    %v14198 = vpack.c.b16 %v14099, %v14098
    %v14199 = vpack.c.b16 %v14101, %v14100
    %v14200 = vpack.c.b16 %v14103, %v14102
    %v14201 = vpack.c.b16 %v14105, %v14104
    %v14202 = vpack.c.b16 %v14107, %v14106
    %v14203 = vpack.c.b16 %v14109, %v14108
    %v14204 = vpack.c.b16 %v14111, %v14110
    %v14205 = vpack.c.b16 %v14113, %v14112
    %v14206 = vpack.c.b16 %v14115, %v14114
    %v14207 = vpack.c.b16 %v14117, %v14116
    %v14208 = vpack.c.b16 %v14119, %v14118
    %v14209 = vpack.c.b16 %v14121, %v14120
    %v14210 = vpack.c.b16 %v14123, %v14122
    %v14211 = vpack.c.b16 %v14125, %v14124
    %v14212 = vpack.c.b16 %v14127, %v14126
    %v14213 = vpack.c.b16 %v14129, %v14128
    %v14214 = vpack.c.b16 %v14131, %v14130
    %v14215 = vpack.c.b16 %v14133, %v14132
    %v14216 = vpack.c.b16 %v14135, %v14134
    %v14217 = vpack.c.b16 %v14137, %v14136
    %v14218 = vpack.c.b16 %v14139, %v14138
    %v14219 = vpack.c.b16 %v14141, %v14140
    %v14220 = vpack.c.b16 %v14143, %v14142
    %v14221 = vpack.c.b16 %v14145, %v14144
    %v14222 = vpack.c.b16 %v14147, %v14146
    %v14223 = vpack.c.b16 %v14149, %v14148
    %v14224 = vpack.c.b16 %v14151, %v14150
    %v14225 = vpack.c.b16 %v14153, %v14152
    %v14226 = vpack.c.b16 %v14155, %v14154
    %v14227 = vpack.c.b16 %v14157, %v14156
    %v14228 = vpack.c.b16 %v14159, %v14158
    %v14229 = vpack.c.b16 %v14161, %v14160
    %v14230 = vpack.c.b16 %v14163, %v14162
    %v14231 = vpack.c.b16 %v14165, %v14164
    %v14232 = vpack.c.b16 %v14167, %v14166
    %v14233 = vpack.c.b16 %v14169, %v14168
    %14298 = vmatprep.subr.bf16.mxu0 0
    %14299 = vmatpush1.bf16.msra.mxu0 %v14170
    %14300 = vmatprep.subr.bf16.mxu0 0
    %14301 = vmatpush1.bf16.msra.mxu0 %v14171
    %14302 = vmatprep.subr.bf16.mxu0 0
    %14303 = vmatpush1.bf16.msra.mxu0 %v14172
    %14304 = vmatprep.subr.bf16.mxu0 0
    %14305 = vmatpush1.bf16.msra.mxu0 %v14173
    %14306 = vmatprep.subr.bf16.mxu0 0
    %14307 = vmatpush1.bf16.msra.mxu0 %v14174
    %14308 = vmatprep.subr.bf16.mxu0 0
    %14309 = vmatpush1.bf16.msra.mxu0 %v14175
    %14310 = vmatprep.subr.bf16.mxu0 0
    %14311 = vmatpush1.bf16.msra.mxu0 %v14176
    %14312 = vmatprep.subr.bf16.mxu0 0
    %14313 = vmatpush1.bf16.msra.mxu0 %v14177
    %14314 = vmatprep.subr.bf16.mxu0 0
    %14315 = vmatpush1.bf16.msra.mxu0 %v14178
    %14316 = vmatprep.subr.bf16.mxu0 0
    %14317 = vmatpush1.bf16.msra.mxu0 %v14179
    %14318 = vmatprep.subr.bf16.mxu0 0
    %14319 = vmatpush1.bf16.msra.mxu0 %v14180
    %14320 = vmatprep.subr.bf16.mxu0 0
    %14321 = vmatpush1.bf16.msra.mxu0 %v14181
    %14322 = vmatprep.subr.bf16.mxu0 0
    %14323 = vmatpush1.bf16.msra.mxu0 %v14182
    %14324 = vmatprep.subr.bf16.mxu0 0
    %14325 = vmatpush1.bf16.msra.mxu0 %v14183
    %14326 = vmatprep.subr.bf16.mxu0 0
    %14327 = vmatpush1.bf16.msra.mxu0 %v14184
    %14328 = vmatprep.subr.bf16.mxu0 0
    %14329 = vmatpush1.bf16.msra.mxu0 %v14185
    %14330 = vmatprep.mubr.bf16.mxu0 %v13772
    %14331 = vmatmul.mubr.bf16.gmra.mrb[0].mxu0 %v13771
    %v14332 = vpop.f32.mrb[0].mxu0
    %v14333 = vadd.f32 %v13912, %v14332
    %v14334 = vpop.f32.mrb[0].mxu0
    %v14335 = vpop.f32.mrb[0].mxu0
    %v14336 = vpop.f32.mrb[0].mxu0
    %14337 = vdwg.mxu0
    %14338 = vmatprep.subr.bf16.mxu0 0
    %14339 = vmatpush1.bf16.msra.mxu0 %v14186
    %14340 = vmatprep.subr.bf16.mxu0 0
    %14341 = vmatpush1.bf16.msra.mxu0 %v14187
    %14342 = vmatprep.subr.bf16.mxu0 0
    %14343 = vmatpush1.bf16.msra.mxu0 %v14188
    %14344 = vmatprep.subr.bf16.mxu0 0
    %14345 = vmatpush1.bf16.msra.mxu0 %v14189
    %14346 = vmatprep.subr.bf16.mxu0 0
    %14347 = vmatpush1.bf16.msra.mxu0 %v14190
    %14348 = vmatprep.subr.bf16.mxu0 0
    %14349 = vmatpush1.bf16.msra.mxu0 %v14191
    %14350 = vmatprep.subr.bf16.mxu0 0
    %14351 = vmatpush1.bf16.msra.mxu0 %v14192
    %14352 = vmatprep.subr.bf16.mxu0 0
    %14353 = vmatpush1.bf16.msra.mxu0 %v14193
    %14354 = vmatprep.subr.bf16.mxu0 0
    %14355 = vmatpush1.bf16.msra.mxu0 %v14194
    %14356 = vmatprep.subr.bf16.mxu0 0
    %14357 = vmatpush1.bf16.msra.mxu0 %v14195
    %14358 = vmatprep.subr.bf16.mxu0 0
    %14359 = vmatpush1.bf16.msra.mxu0 %v14196
    %14360 = vmatprep.subr.bf16.mxu0 0
    %14361 = vmatpush1.bf16.msra.mxu0 %v14197
    %14362 = vmatprep.subr.bf16.mxu0 0
    %14363 = vmatpush1.bf16.msra.mxu0 %v14198
    %14364 = vmatprep.subr.bf16.mxu0 0
    %14365 = vmatpush1.bf16.msra.mxu0 %v14199
    %14366 = vmatprep.subr.bf16.mxu0 0
    %14367 = vmatpush1.bf16.msra.mxu0 %v14200
    %14368 = vmatprep.subr.bf16.mxu0 0
    %14369 = vmatpush1.bf16.msra.mxu0 %v14201
    %14370 = vmatprep.mubr.bf16.mxu0 %v13774
    %14371 = vmatmul.mubr.bf16.gmra.mrb[0].mxu0 %v13773
    %v14372 = vpop.f32.mrb[0].mxu0
    %v14373 = vadd.f32 %v14333, %v14372
    %v14374 = vpop.f32.mrb[0].mxu0
    %v14375 = vpop.f32.mrb[0].mxu0
    %v14376 = vpop.f32.mrb[0].mxu0
    %14377 = vdwg.mxu0
    %14378 = vmatprep.subr.bf16.mxu0 0
    %14379 = vmatpush1.bf16.msra.mxu0 %v14202
    %14380 = vmatprep.subr.bf16.mxu0 0
    %14381 = vmatpush1.bf16.msra.mxu0 %v14203
    %14382 = vmatprep.subr.bf16.mxu0 0
    %14383 = vmatpush1.bf16.msra.mxu0 %v14204
    %14384 = vmatprep.subr.bf16.mxu0 0
    %14385 = vmatpush1.bf16.msra.mxu0 %v14205
    %14386 = vmatprep.subr.bf16.mxu0 0
    %14387 = vmatpush1.bf16.msra.mxu0 %v14206
    %14388 = vmatprep.subr.bf16.mxu0 0
    %14389 = vmatpush1.bf16.msra.mxu0 %v14207
    %14390 = vmatprep.subr.bf16.mxu0 0
    %14391 = vmatpush1.bf16.msra.mxu0 %v14208
    %14392 = vmatprep.subr.bf16.mxu0 0
    %14393 = vmatpush1.bf16.msra.mxu0 %v14209
    %14394 = vmatprep.subr.bf16.mxu0 0
    %14395 = vmatpush1.bf16.msra.mxu0 %v14210
    %14396 = vmatprep.subr.bf16.mxu0 0
    %14397 = vmatpush1.bf16.msra.mxu0 %v14211
    %14398 = vmatprep.subr.bf16.mxu0 0
    %14399 = vmatpush1.bf16.msra.mxu0 %v14212
    %14400 = vmatprep.subr.bf16.mxu0 0
    %14401 = vmatpush1.bf16.msra.mxu0 %v14213
    %14402 = vmatprep.subr.bf16.mxu0 0
    %14403 = vmatpush1.bf16.msra.mxu0 %v14214
    %14404 = vmatprep.subr.bf16.mxu0 0
    %14405 = vmatpush1.bf16.msra.mxu0 %v14215
    %14406 = vmatprep.subr.bf16.mxu0 0
    %14407 = vmatpush1.bf16.msra.mxu0 %v14216
    %14408 = vmatprep.subr.bf16.mxu0 0
    %14409 = vmatpush1.bf16.msra.mxu0 %v14217
    %14410 = vmatprep.mubr.bf16.mxu0 %v13776
    %14411 = vmatmul.mubr.bf16.gmra.mrb[0].mxu0 %v13775
    %v14412 = vpop.f32.mrb[0].mxu0
    %v14413 = vadd.f32 %v14373, %v14412
    %v14414 = vpop.f32.mrb[0].mxu0
    %v14415 = vpop.f32.mrb[0].mxu0
    %v14416 = vpop.f32.mrb[0].mxu0
    %14417 = vdwg.mxu0
    %14418 = vmatprep.subr.bf16.mxu0 0
    %14419 = vmatpush1.bf16.msra.mxu0 %v14218
    %14420 = vmatprep.subr.bf16.mxu0 0
    %14421 = vmatpush1.bf16.msra.mxu0 %v14219
    %14422 = vmatprep.subr.bf16.mxu0 0
    %14423 = vmatpush1.bf16.msra.mxu0 %v14220
    %14424 = vmatprep.subr.bf16.mxu0 0
    %14425 = vmatpush1.bf16.msra.mxu0 %v14221
    %14426 = vmatprep.subr.bf16.mxu0 0
    %14427 = vmatpush1.bf16.msra.mxu0 %v14222
    %14428 = vmatprep.subr.bf16.mxu0 0
    %14429 = vmatpush1.bf16.msra.mxu0 %v14223
    %14430 = vmatprep.subr.bf16.mxu0 0
    %14431 = vmatpush1.bf16.msra.mxu0 %v14224
    %14432 = vmatprep.subr.bf16.mxu0 0
    %14433 = vmatpush1.bf16.msra.mxu0 %v14225
    %14434 = vmatprep.subr.bf16.mxu0 0
    %14435 = vmatpush1.bf16.msra.mxu0 %v14226
    %14436 = vmatprep.subr.bf16.mxu0 0
    %14437 = vmatpush1.bf16.msra.mxu0 %v14227
    %14438 = vmatprep.subr.bf16.mxu0 0
    %14439 = vmatpush1.bf16.msra.mxu0 %v14228
    %14440 = vmatprep.subr.bf16.mxu0 0
    %14441 = vmatpush1.bf16.msra.mxu0 %v14229
    %14442 = vmatprep.subr.bf16.mxu0 0
    %14443 = vmatpush1.bf16.msra.mxu0 %v14230
    %14444 = vmatprep.subr.bf16.mxu0 0
    %14445 = vmatpush1.bf16.msra.mxu0 %v14231
    %14446 = vmatprep.subr.bf16.mxu0 0
    %14447 = vmatpush1.bf16.msra.mxu0 %v14232
    %14448 = vmatprep.subr.bf16.mxu0 0
    %14449 = vmatpush1.bf16.msra.mxu0 %v14233
    %14450 = vmatprep.mubr.bf16.mxu0 %v13778
    %14451 = vmatmul.mubr.bf16.gmra.mrb[0].mxu0 %v13777
    %v14452 = vpop.f32.mrb[0].mxu0
    %v14453 = vadd.f32 %v14413, %v14452
    %v14454 = vpop.f32.mrb[0].mxu0
    %v14455 = vpop.f32.mrb[0].mxu0
    %v14456 = vpop.f32.mrb[0].mxu0
    %14457 = vdwg.mxu0
    %14458 = vst [vmem:[#allocation14] sm:$0xff] %v14453
    // Predicated region
    $region58: #{tpu_custom_call.1} parent=1 // pred_check
      _
    $region59: #{tpu_custom_call.1} parent=1 // pred_check_branch
      %14460 = sbr.rel (0) target = $region61
    $region60: #{tpu_custom_call.1} parent=1 // pred_region
      %s14462 = ssub.s32 128, 128
      %14463 = vsyncadd [#allocation4], %s14462
      %s14465 = sshll.u32 [#allocation14], 4
      %s14466 = int_to_ptr.vmem [resolvable:$true] %s14465
      %14468 = dma.vmem_to_hbm [thread:$0]  %s14466, 128, %s7, [#allocation4]
    $region61: #{tpu_custom_call.1} parent=1 // pred_fallthru
      _
    // Predicated region
    $region62: #{tpu_custom_call.1} parent=1 // pred_check
      _
    $region63: #{tpu_custom_call.1} parent=1 // pred_check_branch
      %14470 = sbr.rel (0) target = $region65
    $region64: #{tpu_custom_call.1} parent=1 // pred_region
      %14471 = dma.done [#allocation4], 128
    $region65: #{tpu_custom_call.1} parent=1 // pred_fallthru
      _
    %14472 = vsyncpa [#allocation3], 1
    %14473 = vsyncpa [#allocation6], 1
    %14474 = vsyncpa [#allocation9], 1
    %14475 = vsyncpa [#allocation12], 1
    %14476 = vsyncpa [#allocation4], 1

</llo_original>
